<compile_context>
chip_gen: v7x
topology: tpu7x:2x2x1
jax: 0.10.0
libtpu: 0.0.40
codegen_flags: <defaults>
</compile_context>

<pallas_src>
import functools

import jax
import jax.numpy as jnp
from jax.experimental import pallas as pl
from jax.experimental.pallas import tpu as pltpu

LEAKY_SLOPE = 0.2

STAGE_CONFIGS = (
    dict(in_ch=1, conv_out=8, hidden=16, stride=2, ksize=3, rnn_ksize=3),
    dict(in_ch=16, conv_out=32, hidden=32, stride=2, ksize=3, rnn_ksize=3),
)


def _round_up(x, m):
    return ((x + m - 1) // m) * m


# -----------------------------------------------------------------------------
# Kernel 1: M-tiled matmul + bias (+ LeakyReLU).  bf16 MXU inputs, f32 accumulate.
# -----------------------------------------------------------------------------
def _matmul_bias_act_kernel(x_ref, w_ref, b_ref, o_ref, *, negative_slope):
    y = jnp.dot(x_ref[...], w_ref[...], preferred_element_type=jnp.float32)
    y = y + b_ref[...]
    if negative_slope is not None:
        y = jnp.where(y >= 0, y, negative_slope * y)
    o_ref[...] = y.astype(o_ref.dtype)


def matmul_bias_act(x, w, b, negative_slope=None, block_m=256):
    """(M,K) @ (K,N) + (N,), optional LeakyReLU.  M is tiled and pipelined."""
    M, K = x.shape
    K2, N = w.shape
    assert K == K2
    bm = min(block_m, _round_up(M, 8))
    Mp = _round_up(M, bm)
    if Mp != M:
        x = jnp.pad(x, ((0, Mp - M), (0, 0)))
    xb = x.astype(jnp.bfloat16)            # bf16 operands, f32 accumulation
    wb = w.astype(jnp.bfloat16)
    b2 = b.reshape(1, N).astype(jnp.float32)
    kernel = functools.partial(_matmul_bias_act_kernel,
                               negative_slope=negative_slope)
    out = pl.pallas_call(
        kernel,
        out_shape=jax.ShapeDtypeStruct((Mp, N), jnp.float32),
        grid=(Mp // bm,),
        in_specs=[
            pl.BlockSpec((bm, K), lambda i: (i, 0)),
            pl.BlockSpec((K, N), lambda i: (0, 0)),    # weights VMEM-resident
            pl.BlockSpec((1, N), lambda i: (0, 0)),
        ],
        out_specs=pl.BlockSpec((bm, N), lambda i: (i, 0)),
        compiler_params=pltpu.CompilerParams(dimension_semantics=("parallel",)),
    )(xb, wb, b2)
    return out[:M]


# -----------------------------------------------------------------------------
# Kernel 2: fused ConvLSTM recurrence over the whole sequence (grid=(S,)).
#   gx_ref   : (1, Mq, 4*Ch)  precomputed x->gate contribution for step t (f32)
#   wh_ref   : (9, Ch, 4*Ch)  hidden->gate weights per 3x3 tap (bf16, resident)
#   hseq_ref : (1, Mq, Ch)    h output for step t
#   c_ref    : (Mq, Ch)       final c (VMEM-resident accumulator)
#   hpad_ref : VMEM scratch (B, Ho+2, Wp+2, Ch) zero-padded hidden state
# Mq = B*Ho*Wp where Wp = round_up(Wo, 8) (width padded so in-kernel reshapes
# between (B,Ho,Wp,Ch) and (Mq,Ch) are sublane-tile aligned).
# -----------------------------------------------------------------------------
def _convlstm_seq_kernel(gx_ref, wh_ref, hseq_ref, c_ref, hpad_ref,
                         *, B, Ho, Wo, Wp, Ch):
    t = pl.program_id(0)
    Mq = B * Ho * Wp

    @pl.when(t == 0)
    def _init():
        hpad_ref[...] = jnp.zeros_like(hpad_ref)
        c_ref[...] = jnp.zeros_like(c_ref)

    # x->gate contribution (already includes the conv bias).
    gates = gx_ref[0]                                        # (Mq, 4*Ch) f32

    # hidden->gate contribution: 3x3 conv of h as 9 shifted-window matmuls
    # against the VMEM-resident padded hidden state (zero halo = zero padding).
    for kh in range(3):
        for kw in range(3):
            win = hpad_ref[:, kh:kh + Ho, kw:kw + Wp, :]     # (B, Ho, Wp, Ch)
            win = win.reshape(Mq, Ch).astype(jnp.bfloat16)
            gates = gates + jnp.dot(win, wh_ref[kh * 3 + kw],
                                    preferred_element_type=jnp.float32)

    # gate order: [input, forget, cell, output] column blocks.
    i_g = jax.nn.sigmoid(gates[:, 0 * Ch:1 * Ch])
    f_g = jax.nn.sigmoid(gates[:, 1 * Ch:2 * Ch])
    g_g = jnp.tanh(gates[:, 2 * Ch:3 * Ch])
    o_g = jax.nn.sigmoid(gates[:, 3 * Ch:4 * Ch])

    c_new = f_g * c_ref[...] + i_g * g_g
    h_new = o_g * jnp.tanh(c_new)

    c_ref[...] = c_new              # resident block: HBM writeback only at the end
    hseq_ref[0] = h_new
    # feed h back into the padded scratch; only real (non width-padded) columns,
    # so the zero halo stays zero.
    h4 = h_new.reshape(B, Ho, Wp, Ch)
    hpad_ref[:, 1:Ho + 1, 1:Wo + 1, :] = h4[:, :, :Wo, :]


def convlstm_sequence(gx, wh_taps, b, ho, wo, wp, ch):
    s, mq, c4 = gx.shape
    assert mq == b * ho * wp and c4 == 4 * ch
    kernel = functools.partial(_convlstm_seq_kernel,
                               B=b, Ho=ho, Wo=wo, Wp=wp, Ch=ch)
    hseq, c_fin = pl.pallas_call(
        kernel,
        out_shape=(jax.ShapeDtypeStruct((s, mq, ch), jnp.float32),
                   jax.ShapeDtypeStruct((mq, ch), jnp.float32)),
        grid=(s,),
        in_specs=[
            pl.BlockSpec((1, mq, c4), lambda t: (t, 0, 0)),   # per-step x-gates
            pl.BlockSpec((9, ch, c4), lambda t: (0, 0, 0)),   # resident Wh
        ],
        out_specs=(
            pl.BlockSpec((1, mq, ch), lambda t: (t, 0, 0)),   # h for every step
            pl.BlockSpec((mq, ch), lambda t: (0, 0)),         # final c (accumulator)
        ),
        scratch_shapes=[pltpu.VMEM((b, ho + 2, wp + 2, ch), jnp.float32)],
        compiler_params=pltpu.CompilerParams(dimension_semantics=("arbitrary",)),
    )(gx, wh_taps)
    return hseq, c_fin


# -----------------------------------------------------------------------------
# Glue (pure data movement in plain JAX): im2col + weight layout conversion.
# TODO(synk): patch construction stays in plain XLA; an in-kernel halo gather for
# the conv subnets would cut the 9x im2col HBM traffic further.
# -----------------------------------------------------------------------------
def im2col(x_nhwc, ksize, stride, pad):
    n, h, w, c = x_nhwc.shape
    xp = jnp.pad(x_nhwc, ((0, 0), (pad, pad), (pad, pad), (0, 0)))
    ho = (h + 2 * pad - ksize) // stride + 1
    wo = (w + 2 * pad - ksize) // stride + 1
    cols = []
    for kh in range(ksize):
        for kw in range(ksize):
            cols.append(xp[:, kh:kh + stride * ho:stride,
                           kw:kw + stride * wo:stride, :])
    return jnp.concatenate(cols, axis=-1), ho, wo


def conv_weight_to_matrix(w_oihw):
    """PyTorch (Cout,Cin,kh,kw) -> (kh*kw*Cin, Cout) matching im2col ordering."""
    cout, cin, kh, kw = w_oihw.shape
    return jnp.transpose(w_oihw, (2, 3, 1, 0)).reshape(kh * kw * cin, cout)


# -----------------------------------------------------------------------------
# Encoder forward (matches PyTorch Encoder.forward / forward_by_stage)
# -----------------------------------------------------------------------------
def init_params(key):
    params = []
    for cfg in STAGE_CONFIGS:
        key, k1, k2, k3, k4 = jax.random.split(key, 5)
        conv_w = 0.1 * jax.random.normal(
            k1, (cfg["conv_out"], cfg["in_ch"], cfg["ksize"], cfg["ksize"]),
            dtype=jnp.float32)
        conv_b = 0.1 * jax.random.normal(k2, (cfg["conv_out"],), dtype=jnp.float32)
        rnn_in = cfg["conv_out"] + cfg["hidden"]
        rnn_w = 0.1 * jax.random.normal(
            k3, (4 * cfg["hidden"], rnn_in, cfg["rnn_ksize"], cfg["rnn_ksize"]),
            dtype=jnp.float32)
        rnn_b = 0.1 * jax.random.normal(k4, (4 * cfg["hidden"],), dtype=jnp.float32)
        params.append(dict(conv_w=conv_w, conv_b=conv_b,
                           rnn_w=rnn_w, rnn_b=rnn_b))
    return params


def forward_by_stage(x_bshwc, stage_params, cfg, seq_len):
    """x: (B, S, H, W, Cin) -> (outputs (B,S,Ho,Wo,Chid), (h, c) in NCHW)."""
    b, s, h, w, cin = x_bshwc.shape
    assert s == seq_len
    cout = cfg["conv_out"]
    ch = cfg["hidden"]

    # ---- subnet: Conv2d(stride) + LeakyReLU on all B*S frames at once ----
    xs = x_bshwc.reshape(b * s, h, w, cin)
    patches, ho, wo = im2col(xs, cfg["ksize"], cfg["stride"], pad=1)
    wmat = conv_weight_to_matrix(stage_params["conv_w"])
    y = matmul_bias_act(patches.reshape(-1, wmat.shape[0]), wmat,
                        stage_params["conv_b"], negative_slope=LEAKY_SLOPE)
    y = y.reshape(b, s, ho, wo, cout)

    # ---- ConvLSTM: split W into x- and h- parts (concat order was [x, h]) ----
    wx = stage_params["rnn_w"][:, :cout]        # (4Ch, Cout, 3, 3)
    wh = stage_params["rnn_w"][:, cout:]        # (4Ch, Ch,   3, 3)
    wx_mat = conv_weight_to_matrix(wx)          # (9*Cout, 4Ch)
    wh_taps = jnp.transpose(wh, (2, 3, 1, 0)).reshape(
        cfg["rnn_ksize"] ** 2, ch, 4 * ch).astype(jnp.bfloat16)

    # x->gate contribution for ALL timesteps in one big matmul (incl. bias).
    xpatches, _, _ = im2col(y.reshape(b * s, ho, wo, cout),
                            cfg["rnn_ksize"], 1, pad=1)
    gx = matmul_bias_act(xpatches.reshape(-1, wx_mat.shape[0]), wx_mat,
                         stage_params["rnn_b"], negative_slope=None)
    gx = gx.reshape(b, s, ho, wo, 4 * ch)

    # pad width to a sublane-tile multiple so in-kernel reshapes are clean.
    wp = _round_up(wo, 8)
    if wp != wo:
        gx = jnp.pad(gx, ((0, 0), (0, 0), (0, 0), (0, wp - wo), (0, 0)))
    gx = jnp.transpose(gx, (1, 0, 2, 3, 4)).reshape(s, b * ho * wp, 4 * ch)

    # ---- fused recurrence: one pallas_call over the whole sequence ----
    hseq, c_fin = convlstm_sequence(gx, wh_taps, b, ho, wo, wp, ch)

    hseq = hseq.reshape(s, b, ho, wp, ch)[:, :, :, :wo, :]
    outputs = jnp.transpose(hseq, (1, 0, 2, 3, 4))            # (B,S,Ho,Wo,Ch)
    h_last = outputs[:, -1]                                   # (B,Ho,Wo,Ch)
    c_last = c_fin.reshape(b, ho, wp, ch)[:, :, :wo, :]
    state = (jnp.transpose(h_last, (0, 3, 1, 2)),             # NCHW like PyTorch
             jnp.transpose(c_last, (0, 3, 1, 2)))
    return outputs, state


def encoder_forward(x_bschw, params):
    """x: (B, S, C, H, W); returns tuple of (h, c) states per stage."""
    seq_len = x_bschw.shape[1]
    x = jnp.transpose(x_bschw, (0, 1, 3, 4, 2))               # -> (B,S,H,W,C)
    hidden_states = []
    for cfg, stage_params in zip(STAGE_CONFIGS, params):
        x, state = forward_by_stage(x, stage_params, cfg, seq_len)
        hidden_states.append(state)
    return tuple(hidden_states)


# -----------------------------------------------------------------------------
# Main
# -----------------------------------------------------------------------------
if __name__ == "__main__":
    key = jax.random.PRNGKey(0)
    kp, kx = jax.random.split(key)
    params = init_params(kp)

    B, S, C, H, W = 2, 4, 1, 16, 16
    x = jax.random.normal(kx, (B, S, C, H, W), dtype=jnp.float32)

    fwd = jax.jit(encoder_forward)
    hidden_states = fwd(x, params)
    jax.block_until_ready(hidden_states)

    # sanity: expected state shapes
    assert hidden_states[0][0].shape == (B, 16, 8, 8)
    assert hidden_states[0][1].shape == (B, 16, 8, 8)
    assert hidden_states[1][0].shape == (B, 32, 4, 4)
    assert hidden_states[1][1].shape == (B, 32, 4, 4)

    print("KERNEL_OK")
</pallas_src>

<mosaic_0001>
module attributes {stable_mosaic.version = 11 : i64} {
  func.func @_matmul_bias_act_kernel(%arg0: i32, %arg1: memref<256x9xbf16, #tpu.memory_space<vmem>>, %arg2: memref<9x8xbf16, #tpu.memory_space<vmem>>, %arg3: memref<1x8xf32, #tpu.memory_space<vmem>>, %arg4: memref<256x8xf32, #tpu.memory_space<vmem>>) attributes {dimension_semantics = [#tpu.dimension_semantics<parallel>], iteration_bounds = array<i64: 2>, scalar_prefetch = 0 : i64, scratch_operands = 0 : i64, tpu.core_type = #tpu.core_type<tc>, window_params = [{transform_indices = @transform_0, window_bounds = array<i64: 256, 9>}, {pipeline_mode = #tpu.pipeline_mode<synchronous>, transform_indices = @transform_1, window_bounds = array<i64: 9, 8>}, {pipeline_mode = #tpu.pipeline_mode<synchronous>, transform_indices = @transform_2, window_bounds = array<i64: 1, 8>}, {transform_indices = @transform_3, window_bounds = array<i64: 256, 8>}]} {
    %c0 = arith.constant 0 : index
    %c0_0 = arith.constant 0 : index
    %0 = vector.load %arg1[%c0, %c0_0] : memref<256x9xbf16, #tpu.memory_space<vmem>>, vector<256x9xbf16>
    %c0_1 = arith.constant 0 : index
    %c0_2 = arith.constant 0 : index
    %1 = vector.load %arg2[%c0_1, %c0_2] : memref<9x8xbf16, #tpu.memory_space<vmem>>, vector<9x8xbf16>
    %cst = arith.constant dense<0.000000e+00> : vector<256x8xf32>
    %2 = tpu.matmul %0, %1, %cst {dimension_numbers = #tpu.dot_dimension_numbers<[1], [0], [0], [1], [0, 0, 1, 1], [], []>} : vector<256x9xbf16>, vector<9x8xbf16>, vector<256x8xf32> -> vector<256x8xf32>
    %c0_3 = arith.constant 0 : index
    %c0_4 = arith.constant 0 : index
    %3 = vector.load %arg3[%c0_3, %c0_4] : memref<1x8xf32, #tpu.memory_space<vmem>>, vector<1x8xf32>
    %4 = vector.broadcast %3 : vector<1x8xf32> to vector<256x8xf32>
    %5 = arith.addf %2, %4 : vector<256x8xf32>
    %cst_5 = arith.constant 0.000000e+00 : f32
    %6 = vector.broadcast %cst_5 : f32 to vector<256x8xf32>
    %7 = arith.cmpf oge, %5, %6 : vector<256x8xf32>
    %cst_6 = arith.constant 2.000000e-01 : f32
    %8 = vector.broadcast %cst_6 : f32 to vector<256x8xf32>
    %9 = arith.mulf %8, %5 : vector<256x8xf32>
    %10 = arith.select %7, %5, %9 : vector<256x8xi1>, vector<256x8xf32>
    %c0_7 = arith.constant 0 : index
    %c0_8 = arith.constant 0 : index
    %11 = vector.load %arg4[%c0_7, %c0_8] : memref<256x8xf32, #tpu.memory_space<vmem>>, vector<256x8xf32>
    tpu.vector_store %arg4[%c0_7, %c0_8], %10 {strides = array<i32>} : memref<256x8xf32, #tpu.memory_space<vmem>>, vector<256x8xf32>,
    return
  }
  func.func @transform_0(%arg0: i32) -> (i32, i32) {
    %c0_i32 = arith.constant 0 : i32
    %c0_i32_0 = arith.constant 0 : i32
    return %arg0, %c0_i32 : i32, i32
  }
  func.func @transform_1(%arg0: i32) -> (i32, i32) {
    %c0_i32 = arith.constant 0 : i32
    %c0_i32_0 = arith.constant 0 : i32
    %c0_i32_1 = arith.constant 0 : i32
    return %c0_i32, %c0_i32_0 : i32, i32
  }
  func.func @transform_2(%arg0: i32) -> (i32, i32) {
    %c0_i32 = arith.constant 0 : i32
    %c0_i32_0 = arith.constant 0 : i32
    %c0_i32_1 = arith.constant 0 : i32
    return %c0_i32, %c0_i32_0 : i32, i32
  }
  func.func @transform_3(%arg0: i32) -> (i32, i32) {
    %c0_i32 = arith.constant 0 : i32
    %c0_i32_0 = arith.constant 0 : i32
    return %arg0, %c0_i32 : i32, i32
  }
}

module attributes {stable_mosaic.version = 11 : i64} {
  func.func @_matmul_bias_act_kernel(%arg0: i32, %arg1: memref<256x72xbf16, #tpu.memory_space<vmem>>, %arg2: memref<72x64xbf16, #tpu.memory_space<vmem>>, %arg3: memref<1x64xf32, #tpu.memory_space<vmem>>, %arg4: memref<256x64xf32, #tpu.memory_space<vmem>>) attributes {dimension_semantics = [#tpu.dimension_semantics<parallel>], iteration_bounds = array<i64: 2>, scalar_prefetch = 0 : i64, scratch_operands = 0 : i64, tpu.core_type = #tpu.core_type<tc>, window_params = [{transform_indices = @transform_0, window_bounds = array<i64: 256, 72>}, {pipeline_mode = #tpu.pipeline_mode<synchronous>, transform_indices = @transform_1, window_bounds = array<i64: 72, 64>}, {pipeline_mode = #tpu.pipeline_mode<synchronous>, transform_indices = @transform_2, window_bounds = array<i64: 1, 64>}, {transform_indices = @transform_3, window_bounds = array<i64: 256, 64>}]} {
    %c0 = arith.constant 0 : index
    %c0_0 = arith.constant 0 : index
    %0 = vector.load %arg1[%c0, %c0_0] : memref<256x72xbf16, #tpu.memory_space<vmem>>, vector<256x72xbf16>
    %c0_1 = arith.constant 0 : index
    %c0_2 = arith.constant 0 : index
    %1 = vector.load %arg2[%c0_1, %c0_2] : memref<72x64xbf16, #tpu.memory_space<vmem>>, vector<72x64xbf16>
    %cst = arith.constant dense<0.000000e+00> : vector<256x64xf32>
    %2 = tpu.matmul %0, %1, %cst {dimension_numbers = #tpu.dot_dimension_numbers<[1], [0], [0], [1], [0, 0, 1, 1], [], []>} : vector<256x72xbf16>, vector<72x64xbf16>, vector<256x64xf32> -> vector<256x64xf32>
    %c0_3 = arith.constant 0 : index
    %c0_4 = arith.constant 0 : index
    %3 = vector.load %arg3[%c0_3, %c0_4] : memref<1x64xf32, #tpu.memory_space<vmem>>, vector<1x64xf32>
    %4 = vector.broadcast %3 : vector<1x64xf32> to vector<256x64xf32>
    %5 = arith.addf %2, %4 : vector<256x64xf32>
    %c0_5 = arith.constant 0 : index
    %c0_6 = arith.constant 0 : index
    %6 = vector.load %arg4[%c0_5, %c0_6] : memref<256x64xf32, #tpu.memory_space<vmem>>, vector<256x64xf32>
    tpu.vector_store %arg4[%c0_5, %c0_6], %5 {strides = array<i32>} : memref<256x64xf32, #tpu.memory_space<vmem>>, vector<256x64xf32>,
    return
  }
  func.func @transform_0(%arg0: i32) -> (i32, i32) {
    %c0_i32 = arith.constant 0 : i32
    %c0_i32_0 = arith.constant 0 : i32
    return %arg0, %c0_i32 : i32, i32
  }
  func.func @transform_1(%arg0: i32) -> (i32, i32) {
    %c0_i32 = arith.constant 0 : i32
    %c0_i32_0 = arith.constant 0 : i32
    %c0_i32_1 = arith.constant 0 : i32
    return %c0_i32, %c0_i32_0 : i32, i32
  }
  func.func @transform_2(%arg0: i32) -> (i32, i32) {
    %c0_i32 = arith.constant 0 : i32
    %c0_i32_0 = arith.constant 0 : i32
    %c0_i32_1 = arith.constant 0 : i32
    return %c0_i32, %c0_i32_0 : i32, i32
  }
  func.func @transform_3(%arg0: i32) -> (i32, i32) {
    %c0_i32 = arith.constant 0 : i32
    %c0_i32_0 = arith.constant 0 : i32
    return %arg0, %c0_i32 : i32, i32
  }
}

module attributes {stable_mosaic.version = 11 : i64} {
  func.func @_convlstm_seq_kernel(%arg0: i32, %arg1: memref<1x128x64xf32, #tpu.memory_space<vmem>>, %arg2: memref<9x16x64xbf16, #tpu.memory_space<vmem>>, %arg3: memref<1x128x16xf32, #tpu.memory_space<vmem>>, %arg4: memref<128x16xf32, #tpu.memory_space<vmem>>, %arg5: memref<2x10x10x16xf32, #tpu.memory_space<vmem>>) attributes {dimension_semantics = [#tpu.dimension_semantics<arbitrary>], iteration_bounds = array<i64: 4>, scalar_prefetch = 0 : i64, scratch_operands = 1 : i64, tpu.core_type = #tpu.core_type<tc>, window_params = [{transform_indices = @transform_0, window_bounds = array<i64: 1, 128, 64>}, {pipeline_mode = #tpu.pipeline_mode<synchronous>, transform_indices = @transform_1, window_bounds = array<i64: 9, 16, 64>}, {transform_indices = @transform_2, window_bounds = array<i64: 1, 128, 16>}, {pipeline_mode = #tpu.pipeline_mode<synchronous>, transform_indices = @transform_3, window_bounds = array<i64: 128, 16>}]} {
    %c0_i32 = arith.constant 0 : i32
    %0 = arith.cmpi eq, %arg0, %c0_i32 : i32
    %1 = arith.extui %0 : i1 to i32
    %c0_i32_0 = arith.constant 0 : i32
    %2 = arith.cmpi ne, %1, %c0_i32_0 : i32
    scf.if %2 {
      %cst_80 = arith.constant 0.000000e+00 : f32
      %100 = vector.broadcast %cst_80 : f32 to vector<2x10x10x16xf32>
      %c0_81 = arith.constant 0 : index
      %c0_82 = arith.constant 0 : index
      %c0_83 = arith.constant 0 : index
      %c0_84 = arith.constant 0 : index
      %101 = vector.load %arg5[%c0_81, %c0_82, %c0_83, %c0_84] : memref<2x10x10x16xf32, #tpu.memory_space<vmem>>, vector<2x10x10x16xf32>
      tpu.vector_store %arg5[%c0_81, %c0_82, %c0_83, %c0_84], %100 {strides = array<i32>} : memref<2x10x10x16xf32, #tpu.memory_space<vmem>>, vector<2x10x10x16xf32>,
      %cst_85 = arith.constant 0.000000e+00 : f32
      %102 = vector.broadcast %cst_85 : f32 to vector<128x16xf32>
      %c0_86 = arith.constant 0 : index
      %c0_87 = arith.constant 0 : index
      %103 = vector.load %arg4[%c0_86, %c0_87] : memref<128x16xf32, #tpu.memory_space<vmem>>, vector<128x16xf32>
      tpu.vector_store %arg4[%c0_86, %c0_87], %102 {strides = array<i32>} : memref<128x16xf32, #tpu.memory_space<vmem>>, vector<128x16xf32>,
    } else {
    }
    %c0 = arith.constant 0 : index
    %c0_1 = arith.constant 0 : index
    %c0_2 = arith.constant 0 : index
    %3 = vector.load %arg1[%c0, %c0_1, %c0_2] : memref<1x128x64xf32, #tpu.memory_space<vmem>>, vector<1x128x64xf32>
    %4 = vector.shape_cast %3 : vector<1x128x64xf32> to vector<128x64xf32>
    %c0_3 = arith.constant 0 : index
    %c0_4 = arith.constant 0 : index
    %c0_5 = arith.constant 0 : index
    %c0_6 = arith.constant 0 : index
    %5 = vector.load %arg5[%c0_3, %c0_4, %c0_5, %c0_6] : memref<2x10x10x16xf32, #tpu.memory_space<vmem>>, vector<2x8x8x16xf32>
    %6 = vector.shape_cast %5 : vector<2x8x8x16xf32> to vector<128x16xf32>
    %7 = arith.truncf %6 : vector<128x16xf32> to vector<128x16xbf16>
    %c0_7 = arith.constant 0 : index
    %c0_8 = arith.constant 0 : index
    %c0_9 = arith.constant 0 : index
    %8 = vector.load %arg2[%c0_7, %c0_8, %c0_9] : memref<9x16x64xbf16, #tpu.memory_space<vmem>>, vector<1x16x64xbf16>
    %9 = vector.shape_cast %8 : vector<1x16x64xbf16> to vector<16x64xbf16>
    %cst = arith.constant dense<0.000000e+00> : vector<128x64xf32>
    %10 = tpu.matmul %7, %9, %cst {dimension_numbers = #tpu.dot_dimension_numbers<[1], [0], [0], [1], [0, 0, 1, 1], [], []>} : vector<128x16xbf16>, vector<16x64xbf16>, vector<128x64xf32> -> vector<128x64xf32>
    %11 = arith.addf %4, %10 : vector<128x64xf32>
    %c0_10 = arith.constant 0 : index
    %c0_11 = arith.constant 0 : index
    %c1 = arith.constant 1 : index
    %c0_12 = arith.constant 0 : index
    %12 = vector.load %arg5[%c0_10, %c0_11, %c1, %c0_12] : memref<2x10x10x16xf32, #tpu.memory_space<vmem>>, vector<2x8x8x16xf32>
    %13 = vector.shape_cast %12 : vector<2x8x8x16xf32> to vector<128x16xf32>
    %14 = arith.truncf %13 : vector<128x16xf32> to vector<128x16xbf16>
    %c1_13 = arith.constant 1 : index
    %c0_14 = arith.constant 0 : index
    %c0_15 = arith.constant 0 : index
    %15 = vector.load %arg2[%c1_13, %c0_14, %c0_15] : memref<9x16x64xbf16, #tpu.memory_space<vmem>>, vector<1x16x64xbf16>
    %16 = vector.shape_cast %15 : vector<1x16x64xbf16> to vector<16x64xbf16>
    %cst_16 = arith.constant dense<0.000000e+00> : vector<128x64xf32>
    %17 = tpu.matmul %14, %16, %cst_16 {dimension_numbers = #tpu.dot_dimension_numbers<[1], [0], [0], [1], [0, 0, 1, 1], [], []>} : vector<128x16xbf16>, vector<16x64xbf16>, vector<128x64xf32> -> vector<128x64xf32>
    %18 = arith.addf %11, %17 : vector<128x64xf32>
    %c0_17 = arith.constant 0 : index
    %c0_18 = arith.constant 0 : index
    %c2 = arith.constant 2 : index
    %c0_19 = arith.constant 0 : index
    %19 = vector.load %arg5[%c0_17, %c0_18, %c2, %c0_19] : memref<2x10x10x16xf32, #tpu.memory_space<vmem>>, vector<2x8x8x16xf32>
    %20 = vector.shape_cast %19 : vector<2x8x8x16xf32> to vector<128x16xf32>
    %21 = arith.truncf %20 : vector<128x16xf32> to vector<128x16xbf16>
    %c2_20 = arith.constant 2 : index
    %c0_21 = arith.constant 0 : index
    %c0_22 = arith.constant 0 : index
    %22 = vector.load %arg2[%c2_20, %c0_21, %c0_22] : memref<9x16x64xbf16, #tpu.memory_space<vmem>>, vector<1x16x64xbf16>
    %23 = vector.shape_cast %22 : vector<1x16x64xbf16> to vector<16x64xbf16>
    %cst_23 = arith.constant dense<0.000000e+00> : vector<128x64xf32>
    %24 = tpu.matmul %21, %23, %cst_23 {dimension_numbers = #tpu.dot_dimension_numbers<[1], [0], [0], [1], [0, 0, 1, 1], [], []>} : vector<128x16xbf16>, vector<16x64xbf16>, vector<128x64xf32> -> vector<128x64xf32>
    %25 = arith.addf %18, %24 : vector<128x64xf32>
    %c0_24 = arith.constant 0 : index
    %c1_25 = arith.constant 1 : index
    %c0_26 = arith.constant 0 : index
    %c0_27 = arith.constant 0 : index
    %26 = vector.load %arg5[%c0_24, %c1_25, %c0_26, %c0_27] : memref<2x10x10x16xf32, #tpu.memory_space<vmem>>, vector<2x8x8x16xf32>
    %27 = vector.shape_cast %26 : vector<2x8x8x16xf32> to vector<128x16xf32>
    %28 = arith.truncf %27 : vector<128x16xf32> to vector<128x16xbf16>
    %c3 = arith.constant 3 : index
    %c0_28 = arith.constant 0 : index
    %c0_29 = arith.constant 0 : index
    %29 = vector.load %arg2[%c3, %c0_28, %c0_29] : memref<9x16x64xbf16, #tpu.memory_space<vmem>>, vector<1x16x64xbf16>
    %30 = vector.shape_cast %29 : vector<1x16x64xbf16> to vector<16x64xbf16>
    %cst_30 = arith.constant dense<0.000000e+00> : vector<128x64xf32>
    %31 = tpu.matmul %28, %30, %cst_30 {dimension_numbers = #tpu.dot_dimension_numbers<[1], [0], [0], [1], [0, 0, 1, 1], [], []>} : vector<128x16xbf16>, vector<16x64xbf16>, vector<128x64xf32> -> vector<128x64xf32>
    %32 = arith.addf %25, %31 : vector<128x64xf32>
    %c0_31 = arith.constant 0 : index
    %c1_32 = arith.constant 1 : index
    %c1_33 = arith.constant 1 : index
    %c0_34 = arith.constant 0 : index
    %33 = vector.load %arg5[%c0_31, %c1_32, %c1_33, %c0_34] : memref<2x10x10x16xf32, #tpu.memory_space<vmem>>, vector<2x8x8x16xf32>
    %34 = vector.shape_cast %33 : vector<2x8x8x16xf32> to vector<128x16xf32>
    %35 = arith.truncf %34 : vector<128x16xf32> to vector<128x16xbf16>
    %c4 = arith.constant 4 : index
    %c0_35 = arith.constant 0 : index
    %c0_36 = arith.constant 0 : index
    %36 = vector.load %arg2[%c4, %c0_35, %c0_36] : memref<9x16x64xbf16, #tpu.memory_space<vmem>>, vector<1x16x64xbf16>
    %37 = vector.shape_cast %36 : vector<1x16x64xbf16> to vector<16x64xbf16>
    %cst_37 = arith.constant dense<0.000000e+00> : vector<128x64xf32>
    %38 = tpu.matmul %35, %37, %cst_37 {dimension_numbers = #tpu.dot_dimension_numbers<[1], [0], [0], [1], [0, 0, 1, 1], [], []>} : vector<128x16xbf16>, vector<16x64xbf16>, vector<128x64xf32> -> vector<128x64xf32>
    %39 = arith.addf %32, %38 : vector<128x64xf32>
    %c0_38 = arith.constant 0 : index
    %c1_39 = arith.constant 1 : index
    %c2_40 = arith.constant 2 : index
    %c0_41 = arith.constant 0 : index
    %40 = vector.load %arg5[%c0_38, %c1_39, %c2_40, %c0_41] : memref<2x10x10x16xf32, #tpu.memory_space<vmem>>, vector<2x8x8x16xf32>
    %41 = vector.shape_cast %40 : vector<2x8x8x16xf32> to vector<128x16xf32>
    %42 = arith.truncf %41 : vector<128x16xf32> to vector<128x16xbf16>
    %c5 = arith.constant 5 : index
    %c0_42 = arith.constant 0 : index
    %c0_43 = arith.constant 0 : index
    %43 = vector.load %arg2[%c5, %c0_42, %c0_43] : memref<9x16x64xbf16, #tpu.memory_space<vmem>>, vector<1x16x64xbf16>
    %44 = vector.shape_cast %43 : vector<1x16x64xbf16> to vector<16x64xbf16>
    %cst_44 = arith.constant dense<0.000000e+00> : vector<128x64xf32>
    %45 = tpu.matmul %42, %44, %cst_44 {dimension_numbers = #tpu.dot_dimension_numbers<[1], [0], [0], [1], [0, 0, 1, 1], [], []>} : vector<128x16xbf16>, vector<16x64xbf16>, vector<128x64xf32> -> vector<128x64xf32>
    %46 = arith.addf %39, %45 : vector<128x64xf32>
    %c0_45 = arith.constant 0 : index
    %c2_46 = arith.constant 2 : index
    %c0_47 = arith.constant 0 : index
    %c0_48 = arith.constant 0 : index
    %47 = vector.load %arg5[%c0_45, %c2_46, %c0_47, %c0_48] : memref<2x10x10x16xf32, #tpu.memory_space<vmem>>, vector<2x8x8x16xf32>
    %48 = vector.shape_cast %47 : vector<2x8x8x16xf32> to vector<128x16xf32>
    %49 = arith.truncf %48 : vector<128x16xf32> to vector<128x16xbf16>
    %c6 = arith.constant 6 : index
    %c0_49 = arith.constant 0 : index
    %c0_50 = arith.constant 0 : index
    %50 = vector.load %arg2[%c6, %c0_49, %c0_50] : memref<9x16x64xbf16, #tpu.memory_space<vmem>>, vector<1x16x64xbf16>
    %51 = vector.shape_cast %50 : vector<1x16x64xbf16> to vector<16x64xbf16>
    %cst_51 = arith.constant dense<0.000000e+00> : vector<128x64xf32>
    %52 = tpu.matmul %49, %51, %cst_51 {dimension_numbers = #tpu.dot_dimension_numbers<[1], [0], [0], [1], [0, 0, 1, 1], [], []>} : vector<128x16xbf16>, vector<16x64xbf16>, vector<128x64xf32> -> vector<128x64xf32>
    %53 = arith.addf %46, %52 : vector<128x64xf32>
    %c0_52 = arith.constant 0 : index
    %c2_53 = arith.constant 2 : index
    %c1_54 = arith.constant 1 : index
    %c0_55 = arith.constant 0 : index
    %54 = vector.load %arg5[%c0_52, %c2_53, %c1_54, %c0_55] : memref<2x10x10x16xf32, #tpu.memory_space<vmem>>, vector<2x8x8x16xf32>
    %55 = vector.shape_cast %54 : vector<2x8x8x16xf32> to vector<128x16xf32>
    %56 = arith.truncf %55 : vector<128x16xf32> to vector<128x16xbf16>
    %c7 = arith.constant 7 : index
    %c0_56 = arith.constant 0 : index
    %c0_57 = arith.constant 0 : index
    %57 = vector.load %arg2[%c7, %c0_56, %c0_57] : memref<9x16x64xbf16, #tpu.memory_space<vmem>>, vector<1x16x64xbf16>
    %58 = vector.shape_cast %57 : vector<1x16x64xbf16> to vector<16x64xbf16>
    %cst_58 = arith.constant dense<0.000000e+00> : vector<128x64xf32>
    %59 = tpu.matmul %56, %58, %cst_58 {dimension_numbers = #tpu.dot_dimension_numbers<[1], [0], [0], [1], [0, 0, 1, 1], [], []>} : vector<128x16xbf16>, vector<16x64xbf16>, vector<128x64xf32> -> vector<128x64xf32>
    %60 = arith.addf %53, %59 : vector<128x64xf32>
    %c0_59 = arith.constant 0 : index
    %c2_60 = arith.constant 2 : index
    %c2_61 = arith.constant 2 : index
    %c0_62 = arith.constant 0 : index
    %61 = vector.load %arg5[%c0_59, %c2_60, %c2_61, %c0_62] : memref<2x10x10x16xf32, #tpu.memory_space<vmem>>, vector<2x8x8x16xf32>
    %62 = vector.shape_cast %61 : vector<2x8x8x16xf32> to vector<128x16xf32>
    %63 = arith.truncf %62 : vector<128x16xf32> to vector<128x16xbf16>
    %c8 = arith.constant 8 : index
    %c0_63 = arith.constant 0 : index
    %c0_64 = arith.constant 0 : index
    %64 = vector.load %arg2[%c8, %c0_63, %c0_64] : memref<9x16x64xbf16, #tpu.memory_space<vmem>>, vector<1x16x64xbf16>
    %65 = vector.shape_cast %64 : vector<1x16x64xbf16> to vector<16x64xbf16>
    %cst_65 = arith.constant dense<0.000000e+00> : vector<128x64xf32>
    %66 = tpu.matmul %63, %65, %cst_65 {dimension_numbers = #tpu.dot_dimension_numbers<[1], [0], [0], [1], [0, 0, 1, 1], [], []>} : vector<128x16xbf16>, vector<16x64xbf16>, vector<128x64xf32> -> vector<128x64xf32>
    %67 = arith.addf %60, %66 : vector<128x64xf32>
    %68 = vector.extract_strided_slice %67 {offsets = [0, 0], sizes = [128, 16], strides = [1, 1]} : vector<128x64xf32> to vector<128x16xf32>
    %69 = arith.negf %68 : vector<128x16xf32>
    %70 = math.exp %69 : vector<128x16xf32>
    %cst_66 = arith.constant 1.000000e+00 : f32
    %71 = vector.broadcast %cst_66 : f32 to vector<128x16xf32>
    %72 = arith.addf %71, %70 : vector<128x16xf32>
    %73 = arith.divf %71, %72 : vector<128x16xf32>
    %74 = vector.extract_strided_slice %67 {offsets = [0, 16], sizes = [128, 16], strides = [1, 1]} : vector<128x64xf32> to vector<128x16xf32>
    %75 = arith.negf %74 : vector<128x16xf32>
    %76 = math.exp %75 : vector<128x16xf32>
    %cst_67 = arith.constant 1.000000e+00 : f32
    %77 = vector.broadcast %cst_67 : f32 to vector<128x16xf32>
    %78 = arith.addf %77, %76 : vector<128x16xf32>
    %79 = arith.divf %77, %78 : vector<128x16xf32>
    %80 = vector.extract_strided_slice %67 {offsets = [0, 32], sizes = [128, 16], strides = [1, 1]} : vector<128x64xf32> to vector<128x16xf32>
    %81 = math.tanh %80 : vector<128x16xf32>
    %82 = vector.extract_strided_slice %67 {offsets = [0, 48], sizes = [128, 16], strides = [1, 1]} : vector<128x64xf32> to vector<128x16xf32>
    %83 = arith.negf %82 : vector<128x16xf32>
    %84 = math.exp %83 : vector<128x16xf32>
    %cst_68 = arith.constant 1.000000e+00 : f32
    %85 = vector.broadcast %cst_68 : f32 to vector<128x16xf32>
    %86 = arith.addf %85, %84 : vector<128x16xf32>
    %87 = arith.divf %85, %86 : vector<128x16xf32>
    %c0_69 = arith.constant 0 : index
    %c0_70 = arith.constant 0 : index
    %88 = vector.load %arg4[%c0_69, %c0_70] : memref<128x16xf32, #tpu.memory_space<vmem>>, vector<128x16xf32>
    %89 = arith.mulf %79, %88 : vector<128x16xf32>
    %90 = arith.mulf %73, %81 : vector<128x16xf32>
    %91 = arith.addf %89, %90 : vector<128x16xf32>
    %92 = math.tanh %91 : vector<128x16xf32>
    %93 = arith.mulf %87, %92 : vector<128x16xf32>
    %c0_71 = arith.constant 0 : index
    %c0_72 = arith.constant 0 : index
    %94 = vector.load %arg4[%c0_71, %c0_72] : memref<128x16xf32, #tpu.memory_space<vmem>>, vector<128x16xf32>
    tpu.vector_store %arg4[%c0_71, %c0_72], %91 {strides = array<i32>} : memref<128x16xf32, #tpu.memory_space<vmem>>, vector<128x16xf32>,
    %c0_73 = arith.constant 0 : index
    %c0_74 = arith.constant 0 : index
    %c0_75 = arith.constant 0 : index
    %95 = vector.load %arg3[%c0_73, %c0_74, %c0_75] : memref<1x128x16xf32, #tpu.memory_space<vmem>>, vector<1x128x16xf32>
    %96 = vector.shape_cast %95 : vector<1x128x16xf32> to vector<128x16xf32>
    %97 = vector.shape_cast %93 : vector<128x16xf32> to vector<1x128x16xf32>
    tpu.vector_store %arg3[%c0_73, %c0_74, %c0_75], %97 {strides = array<i32>} : memref<1x128x16xf32, #tpu.memory_space<vmem>>, vector<1x128x16xf32>,
    %98 = vector.shape_cast %93 : vector<128x16xf32> to vector<2x8x8x16xf32>
    %c0_76 = arith.constant 0 : index
    %c1_77 = arith.constant 1 : index
    %c1_78 = arith.constant 1 : index
    %c0_79 = arith.constant 0 : index
    %99 = vector.load %arg5[%c0_76, %c1_77, %c1_78, %c0_79] : memref<2x10x10x16xf32, #tpu.memory_space<vmem>>, vector<2x8x8x16xf32>
    tpu.vector_store %arg5[%c0_76, %c1_77, %c1_78, %c0_79], %98 {strides = array<i32>} : memref<2x10x10x16xf32, #tpu.memory_space<vmem>>, vector<2x8x8x16xf32>,
    return
  }
  func.func @transform_0(%arg0: i32) -> (i32, i32, i32) {
    %c0_i32 = arith.constant 0 : i32
    %c0_i32_0 = arith.constant 0 : i32
    %c0_i32_1 = arith.constant 0 : i32
    return %arg0, %c0_i32, %c0_i32_0 : i32, i32, i32
  }
  func.func @transform_1(%arg0: i32) -> (i32, i32, i32) {
    %c0_i32 = arith.constant 0 : i32
    %c0_i32_0 = arith.constant 0 : i32
    %c0_i32_1 = arith.constant 0 : i32
    %c0_i32_2 = arith.constant 0 : i32
    return %c0_i32, %c0_i32_0, %c0_i32_1 : i32, i32, i32
  }
  func.func @transform_2(%arg0: i32) -> (i32, i32, i32) {
    %c0_i32 = arith.constant 0 : i32
    %c0_i32_0 = arith.constant 0 : i32
    %c0_i32_1 = arith.constant 0 : i32
    return %arg0, %c0_i32, %c0_i32_0 : i32, i32, i32
  }
  func.func @transform_3(%arg0: i32) -> (i32, i32) {
    %c0_i32 = arith.constant 0 : i32
    %c0_i32_0 = arith.constant 0 : i32
    %c0_i32_1 = arith.constant 0 : i32
    return %c0_i32, %c0_i32_0 : i32, i32
  }
}

module attributes {stable_mosaic.version = 11 : i64} {
  func.func @_matmul_bias_act_kernel(%arg0: i32, %arg1: memref<128x144xbf16, #tpu.memory_space<vmem>>, %arg2: memref<144x32xbf16, #tpu.memory_space<vmem>>, %arg3: memref<1x32xf32, #tpu.memory_space<vmem>>, %arg4: memref<128x32xf32, #tpu.memory_space<vmem>>) attributes {dimension_semantics = [#tpu.dimension_semantics<parallel>], iteration_bounds = array<i64: 1>, scalar_prefetch = 0 : i64, scratch_operands = 0 : i64, tpu.core_type = #tpu.core_type<tc>, window_params = [{transform_indices = @transform_0, window_bounds = array<i64: 128, 144>}, {pipeline_mode = #tpu.pipeline_mode<synchronous>, transform_indices = @transform_1, window_bounds = array<i64: 144, 32>}, {pipeline_mode = #tpu.pipeline_mode<synchronous>, transform_indices = @transform_2, window_bounds = array<i64: 1, 32>}, {transform_indices = @transform_3, window_bounds = array<i64: 128, 32>}]} {
    %c0 = arith.constant 0 : index
    %c0_0 = arith.constant 0 : index
    %0 = vector.load %arg1[%c0, %c0_0] : memref<128x144xbf16, #tpu.memory_space<vmem>>, vector<128x144xbf16>
    %c0_1 = arith.constant 0 : index
    %c0_2 = arith.constant 0 : index
    %1 = vector.load %arg2[%c0_1, %c0_2] : memref<144x32xbf16, #tpu.memory_space<vmem>>, vector<144x32xbf16>
    %cst = arith.constant dense<0.000000e+00> : vector<128x32xf32>
    %2 = tpu.matmul %0, %1, %cst {dimension_numbers = #tpu.dot_dimension_numbers<[1], [0], [0], [1], [0, 0, 1, 1], [], []>} : vector<128x144xbf16>, vector<144x32xbf16>, vector<128x32xf32> -> vector<128x32xf32>
    %c0_3 = arith.constant 0 : index
    %c0_4 = arith.constant 0 : index
    %3 = vector.load %arg3[%c0_3, %c0_4] : memref<1x32xf32, #tpu.memory_space<vmem>>, vector<1x32xf32>
    %4 = vector.broadcast %3 : vector<1x32xf32> to vector<128x32xf32>
    %5 = arith.addf %2, %4 : vector<128x32xf32>
    %cst_5 = arith.constant 0.000000e+00 : f32
    %6 = vector.broadcast %cst_5 : f32 to vector<128x32xf32>
    %7 = arith.cmpf oge, %5, %6 : vector<128x32xf32>
    %cst_6 = arith.constant 2.000000e-01 : f32
    %8 = vector.broadcast %cst_6 : f32 to vector<128x32xf32>
    %9 = arith.mulf %8, %5 : vector<128x32xf32>
    %10 = arith.select %7, %5, %9 : vector<128x32xi1>, vector<128x32xf32>
    %c0_7 = arith.constant 0 : index
    %c0_8 = arith.constant 0 : index
    %11 = vector.load %arg4[%c0_7, %c0_8] : memref<128x32xf32, #tpu.memory_space<vmem>>, vector<128x32xf32>
    tpu.vector_store %arg4[%c0_7, %c0_8], %10 {strides = array<i32>} : memref<128x32xf32, #tpu.memory_space<vmem>>, vector<128x32xf32>,
    return
  }
  func.func @transform_0(%arg0: i32) -> (i32, i32) {
    %c0_i32 = arith.constant 0 : i32
    %c0_i32_0 = arith.constant 0 : i32
    return %arg0, %c0_i32 : i32, i32
  }
  func.func @transform_1(%arg0: i32) -> (i32, i32) {
    %c0_i32 = arith.constant 0 : i32
    %c0_i32_0 = arith.constant 0 : i32
    %c0_i32_1 = arith.constant 0 : i32
    return %c0_i32, %c0_i32_0 : i32, i32
  }
  func.func @transform_2(%arg0: i32) -> (i32, i32) {
    %c0_i32 = arith.constant 0 : i32
    %c0_i32_0 = arith.constant 0 : i32
    %c0_i32_1 = arith.constant 0 : i32
    return %c0_i32, %c0_i32_0 : i32, i32
  }
  func.func @transform_3(%arg0: i32) -> (i32, i32) {
    %c0_i32 = arith.constant 0 : i32
    %c0_i32_0 = arith.constant 0 : i32
    return %arg0, %c0_i32 : i32, i32
  }
}

module attributes {stable_mosaic.version = 11 : i64} {
  func.func @_matmul_bias_act_kernel(%arg0: i32, %arg1: memref<128x288xbf16, #tpu.memory_space<vmem>>, %arg2: memref<288x128xbf16, #tpu.memory_space<vmem>>, %arg3: memref<1x128xf32, #tpu.memory_space<vmem>>, %arg4: memref<128x128xf32, #tpu.memory_space<vmem>>) attributes {dimension_semantics = [#tpu.dimension_semantics<parallel>], iteration_bounds = array<i64: 1>, scalar_prefetch = 0 : i64, scratch_operands = 0 : i64, tpu.core_type = #tpu.core_type<tc>, window_params = [{transform_indices = @transform_0, window_bounds = array<i64: 128, 288>}, {pipeline_mode = #tpu.pipeline_mode<synchronous>, transform_indices = @transform_1, window_bounds = array<i64: 288, 128>}, {pipeline_mode = #tpu.pipeline_mode<synchronous>, transform_indices = @transform_2, window_bounds = array<i64: 1, 128>}, {transform_indices = @transform_3, window_bounds = array<i64: 128, 128>}]} {
    %c0 = arith.constant 0 : index
    %c0_0 = arith.constant 0 : index
    %0 = vector.load %arg1[%c0, %c0_0] : memref<128x288xbf16, #tpu.memory_space<vmem>>, vector<128x288xbf16>
    %c0_1 = arith.constant 0 : index
    %c0_2 = arith.constant 0 : index
    %1 = vector.load %arg2[%c0_1, %c0_2] : memref<288x128xbf16, #tpu.memory_space<vmem>>, vector<288x128xbf16>
    %cst = arith.constant dense<0.000000e+00> : vector<128x128xf32>
    %2 = tpu.matmul %0, %1, %cst {dimension_numbers = #tpu.dot_dimension_numbers<[1], [0], [0], [1], [0, 0, 1, 1], [], []>} : vector<128x288xbf16>, vector<288x128xbf16>, vector<128x128xf32> -> vector<128x128xf32>
    %c0_3 = arith.constant 0 : index
    %c0_4 = arith.constant 0 : index
    %3 = vector.load %arg3[%c0_3, %c0_4] : memref<1x128xf32, #tpu.memory_space<vmem>>, vector<1x128xf32>
    %4 = vector.broadcast %3 : vector<1x128xf32> to vector<128x128xf32>
    %5 = arith.addf %2, %4 : vector<128x128xf32>
    %c0_5 = arith.constant 0 : index
    %c0_6 = arith.constant 0 : index
    %6 = vector.load %arg4[%c0_5, %c0_6] : memref<128x128xf32, #tpu.memory_space<vmem>>, vector<128x128xf32>
    tpu.vector_store %arg4[%c0_5, %c0_6], %5 {strides = array<i32>} : memref<128x128xf32, #tpu.memory_space<vmem>>, vector<128x128xf32>,
    return
  }
  func.func @transform_0(%arg0: i32) -> (i32, i32) {
    %c0_i32 = arith.constant 0 : i32
    %c0_i32_0 = arith.constant 0 : i32
    return %arg0, %c0_i32 : i32, i32
  }
  func.func @transform_1(%arg0: i32) -> (i32, i32) {
    %c0_i32 = arith.constant 0 : i32
    %c0_i32_0 = arith.constant 0 : i32
    %c0_i32_1 = arith.constant 0 : i32
    return %c0_i32, %c0_i32_0 : i32, i32
  }
  func.func @transform_2(%arg0: i32) -> (i32, i32) {
    %c0_i32 = arith.constant 0 : i32
    %c0_i32_0 = arith.constant 0 : i32
    %c0_i32_1 = arith.constant 0 : i32
    return %c0_i32, %c0_i32_0 : i32, i32
  }
  func.func @transform_3(%arg0: i32) -> (i32, i32) {
    %c0_i32 = arith.constant 0 : i32
    %c0_i32_0 = arith.constant 0 : i32
    return %arg0, %c0_i32 : i32, i32
  }
}

module attributes {stable_mosaic.version = 11 : i64} {
  func.func @_convlstm_seq_kernel(%arg0: i32, %arg1: memref<1x64x128xf32, #tpu.memory_space<vmem>>, %arg2: memref<9x32x128xbf16, #tpu.memory_space<vmem>>, %arg3: memref<1x64x32xf32, #tpu.memory_space<vmem>>, %arg4: memref<64x32xf32, #tpu.memory_space<vmem>>, %arg5: memref<2x6x10x32xf32, #tpu.memory_space<vmem>>) attributes {dimension_semantics = [#tpu.dimension_semantics<arbitrary>], iteration_bounds = array<i64: 4>, scalar_prefetch = 0 : i64, scratch_operands = 1 : i64, tpu.core_type = #tpu.core_type<tc>, window_params = [{transform_indices = @transform_0, window_bounds = array<i64: 1, 64, 128>}, {pipeline_mode = #tpu.pipeline_mode<synchronous>, transform_indices = @transform_1, window_bounds = array<i64: 9, 32, 128>}, {transform_indices = @transform_2, window_bounds = array<i64: 1, 64, 32>}, {pipeline_mode = #tpu.pipeline_mode<synchronous>, transform_indices = @transform_3, window_bounds = array<i64: 64, 32>}]} {
    %c0_i32 = arith.constant 0 : i32
    %0 = arith.cmpi eq, %arg0, %c0_i32 : i32
    %1 = arith.extui %0 : i1 to i32
    %c0_i32_0 = arith.constant 0 : i32
    %2 = arith.cmpi ne, %1, %c0_i32_0 : i32
    scf.if %2 {
      %cst_80 = arith.constant 0.000000e+00 : f32
      %101 = vector.broadcast %cst_80 : f32 to vector<2x6x10x32xf32>
      %c0_81 = arith.constant 0 : index
      %c0_82 = arith.constant 0 : index
      %c0_83 = arith.constant 0 : index
      %c0_84 = arith.constant 0 : index
      %102 = vector.load %arg5[%c0_81, %c0_82, %c0_83, %c0_84] : memref<2x6x10x32xf32, #tpu.memory_space<vmem>>, vector<2x6x10x32xf32>
      tpu.vector_store %arg5[%c0_81, %c0_82, %c0_83, %c0_84], %101 {strides = array<i32>} : memref<2x6x10x32xf32, #tpu.memory_space<vmem>>, vector<2x6x10x32xf32>,
      %cst_85 = arith.constant 0.000000e+00 : f32
      %103 = vector.broadcast %cst_85 : f32 to vector<64x32xf32>
      %c0_86 = arith.constant 0 : index
      %c0_87 = arith.constant 0 : index
      %104 = vector.load %arg4[%c0_86, %c0_87] : memref<64x32xf32, #tpu.memory_space<vmem>>, vector<64x32xf32>
      tpu.vector_store %arg4[%c0_86, %c0_87], %103 {strides = array<i32>} : memref<64x32xf32, #tpu.memory_space<vmem>>, vector<64x32xf32>,
    } else {
    }
    %c0 = arith.constant 0 : index
    %c0_1 = arith.constant 0 : index
    %c0_2 = arith.constant 0 : index
    %3 = vector.load %arg1[%c0, %c0_1, %c0_2] : memref<1x64x128xf32, #tpu.memory_space<vmem>>, vector<1x64x128xf32>
    %4 = vector.shape_cast %3 : vector<1x64x128xf32> to vector<64x128xf32>
    %c0_3 = arith.constant 0 : index
    %c0_4 = arith.constant 0 : index
    %c0_5 = arith.constant 0 : index
    %c0_6 = arith.constant 0 : index
    %5 = vector.load %arg5[%c0_3, %c0_4, %c0_5, %c0_6] : memref<2x6x10x32xf32, #tpu.memory_space<vmem>>, vector<2x4x8x32xf32>
    %6 = vector.shape_cast %5 : vector<2x4x8x32xf32> to vector<64x32xf32>
    %7 = arith.truncf %6 : vector<64x32xf32> to vector<64x32xbf16>
    %c0_7 = arith.constant 0 : index
    %c0_8 = arith.constant 0 : index
    %c0_9 = arith.constant 0 : index
    %8 = vector.load %arg2[%c0_7, %c0_8, %c0_9] : memref<9x32x128xbf16, #tpu.memory_space<vmem>>, vector<1x32x128xbf16>
    %9 = vector.shape_cast %8 : vector<1x32x128xbf16> to vector<32x128xbf16>
    %cst = arith.constant dense<0.000000e+00> : vector<64x128xf32>
    %10 = tpu.matmul %7, %9, %cst {dimension_numbers = #tpu.dot_dimension_numbers<[1], [0], [0], [1], [0, 0, 1, 1], [], []>} : vector<64x32xbf16>, vector<32x128xbf16>, vector<64x128xf32> -> vector<64x128xf32>
    %11 = arith.addf %4, %10 : vector<64x128xf32>
    %c0_10 = arith.constant 0 : index
    %c0_11 = arith.constant 0 : index
    %c1 = arith.constant 1 : index
    %c0_12 = arith.constant 0 : index
    %12 = vector.load %arg5[%c0_10, %c0_11, %c1, %c0_12] : memref<2x6x10x32xf32, #tpu.memory_space<vmem>>, vector<2x4x8x32xf32>
    %13 = vector.shape_cast %12 : vector<2x4x8x32xf32> to vector<64x32xf32>
    %14 = arith.truncf %13 : vector<64x32xf32> to vector<64x32xbf16>
    %c1_13 = arith.constant 1 : index
    %c0_14 = arith.constant 0 : index
    %c0_15 = arith.constant 0 : index
    %15 = vector.load %arg2[%c1_13, %c0_14, %c0_15] : memref<9x32x128xbf16, #tpu.memory_space<vmem>>, vector<1x32x128xbf16>
    %16 = vector.shape_cast %15 : vector<1x32x128xbf16> to vector<32x128xbf16>
    %cst_16 = arith.constant dense<0.000000e+00> : vector<64x128xf32>
    %17 = tpu.matmul %14, %16, %cst_16 {dimension_numbers = #tpu.dot_dimension_numbers<[1], [0], [0], [1], [0, 0, 1, 1], [], []>} : vector<64x32xbf16>, vector<32x128xbf16>, vector<64x128xf32> -> vector<64x128xf32>
    %18 = arith.addf %11, %17 : vector<64x128xf32>
    %c0_17 = arith.constant 0 : index
    %c0_18 = arith.constant 0 : index
    %c2 = arith.constant 2 : index
    %c0_19 = arith.constant 0 : index
    %19 = vector.load %arg5[%c0_17, %c0_18, %c2, %c0_19] : memref<2x6x10x32xf32, #tpu.memory_space<vmem>>, vector<2x4x8x32xf32>
    %20 = vector.shape_cast %19 : vector<2x4x8x32xf32> to vector<64x32xf32>
    %21 = arith.truncf %20 : vector<64x32xf32> to vector<64x32xbf16>
    %c2_20 = arith.constant 2 : index
    %c0_21 = arith.constant 0 : index
    %c0_22 = arith.constant 0 : index
    %22 = vector.load %arg2[%c2_20, %c0_21, %c0_22] : memref<9x32x128xbf16, #tpu.memory_space<vmem>>, vector<1x32x128xbf16>
    %23 = vector.shape_cast %22 : vector<1x32x128xbf16> to vector<32x128xbf16>
    %cst_23 = arith.constant dense<0.000000e+00> : vector<64x128xf32>
    %24 = tpu.matmul %21, %23, %cst_23 {dimension_numbers = #tpu.dot_dimension_numbers<[1], [0], [0], [1], [0, 0, 1, 1], [], []>} : vector<64x32xbf16>, vector<32x128xbf16>, vector<64x128xf32> -> vector<64x128xf32>
    %25 = arith.addf %18, %24 : vector<64x128xf32>
    %c0_24 = arith.constant 0 : index
    %c1_25 = arith.constant 1 : index
    %c0_26 = arith.constant 0 : index
    %c0_27 = arith.constant 0 : index
    %26 = vector.load %arg5[%c0_24, %c1_25, %c0_26, %c0_27] : memref<2x6x10x32xf32, #tpu.memory_space<vmem>>, vector<2x4x8x32xf32>
    %27 = vector.shape_cast %26 : vector<2x4x8x32xf32> to vector<64x32xf32>
    %28 = arith.truncf %27 : vector<64x32xf32> to vector<64x32xbf16>
    %c3 = arith.constant 3 : index
    %c0_28 = arith.constant 0 : index
    %c0_29 = arith.constant 0 : index
    %29 = vector.load %arg2[%c3, %c0_28, %c0_29] : memref<9x32x128xbf16, #tpu.memory_space<vmem>>, vector<1x32x128xbf16>
    %30 = vector.shape_cast %29 : vector<1x32x128xbf16> to vector<32x128xbf16>
    %cst_30 = arith.constant dense<0.000000e+00> : vector<64x128xf32>
    %31 = tpu.matmul %28, %30, %cst_30 {dimension_numbers = #tpu.dot_dimension_numbers<[1], [0], [0], [1], [0, 0, 1, 1], [], []>} : vector<64x32xbf16>, vector<32x128xbf16>, vector<64x128xf32> -> vector<64x128xf32>
    %32 = arith.addf %25, %31 : vector<64x128xf32>
    %c0_31 = arith.constant 0 : index
    %c1_32 = arith.constant 1 : index
    %c1_33 = arith.constant 1 : index
    %c0_34 = arith.constant 0 : index
    %33 = vector.load %arg5[%c0_31, %c1_32, %c1_33, %c0_34] : memref<2x6x10x32xf32, #tpu.memory_space<vmem>>, vector<2x4x8x32xf32>
    %34 = vector.shape_cast %33 : vector<2x4x8x32xf32> to vector<64x32xf32>
    %35 = arith.truncf %34 : vector<64x32xf32> to vector<64x32xbf16>
    %c4 = arith.constant 4 : index
    %c0_35 = arith.constant 0 : index
    %c0_36 = arith.constant 0 : index
    %36 = vector.load %arg2[%c4, %c0_35, %c0_36] : memref<9x32x128xbf16, #tpu.memory_space<vmem>>, vector<1x32x128xbf16>
    %37 = vector.shape_cast %36 : vector<1x32x128xbf16> to vector<32x128xbf16>
    %cst_37 = arith.constant dense<0.000000e+00> : vector<64x128xf32>
    %38 = tpu.matmul %35, %37, %cst_37 {dimension_numbers = #tpu.dot_dimension_numbers<[1], [0], [0], [1], [0, 0, 1, 1], [], []>} : vector<64x32xbf16>, vector<32x128xbf16>, vector<64x128xf32> -> vector<64x128xf32>
    %39 = arith.addf %32, %38 : vector<64x128xf32>
    %c0_38 = arith.constant 0 : index
    %c1_39 = arith.constant 1 : index
    %c2_40 = arith.constant 2 : index
    %c0_41 = arith.constant 0 : index
    %40 = vector.load %arg5[%c0_38, %c1_39, %c2_40, %c0_41] : memref<2x6x10x32xf32, #tpu.memory_space<vmem>>, vector<2x4x8x32xf32>
    %41 = vector.shape_cast %40 : vector<2x4x8x32xf32> to vector<64x32xf32>
    %42 = arith.truncf %41 : vector<64x32xf32> to vector<64x32xbf16>
    %c5 = arith.constant 5 : index
    %c0_42 = arith.constant 0 : index
    %c0_43 = arith.constant 0 : index
    %43 = vector.load %arg2[%c5, %c0_42, %c0_43] : memref<9x32x128xbf16, #tpu.memory_space<vmem>>, vector<1x32x128xbf16>
    %44 = vector.shape_cast %43 : vector<1x32x128xbf16> to vector<32x128xbf16>
    %cst_44 = arith.constant dense<0.000000e+00> : vector<64x128xf32>
    %45 = tpu.matmul %42, %44, %cst_44 {dimension_numbers = #tpu.dot_dimension_numbers<[1], [0], [0], [1], [0, 0, 1, 1], [], []>} : vector<64x32xbf16>, vector<32x128xbf16>, vector<64x128xf32> -> vector<64x128xf32>
    %46 = arith.addf %39, %45 : vector<64x128xf32>
    %c0_45 = arith.constant 0 : index
    %c2_46 = arith.constant 2 : index
    %c0_47 = arith.constant 0 : index
    %c0_48 = arith.constant 0 : index
    %47 = vector.load %arg5[%c0_45, %c2_46, %c0_47, %c0_48] : memref<2x6x10x32xf32, #tpu.memory_space<vmem>>, vector<2x4x8x32xf32>
    %48 = vector.shape_cast %47 : vector<2x4x8x32xf32> to vector<64x32xf32>
    %49 = arith.truncf %48 : vector<64x32xf32> to vector<64x32xbf16>
    %c6 = arith.constant 6 : index
    %c0_49 = arith.constant 0 : index
    %c0_50 = arith.constant 0 : index
    %50 = vector.load %arg2[%c6, %c0_49, %c0_50] : memref<9x32x128xbf16, #tpu.memory_space<vmem>>, vector<1x32x128xbf16>
    %51 = vector.shape_cast %50 : vector<1x32x128xbf16> to vector<32x128xbf16>
    %cst_51 = arith.constant dense<0.000000e+00> : vector<64x128xf32>
    %52 = tpu.matmul %49, %51, %cst_51 {dimension_numbers = #tpu.dot_dimension_numbers<[1], [0], [0], [1], [0, 0, 1, 1], [], []>} : vector<64x32xbf16>, vector<32x128xbf16>, vector<64x128xf32> -> vector<64x128xf32>
    %53 = arith.addf %46, %52 : vector<64x128xf32>
    %c0_52 = arith.constant 0 : index
    %c2_53 = arith.constant 2 : index
    %c1_54 = arith.constant 1 : index
    %c0_55 = arith.constant 0 : index
    %54 = vector.load %arg5[%c0_52, %c2_53, %c1_54, %c0_55] : memref<2x6x10x32xf32, #tpu.memory_space<vmem>>, vector<2x4x8x32xf32>
    %55 = vector.shape_cast %54 : vector<2x4x8x32xf32> to vector<64x32xf32>
    %56 = arith.truncf %55 : vector<64x32xf32> to vector<64x32xbf16>
    %c7 = arith.constant 7 : index
    %c0_56 = arith.constant 0 : index
    %c0_57 = arith.constant 0 : index
    %57 = vector.load %arg2[%c7, %c0_56, %c0_57] : memref<9x32x128xbf16, #tpu.memory_space<vmem>>, vector<1x32x128xbf16>
    %58 = vector.shape_cast %57 : vector<1x32x128xbf16> to vector<32x128xbf16>
    %cst_58 = arith.constant dense<0.000000e+00> : vector<64x128xf32>
    %59 = tpu.matmul %56, %58, %cst_58 {dimension_numbers = #tpu.dot_dimension_numbers<[1], [0], [0], [1], [0, 0, 1, 1], [], []>} : vector<64x32xbf16>, vector<32x128xbf16>, vector<64x128xf32> -> vector<64x128xf32>
    %60 = arith.addf %53, %59 : vector<64x128xf32>
    %c0_59 = arith.constant 0 : index
    %c2_60 = arith.constant 2 : index
    %c2_61 = arith.constant 2 : index
    %c0_62 = arith.constant 0 : index
    %61 = vector.load %arg5[%c0_59, %c2_60, %c2_61, %c0_62] : memref<2x6x10x32xf32, #tpu.memory_space<vmem>>, vector<2x4x8x32xf32>
    %62 = vector.shape_cast %61 : vector<2x4x8x32xf32> to vector<64x32xf32>
    %63 = arith.truncf %62 : vector<64x32xf32> to vector<64x32xbf16>
    %c8 = arith.constant 8 : index
    %c0_63 = arith.constant 0 : index
    %c0_64 = arith.constant 0 : index
    %64 = vector.load %arg2[%c8, %c0_63, %c0_64] : memref<9x32x128xbf16, #tpu.memory_space<vmem>>, vector<1x32x128xbf16>
    %65 = vector.shape_cast %64 : vector<1x32x128xbf16> to vector<32x128xbf16>
    %cst_65 = arith.constant dense<0.000000e+00> : vector<64x128xf32>
    %66 = tpu.matmul %63, %65, %cst_65 {dimension_numbers = #tpu.dot_dimension_numbers<[1], [0], [0], [1], [0, 0, 1, 1], [], []>} : vector<64x32xbf16>, vector<32x128xbf16>, vector<64x128xf32> -> vector<64x128xf32>
    %67 = arith.addf %60, %66 : vector<64x128xf32>
    %68 = vector.extract_strided_slice %67 {offsets = [0, 0], sizes = [64, 32], strides = [1, 1]} : vector<64x128xf32> to vector<64x32xf32>
    %69 = arith.negf %68 : vector<64x32xf32>
    %70 = math.exp %69 : vector<64x32xf32>
    %cst_66 = arith.constant 1.000000e+00 : f32
    %71 = vector.broadcast %cst_66 : f32 to vector<64x32xf32>
    %72 = arith.addf %71, %70 : vector<64x32xf32>
    %73 = arith.divf %71, %72 : vector<64x32xf32>
    %74 = vector.extract_strided_slice %67 {offsets = [0, 32], sizes = [64, 32], strides = [1, 1]} : vector<64x128xf32> to vector<64x32xf32>
    %75 = arith.negf %74 : vector<64x32xf32>
    %76 = math.exp %75 : vector<64x32xf32>
    %cst_67 = arith.constant 1.000000e+00 : f32
    %77 = vector.broadcast %cst_67 : f32 to vector<64x32xf32>
    %78 = arith.addf %77, %76 : vector<64x32xf32>
    %79 = arith.divf %77, %78 : vector<64x32xf32>
    %80 = vector.extract_strided_slice %67 {offsets = [0, 64], sizes = [64, 32], strides = [1, 1]} : vector<64x128xf32> to vector<64x32xf32>
    %81 = math.tanh %80 : vector<64x32xf32>
    %82 = vector.extract_strided_slice %67 {offsets = [0, 96], sizes = [64, 32], strides = [1, 1]} : vector<64x128xf32> to vector<64x32xf32>
    %83 = arith.negf %82 : vector<64x32xf32>
    %84 = math.exp %83 : vector<64x32xf32>
    %cst_68 = arith.constant 1.000000e+00 : f32
    %85 = vector.broadcast %cst_68 : f32 to vector<64x32xf32>
    %86 = arith.addf %85, %84 : vector<64x32xf32>
    %87 = arith.divf %85, %86 : vector<64x32xf32>
    %c0_69 = arith.constant 0 : index
    %c0_70 = arith.constant 0 : index
    %88 = vector.load %arg4[%c0_69, %c0_70] : memref<64x32xf32, #tpu.memory_space<vmem>>, vector<64x32xf32>
    %89 = arith.mulf %79, %88 : vector<64x32xf32>
    %90 = arith.mulf %73, %81 : vector<64x32xf32>
    %91 = arith.addf %89, %90 : vector<64x32xf32>
    %92 = math.tanh %91 : vector<64x32xf32>
    %93 = arith.mulf %87, %92 : vector<64x32xf32>
    %c0_71 = arith.constant 0 : index
    %c0_72 = arith.constant 0 : index
    %94 = vector.load %arg4[%c0_71, %c0_72] : memref<64x32xf32, #tpu.memory_space<vmem>>, vector<64x32xf32>
    tpu.vector_store %arg4[%c0_71, %c0_72], %91 {strides = array<i32>} : memref<64x32xf32, #tpu.memory_space<vmem>>, vector<64x32xf32>,
    %c0_73 = arith.constant 0 : index
    %c0_74 = arith.constant 0 : index
    %c0_75 = arith.constant 0 : index
    %95 = vector.load %arg3[%c0_73, %c0_74, %c0_75] : memref<1x64x32xf32, #tpu.memory_space<vmem>>, vector<1x64x32xf32>
    %96 = vector.shape_cast %95 : vector<1x64x32xf32> to vector<64x32xf32>
    %97 = vector.shape_cast %93 : vector<64x32xf32> to vector<1x64x32xf32>
    tpu.vector_store %arg3[%c0_73, %c0_74, %c0_75], %97 {strides = array<i32>} : memref<1x64x32xf32, #tpu.memory_space<vmem>>, vector<1x64x32xf32>,
    %98 = vector.shape_cast %93 : vector<64x32xf32> to vector<2x4x8x32xf32>
    %99 = vector.extract_strided_slice %98 {offsets = [0, 0, 0, 0], sizes = [2, 4, 4, 32], strides = [1, 1, 1, 1]} : vector<2x4x8x32xf32> to vector<2x4x4x32xf32>
    %c0_76 = arith.constant 0 : index
    %c1_77 = arith.constant 1 : index
    %c1_78 = arith.constant 1 : index
    %c0_79 = arith.constant 0 : index
    %100 = vector.load %arg5[%c0_76, %c1_77, %c1_78, %c0_79] : memref<2x6x10x32xf32, #tpu.memory_space<vmem>>, vector<2x4x4x32xf32>
    tpu.vector_store %arg5[%c0_76, %c1_77, %c1_78, %c0_79], %99 {strides = array<i32>} : memref<2x6x10x32xf32, #tpu.memory_space<vmem>>, vector<2x4x4x32xf32>,
    return
  }
  func.func @transform_0(%arg0: i32) -> (i32, i32, i32) {
    %c0_i32 = arith.constant 0 : i32
    %c0_i32_0 = arith.constant 0 : i32
    %c0_i32_1 = arith.constant 0 : i32
    return %arg0, %c0_i32, %c0_i32_0 : i32, i32, i32
  }
  func.func @transform_1(%arg0: i32) -> (i32, i32, i32) {
    %c0_i32 = arith.constant 0 : i32
    %c0_i32_0 = arith.constant 0 : i32
    %c0_i32_1 = arith.constant 0 : i32
    %c0_i32_2 = arith.constant 0 : i32
    return %c0_i32, %c0_i32_0, %c0_i32_1 : i32, i32, i32
  }
  func.func @transform_2(%arg0: i32) -> (i32, i32, i32) {
    %c0_i32 = arith.constant 0 : i32
    %c0_i32_0 = arith.constant 0 : i32
    %c0_i32_1 = arith.constant 0 : i32
    return %arg0, %c0_i32, %c0_i32_0 : i32, i32, i32
  }
  func.func @transform_3(%arg0: i32) -> (i32, i32) {
    %c0_i32 = arith.constant 0 : i32
    %c0_i32_0 = arith.constant 0 : i32
    %c0_i32_1 = arith.constant 0 : i32
    return %c0_i32, %c0_i32_0 : i32, i32
  }
}

</mosaic_0001>

<llo_original>
// kernel: encoder_forward.6
$region0: #{encoder_forward.6}
  #allocation0 [shape = 'u32[]', space=smem, size = 0x4, offset = 0x4, fixed_abs, tag = 'smem constant byte address 0x4 - core index']
  #allocation1 [shape = 'u32[144,128]{1,0:T(1,128)}', space=vmem, size = 0x12000, scoped, tag = 'internal scratch']
  %s0 = inlined_call_operand.vmem [shape: bf16[512,9], index: 0, kind: input, shape index: {}]
  %s1 = inlined_call_operand.vmem [shape: bf16[9,8], index: 1, kind: input, shape index: {}]
  %s2 = inlined_call_operand.vmem [shape: f32[1,8], index: 2, kind: input, shape index: {}]
  %s3 = inlined_call_operand.vmem [shape: f32[512,8], index: 3, kind: output, shape index: {}]
  %s4 = sld [smem:[#allocation0]]
  $region45: #{encoder_forward.6} parent=0
    _
  %s6 = ssub.s32 1, %s4
  %s7 = scalar_select 0, %s6, %s4
  loop: start=0, step=1, limit=4
  $region2: #{encoder_forward.6} parent=0 // loop_pre_header
    _
  $region3: #{encoder_forward.6} parent=0 // loop_header
    %s9 = sphi 0, %s13
    %p10 = scmp.ge.s32.totalorder %s9, 4
    %s19 = sphi 0, %s21
    %s22 = sphi 0, %s19
    %s23 = sphi 0, %s22
    %s39 = sphi 0, %s23
    %s43 = sphi 0, %s43
    %s45 = sphi 0, %s43
    %s46 = sphi 0, %s45
    %s60 = sphi 0, %s46
    %s64 = sphi 0, %s64
    %s66 = sphi 0, %s64
    %s67 = sphi 0, %s66
    %s81 = sphi 0, %s67
    %s87 = sphi 0, %s89
    %s90 = sphi 0, %s87
    %s91 = sphi 0, %s90
    %s107 = sphi 0, %s91
  $region4: #{encoder_forward.6} parent=0 // loop_header_branch
    %12 = sbr.rel (%p10) target = $region8
  $region5: #{encoder_forward.6} parent=0 // loop_body
    %s14 = ssub.s32 %s9, 1
    %s15 = ssub.s32 %s9, 2
    %s16 = sadd.s32 %s9, 1
    %s17 = ssub.s32 %s9, %s16
    %p18 = scmp.eq.s32.totalorder %s17, 0
    %s20 = sadd.s32 %s19, 1
    %s21 = scalar_select %p18, %s19, %s20
    %p24 = pneg %p18
    %p25 = scmp.eq.s32.totalorder %s9, 1
    %p26 = por %p24, %p25
    %p27 = scmp.ne.s32.totalorder %s19, %s22
    %p28 = scmp.eq.s32.totalorder %s9, 0
    %p29 = por %p27, %p28
    %p30 = scmp.ne.s32.totalorder %s19, %s22
    %p31 = scmp.eq.s32.totalorder %s14, 1
    %p32 = por %p30, %p31
    %p33 = scmp.ne.s32.totalorder %s22, %s23
    %p34 = scmp.eq.s32.totalorder %s14, 0
    %p35 = por %p33, %p34
    %p36 = scmp.ne.s32.totalorder %s22, %s23
    %p37 = scmp.eq.s32.totalorder %s15, 1
    %p38 = por %p36, %p37
    %p40 = scmp.ne.s32.totalorder %s23, %s39
    %p41 = scmp.eq.s32.totalorder %s15, 0
    %p42 = por %p40, %p41
    %s44 = sadd.s32 %s43, 1
    %p47 = scmp.eq.s32.totalorder %s9, 1
    %p48 = scmp.ne.s32.totalorder %s43, %s45
    %p49 = scmp.eq.s32.totalorder %s9, 0
    %p50 = por %p48, %p49
    %p51 = scmp.ne.s32.totalorder %s43, %s45
    %p52 = scmp.eq.s32.totalorder %s14, 1
    %p53 = por %p51, %p52
    %p54 = scmp.ne.s32.totalorder %s45, %s46
    %p55 = scmp.eq.s32.totalorder %s14, 0
    %p56 = por %p54, %p55
    %p57 = scmp.ne.s32.totalorder %s45, %s46
    %p58 = scmp.eq.s32.totalorder %s15, 1
    %p59 = por %p57, %p58
    %p61 = scmp.ne.s32.totalorder %s46, %s60
    %p62 = scmp.eq.s32.totalorder %s15, 0
    %p63 = por %p61, %p62
    %s65 = sadd.s32 %s64, 1
    %p68 = scmp.eq.s32.totalorder %s9, 1
    %p69 = scmp.ne.s32.totalorder %s64, %s66
    %p70 = scmp.eq.s32.totalorder %s9, 0
    %p71 = por %p69, %p70
    %p72 = scmp.ne.s32.totalorder %s64, %s66
    %p73 = scmp.eq.s32.totalorder %s14, 1
    %p74 = por %p72, %p73
    %p75 = scmp.ne.s32.totalorder %s66, %s67
    %p76 = scmp.eq.s32.totalorder %s14, 0
    %p77 = por %p75, %p76
    %p78 = scmp.ne.s32.totalorder %s66, %s67
    %p79 = scmp.eq.s32.totalorder %s15, 1
    %p80 = por %p78, %p79
    %p82 = scmp.ne.s32.totalorder %s67, %s81
    %p83 = scmp.eq.s32.totalorder %s15, 0
    %p84 = por %p82, %p83
    %s85 = ssub.s32 %s9, %s16
    %p86 = scmp.eq.s32.totalorder %s85, 0
    %s88 = sadd.s32 %s87, 1
    %s89 = scalar_select %p86, %s87, %s88
    %p92 = pneg %p86
    %p93 = scmp.eq.s32.totalorder %s9, 1
    %p94 = por %p92, %p93
    %p95 = scmp.ne.s32.totalorder %s87, %s90
    %p96 = scmp.eq.s32.totalorder %s9, 0
    %p97 = por %p95, %p96
    %p98 = scmp.ne.s32.totalorder %s87, %s90
    %p99 = scmp.eq.s32.totalorder %s14, 1
    %p100 = por %p98, %p99
    %p101 = scmp.ne.s32.totalorder %s90, %s91
    %p102 = scmp.eq.s32.totalorder %s14, 0
    %p103 = por %p101, %p102
    %p104 = scmp.ne.s32.totalorder %s90, %s91
    %p105 = scmp.eq.s32.totalorder %s15, 1
    %p106 = por %p104, %p105
    %p108 = scmp.ne.s32.totalorder %s91, %s107
    %p109 = scmp.eq.s32.totalorder %s15, 0
    %p110 = por %p108, %p109
    %p111 = scmp.le.s32.totalorder 1, %s9
    %p112 = scmp.lt.s32.totalorder %s9, 3
    %p113 = pnand %p111, %p112
    %p114 = pneg %p113
    // Predicated region
    $region9: #{encoder_forward.6} parent=5 // pred_check
      _
    $region10: #{encoder_forward.6} parent=5 // pred_check_branch
      %116 = sbr.rel (%p113) target = $region12
    $region11: #{encoder_forward.6} parent=5 // pred_region
      %s117 = ssub.s32 %s9, 1
      // Predicated region
      $region13: #{encoder_forward.6} parent=11 // pred_check
        %p118 = pneg %p56
      $region14: #{encoder_forward.6} parent=11 // pred_check_branch
        %120 = sbr.rel (%p118) target = $region16
      $region15: #{encoder_forward.6} parent=11 // pred_region
        _
      $region16: #{encoder_forward.6} parent=11 // pred_fallthru
        _
      // Predicated region
      $region17: #{encoder_forward.6} parent=11 // pred_check
        %p121 = pneg %p77
      $region18: #{encoder_forward.6} parent=11 // pred_check_branch
        %123 = sbr.rel (%p121) target = $region20
      $region19: #{encoder_forward.6} parent=11 // pred_region
        _
      $region20: #{encoder_forward.6} parent=11 // pred_fallthru
        _
    $region12: #{encoder_forward.6} parent=5 // pred_fallthru
      _
    %p124 = scmp.lt.s32.totalorder %s9, 2
    // Predicated region
    $region21: #{encoder_forward.6} parent=5 // pred_check
      %p125 = pneg %p124
    $region22: #{encoder_forward.6} parent=5 // pred_check_branch
      %127 = sbr.rel (%p125) target = $region24
    $region23: #{encoder_forward.6} parent=5 // pred_region
      // Predicated region
      $region25: #{encoder_forward.6} parent=23 // pred_check
        %p128 = pneg %p29
      $region26: #{encoder_forward.6} parent=23 // pred_check_branch
        %130 = sbr.rel (%p128) target = $region28
      $region27: #{encoder_forward.6} parent=23 // pred_region
        %s131 = smul.u32 32, %s9
        %p132 = scmp.lt.s32.totalorder %s131, 63
        %s133 = scalar_select %p132, %s131, 63
        %s134 = smul.addr %s133, 4
        %s135 = scalar_lea.vmem %s0, %s134
        %s136 = smul.u32 32, %s9
      $region28: #{encoder_forward.6} parent=23 // pred_fallthru
        _
    $region24: #{encoder_forward.6} parent=5 // pred_fallthru
      _
    %p137 = scmp.le.s32.totalorder 1, %s9
    %p138 = scmp.lt.s32.totalorder %s9, 3
    %p139 = pnand %p137, %p138
    %p140 = pneg %p139
    // Predicated region
    $region29: #{encoder_forward.6} parent=5 // pred_check
      _
    $region30: #{encoder_forward.6} parent=5 // pred_check_branch
      %142 = sbr.rel (%p139) target = $region32
    $region31: #{encoder_forward.6} parent=5 // pred_region
      %s143 = ssub.s32 %s9, 1
      %s144 = smul.u32 32, %s14
      %p145 = scmp.lt.s32.totalorder %s144, 63
      %s146 = scalar_select %p145, %s144, 63
      %s147 = smul.addr %s146, 4
      %s148 = scalar_lea.vmem %s0, %s147
      %p149 = pneg %p35
      %p150 = pneg %p32
      %p151 = pneg %p56
      %p152 = pneg %p53
      %p153 = pneg %p77
      %p154 = pneg %p74
      %p155 = pneg %p103
      %p156 = pneg %p100
      %s157 = smul.u32 32, %s14
      %p158 = scmp.lt.s32.totalorder %s157, 63
      %s159 = scalar_select %p158, %s157, 63
      %s160 = smul.addr %s159, 8
      %s161 = scalar_lea.vmem %s3, %s160
      %s162 = smul.u32 32, %s14
      %p163 = scmp.lt.s32.totalorder %s162, 63
      %s164 = scalar_select %p163, %s162, 63
      %s165 = smul.addr %s164, 4
      %s166 = scalar_lea.vmem %s0, %s165
      %s167 = smul.u32 32, %s14
      %s168 = smul.u32 32, %s14
      %p169 = scmp.lt.s32.totalorder %s168, 63
      %s170 = scalar_select %p169, %s168, 63
      %s171 = smul.addr %s170, 8
      %s172 = scalar_lea.vmem %s3, %s171
      %s173 = smul.u32 32, %s14
      %v175 = vld [vmem:[%s166] sm:$0xf]
      %v176 = vld [vmem:[%s166 + $0x4] sm:$0xf]
      %v177 = vld [vmem:[%s166 + $0x8] sm:$0xf]
      %v178 = vld [vmem:[%s166 + $0xc] sm:$0xf]
      %v179 = vld [vmem:[%s166 + $0x10] sm:$0xf]
      %v180 = vld [vmem:[%s166 + $0x14] sm:$0xf]
      %v181 = vld [vmem:[%s166 + $0x18] sm:$0xf]
      %v182 = vld [vmem:[%s166 + $0x1c] sm:$0xf]
      %v183 = vld [vmem:[%s166 + $0x20] sm:$0xf]
      %v184 = vld [vmem:[%s166 + $0x24] sm:$0xf]
      %v185 = vld [vmem:[%s166 + $0x28] sm:$0xf]
      %v186 = vld [vmem:[%s166 + $0x2c] sm:$0xf]
      %v187 = vld [vmem:[%s166 + $0x30] sm:$0xf]
      %v188 = vld [vmem:[%s166 + $0x34] sm:$0xf]
      %v189 = vld [vmem:[%s166 + $0x38] sm:$0xf]
      %v190 = vld [vmem:[%s166 + $0x3c] sm:$0xf]
      %v191 = vld [vmem:[%s166 + $0x40] sm:$0xf]
      %v192 = vld [vmem:[%s166 + $0x44] sm:$0xf]
      %v193 = vld [vmem:[%s166 + $0x48] sm:$0xf]
      %v194 = vld [vmem:[%s166 + $0x4c] sm:$0xf]
      %v195 = vld [vmem:[%s166 + $0x50] sm:$0xf]
      %v196 = vld [vmem:[%s166 + $0x54] sm:$0xf]
      %v197 = vld [vmem:[%s166 + $0x58] sm:$0xf]
      %v198 = vld [vmem:[%s166 + $0x5c] sm:$0xf]
      %v199 = vld [vmem:[%s166 + $0x60] sm:$0xf]
      %v200 = vld [vmem:[%s166 + $0x64] sm:$0xf]
      %v201 = vld [vmem:[%s166 + $0x68] sm:$0xf]
      %v202 = vld [vmem:[%s166 + $0x6c] sm:$0xf]
      %v203 = vld [vmem:[%s166 + $0x70] sm:$0xf]
      %v204 = vld [vmem:[%s166 + $0x74] sm:$0xf]
      %v205 = vld [vmem:[%s166 + $0x78] sm:$0xf]
      %v206 = vld [vmem:[%s166 + $0x7c] sm:$0xf]
      %v207 = vld [vmem:[%s1] sm:$0xf]
      %v208 = vld [vmem:[%s1 + $0x4] sm:$0x1]
      %v209 = vld [vmem:[%s2] sm:$0x1]
      %v211 = vlaneseq
      %v212 = vshrl.u32 %v211, 7
      %v213 = vsub.s32 0, %v212
      %v214 = vrot.slane %v209, %v213
      %v248 = vunpack.c.l.b16 %v175
      %v249 = vunpack.c.l.b16 %v176
      %v250 = vunpack.c.l.b16 %v177
      %v251 = vunpack.c.l.b16 %v178
      %v252 = vunpack.c.l.b16 %v179
      %v253 = vunpack.c.l.b16 %v180
      %v254 = vunpack.c.l.b16 %v181
      %v255 = vunpack.c.l.b16 %v182
      %v256 = vunpack.c.l.b16 %v183
      %v257 = vunpack.c.l.b16 %v184
      %v258 = vunpack.c.l.b16 %v185
      %v259 = vunpack.c.l.b16 %v186
      %v260 = vunpack.c.l.b16 %v187
      %v261 = vunpack.c.l.b16 %v188
      %v262 = vunpack.c.l.b16 %v189
      %v263 = vunpack.c.l.b16 %v190
      %v264 = vunpack.c.l.b16 %v191
      %v265 = vunpack.c.l.b16 %v192
      %v266 = vunpack.c.l.b16 %v193
      %v267 = vunpack.c.l.b16 %v194
      %v268 = vunpack.c.l.b16 %v195
      %v269 = vunpack.c.l.b16 %v196
      %v270 = vunpack.c.l.b16 %v197
      %v271 = vunpack.c.l.b16 %v198
      %v272 = vunpack.c.l.b16 %v199
      %v273 = vunpack.c.l.b16 %v200
      %v274 = vunpack.c.l.b16 %v201
      %v275 = vunpack.c.l.b16 %v202
      %v276 = vunpack.c.l.b16 %v203
      %v277 = vunpack.c.l.b16 %v204
      %v278 = vunpack.c.l.b16 %v205
      %v279 = vunpack.c.l.b16 %v206
      %v280 = vpack.c.b16 %v249, %v248
      %v281 = vpack.c.b16 %v251, %v250
      %v282 = vpack.c.b16 %v253, %v252
      %v283 = vpack.c.b16 %v255, %v254
      %v284 = vpack.c.b16 %v257, %v256
      %v285 = vpack.c.b16 %v259, %v258
      %v286 = vpack.c.b16 %v261, %v260
      %v287 = vpack.c.b16 %v263, %v262
      %v288 = vpack.c.b16 %v265, %v264
      %v289 = vpack.c.b16 %v267, %v266
      %v290 = vpack.c.b16 %v269, %v268
      %v291 = vpack.c.b16 %v271, %v270
      %v292 = vpack.c.b16 %v273, %v272
      %v293 = vpack.c.b16 %v275, %v274
      %v294 = vpack.c.b16 %v277, %v276
      %v295 = vpack.c.b16 %v279, %v278
      %v298 = vunpack.c.l.b16 %v207
      %v299 = vunpack.c.l.b16 %v208
      %v300 = vpack.c.b16 %v299, %v298
      %vm301 = vcmask 72704
      %v303 = vsel %vm301, %v280, 0
      %v306 = vsel %vm301, %v281, 0
      %v309 = vsel %vm301, %v282, 0
      %v312 = vsel %vm301, %v283, 0
      %v315 = vsel %vm301, %v284, 0
      %v318 = vsel %vm301, %v285, 0
      %v321 = vsel %vm301, %v286, 0
      %v324 = vsel %vm301, %v287, 0
      %v327 = vsel %vm301, %v288, 0
      %v330 = vsel %vm301, %v289, 0
      %v333 = vsel %vm301, %v290, 0
      %v336 = vsel %vm301, %v291, 0
      %v339 = vsel %vm301, %v292, 0
      %v342 = vsel %vm301, %v293, 0
      %v345 = vsel %vm301, %v294, 0
      %v348 = vsel %vm301, %v295, 0
      %vm350 = vcmask 1043456
      %vm351 = vcmask 1044480
      %v352 = vsel %vm350, 4294967295, 65535
      %v353 = vsel %vm351, %v352, 0
      %v355 = vand.u32 %v300, %v353
      %357 = vmatprep.subr.bf16.mxu0 0
      %358 = vmatpush1.bf16.msra.mxu0 %v355
      %359 = vmatprep.subr.bf16.mxu0 0
      %360 = vmatpush1.bf16.msra.mxu0 0
      %361 = vmatprep.subr.bf16.mxu0 0
      %362 = vmatpush1.bf16.msra.mxu0 0
      %363 = vmatprep.subr.bf16.mxu0 0
      %364 = vmatpush1.bf16.msra.mxu0 0
      %365 = vmatprep.subr.bf16.mxu0 0
      %366 = vmatpush1.bf16.msra.mxu0 0
      %367 = vmatprep.subr.bf16.mxu0 0
      %368 = vmatpush1.bf16.msra.mxu0 0
      %369 = vmatprep.subr.bf16.mxu0 0
      %370 = vmatpush1.bf16.msra.mxu0 0
      %371 = vmatprep.subr.bf16.mxu0 0
      %372 = vmatpush1.bf16.msra.mxu0 0
      %373 = vmatprep.subr.bf16.mxu0 0
      %374 = vmatpush1.bf16.msra.mxu0 0
      %375 = vmatprep.subr.bf16.mxu0 0
      %376 = vmatpush1.bf16.msra.mxu0 0
      %377 = vmatprep.subr.bf16.mxu0 0
      %378 = vmatpush1.bf16.msra.mxu0 0
      %379 = vmatprep.subr.bf16.mxu0 0
      %380 = vmatpush1.bf16.msra.mxu0 0
      %381 = vmatprep.subr.bf16.mxu0 0
      %382 = vmatpush1.bf16.msra.mxu0 0
      %383 = vmatprep.subr.bf16.mxu0 0
      %384 = vmatpush1.bf16.msra.mxu0 0
      %385 = vmatprep.subr.bf16.mxu0 0
      %386 = vmatpush1.bf16.msra.mxu0 0
      %387 = vmatprep.subr.bf16.mxu0 0
      %388 = vmatpush1.bf16.msra.mxu0 0
      %389 = vmatprep.mubr.bf16.mxu0 0
      %390 = vmatmul.mubr.bf16.gmra.mrb[0].mxu0 %v303
      %v391 = vpop.f32.mrb[0].mxu0
      %v392 = vadd.f32 %v214, %v391
      %v393 = vpop.f32.mrb[0].mxu0
      %v394 = vpop.f32.mrb[0].mxu0
      %v395 = vadd.f32 %v214, %v394
      %v396 = vpop.f32.mrb[0].mxu0
      %397 = vmatprep.mubr.bf16.mxu0 0
      %398 = vmatmul.mubr.bf16.gmra.mrb[0].mxu0 %v306
      %v399 = vpop.f32.mrb[0].mxu0
      %v400 = vadd.f32 %v214, %v399
      %v401 = vpop.f32.mrb[0].mxu0
      %v402 = vpop.f32.mrb[0].mxu0
      %v403 = vadd.f32 %v214, %v402
      %v404 = vpop.f32.mrb[0].mxu0
      %405 = vmatprep.mubr.bf16.mxu0 0
      %406 = vmatmul.mubr.bf16.gmra.mrb[0].mxu0 %v309
      %v407 = vpop.f32.mrb[0].mxu0
      %v408 = vadd.f32 %v214, %v407
      %v409 = vpop.f32.mrb[0].mxu0
      %v410 = vpop.f32.mrb[0].mxu0
      %v411 = vadd.f32 %v214, %v410
      %v412 = vpop.f32.mrb[0].mxu0
      %413 = vmatprep.mubr.bf16.mxu0 0
      %414 = vmatmul.mubr.bf16.gmra.mrb[0].mxu0 %v312
      %v415 = vpop.f32.mrb[0].mxu0
      %v416 = vadd.f32 %v214, %v415
      %v417 = vpop.f32.mrb[0].mxu0
      %v418 = vpop.f32.mrb[0].mxu0
      %v419 = vadd.f32 %v214, %v418
      %v420 = vpop.f32.mrb[0].mxu0
      %421 = vmatprep.mubr.bf16.mxu0 0
      %422 = vmatmul.mubr.bf16.gmra.mrb[0].mxu0 %v315
      %v423 = vpop.f32.mrb[0].mxu0
      %v424 = vadd.f32 %v214, %v423
      %v425 = vpop.f32.mrb[0].mxu0
      %v426 = vpop.f32.mrb[0].mxu0
      %v427 = vadd.f32 %v214, %v426
      %v428 = vpop.f32.mrb[0].mxu0
      %429 = vmatprep.mubr.bf16.mxu0 0
      %430 = vmatmul.mubr.bf16.gmra.mrb[0].mxu0 %v318
      %v431 = vpop.f32.mrb[0].mxu0
      %v432 = vadd.f32 %v214, %v431
      %v433 = vpop.f32.mrb[0].mxu0
      %v434 = vpop.f32.mrb[0].mxu0
      %v435 = vadd.f32 %v214, %v434
      %v436 = vpop.f32.mrb[0].mxu0
      %437 = vmatprep.mubr.bf16.mxu0 0
      %438 = vmatmul.mubr.bf16.gmra.mrb[0].mxu0 %v321
      %v439 = vpop.f32.mrb[0].mxu0
      %v440 = vadd.f32 %v214, %v439
      %v441 = vpop.f32.mrb[0].mxu0
      %v442 = vpop.f32.mrb[0].mxu0
      %v443 = vadd.f32 %v214, %v442
      %v444 = vpop.f32.mrb[0].mxu0
      %445 = vmatprep.mubr.bf16.mxu0 0
      %446 = vmatmul.mubr.bf16.gmra.mrb[0].mxu0 %v324
      %v447 = vpop.f32.mrb[0].mxu0
      %v448 = vadd.f32 %v214, %v447
      %v449 = vpop.f32.mrb[0].mxu0
      %v450 = vpop.f32.mrb[0].mxu0
      %v451 = vadd.f32 %v214, %v450
      %v452 = vpop.f32.mrb[0].mxu0
      %453 = vmatprep.mubr.bf16.mxu0 0
      %454 = vmatmul.mubr.bf16.gmra.mrb[0].mxu0 %v327
      %v455 = vpop.f32.mrb[0].mxu0
      %v456 = vadd.f32 %v214, %v455
      %v457 = vpop.f32.mrb[0].mxu0
      %v458 = vpop.f32.mrb[0].mxu0
      %v459 = vadd.f32 %v214, %v458
      %v460 = vpop.f32.mrb[0].mxu0
      %461 = vmatprep.mubr.bf16.mxu0 0
      %462 = vmatmul.mubr.bf16.gmra.mrb[0].mxu0 %v330
      %v463 = vpop.f32.mrb[0].mxu0
      %v464 = vadd.f32 %v214, %v463
      %v465 = vpop.f32.mrb[0].mxu0
      %v466 = vpop.f32.mrb[0].mxu0
      %v467 = vadd.f32 %v214, %v466
      %v468 = vpop.f32.mrb[0].mxu0
      %469 = vmatprep.mubr.bf16.mxu0 0
      %470 = vmatmul.mubr.bf16.gmra.mrb[0].mxu0 %v333
      %v471 = vpop.f32.mrb[0].mxu0
      %v472 = vadd.f32 %v214, %v471
      %v473 = vpop.f32.mrb[0].mxu0
      %v474 = vpop.f32.mrb[0].mxu0
      %v475 = vadd.f32 %v214, %v474
      %v476 = vpop.f32.mrb[0].mxu0
      %477 = vmatprep.mubr.bf16.mxu0 0
      %478 = vmatmul.mubr.bf16.gmra.mrb[0].mxu0 %v336
      %v479 = vpop.f32.mrb[0].mxu0
      %v480 = vadd.f32 %v214, %v479
      %v481 = vpop.f32.mrb[0].mxu0
      %v482 = vpop.f32.mrb[0].mxu0
      %v483 = vadd.f32 %v214, %v482
      %v484 = vpop.f32.mrb[0].mxu0
      %485 = vmatprep.mubr.bf16.mxu0 0
      %486 = vmatmul.mubr.bf16.gmra.mrb[0].mxu0 %v339
      %v487 = vpop.f32.mrb[0].mxu0
      %v488 = vadd.f32 %v214, %v487
      %v489 = vpop.f32.mrb[0].mxu0
      %v490 = vpop.f32.mrb[0].mxu0
      %v491 = vadd.f32 %v214, %v490
      %v492 = vpop.f32.mrb[0].mxu0
      %493 = vmatprep.mubr.bf16.mxu0 0
      %494 = vmatmul.mubr.bf16.gmra.mrb[0].mxu0 %v342
      %v495 = vpop.f32.mrb[0].mxu0
      %v496 = vadd.f32 %v214, %v495
      %v497 = vpop.f32.mrb[0].mxu0
      %v498 = vpop.f32.mrb[0].mxu0
      %v499 = vadd.f32 %v214, %v498
      %v500 = vpop.f32.mrb[0].mxu0
      %501 = vmatprep.mubr.bf16.mxu0 0
      %502 = vmatmul.mubr.bf16.gmra.mrb[0].mxu0 %v345
      %v503 = vpop.f32.mrb[0].mxu0
      %v504 = vadd.f32 %v214, %v503
      %v505 = vpop.f32.mrb[0].mxu0
      %v506 = vpop.f32.mrb[0].mxu0
      %v507 = vadd.f32 %v214, %v506
      %v508 = vpop.f32.mrb[0].mxu0
      %509 = vmatprep.mubr.bf16.mxu0 0
      %510 = vmatmul.mubr.bf16.gmra.mrb[0].mxu0 %v348
      %v511 = vpop.f32.mrb[0].mxu0
      %v512 = vadd.f32 %v214, %v511
      %v513 = vpop.f32.mrb[0].mxu0
      %v514 = vpop.f32.mrb[0].mxu0
      %v515 = vadd.f32 %v214, %v514
      %v516 = vpop.f32.mrb[0].mxu0
      %517 = vdwg.mxu0
      %vm518 = vcmp.ge.f32.partialorder %v392, 0.0
      %vm519 = vcmp.ge.f32.partialorder %v395, 0.0
      %vm520 = vcmp.ge.f32.partialorder %v400, 0.0
      %vm521 = vcmp.ge.f32.partialorder %v403, 0.0
      %vm522 = vcmp.ge.f32.partialorder %v408, 0.0
      %vm523 = vcmp.ge.f32.partialorder %v411, 0.0
      %vm524 = vcmp.ge.f32.partialorder %v416, 0.0
      %vm525 = vcmp.ge.f32.partialorder %v419, 0.0
      %vm526 = vcmp.ge.f32.partialorder %v424, 0.0
      %vm527 = vcmp.ge.f32.partialorder %v427, 0.0
      %vm528 = vcmp.ge.f32.partialorder %v432, 0.0
      %vm529 = vcmp.ge.f32.partialorder %v435, 0.0
      %vm530 = vcmp.ge.f32.partialorder %v440, 0.0
      %vm531 = vcmp.ge.f32.partialorder %v443, 0.0
      %vm532 = vcmp.ge.f32.partialorder %v448, 0.0
      %vm533 = vcmp.ge.f32.partialorder %v451, 0.0
      %vm534 = vcmp.ge.f32.partialorder %v456, 0.0
      %vm535 = vcmp.ge.f32.partialorder %v459, 0.0
      %vm536 = vcmp.ge.f32.partialorder %v464, 0.0
      %vm537 = vcmp.ge.f32.partialorder %v467, 0.0
      %vm538 = vcmp.ge.f32.partialorder %v472, 0.0
      %vm539 = vcmp.ge.f32.partialorder %v475, 0.0
      %vm540 = vcmp.ge.f32.partialorder %v480, 0.0
      %vm541 = vcmp.ge.f32.partialorder %v483, 0.0
      %vm542 = vcmp.ge.f32.partialorder %v488, 0.0
      %vm543 = vcmp.ge.f32.partialorder %v491, 0.0
      %vm544 = vcmp.ge.f32.partialorder %v496, 0.0
      %vm545 = vcmp.ge.f32.partialorder %v499, 0.0
      %vm546 = vcmp.ge.f32.partialorder %v504, 0.0
      %vm547 = vcmp.ge.f32.partialorder %v507, 0.0
      %vm548 = vcmp.ge.f32.partialorder %v512, 0.0
      %vm549 = vcmp.ge.f32.partialorder %v515, 0.0
      %v550 = vmul.f32 %v392, 0.2
      %v551 = vmul.f32 %v395, 0.2
      %v552 = vmul.f32 %v400, 0.2
      %v553 = vmul.f32 %v403, 0.2
      %v554 = vmul.f32 %v408, 0.2
      %v555 = vmul.f32 %v411, 0.2
      %v556 = vmul.f32 %v416, 0.2
      %v557 = vmul.f32 %v419, 0.2
      %v558 = vmul.f32 %v424, 0.2
      %v559 = vmul.f32 %v427, 0.2
      %v560 = vmul.f32 %v432, 0.2
      %v561 = vmul.f32 %v435, 0.2
      %v562 = vmul.f32 %v440, 0.2
      %v563 = vmul.f32 %v443, 0.2
      %v564 = vmul.f32 %v448, 0.2
      %v565 = vmul.f32 %v451, 0.2
      %v566 = vmul.f32 %v456, 0.2
      %v567 = vmul.f32 %v459, 0.2
      %v568 = vmul.f32 %v464, 0.2
      %v569 = vmul.f32 %v467, 0.2
      %v570 = vmul.f32 %v472, 0.2
      %v571 = vmul.f32 %v475, 0.2
      %v572 = vmul.f32 %v480, 0.2
      %v573 = vmul.f32 %v483, 0.2
      %v574 = vmul.f32 %v488, 0.2
      %v575 = vmul.f32 %v491, 0.2
      %v576 = vmul.f32 %v496, 0.2
      %v577 = vmul.f32 %v499, 0.2
      %v578 = vmul.f32 %v504, 0.2
      %v579 = vmul.f32 %v507, 0.2
      %v580 = vmul.f32 %v512, 0.2
      %v581 = vmul.f32 %v515, 0.2
      %v582 = vsel %vm518, %v392, %v550
      %v583 = vsel %vm519, %v395, %v551
      %v584 = vsel %vm520, %v400, %v552
      %v585 = vsel %vm521, %v403, %v553
      %v586 = vsel %vm522, %v408, %v554
      %v587 = vsel %vm523, %v411, %v555
      %v588 = vsel %vm524, %v416, %v556
      %v589 = vsel %vm525, %v419, %v557
      %v590 = vsel %vm526, %v424, %v558
      %v591 = vsel %vm527, %v427, %v559
      %v592 = vsel %vm528, %v432, %v560
      %v593 = vsel %vm529, %v435, %v561
      %v594 = vsel %vm530, %v440, %v562
      %v595 = vsel %vm531, %v443, %v563
      %v596 = vsel %vm532, %v448, %v564
      %v597 = vsel %vm533, %v451, %v565
      %v598 = vsel %vm534, %v456, %v566
      %v599 = vsel %vm535, %v459, %v567
      %v600 = vsel %vm536, %v464, %v568
      %v601 = vsel %vm537, %v467, %v569
      %v602 = vsel %vm538, %v472, %v570
      %v603 = vsel %vm539, %v475, %v571
      %v604 = vsel %vm540, %v480, %v572
      %v605 = vsel %vm541, %v483, %v573
      %v606 = vsel %vm542, %v488, %v574
      %v607 = vsel %vm543, %v491, %v575
      %v608 = vsel %vm544, %v496, %v576
      %v609 = vsel %vm545, %v499, %v577
      %v610 = vsel %vm546, %v504, %v578
      %v611 = vsel %vm547, %v507, %v579
      %v612 = vsel %vm548, %v512, %v580
      %v613 = vsel %vm549, %v515, %v581
      %vm614 = vcmask 64512
      %615 = vst.msk [vmem:[%s172] sm:$0xff] %vm614, %v582
      %616 = vst.msk [vmem:[%s172 + $0x8] sm:$0xff] %vm614, %v583
      %617 = vst.msk [vmem:[%s172 + $0x10] sm:$0xff] %vm614, %v584
      %618 = vst.msk [vmem:[%s172 + $0x18] sm:$0xff] %vm614, %v585
      %619 = vst.msk [vmem:[%s172 + $0x20] sm:$0xff] %vm614, %v586
      %620 = vst.msk [vmem:[%s172 + $0x28] sm:$0xff] %vm614, %v587
      %621 = vst.msk [vmem:[%s172 + $0x30] sm:$0xff] %vm614, %v588
      %622 = vst.msk [vmem:[%s172 + $0x38] sm:$0xff] %vm614, %v589
      %623 = vst.msk [vmem:[%s172 + $0x40] sm:$0xff] %vm614, %v590
      %624 = vst.msk [vmem:[%s172 + $0x48] sm:$0xff] %vm614, %v591
      %625 = vst.msk [vmem:[%s172 + $0x50] sm:$0xff] %vm614, %v592
      %626 = vst.msk [vmem:[%s172 + $0x58] sm:$0xff] %vm614, %v593
      %627 = vst.msk [vmem:[%s172 + $0x60] sm:$0xff] %vm614, %v594
      %628 = vst.msk [vmem:[%s172 + $0x68] sm:$0xff] %vm614, %v595
      %629 = vst.msk [vmem:[%s172 + $0x70] sm:$0xff] %vm614, %v596
      %630 = vst.msk [vmem:[%s172 + $0x78] sm:$0xff] %vm614, %v597
      %631 = vst.msk [vmem:[%s172 + $0x80] sm:$0xff] %vm614, %v598
      %632 = vst.msk [vmem:[%s172 + $0x88] sm:$0xff] %vm614, %v599
      %633 = vst.msk [vmem:[%s172 + $0x90] sm:$0xff] %vm614, %v600
      %634 = vst.msk [vmem:[%s172 + $0x98] sm:$0xff] %vm614, %v601
      %635 = vst.msk [vmem:[%s172 + $0xa0] sm:$0xff] %vm614, %v602
      %636 = vst.msk [vmem:[%s172 + $0xa8] sm:$0xff] %vm614, %v603
      %637 = vst.msk [vmem:[%s172 + $0xb0] sm:$0xff] %vm614, %v604
      %638 = vst.msk [vmem:[%s172 + $0xb8] sm:$0xff] %vm614, %v605
      %639 = vst.msk [vmem:[%s172 + $0xc0] sm:$0xff] %vm614, %v606
      %640 = vst.msk [vmem:[%s172 + $0xc8] sm:$0xff] %vm614, %v607
      %641 = vst.msk [vmem:[%s172 + $0xd0] sm:$0xff] %vm614, %v608
      %642 = vst.msk [vmem:[%s172 + $0xd8] sm:$0xff] %vm614, %v609
      %643 = vst.msk [vmem:[%s172 + $0xe0] sm:$0xff] %vm614, %v610
      %644 = vst.msk [vmem:[%s172 + $0xe8] sm:$0xff] %vm614, %v611
      %645 = vst.msk [vmem:[%s172 + $0xf0] sm:$0xff] %vm614, %v612
      %646 = vst.msk [vmem:[%s172 + $0xf8] sm:$0xff] %vm614, %v613
      %s647 = smul.u32 32, %s14
      %p648 = scmp.lt.s32.totalorder %s647, 63
      %s649 = scalar_select %p648, %s647, 63
      %s650 = smul.addr %s649, 8
      %s651 = scalar_lea.vmem %s3, %s650
      // Predicated region
      $region33: #{encoder_forward.6} parent=31 // pred_check
        %p652 = pneg %p100
      $region34: #{encoder_forward.6} parent=31 // pred_check_branch
        %654 = sbr.rel (%p652) target = $region36
      $region35: #{encoder_forward.6} parent=31 // pred_region
        %s655 = smul.u32 32, %s14
      $region36: #{encoder_forward.6} parent=31 // pred_fallthru
        _
    $region32: #{encoder_forward.6} parent=5 // pred_fallthru
      _
    %p656 = scmp.le.s32.totalorder 2, %s9
    // Predicated region
    $region37: #{encoder_forward.6} parent=5 // pred_check
      %p657 = pneg %p656
    $region38: #{encoder_forward.6} parent=5 // pred_check_branch
      %659 = sbr.rel (%p657) target = $region40
    $region39: #{encoder_forward.6} parent=5 // pred_region
      %s660 = ssub.s32 %s9, 2
      // Predicated region
      $region41: #{encoder_forward.6} parent=39 // pred_check
        %p661 = pneg %p106
      $region42: #{encoder_forward.6} parent=39 // pred_check_branch
        %663 = sbr.rel (%p661) target = $region44
      $region43: #{encoder_forward.6} parent=39 // pred_region
        %s664 = smul.u32 32, %s15
        %p665 = scmp.lt.s32.totalorder %s664, 63
        %s666 = scalar_select %p665, %s664, 63
        %s667 = smul.addr %s666, 8
        %s668 = scalar_lea.vmem %s3, %s667
      $region44: #{encoder_forward.6} parent=39 // pred_fallthru
        _
    $region40: #{encoder_forward.6} parent=5 // pred_fallthru
      _
  $region6: #{encoder_forward.6} parent=0 // loop_footer
    %s13 = sadd.s32 1, %s9
  $region7: #{encoder_forward.6} parent=0 // loop_footer_branch
    %8 = sbr.rel target = $region3
  $region8: #{encoder_forward.6} parent=0 // loop_exit
    _

// kernel: encoder_forward.7
$region0: #{encoder_forward.7}
  #allocation0 [shape = 'u32[]', space=smem, size = 0x4, offset = 0x4, fixed_abs, tag = 'smem constant byte address 0x4 - core index']
  #allocation1 [shape = 'u32[144,128]{1,0:T(1,128)}', space=vmem, size = 0x12000, scoped, tag = 'internal scratch']
  %s0 = inlined_call_operand.vmem [shape: bf16[512,72], index: 0, kind: input, shape index: {}]
  %s1 = inlined_call_operand.vmem [shape: bf16[72,64], index: 1, kind: input, shape index: {}]
  %s2 = inlined_call_operand.vmem [shape: f32[1,64], index: 2, kind: input, shape index: {}]
  %s3 = inlined_call_operand.vmem [shape: f32[512,64], index: 3, kind: output, shape index: {}]
  %s4 = sld [smem:[#allocation0]]
  $region45: #{encoder_forward.7} parent=0
    _
  %s6 = ssub.s32 1, %s4
  %s7 = scalar_select 0, %s6, %s4
  loop: start=0, step=1, limit=4
  $region2: #{encoder_forward.7} parent=0 // loop_pre_header
    _
  $region3: #{encoder_forward.7} parent=0 // loop_header
    %s9 = sphi 0, %s13
    %p10 = scmp.ge.s32.totalorder %s9, 4
    %s19 = sphi 0, %s21
    %s22 = sphi 0, %s19
    %s23 = sphi 0, %s22
    %s39 = sphi 0, %s23
    %s43 = sphi 0, %s43
    %s45 = sphi 0, %s43
    %s46 = sphi 0, %s45
    %s60 = sphi 0, %s46
    %s64 = sphi 0, %s64
    %s66 = sphi 0, %s64
    %s67 = sphi 0, %s66
    %s81 = sphi 0, %s67
    %s87 = sphi 0, %s89
    %s90 = sphi 0, %s87
    %s91 = sphi 0, %s90
    %s107 = sphi 0, %s91
  $region4: #{encoder_forward.7} parent=0 // loop_header_branch
    %12 = sbr.rel (%p10) target = $region8
  $region5: #{encoder_forward.7} parent=0 // loop_body
    %s14 = ssub.s32 %s9, 1
    %s15 = ssub.s32 %s9, 2
    %s16 = sadd.s32 %s9, 1
    %s17 = ssub.s32 %s9, %s16
    %p18 = scmp.eq.s32.totalorder %s17, 0
    %s20 = sadd.s32 %s19, 1
    %s21 = scalar_select %p18, %s19, %s20
    %p24 = pneg %p18
    %p25 = scmp.eq.s32.totalorder %s9, 1
    %p26 = por %p24, %p25
    %p27 = scmp.ne.s32.totalorder %s19, %s22
    %p28 = scmp.eq.s32.totalorder %s9, 0
    %p29 = por %p27, %p28
    %p30 = scmp.ne.s32.totalorder %s19, %s22
    %p31 = scmp.eq.s32.totalorder %s14, 1
    %p32 = por %p30, %p31
    %p33 = scmp.ne.s32.totalorder %s22, %s23
    %p34 = scmp.eq.s32.totalorder %s14, 0
    %p35 = por %p33, %p34
    %p36 = scmp.ne.s32.totalorder %s22, %s23
    %p37 = scmp.eq.s32.totalorder %s15, 1
    %p38 = por %p36, %p37
    %p40 = scmp.ne.s32.totalorder %s23, %s39
    %p41 = scmp.eq.s32.totalorder %s15, 0
    %p42 = por %p40, %p41
    %s44 = sadd.s32 %s43, 1
    %p47 = scmp.eq.s32.totalorder %s9, 1
    %p48 = scmp.ne.s32.totalorder %s43, %s45
    %p49 = scmp.eq.s32.totalorder %s9, 0
    %p50 = por %p48, %p49
    %p51 = scmp.ne.s32.totalorder %s43, %s45
    %p52 = scmp.eq.s32.totalorder %s14, 1
    %p53 = por %p51, %p52
    %p54 = scmp.ne.s32.totalorder %s45, %s46
    %p55 = scmp.eq.s32.totalorder %s14, 0
    %p56 = por %p54, %p55
    %p57 = scmp.ne.s32.totalorder %s45, %s46
    %p58 = scmp.eq.s32.totalorder %s15, 1
    %p59 = por %p57, %p58
    %p61 = scmp.ne.s32.totalorder %s46, %s60
    %p62 = scmp.eq.s32.totalorder %s15, 0
    %p63 = por %p61, %p62
    %s65 = sadd.s32 %s64, 1
    %p68 = scmp.eq.s32.totalorder %s9, 1
    %p69 = scmp.ne.s32.totalorder %s64, %s66
    %p70 = scmp.eq.s32.totalorder %s9, 0
    %p71 = por %p69, %p70
    %p72 = scmp.ne.s32.totalorder %s64, %s66
    %p73 = scmp.eq.s32.totalorder %s14, 1
    %p74 = por %p72, %p73
    %p75 = scmp.ne.s32.totalorder %s66, %s67
    %p76 = scmp.eq.s32.totalorder %s14, 0
    %p77 = por %p75, %p76
    %p78 = scmp.ne.s32.totalorder %s66, %s67
    %p79 = scmp.eq.s32.totalorder %s15, 1
    %p80 = por %p78, %p79
    %p82 = scmp.ne.s32.totalorder %s67, %s81
    %p83 = scmp.eq.s32.totalorder %s15, 0
    %p84 = por %p82, %p83
    %s85 = ssub.s32 %s9, %s16
    %p86 = scmp.eq.s32.totalorder %s85, 0
    %s88 = sadd.s32 %s87, 1
    %s89 = scalar_select %p86, %s87, %s88
    %p92 = pneg %p86
    %p93 = scmp.eq.s32.totalorder %s9, 1
    %p94 = por %p92, %p93
    %p95 = scmp.ne.s32.totalorder %s87, %s90
    %p96 = scmp.eq.s32.totalorder %s9, 0
    %p97 = por %p95, %p96
    %p98 = scmp.ne.s32.totalorder %s87, %s90
    %p99 = scmp.eq.s32.totalorder %s14, 1
    %p100 = por %p98, %p99
    %p101 = scmp.ne.s32.totalorder %s90, %s91
    %p102 = scmp.eq.s32.totalorder %s14, 0
    %p103 = por %p101, %p102
    %p104 = scmp.ne.s32.totalorder %s90, %s91
    %p105 = scmp.eq.s32.totalorder %s15, 1
    %p106 = por %p104, %p105
    %p108 = scmp.ne.s32.totalorder %s91, %s107
    %p109 = scmp.eq.s32.totalorder %s15, 0
    %p110 = por %p108, %p109
    %p111 = scmp.le.s32.totalorder 1, %s9
    %p112 = scmp.lt.s32.totalorder %s9, 3
    %p113 = pnand %p111, %p112
    %p114 = pneg %p113
    // Predicated region
    $region9: #{encoder_forward.7} parent=5 // pred_check
      _
    $region10: #{encoder_forward.7} parent=5 // pred_check_branch
      %116 = sbr.rel (%p113) target = $region12
    $region11: #{encoder_forward.7} parent=5 // pred_region
      %s117 = ssub.s32 %s9, 1
      // Predicated region
      $region13: #{encoder_forward.7} parent=11 // pred_check
        %p118 = pneg %p56
      $region14: #{encoder_forward.7} parent=11 // pred_check_branch
        %120 = sbr.rel (%p118) target = $region16
      $region15: #{encoder_forward.7} parent=11 // pred_region
        _
      $region16: #{encoder_forward.7} parent=11 // pred_fallthru
        _
      // Predicated region
      $region17: #{encoder_forward.7} parent=11 // pred_check
        %p121 = pneg %p77
      $region18: #{encoder_forward.7} parent=11 // pred_check_branch
        %123 = sbr.rel (%p121) target = $region20
      $region19: #{encoder_forward.7} parent=11 // pred_region
        _
      $region20: #{encoder_forward.7} parent=11 // pred_fallthru
        _
    $region12: #{encoder_forward.7} parent=5 // pred_fallthru
      _
    %p124 = scmp.lt.s32.totalorder %s9, 2
    // Predicated region
    $region21: #{encoder_forward.7} parent=5 // pred_check
      %p125 = pneg %p124
    $region22: #{encoder_forward.7} parent=5 // pred_check_branch
      %127 = sbr.rel (%p125) target = $region24
    $region23: #{encoder_forward.7} parent=5 // pred_region
      // Predicated region
      $region25: #{encoder_forward.7} parent=23 // pred_check
        %p128 = pneg %p29
      $region26: #{encoder_forward.7} parent=23 // pred_check_branch
        %130 = sbr.rel (%p128) target = $region28
      $region27: #{encoder_forward.7} parent=23 // pred_region
        %s131 = smul.u32 32, %s9
        %p132 = scmp.lt.s32.totalorder %s131, 63
        %s133 = scalar_select %p132, %s131, 63
        %s134 = smul.addr %s133, 4
        %s135 = scalar_lea.vmem %s0, %s134
        %s136 = smul.u32 32, %s9
      $region28: #{encoder_forward.7} parent=23 // pred_fallthru
        _
    $region24: #{encoder_forward.7} parent=5 // pred_fallthru
      _
    %p137 = scmp.le.s32.totalorder 1, %s9
    %p138 = scmp.lt.s32.totalorder %s9, 3
    %p139 = pnand %p137, %p138
    %p140 = pneg %p139
    // Predicated region
    $region29: #{encoder_forward.7} parent=5 // pred_check
      _
    $region30: #{encoder_forward.7} parent=5 // pred_check_branch
      %142 = sbr.rel (%p139) target = $region32
    $region31: #{encoder_forward.7} parent=5 // pred_region
      %s143 = ssub.s32 %s9, 1
      %s144 = smul.u32 32, %s14
      %p145 = scmp.lt.s32.totalorder %s144, 63
      %s146 = scalar_select %p145, %s144, 63
      %s147 = smul.addr %s146, 4
      %s148 = scalar_lea.vmem %s0, %s147
      %p149 = pneg %p35
      %p150 = pneg %p32
      %p151 = pneg %p56
      %p152 = pneg %p53
      %p153 = pneg %p77
      %p154 = pneg %p74
      %p155 = pneg %p103
      %p156 = pneg %p100
      %s157 = smul.u32 32, %s14
      %p158 = scmp.lt.s32.totalorder %s157, 63
      %s159 = scalar_select %p158, %s157, 63
      %s160 = smul.addr %s159, 8
      %s161 = scalar_lea.vmem %s3, %s160
      %s162 = smul.u32 32, %s14
      %p163 = scmp.lt.s32.totalorder %s162, 63
      %s164 = scalar_select %p163, %s162, 63
      %s165 = smul.addr %s164, 4
      %s166 = scalar_lea.vmem %s0, %s165
      %s167 = smul.u32 32, %s14
      %s168 = smul.u32 32, %s14
      %p169 = scmp.lt.s32.totalorder %s168, 63
      %s170 = scalar_select %p169, %s168, 63
      %s171 = smul.addr %s170, 8
      %s172 = scalar_lea.vmem %s3, %s171
      %s173 = smul.u32 32, %s14
      %v175 = vld [vmem:[%s166] sm:$0xf]
      %v176 = vld [vmem:[%s166 + $0x4] sm:$0xf]
      %v177 = vld [vmem:[%s166 + $0x8] sm:$0xf]
      %v178 = vld [vmem:[%s166 + $0xc] sm:$0xf]
      %v179 = vld [vmem:[%s166 + $0x10] sm:$0xf]
      %v180 = vld [vmem:[%s166 + $0x14] sm:$0xf]
      %v181 = vld [vmem:[%s166 + $0x18] sm:$0xf]
      %v182 = vld [vmem:[%s166 + $0x1c] sm:$0xf]
      %v183 = vld [vmem:[%s166 + $0x20] sm:$0xf]
      %v184 = vld [vmem:[%s166 + $0x24] sm:$0xf]
      %v185 = vld [vmem:[%s166 + $0x28] sm:$0xf]
      %v186 = vld [vmem:[%s166 + $0x2c] sm:$0xf]
      %v187 = vld [vmem:[%s166 + $0x30] sm:$0xf]
      %v188 = vld [vmem:[%s166 + $0x34] sm:$0xf]
      %v189 = vld [vmem:[%s166 + $0x38] sm:$0xf]
      %v190 = vld [vmem:[%s166 + $0x3c] sm:$0xf]
      %v191 = vld [vmem:[%s166 + $0x40] sm:$0xf]
      %v192 = vld [vmem:[%s166 + $0x44] sm:$0xf]
      %v193 = vld [vmem:[%s166 + $0x48] sm:$0xf]
      %v194 = vld [vmem:[%s166 + $0x4c] sm:$0xf]
      %v195 = vld [vmem:[%s166 + $0x50] sm:$0xf]
      %v196 = vld [vmem:[%s166 + $0x54] sm:$0xf]
      %v197 = vld [vmem:[%s166 + $0x58] sm:$0xf]
      %v198 = vld [vmem:[%s166 + $0x5c] sm:$0xf]
      %v199 = vld [vmem:[%s166 + $0x60] sm:$0xf]
      %v200 = vld [vmem:[%s166 + $0x64] sm:$0xf]
      %v201 = vld [vmem:[%s166 + $0x68] sm:$0xf]
      %v202 = vld [vmem:[%s166 + $0x6c] sm:$0xf]
      %v203 = vld [vmem:[%s166 + $0x70] sm:$0xf]
      %v204 = vld [vmem:[%s166 + $0x74] sm:$0xf]
      %v205 = vld [vmem:[%s166 + $0x78] sm:$0xf]
      %v206 = vld [vmem:[%s166 + $0x7c] sm:$0xf]
      %v207 = vld [vmem:[%s1] sm:$0xf]
      %v208 = vld [vmem:[%s1 + $0x4] sm:$0xf]
      %v209 = vld [vmem:[%s1 + $0x8] sm:$0xf]
      %v210 = vld [vmem:[%s1 + $0xc] sm:$0xf]
      %v211 = vld [vmem:[%s1 + $0x10] sm:$0xf]
      %v212 = vld [vmem:[%s1 + $0x14] sm:$0xf]
      %v213 = vld [vmem:[%s1 + $0x18] sm:$0xf]
      %v214 = vld [vmem:[%s1 + $0x1c] sm:$0xf]
      %v215 = vld [vmem:[%s1 + $0x20] sm:$0xf]
      %v216 = vld [vmem:[%s2] sm:$0x1]
      %v218 = vlaneseq
      %v219 = vshrl.u32 %v218, 7
      %v220 = vsub.s32 0, %v219
      %v221 = vrot.slane %v216, %v220
      %v255 = vunpack.c.l.b16 %v175
      %v256 = vunpack.c.l.b16 %v176
      %v257 = vunpack.c.l.b16 %v177
      %v258 = vunpack.c.l.b16 %v178
      %v259 = vunpack.c.l.b16 %v179
      %v260 = vunpack.c.l.b16 %v180
      %v261 = vunpack.c.l.b16 %v181
      %v262 = vunpack.c.l.b16 %v182
      %v263 = vunpack.c.l.b16 %v183
      %v264 = vunpack.c.l.b16 %v184
      %v265 = vunpack.c.l.b16 %v185
      %v266 = vunpack.c.l.b16 %v186
      %v267 = vunpack.c.l.b16 %v187
      %v268 = vunpack.c.l.b16 %v188
      %v269 = vunpack.c.l.b16 %v189
      %v270 = vunpack.c.l.b16 %v190
      %v271 = vunpack.c.l.b16 %v191
      %v272 = vunpack.c.l.b16 %v192
      %v273 = vunpack.c.l.b16 %v193
      %v274 = vunpack.c.l.b16 %v194
      %v275 = vunpack.c.l.b16 %v195
      %v276 = vunpack.c.l.b16 %v196
      %v277 = vunpack.c.l.b16 %v197
      %v278 = vunpack.c.l.b16 %v198
      %v279 = vunpack.c.l.b16 %v199
      %v280 = vunpack.c.l.b16 %v200
      %v281 = vunpack.c.l.b16 %v201
      %v282 = vunpack.c.l.b16 %v202
      %v283 = vunpack.c.l.b16 %v203
      %v284 = vunpack.c.l.b16 %v204
      %v285 = vunpack.c.l.b16 %v205
      %v286 = vunpack.c.l.b16 %v206
      %v287 = vpack.c.b16 %v256, %v255
      %v288 = vpack.c.b16 %v258, %v257
      %v289 = vpack.c.b16 %v260, %v259
      %v290 = vpack.c.b16 %v262, %v261
      %v291 = vpack.c.b16 %v264, %v263
      %v292 = vpack.c.b16 %v266, %v265
      %v293 = vpack.c.b16 %v268, %v267
      %v294 = vpack.c.b16 %v270, %v269
      %v295 = vpack.c.b16 %v272, %v271
      %v296 = vpack.c.b16 %v274, %v273
      %v297 = vpack.c.b16 %v276, %v275
      %v298 = vpack.c.b16 %v278, %v277
      %v299 = vpack.c.b16 %v280, %v279
      %v300 = vpack.c.b16 %v282, %v281
      %v301 = vpack.c.b16 %v284, %v283
      %v302 = vpack.c.b16 %v286, %v285
      %v312 = vunpack.c.l.b16 %v207
      %v313 = vunpack.c.l.b16 %v208
      %v314 = vunpack.c.l.b16 %v209
      %v315 = vunpack.c.l.b16 %v210
      %v316 = vunpack.c.l.b16 %v211
      %v317 = vunpack.c.l.b16 %v212
      %v318 = vunpack.c.l.b16 %v213
      %v319 = vunpack.c.l.b16 %v214
      %v320 = vunpack.c.l.b16 %v215
      %v321 = vpack.c.b16 %v313, %v312
      %v322 = vpack.c.b16 %v315, %v314
      %v323 = vpack.c.b16 %v317, %v316
      %v324 = vpack.c.b16 %v319, %v318
      %v325 = vpack.c.b16 %v320, %v320
      %vm330 = vcmask 588800
      %v332 = vsel %vm330, %v287, 0
      %v335 = vsel %vm330, %v288, 0
      %v338 = vsel %vm330, %v289, 0
      %v341 = vsel %vm330, %v290, 0
      %v344 = vsel %vm330, %v291, 0
      %v347 = vsel %vm330, %v292, 0
      %v350 = vsel %vm330, %v293, 0
      %v353 = vsel %vm330, %v294, 0
      %v356 = vsel %vm330, %v295, 0
      %v359 = vsel %vm330, %v296, 0
      %v362 = vsel %vm330, %v297, 0
      %v365 = vsel %vm330, %v298, 0
      %v368 = vsel %vm330, %v299, 0
      %v371 = vsel %vm330, %v300, 0
      %v374 = vsel %vm330, %v301, 0
      %v377 = vsel %vm330, %v302, 0
      %vm379 = vcmask 1043456
      %v381 = vsel %vm379, %v325, 0
      %383 = vmatprep.subr.bf16.mxu0 0
      %384 = vmatpush1.bf16.msra.mxu0 %v321
      %385 = vmatprep.subr.bf16.mxu0 0
      %386 = vmatpush1.bf16.msra.mxu0 %v322
      %387 = vmatprep.subr.bf16.mxu0 0
      %388 = vmatpush1.bf16.msra.mxu0 %v323
      %389 = vmatprep.subr.bf16.mxu0 0
      %390 = vmatpush1.bf16.msra.mxu0 %v324
      %391 = vmatprep.subr.bf16.mxu0 0
      %392 = vmatpush1.bf16.msra.mxu0 %v381
      %393 = vmatprep.subr.bf16.mxu0 0
      %394 = vmatpush1.bf16.msra.mxu0 0
      %395 = vmatprep.subr.bf16.mxu0 0
      %396 = vmatpush1.bf16.msra.mxu0 0
      %397 = vmatprep.subr.bf16.mxu0 0
      %398 = vmatpush1.bf16.msra.mxu0 0
      %399 = vmatprep.subr.bf16.mxu0 0
      %400 = vmatpush1.bf16.msra.mxu0 0
      %401 = vmatprep.subr.bf16.mxu0 0
      %402 = vmatpush1.bf16.msra.mxu0 0
      %403 = vmatprep.subr.bf16.mxu0 0
      %404 = vmatpush1.bf16.msra.mxu0 0
      %405 = vmatprep.subr.bf16.mxu0 0
      %406 = vmatpush1.bf16.msra.mxu0 0
      %407 = vmatprep.subr.bf16.mxu0 0
      %408 = vmatpush1.bf16.msra.mxu0 0
      %409 = vmatprep.subr.bf16.mxu0 0
      %410 = vmatpush1.bf16.msra.mxu0 0
      %411 = vmatprep.subr.bf16.mxu0 0
      %412 = vmatpush1.bf16.msra.mxu0 0
      %413 = vmatprep.subr.bf16.mxu0 0
      %414 = vmatpush1.bf16.msra.mxu0 0
      %415 = vmatprep.mubr.bf16.mxu0 0
      %416 = vmatmul.mubr.bf16.gmra.mrb[0].mxu0 %v332
      %v417 = vpop.f32.mrb[0].mxu0
      %v418 = vadd.f32 %v221, %v417
      %v419 = vpop.f32.mrb[0].mxu0
      %v420 = vpop.f32.mrb[0].mxu0
      %v421 = vadd.f32 %v221, %v420
      %v422 = vpop.f32.mrb[0].mxu0
      %423 = vmatprep.mubr.bf16.mxu0 0
      %424 = vmatmul.mubr.bf16.gmra.mrb[0].mxu0 %v335
      %v425 = vpop.f32.mrb[0].mxu0
      %v426 = vadd.f32 %v221, %v425
      %v427 = vpop.f32.mrb[0].mxu0
      %v428 = vpop.f32.mrb[0].mxu0
      %v429 = vadd.f32 %v221, %v428
      %v430 = vpop.f32.mrb[0].mxu0
      %431 = vmatprep.mubr.bf16.mxu0 0
      %432 = vmatmul.mubr.bf16.gmra.mrb[0].mxu0 %v338
      %v433 = vpop.f32.mrb[0].mxu0
      %v434 = vadd.f32 %v221, %v433
      %v435 = vpop.f32.mrb[0].mxu0
      %v436 = vpop.f32.mrb[0].mxu0
      %v437 = vadd.f32 %v221, %v436
      %v438 = vpop.f32.mrb[0].mxu0
      %439 = vmatprep.mubr.bf16.mxu0 0
      %440 = vmatmul.mubr.bf16.gmra.mrb[0].mxu0 %v341
      %v441 = vpop.f32.mrb[0].mxu0
      %v442 = vadd.f32 %v221, %v441
      %v443 = vpop.f32.mrb[0].mxu0
      %v444 = vpop.f32.mrb[0].mxu0
      %v445 = vadd.f32 %v221, %v444
      %v446 = vpop.f32.mrb[0].mxu0
      %447 = vmatprep.mubr.bf16.mxu0 0
      %448 = vmatmul.mubr.bf16.gmra.mrb[0].mxu0 %v344
      %v449 = vpop.f32.mrb[0].mxu0
      %v450 = vadd.f32 %v221, %v449
      %v451 = vpop.f32.mrb[0].mxu0
      %v452 = vpop.f32.mrb[0].mxu0
      %v453 = vadd.f32 %v221, %v452
      %v454 = vpop.f32.mrb[0].mxu0
      %455 = vmatprep.mubr.bf16.mxu0 0
      %456 = vmatmul.mubr.bf16.gmra.mrb[0].mxu0 %v347
      %v457 = vpop.f32.mrb[0].mxu0
      %v458 = vadd.f32 %v221, %v457
      %v459 = vpop.f32.mrb[0].mxu0
      %v460 = vpop.f32.mrb[0].mxu0
      %v461 = vadd.f32 %v221, %v460
      %v462 = vpop.f32.mrb[0].mxu0
      %463 = vmatprep.mubr.bf16.mxu0 0
      %464 = vmatmul.mubr.bf16.gmra.mrb[0].mxu0 %v350
      %v465 = vpop.f32.mrb[0].mxu0
      %v466 = vadd.f32 %v221, %v465
      %v467 = vpop.f32.mrb[0].mxu0
      %v468 = vpop.f32.mrb[0].mxu0
      %v469 = vadd.f32 %v221, %v468
      %v470 = vpop.f32.mrb[0].mxu0
      %471 = vmatprep.mubr.bf16.mxu0 0
      %472 = vmatmul.mubr.bf16.gmra.mrb[0].mxu0 %v353
      %v473 = vpop.f32.mrb[0].mxu0
      %v474 = vadd.f32 %v221, %v473
      %v475 = vpop.f32.mrb[0].mxu0
      %v476 = vpop.f32.mrb[0].mxu0
      %v477 = vadd.f32 %v221, %v476
      %v478 = vpop.f32.mrb[0].mxu0
      %479 = vmatprep.mubr.bf16.mxu0 0
      %480 = vmatmul.mubr.bf16.gmra.mrb[0].mxu0 %v356
      %v481 = vpop.f32.mrb[0].mxu0
      %v482 = vadd.f32 %v221, %v481
      %v483 = vpop.f32.mrb[0].mxu0
      %v484 = vpop.f32.mrb[0].mxu0
      %v485 = vadd.f32 %v221, %v484
      %v486 = vpop.f32.mrb[0].mxu0
      %487 = vmatprep.mubr.bf16.mxu0 0
      %488 = vmatmul.mubr.bf16.gmra.mrb[0].mxu0 %v359
      %v489 = vpop.f32.mrb[0].mxu0
      %v490 = vadd.f32 %v221, %v489
      %v491 = vpop.f32.mrb[0].mxu0
      %v492 = vpop.f32.mrb[0].mxu0
      %v493 = vadd.f32 %v221, %v492
      %v494 = vpop.f32.mrb[0].mxu0
      %495 = vmatprep.mubr.bf16.mxu0 0
      %496 = vmatmul.mubr.bf16.gmra.mrb[0].mxu0 %v362
      %v497 = vpop.f32.mrb[0].mxu0
      %v498 = vadd.f32 %v221, %v497
      %v499 = vpop.f32.mrb[0].mxu0
      %v500 = vpop.f32.mrb[0].mxu0
      %v501 = vadd.f32 %v221, %v500
      %v502 = vpop.f32.mrb[0].mxu0
      %503 = vmatprep.mubr.bf16.mxu0 0
      %504 = vmatmul.mubr.bf16.gmra.mrb[0].mxu0 %v365
      %v505 = vpop.f32.mrb[0].mxu0
      %v506 = vadd.f32 %v221, %v505
      %v507 = vpop.f32.mrb[0].mxu0
      %v508 = vpop.f32.mrb[0].mxu0
      %v509 = vadd.f32 %v221, %v508
      %v510 = vpop.f32.mrb[0].mxu0
      %511 = vmatprep.mubr.bf16.mxu0 0
      %512 = vmatmul.mubr.bf16.gmra.mrb[0].mxu0 %v368
      %v513 = vpop.f32.mrb[0].mxu0
      %v514 = vadd.f32 %v221, %v513
      %v515 = vpop.f32.mrb[0].mxu0
      %v516 = vpop.f32.mrb[0].mxu0
      %v517 = vadd.f32 %v221, %v516
      %v518 = vpop.f32.mrb[0].mxu0
      %519 = vmatprep.mubr.bf16.mxu0 0
      %520 = vmatmul.mubr.bf16.gmra.mrb[0].mxu0 %v371
      %v521 = vpop.f32.mrb[0].mxu0
      %v522 = vadd.f32 %v221, %v521
      %v523 = vpop.f32.mrb[0].mxu0
      %v524 = vpop.f32.mrb[0].mxu0
      %v525 = vadd.f32 %v221, %v524
      %v526 = vpop.f32.mrb[0].mxu0
      %527 = vmatprep.mubr.bf16.mxu0 0
      %528 = vmatmul.mubr.bf16.gmra.mrb[0].mxu0 %v374
      %v529 = vpop.f32.mrb[0].mxu0
      %v530 = vadd.f32 %v221, %v529
      %v531 = vpop.f32.mrb[0].mxu0
      %v532 = vpop.f32.mrb[0].mxu0
      %v533 = vadd.f32 %v221, %v532
      %v534 = vpop.f32.mrb[0].mxu0
      %535 = vmatprep.mubr.bf16.mxu0 0
      %536 = vmatmul.mubr.bf16.gmra.mrb[0].mxu0 %v377
      %v537 = vpop.f32.mrb[0].mxu0
      %v538 = vadd.f32 %v221, %v537
      %v539 = vpop.f32.mrb[0].mxu0
      %v540 = vpop.f32.mrb[0].mxu0
      %v541 = vadd.f32 %v221, %v540
      %v542 = vpop.f32.mrb[0].mxu0
      %543 = vdwg.mxu0
      %vm544 = vcmask 523264
      %545 = vst.msk [vmem:[%s172] sm:$0xff] %vm544, %v418
      %546 = vst.msk [vmem:[%s172 + $0x8] sm:$0xff] %vm544, %v421
      %547 = vst.msk [vmem:[%s172 + $0x10] sm:$0xff] %vm544, %v426
      %548 = vst.msk [vmem:[%s172 + $0x18] sm:$0xff] %vm544, %v429
      %549 = vst.msk [vmem:[%s172 + $0x20] sm:$0xff] %vm544, %v434
      %550 = vst.msk [vmem:[%s172 + $0x28] sm:$0xff] %vm544, %v437
      %551 = vst.msk [vmem:[%s172 + $0x30] sm:$0xff] %vm544, %v442
      %552 = vst.msk [vmem:[%s172 + $0x38] sm:$0xff] %vm544, %v445
      %553 = vst.msk [vmem:[%s172 + $0x40] sm:$0xff] %vm544, %v450
      %554 = vst.msk [vmem:[%s172 + $0x48] sm:$0xff] %vm544, %v453
      %555 = vst.msk [vmem:[%s172 + $0x50] sm:$0xff] %vm544, %v458
      %556 = vst.msk [vmem:[%s172 + $0x58] sm:$0xff] %vm544, %v461
      %557 = vst.msk [vmem:[%s172 + $0x60] sm:$0xff] %vm544, %v466
      %558 = vst.msk [vmem:[%s172 + $0x68] sm:$0xff] %vm544, %v469
      %559 = vst.msk [vmem:[%s172 + $0x70] sm:$0xff] %vm544, %v474
      %560 = vst.msk [vmem:[%s172 + $0x78] sm:$0xff] %vm544, %v477
      %561 = vst.msk [vmem:[%s172 + $0x80] sm:$0xff] %vm544, %v482
      %562 = vst.msk [vmem:[%s172 + $0x88] sm:$0xff] %vm544, %v485
      %563 = vst.msk [vmem:[%s172 + $0x90] sm:$0xff] %vm544, %v490
      %564 = vst.msk [vmem:[%s172 + $0x98] sm:$0xff] %vm544, %v493
      %565 = vst.msk [vmem:[%s172 + $0xa0] sm:$0xff] %vm544, %v498
      %566 = vst.msk [vmem:[%s172 + $0xa8] sm:$0xff] %vm544, %v501
      %567 = vst.msk [vmem:[%s172 + $0xb0] sm:$0xff] %vm544, %v506
      %568 = vst.msk [vmem:[%s172 + $0xb8] sm:$0xff] %vm544, %v509
      %569 = vst.msk [vmem:[%s172 + $0xc0] sm:$0xff] %vm544, %v514
      %570 = vst.msk [vmem:[%s172 + $0xc8] sm:$0xff] %vm544, %v517
      %571 = vst.msk [vmem:[%s172 + $0xd0] sm:$0xff] %vm544, %v522
      %572 = vst.msk [vmem:[%s172 + $0xd8] sm:$0xff] %vm544, %v525
      %573 = vst.msk [vmem:[%s172 + $0xe0] sm:$0xff] %vm544, %v530
      %574 = vst.msk [vmem:[%s172 + $0xe8] sm:$0xff] %vm544, %v533
      %575 = vst.msk [vmem:[%s172 + $0xf0] sm:$0xff] %vm544, %v538
      %576 = vst.msk [vmem:[%s172 + $0xf8] sm:$0xff] %vm544, %v541
      %s577 = smul.u32 32, %s14
      %p578 = scmp.lt.s32.totalorder %s577, 63
      %s579 = scalar_select %p578, %s577, 63
      %s580 = smul.addr %s579, 8
      %s581 = scalar_lea.vmem %s3, %s580
      // Predicated region
      $region33: #{encoder_forward.7} parent=31 // pred_check
        %p582 = pneg %p100
      $region34: #{encoder_forward.7} parent=31 // pred_check_branch
        %584 = sbr.rel (%p582) target = $region36
      $region35: #{encoder_forward.7} parent=31 // pred_region
        %s585 = smul.u32 32, %s14
      $region36: #{encoder_forward.7} parent=31 // pred_fallthru
        _
    $region32: #{encoder_forward.7} parent=5 // pred_fallthru
      _
    %p586 = scmp.le.s32.totalorder 2, %s9
    // Predicated region
    $region37: #{encoder_forward.7} parent=5 // pred_check
      %p587 = pneg %p586
    $region38: #{encoder_forward.7} parent=5 // pred_check_branch
      %589 = sbr.rel (%p587) target = $region40
    $region39: #{encoder_forward.7} parent=5 // pred_region
      %s590 = ssub.s32 %s9, 2
      // Predicated region
      $region41: #{encoder_forward.7} parent=39 // pred_check
        %p591 = pneg %p106
      $region42: #{encoder_forward.7} parent=39 // pred_check_branch
        %593 = sbr.rel (%p591) target = $region44
      $region43: #{encoder_forward.7} parent=39 // pred_region
        %s594 = smul.u32 32, %s15
        %p595 = scmp.lt.s32.totalorder %s594, 63
        %s596 = scalar_select %p595, %s594, 63
        %s597 = smul.addr %s596, 8
        %s598 = scalar_lea.vmem %s3, %s597
      $region44: #{encoder_forward.7} parent=39 // pred_fallthru
        _
    $region40: #{encoder_forward.7} parent=5 // pred_fallthru
      _
  $region6: #{encoder_forward.7} parent=0 // loop_footer
    %s13 = sadd.s32 1, %s9
  $region7: #{encoder_forward.7} parent=0 // loop_footer_branch
    %8 = sbr.rel target = $region3
  $region8: #{encoder_forward.7} parent=0 // loop_exit
    _

// kernel: encoder_forward.8
$region0: #{encoder_forward.8}
  #allocation0 [shape = 'u32[]', space=smem, size = 0x4, offset = 0x4, fixed_abs, tag = 'smem constant byte address 0x4 - core index']
  #allocation1 [shape = 'u32[144,128]{1,0:T(1,128)}', space=vmem, size = 0x12000, scoped, tag = 'internal scratch']
  #allocation2 [shape = 'f32[2,10,10,16]{3,2,1,0:T(8,128)}', space=vmem, size = 0x28000, scoped, tag = 'scratch operand']
  %s0 = inlined_call_operand.vmem [shape: f32[4,128,64], index: 0, kind: input, shape index: {}]
  %s1 = inlined_call_operand.vmem [shape: bf16[9,16,64], index: 1, kind: input, shape index: {}]
  %s2 = inlined_call_operand.vmem [shape: f32[4,128,16], index: 2, kind: output, shape index: {0}]
  %s3 = inlined_call_operand.hbm [shape: f32[128,16], index: 3, kind: output, shape index: {1}]
  %4 = xla_tuple %s2, %s3
  %s5 = sld [smem:[#allocation0]]
  $region53: #{encoder_forward.8} parent=0
    _
  %s7 = ssub.s32 1, %s5
  %s8 = scalar_select 0, %s7, %s5
  $region1: #{encoder_forward.8} parent=0
    #allocation3 [shape = 'u8[65536]{0}', space=vmem, size = 0x10000, scoped, tag = 'output window, operand 1, single buffered']
    #allocation4 [shape = 's32[2]{0}', space=sflag, size = 0x8, scoped, tag = 'scoped memory for encoder_forward.8']
    %9 = vsyncpa [#allocation4], 0
    loop: start=0, step=1, limit=6
    $region2: #{encoder_forward.8} parent=1 // loop_pre_header
      _
    $region3: #{encoder_forward.8} parent=1 // loop_header
      %s11 = sphi 0, %s15
      %p12 = scmp.ge.s32.totalorder %s11, 6
      %s21 = sphi 0, %s23
      %s24 = sphi 0, %s21
      %s25 = sphi 0, %s24
      %s41 = sphi 0, %s25
      %s45 = sphi 0, %s45
      %s47 = sphi 0, %s45
      %s48 = sphi 0, %s47
      %s62 = sphi 0, %s48
      %s68 = sphi 0, %s70
      %s71 = sphi 0, %s68
      %s72 = sphi 0, %s71
      %s88 = sphi 0, %s72
      %s92 = sphi 0, %s92
      %s94 = sphi 0, %s92
      %s95 = sphi 0, %s94
      %s109 = sphi 0, %s95
    $region4: #{encoder_forward.8} parent=1 // loop_header_branch
      %14 = sbr.rel (%p12) target = $region8
    $region5: #{encoder_forward.8} parent=1 // loop_body
      %s16 = ssub.s32 %s11, 1
      %s17 = ssub.s32 %s11, 2
      %s18 = sadd.s32 %s11, 1
      %s19 = ssub.s32 %s11, %s18
      %p20 = scmp.eq.s32.totalorder %s19, 0
      %s22 = sadd.s32 %s21, 1
      %s23 = scalar_select %p20, %s21, %s22
      %p26 = pneg %p20
      %p27 = scmp.eq.s32.totalorder %s11, 3
      %p28 = por %p26, %p27
      %p29 = scmp.ne.s32.totalorder %s21, %s24
      %p30 = scmp.eq.s32.totalorder %s11, 0
      %p31 = por %p29, %p30
      %p32 = scmp.ne.s32.totalorder %s21, %s24
      %p33 = scmp.eq.s32.totalorder %s16, 3
      %p34 = por %p32, %p33
      %p35 = scmp.ne.s32.totalorder %s24, %s25
      %p36 = scmp.eq.s32.totalorder %s16, 0
      %p37 = por %p35, %p36
      %p38 = scmp.ne.s32.totalorder %s24, %s25
      %p39 = scmp.eq.s32.totalorder %s17, 3
      %p40 = por %p38, %p39
      %p42 = scmp.ne.s32.totalorder %s25, %s41
      %p43 = scmp.eq.s32.totalorder %s17, 0
      %p44 = por %p42, %p43
      %s46 = sadd.s32 %s45, 1
      %p49 = scmp.eq.s32.totalorder %s11, 3
      %p50 = scmp.ne.s32.totalorder %s45, %s47
      %p51 = scmp.eq.s32.totalorder %s11, 0
      %p52 = por %p50, %p51
      %p53 = scmp.ne.s32.totalorder %s45, %s47
      %p54 = scmp.eq.s32.totalorder %s16, 3
      %p55 = por %p53, %p54
      %p56 = scmp.ne.s32.totalorder %s47, %s48
      %p57 = scmp.eq.s32.totalorder %s16, 0
      %p58 = por %p56, %p57
      %p59 = scmp.ne.s32.totalorder %s47, %s48
      %p60 = scmp.eq.s32.totalorder %s17, 3
      %p61 = por %p59, %p60
      %p63 = scmp.ne.s32.totalorder %s48, %s62
      %p64 = scmp.eq.s32.totalorder %s17, 0
      %p65 = por %p63, %p64
      %s66 = ssub.s32 %s11, %s18
      %p67 = scmp.eq.s32.totalorder %s66, 0
      %s69 = sadd.s32 %s68, 1
      %s70 = scalar_select %p67, %s68, %s69
      %p73 = pneg %p67
      %p74 = scmp.eq.s32.totalorder %s11, 3
      %p75 = por %p73, %p74
      %p76 = scmp.ne.s32.totalorder %s68, %s71
      %p77 = scmp.eq.s32.totalorder %s11, 0
      %p78 = por %p76, %p77
      %p79 = scmp.ne.s32.totalorder %s68, %s71
      %p80 = scmp.eq.s32.totalorder %s16, 3
      %p81 = por %p79, %p80
      %p82 = scmp.ne.s32.totalorder %s71, %s72
      %p83 = scmp.eq.s32.totalorder %s16, 0
      %p84 = por %p82, %p83
      %p85 = scmp.ne.s32.totalorder %s71, %s72
      %p86 = scmp.eq.s32.totalorder %s17, 3
      %p87 = por %p85, %p86
      %p89 = scmp.ne.s32.totalorder %s72, %s88
      %p90 = scmp.eq.s32.totalorder %s17, 0
      %p91 = por %p89, %p90
      %s93 = sadd.s32 %s92, 1
      %p96 = scmp.eq.s32.totalorder %s11, 3
      %p97 = scmp.ne.s32.totalorder %s92, %s94
      %p98 = scmp.eq.s32.totalorder %s11, 0
      %p99 = por %p97, %p98
      %p100 = scmp.ne.s32.totalorder %s92, %s94
      %p101 = scmp.eq.s32.totalorder %s16, 3
      %p102 = por %p100, %p101
      %p103 = scmp.ne.s32.totalorder %s94, %s95
      %p104 = scmp.eq.s32.totalorder %s16, 0
      %p105 = por %p103, %p104
      %p106 = scmp.ne.s32.totalorder %s94, %s95
      %p107 = scmp.eq.s32.totalorder %s17, 3
      %p108 = por %p106, %p107
      %p110 = scmp.ne.s32.totalorder %s95, %s109
      %p111 = scmp.eq.s32.totalorder %s17, 0
      %p112 = por %p110, %p111
      %p113 = scmp.le.s32.totalorder 1, %s11
      %p114 = scmp.lt.s32.totalorder %s11, 5
      %p115 = pnand %p113, %p114
      %p116 = pneg %p115
      // Predicated region
      $region9: #{encoder_forward.8} parent=5 // pred_check
        _
      $region10: #{encoder_forward.8} parent=5 // pred_check_branch
        %118 = sbr.rel (%p115) target = $region12
      $region11: #{encoder_forward.8} parent=5 // pred_region
        %s119 = ssub.s32 %s11, 1
        // Predicated region
        $region13: #{encoder_forward.8} parent=11 // pred_check
          %p120 = pneg %p58
        $region14: #{encoder_forward.8} parent=11 // pred_check_branch
          %122 = sbr.rel (%p120) target = $region16
        $region15: #{encoder_forward.8} parent=11 // pred_region
          _
        $region16: #{encoder_forward.8} parent=11 // pred_fallthru
          _
      $region12: #{encoder_forward.8} parent=5 // pred_fallthru
        _
      %p123 = scmp.lt.s32.totalorder %s11, 4
      // Predicated region
      $region17: #{encoder_forward.8} parent=5 // pred_check
        %p124 = pneg %p123
      $region18: #{encoder_forward.8} parent=5 // pred_check_branch
        %126 = sbr.rel (%p124) target = $region20
      $region19: #{encoder_forward.8} parent=5 // pred_region
        // Predicated region
        $region21: #{encoder_forward.8} parent=19 // pred_check
          %p127 = pneg %p31
        $region22: #{encoder_forward.8} parent=19 // pred_check_branch
          %129 = sbr.rel (%p127) target = $region24
        $region23: #{encoder_forward.8} parent=19 // pred_region
          %p130 = scmp.lt.s32.totalorder %s11, 3
          %s131 = scalar_select %p130, %s11, 3
          %s132 = smul.addr %s131, 16
          %s133 = smul.addr %s132, 8
          %s134 = scalar_lea.vmem %s0, %s133
        $region24: #{encoder_forward.8} parent=19 // pred_fallthru
          _
      $region20: #{encoder_forward.8} parent=5 // pred_fallthru
        _
      %p135 = scmp.le.s32.totalorder 1, %s11
      %p136 = scmp.lt.s32.totalorder %s11, 5
      %p137 = pnand %p135, %p136
      %p138 = pneg %p137
      // Predicated region
      $region25: #{encoder_forward.8} parent=5 // pred_check
        _
      $region26: #{encoder_forward.8} parent=5 // pred_check_branch
        %140 = sbr.rel (%p137) target = $region28
      $region27: #{encoder_forward.8} parent=5 // pred_region
        %s141 = ssub.s32 %s11, 1
        %p142 = scmp.lt.s32.totalorder %s16, 3
        %s143 = scalar_select %p142, %s16, 3
        %s144 = smul.addr %s143, 16
        %s145 = smul.addr %s144, 8
        %s146 = scalar_lea.vmem %s0, %s145
        %p147 = pneg %p37
        %p148 = pneg %p34
        %p149 = pneg %p58
        %p150 = pneg %p55
        %p151 = pneg %p84
        %p152 = pneg %p81
        %p153 = scmp.lt.s32.totalorder %s16, 3
        %s154 = scalar_select %p153, %s16, 3
        %s155 = smul.addr %s154, 16
        %s156 = smul.addr %s155, 8
        %s157 = scalar_lea.vmem %s2, %s156
        %p158 = pneg %p105
        %p159 = pneg %p102
        %p160 = scmp.lt.s32.totalorder %s16, 3
        %s161 = scalar_select %p160, %s16, 3
        %s162 = smul.addr %s161, 16
        %s163 = smul.addr %s162, 8
        %s164 = scalar_lea.vmem %s0, %s163
        %p165 = scmp.lt.s32.totalorder %s16, 3
        %s166 = scalar_select %p165, %s16, 3
        %s167 = smul.addr %s166, 16
        %s168 = smul.addr %s167, 8
        %s169 = scalar_lea.vmem %s2, %s168
        %p171 = scmp.eq.s32.totalorder %s16, 0
        // Predicated region
        $region29: #{encoder_forward.8} parent=27 // pred_check
          %p172 = pneg %p171
        $region30: #{encoder_forward.8} parent=27 // pred_check_branch
          %174 = sbr.rel (%p172) target = $region32
        $region31: #{encoder_forward.8} parent=27 // pred_region
          %vm175 = vcmask 130048
          %176 = vst.msk [vmem:[#allocation2] sm:$0xff] %vm175, 0.0
          %vm177 = vcmask 123904
          %178 = vst.msk [vmem:[#allocation2 + $0x8] sm:$0x3] %vm177, 0.0
          %179 = vst.msk [vmem:[#allocation2 + $0x10] sm:$0xff] %vm175, 0.0
          %180 = vst.msk [vmem:[#allocation2 + $0x18] sm:$0x3] %vm177, 0.0
          %181 = vst.msk [vmem:[#allocation2 + $0x20] sm:$0xff] %vm175, 0.0
          %182 = vst.msk [vmem:[#allocation2 + $0x28] sm:$0x3] %vm177, 0.0
          %183 = vst.msk [vmem:[#allocation2 + $0x30] sm:$0xff] %vm175, 0.0
          %184 = vst.msk [vmem:[#allocation2 + $0x38] sm:$0x3] %vm177, 0.0
          %185 = vst.msk [vmem:[#allocation2 + $0x40] sm:$0xff] %vm175, 0.0
          %186 = vst.msk [vmem:[#allocation2 + $0x48] sm:$0x3] %vm177, 0.0
          %187 = vst.msk [vmem:[#allocation2 + $0x50] sm:$0xff] %vm175, 0.0
          %188 = vst.msk [vmem:[#allocation2 + $0x58] sm:$0x3] %vm177, 0.0
          %189 = vst.msk [vmem:[#allocation2 + $0x60] sm:$0xff] %vm175, 0.0
          %190 = vst.msk [vmem:[#allocation2 + $0x68] sm:$0x3] %vm177, 0.0
          %191 = vst.msk [vmem:[#allocation2 + $0x70] sm:$0xff] %vm175, 0.0
          %192 = vst.msk [vmem:[#allocation2 + $0x78] sm:$0x3] %vm177, 0.0
          %193 = vst.msk [vmem:[#allocation2 + $0x80] sm:$0xff] %vm175, 0.0
          %194 = vst.msk [vmem:[#allocation2 + $0x88] sm:$0x3] %vm177, 0.0
          %195 = vst.msk [vmem:[#allocation2 + $0x90] sm:$0xff] %vm175, 0.0
          %196 = vst.msk [vmem:[#allocation2 + $0x98] sm:$0x3] %vm177, 0.0
          %197 = vst.msk [vmem:[#allocation2 + $0xa0] sm:$0xff] %vm175, 0.0
          %198 = vst.msk [vmem:[#allocation2 + $0xa8] sm:$0x3] %vm177, 0.0
          %199 = vst.msk [vmem:[#allocation2 + $0xb0] sm:$0xff] %vm175, 0.0
          %200 = vst.msk [vmem:[#allocation2 + $0xb8] sm:$0x3] %vm177, 0.0
          %201 = vst.msk [vmem:[#allocation2 + $0xc0] sm:$0xff] %vm175, 0.0
          %202 = vst.msk [vmem:[#allocation2 + $0xc8] sm:$0x3] %vm177, 0.0
          %203 = vst.msk [vmem:[#allocation2 + $0xd0] sm:$0xff] %vm175, 0.0
          %204 = vst.msk [vmem:[#allocation2 + $0xd8] sm:$0x3] %vm177, 0.0
          %205 = vst.msk [vmem:[#allocation2 + $0xe0] sm:$0xff] %vm175, 0.0
          %206 = vst.msk [vmem:[#allocation2 + $0xe8] sm:$0x3] %vm177, 0.0
          %207 = vst.msk [vmem:[#allocation2 + $0xf0] sm:$0xff] %vm175, 0.0
          %208 = vst.msk [vmem:[#allocation2 + $0xf8] sm:$0x3] %vm177, 0.0
          %209 = vst.msk [vmem:[#allocation2 + $0x100] sm:$0xff] %vm175, 0.0
          %210 = vst.msk [vmem:[#allocation2 + $0x108] sm:$0x3] %vm177, 0.0
          %211 = vst.msk [vmem:[#allocation2 + $0x110] sm:$0xff] %vm175, 0.0
          %212 = vst.msk [vmem:[#allocation2 + $0x118] sm:$0x3] %vm177, 0.0
          %213 = vst.msk [vmem:[#allocation2 + $0x120] sm:$0xff] %vm175, 0.0
          %214 = vst.msk [vmem:[#allocation2 + $0x128] sm:$0x3] %vm177, 0.0
          %215 = vst.msk [vmem:[#allocation2 + $0x130] sm:$0xff] %vm175, 0.0
          %216 = vst.msk [vmem:[#allocation2 + $0x138] sm:$0x3] %vm177, 0.0
          %217 = vst.msk [vmem:[#allocation3] sm:$0xff] %vm175, 0.0
          %218 = vst.msk [vmem:[#allocation3 + $0x8] sm:$0xff] %vm175, 0.0
          %219 = vst.msk [vmem:[#allocation3 + $0x10] sm:$0xff] %vm175, 0.0
          %220 = vst.msk [vmem:[#allocation3 + $0x18] sm:$0xff] %vm175, 0.0
          %221 = vst.msk [vmem:[#allocation3 + $0x20] sm:$0xff] %vm175, 0.0
          %222 = vst.msk [vmem:[#allocation3 + $0x28] sm:$0xff] %vm175, 0.0
          %223 = vst.msk [vmem:[#allocation3 + $0x30] sm:$0xff] %vm175, 0.0
          %224 = vst.msk [vmem:[#allocation3 + $0x38] sm:$0xff] %vm175, 0.0
          %225 = vst.msk [vmem:[#allocation3 + $0x40] sm:$0xff] %vm175, 0.0
          %226 = vst.msk [vmem:[#allocation3 + $0x48] sm:$0xff] %vm175, 0.0
          %227 = vst.msk [vmem:[#allocation3 + $0x50] sm:$0xff] %vm175, 0.0
          %228 = vst.msk [vmem:[#allocation3 + $0x58] sm:$0xff] %vm175, 0.0
          %229 = vst.msk [vmem:[#allocation3 + $0x60] sm:$0xff] %vm175, 0.0
          %230 = vst.msk [vmem:[#allocation3 + $0x68] sm:$0xff] %vm175, 0.0
          %231 = vst.msk [vmem:[#allocation3 + $0x70] sm:$0xff] %vm175, 0.0
          %232 = vst.msk [vmem:[#allocation3 + $0x78] sm:$0xff] %vm175, 0.0
        $region32: #{encoder_forward.8} parent=27 // pred_fallthru
          _
        %v233 = vld [vmem:[%s164] sm:$0xff]
        %v234 = vld [vmem:[%s164 + $0x8] sm:$0xff]
        %v235 = vld [vmem:[%s164 + $0x10] sm:$0xff]
        %v236 = vld [vmem:[%s164 + $0x18] sm:$0xff]
        %v237 = vld [vmem:[%s164 + $0x20] sm:$0xff]
        %v238 = vld [vmem:[%s164 + $0x28] sm:$0xff]
        %v239 = vld [vmem:[%s164 + $0x30] sm:$0xff]
        %v240 = vld [vmem:[%s164 + $0x38] sm:$0xff]
        %v241 = vld [vmem:[%s164 + $0x40] sm:$0xff]
        %v242 = vld [vmem:[%s164 + $0x48] sm:$0xff]
        %v243 = vld [vmem:[%s164 + $0x50] sm:$0xff]
        %v244 = vld [vmem:[%s164 + $0x58] sm:$0xff]
        %v245 = vld [vmem:[%s164 + $0x60] sm:$0xff]
        %v246 = vld [vmem:[%s164 + $0x68] sm:$0xff]
        %v247 = vld [vmem:[%s164 + $0x70] sm:$0xff]
        %v248 = vld [vmem:[%s164 + $0x78] sm:$0xff]
        %v249 = vld [vmem:[#allocation2] sm:$0xff]
        %v250 = vld [vmem:[#allocation2 + $0x10] sm:$0xff]
        %v251 = vld [vmem:[#allocation2 + $0x20] sm:$0xff]
        %v252 = vld [vmem:[#allocation2 + $0x30] sm:$0xff]
        %v253 = vld [vmem:[#allocation2 + $0x40] sm:$0xff]
        %v254 = vld [vmem:[#allocation2 + $0x50] sm:$0xff]
        %v255 = vld [vmem:[#allocation2 + $0x60] sm:$0xff]
        %v256 = vld [vmem:[#allocation2 + $0x70] sm:$0xff]
        %v257 = vld [vmem:[#allocation2 + $0xa0] sm:$0xff]
        %v258 = vld [vmem:[#allocation2 + $0xb0] sm:$0xff]
        %v259 = vld [vmem:[#allocation2 + $0xc0] sm:$0xff]
        %v260 = vld [vmem:[#allocation2 + $0xd0] sm:$0xff]
        %v261 = vld [vmem:[#allocation2 + $0xe0] sm:$0xff]
        %v262 = vld [vmem:[#allocation2 + $0xf0] sm:$0xff]
        %v263 = vld [vmem:[#allocation2 + $0x100] sm:$0xff]
        %v264 = vld [vmem:[#allocation2 + $0x110] sm:$0xff]
        %v265 = vpack.c.bf16 %v250, %v249
        %v266 = vpack.c.bf16 %v252, %v251
        %v267 = vpack.c.bf16 %v254, %v253
        %v268 = vpack.c.bf16 %v256, %v255
        %v269 = vpack.c.bf16 %v258, %v257
        %v270 = vpack.c.bf16 %v260, %v259
        %v271 = vpack.c.bf16 %v262, %v261
        %v272 = vpack.c.bf16 %v264, %v263
        %v273 = vld [vmem:[%s1] sm:$0xf]
        %v274 = vld [vmem:[%s1 + $0x4] sm:$0xf]
        %v277 = vunpack.c.l.b16 %v273
        %v278 = vunpack.c.l.b16 %v274
        %v279 = vpack.c.b16 %v278, %v277
        %vm281 = vcmask 130048
        %v283 = vsel %vm281, %v265, 0
        %v286 = vsel %vm281, %v266, 0
        %v289 = vsel %vm281, %v267, 0
        %v292 = vsel %vm281, %v268, 0
        %v295 = vsel %vm281, %v269, 0
        %v298 = vsel %vm281, %v270, 0
        %v301 = vsel %vm281, %v271, 0
        %v304 = vsel %vm281, %v272, 0
        %306 = vmatprep.subr.bf16.mxu0 0
        %307 = vmatpush1.bf16.msra.mxu0 %v279
        %308 = vmatprep.subr.bf16.mxu0 0
        %309 = vmatpush1.bf16.msra.mxu0 0
        %310 = vmatprep.subr.bf16.mxu0 0
        %311 = vmatpush1.bf16.msra.mxu0 0
        %312 = vmatprep.subr.bf16.mxu0 0
        %313 = vmatpush1.bf16.msra.mxu0 0
        %314 = vmatprep.subr.bf16.mxu0 0
        %315 = vmatpush1.bf16.msra.mxu0 0
        %316 = vmatprep.subr.bf16.mxu0 0
        %317 = vmatpush1.bf16.msra.mxu0 0
        %318 = vmatprep.subr.bf16.mxu0 0
        %319 = vmatpush1.bf16.msra.mxu0 0
        %320 = vmatprep.subr.bf16.mxu0 0
        %321 = vmatpush1.bf16.msra.mxu0 0
        %322 = vmatprep.subr.bf16.mxu0 0
        %323 = vmatpush1.bf16.msra.mxu0 0
        %324 = vmatprep.subr.bf16.mxu0 0
        %325 = vmatpush1.bf16.msra.mxu0 0
        %326 = vmatprep.subr.bf16.mxu0 0
        %327 = vmatpush1.bf16.msra.mxu0 0
        %328 = vmatprep.subr.bf16.mxu0 0
        %329 = vmatpush1.bf16.msra.mxu0 0
        %330 = vmatprep.subr.bf16.mxu0 0
        %331 = vmatpush1.bf16.msra.mxu0 0
        %332 = vmatprep.subr.bf16.mxu0 0
        %333 = vmatpush1.bf16.msra.mxu0 0
        %334 = vmatprep.subr.bf16.mxu0 0
        %335 = vmatpush1.bf16.msra.mxu0 0
        %336 = vmatprep.subr.bf16.mxu0 0
        %337 = vmatpush1.bf16.msra.mxu0 0
        %338 = vmatprep.mubr.bf16.mxu0 0
        %339 = vmatmul.mubr.bf16.gmra.mrb[0].mxu0 %v283
        %v340 = vpop.f32.mrb[0].mxu0
        %v341 = vadd.f32 0.0, %v340
        %v342 = vpop.f32.mrb[0].mxu0
        %v343 = vpop.f32.mrb[0].mxu0
        %v344 = vadd.f32 0.0, %v343
        %v345 = vpop.f32.mrb[0].mxu0
        %346 = vmatprep.mubr.bf16.mxu0 0
        %347 = vmatmul.mubr.bf16.gmra.mrb[0].mxu0 %v286
        %v348 = vpop.f32.mrb[0].mxu0
        %v349 = vadd.f32 0.0, %v348
        %v350 = vpop.f32.mrb[0].mxu0
        %v351 = vpop.f32.mrb[0].mxu0
        %v352 = vadd.f32 0.0, %v351
        %v353 = vpop.f32.mrb[0].mxu0
        %354 = vmatprep.mubr.bf16.mxu0 0
        %355 = vmatmul.mubr.bf16.gmra.mrb[0].mxu0 %v289
        %v356 = vpop.f32.mrb[0].mxu0
        %v357 = vadd.f32 0.0, %v356
        %v358 = vpop.f32.mrb[0].mxu0
        %v359 = vpop.f32.mrb[0].mxu0
        %v360 = vadd.f32 0.0, %v359
        %v361 = vpop.f32.mrb[0].mxu0
        %362 = vmatprep.mubr.bf16.mxu0 0
        %363 = vmatmul.mubr.bf16.gmra.mrb[0].mxu0 %v292
        %v364 = vpop.f32.mrb[0].mxu0
        %v365 = vadd.f32 0.0, %v364
        %v366 = vpop.f32.mrb[0].mxu0
        %v367 = vpop.f32.mrb[0].mxu0
        %v368 = vadd.f32 0.0, %v367
        %v369 = vpop.f32.mrb[0].mxu0
        %370 = vmatprep.mubr.bf16.mxu0 0
        %371 = vmatmul.mubr.bf16.gmra.mrb[0].mxu0 %v295
        %v372 = vpop.f32.mrb[0].mxu0
        %v373 = vadd.f32 0.0, %v372
        %v374 = vpop.f32.mrb[0].mxu0
        %v375 = vpop.f32.mrb[0].mxu0
        %v376 = vadd.f32 0.0, %v375
        %v377 = vpop.f32.mrb[0].mxu0
        %378 = vmatprep.mubr.bf16.mxu0 0
        %379 = vmatmul.mubr.bf16.gmra.mrb[0].mxu0 %v298
        %v380 = vpop.f32.mrb[0].mxu0
        %v381 = vadd.f32 0.0, %v380
        %v382 = vpop.f32.mrb[0].mxu0
        %v383 = vpop.f32.mrb[0].mxu0
        %v384 = vadd.f32 0.0, %v383
        %v385 = vpop.f32.mrb[0].mxu0
        %386 = vmatprep.mubr.bf16.mxu0 0
        %387 = vmatmul.mubr.bf16.gmra.mrb[0].mxu0 %v301
        %v388 = vpop.f32.mrb[0].mxu0
        %v389 = vadd.f32 0.0, %v388
        %v390 = vpop.f32.mrb[0].mxu0
        %v391 = vpop.f32.mrb[0].mxu0
        %v392 = vadd.f32 0.0, %v391
        %v393 = vpop.f32.mrb[0].mxu0
        %394 = vmatprep.mubr.bf16.mxu0 0
        %395 = vmatmul.mubr.bf16.gmra.mrb[0].mxu0 %v304
        %v396 = vpop.f32.mrb[0].mxu0
        %v397 = vadd.f32 0.0, %v396
        %v398 = vpop.f32.mrb[0].mxu0
        %v399 = vpop.f32.mrb[0].mxu0
        %v400 = vadd.f32 0.0, %v399
        %v401 = vpop.f32.mrb[0].mxu0
        %402 = vdwg.mxu0
        %v403 = vadd.f32 %v233, %v341
        %v404 = vadd.f32 %v234, %v344
        %v405 = vadd.f32 %v235, %v349
        %v406 = vadd.f32 %v236, %v352
        %v407 = vadd.f32 %v237, %v357
        %v408 = vadd.f32 %v238, %v360
        %v409 = vadd.f32 %v239, %v365
        %v410 = vadd.f32 %v240, %v368
        %v411 = vadd.f32 %v241, %v373
        %v412 = vadd.f32 %v242, %v376
        %v413 = vadd.f32 %v243, %v381
        %v414 = vadd.f32 %v244, %v384
        %v415 = vadd.f32 %v245, %v389
        %v416 = vadd.f32 %v246, %v392
        %v417 = vadd.f32 %v247, %v397
        %v418 = vadd.f32 %v248, %v400
        %v419 = vld [vmem:[#allocation2 + $0x1] sm:$0xff]
        %v420 = vld [vmem:[#allocation2 + $0x11] sm:$0xff]
        %v421 = vld [vmem:[#allocation2 + $0x21] sm:$0xff]
        %v422 = vld [vmem:[#allocation2 + $0x31] sm:$0xff]
        %v423 = vld [vmem:[#allocation2 + $0x41] sm:$0xff]
        %v424 = vld [vmem:[#allocation2 + $0x51] sm:$0xff]
        %v425 = vld [vmem:[#allocation2 + $0x61] sm:$0xff]
        %v426 = vld [vmem:[#allocation2 + $0x71] sm:$0xff]
        %v427 = vld [vmem:[#allocation2 + $0xa1] sm:$0xff]
        %v428 = vld [vmem:[#allocation2 + $0xb1] sm:$0xff]
        %v429 = vld [vmem:[#allocation2 + $0xc1] sm:$0xff]
        %v430 = vld [vmem:[#allocation2 + $0xd1] sm:$0xff]
        %v431 = vld [vmem:[#allocation2 + $0xe1] sm:$0xff]
        %v432 = vld [vmem:[#allocation2 + $0xf1] sm:$0xff]
        %v433 = vld [vmem:[#allocation2 + $0x101] sm:$0xff]
        %v434 = vld [vmem:[#allocation2 + $0x111] sm:$0xff]
        %v435 = vpack.c.bf16 %v420, %v419
        %v436 = vpack.c.bf16 %v422, %v421
        %v437 = vpack.c.bf16 %v424, %v423
        %v438 = vpack.c.bf16 %v426, %v425
        %v439 = vpack.c.bf16 %v428, %v427
        %v440 = vpack.c.bf16 %v430, %v429
        %v441 = vpack.c.bf16 %v432, %v431
        %v442 = vpack.c.bf16 %v434, %v433
        %s443 = scalar_lea.vmem %s1, 8
        %v444 = vld [vmem:[%s443] sm:$0xf]
        %v445 = vld [vmem:[%s443 + $0x4] sm:$0xf]
        %v448 = vunpack.c.l.b16 %v444
        %v449 = vunpack.c.l.b16 %v445
        %v450 = vpack.c.b16 %v449, %v448
        %v453 = vsel %vm281, %v435, 0
        %v456 = vsel %vm281, %v436, 0
        %v459 = vsel %vm281, %v437, 0
        %v462 = vsel %vm281, %v438, 0
        %v465 = vsel %vm281, %v439, 0
        %v468 = vsel %vm281, %v440, 0
        %v471 = vsel %vm281, %v441, 0
        %v474 = vsel %vm281, %v442, 0
        %476 = vmatprep.subr.bf16.mxu0 0
        %477 = vmatpush1.bf16.msra.mxu0 %v450
        %478 = vmatprep.subr.bf16.mxu0 0
        %479 = vmatpush1.bf16.msra.mxu0 0
        %480 = vmatprep.subr.bf16.mxu0 0
        %481 = vmatpush1.bf16.msra.mxu0 0
        %482 = vmatprep.subr.bf16.mxu0 0
        %483 = vmatpush1.bf16.msra.mxu0 0
        %484 = vmatprep.subr.bf16.mxu0 0
        %485 = vmatpush1.bf16.msra.mxu0 0
        %486 = vmatprep.subr.bf16.mxu0 0
        %487 = vmatpush1.bf16.msra.mxu0 0
        %488 = vmatprep.subr.bf16.mxu0 0
        %489 = vmatpush1.bf16.msra.mxu0 0
        %490 = vmatprep.subr.bf16.mxu0 0
        %491 = vmatpush1.bf16.msra.mxu0 0
        %492 = vmatprep.subr.bf16.mxu0 0
        %493 = vmatpush1.bf16.msra.mxu0 0
        %494 = vmatprep.subr.bf16.mxu0 0
        %495 = vmatpush1.bf16.msra.mxu0 0
        %496 = vmatprep.subr.bf16.mxu0 0
        %497 = vmatpush1.bf16.msra.mxu0 0
        %498 = vmatprep.subr.bf16.mxu0 0
        %499 = vmatpush1.bf16.msra.mxu0 0
        %500 = vmatprep.subr.bf16.mxu0 0
        %501 = vmatpush1.bf16.msra.mxu0 0
        %502 = vmatprep.subr.bf16.mxu0 0
        %503 = vmatpush1.bf16.msra.mxu0 0
        %504 = vmatprep.subr.bf16.mxu0 0
        %505 = vmatpush1.bf16.msra.mxu0 0
        %506 = vmatprep.subr.bf16.mxu0 0
        %507 = vmatpush1.bf16.msra.mxu0 0
        %508 = vmatprep.mubr.bf16.mxu0 0
        %509 = vmatmul.mubr.bf16.gmra.mrb[0].mxu0 %v453
        %v510 = vpop.f32.mrb[0].mxu0
        %v511 = vadd.f32 0.0, %v510
        %v512 = vpop.f32.mrb[0].mxu0
        %v513 = vpop.f32.mrb[0].mxu0
        %v514 = vadd.f32 0.0, %v513
        %v515 = vpop.f32.mrb[0].mxu0
        %516 = vmatprep.mubr.bf16.mxu0 0
        %517 = vmatmul.mubr.bf16.gmra.mrb[0].mxu0 %v456
        %v518 = vpop.f32.mrb[0].mxu0
        %v519 = vadd.f32 0.0, %v518
        %v520 = vpop.f32.mrb[0].mxu0
        %v521 = vpop.f32.mrb[0].mxu0
        %v522 = vadd.f32 0.0, %v521
        %v523 = vpop.f32.mrb[0].mxu0
        %524 = vmatprep.mubr.bf16.mxu0 0
        %525 = vmatmul.mubr.bf16.gmra.mrb[0].mxu0 %v459
        %v526 = vpop.f32.mrb[0].mxu0
        %v527 = vadd.f32 0.0, %v526
        %v528 = vpop.f32.mrb[0].mxu0
        %v529 = vpop.f32.mrb[0].mxu0
        %v530 = vadd.f32 0.0, %v529
        %v531 = vpop.f32.mrb[0].mxu0
        %532 = vmatprep.mubr.bf16.mxu0 0
        %533 = vmatmul.mubr.bf16.gmra.mrb[0].mxu0 %v462
        %v534 = vpop.f32.mrb[0].mxu0
        %v535 = vadd.f32 0.0, %v534
        %v536 = vpop.f32.mrb[0].mxu0
        %v537 = vpop.f32.mrb[0].mxu0
        %v538 = vadd.f32 0.0, %v537
        %v539 = vpop.f32.mrb[0].mxu0
        %540 = vmatprep.mubr.bf16.mxu0 0
        %541 = vmatmul.mubr.bf16.gmra.mrb[0].mxu0 %v465
        %v542 = vpop.f32.mrb[0].mxu0
        %v543 = vadd.f32 0.0, %v542
        %v544 = vpop.f32.mrb[0].mxu0
        %v545 = vpop.f32.mrb[0].mxu0
        %v546 = vadd.f32 0.0, %v545
        %v547 = vpop.f32.mrb[0].mxu0
        %548 = vmatprep.mubr.bf16.mxu0 0
        %549 = vmatmul.mubr.bf16.gmra.mrb[0].mxu0 %v468
        %v550 = vpop.f32.mrb[0].mxu0
        %v551 = vadd.f32 0.0, %v550
        %v552 = vpop.f32.mrb[0].mxu0
        %v553 = vpop.f32.mrb[0].mxu0
        %v554 = vadd.f32 0.0, %v553
        %v555 = vpop.f32.mrb[0].mxu0
        %556 = vmatprep.mubr.bf16.mxu0 0
        %557 = vmatmul.mubr.bf16.gmra.mrb[0].mxu0 %v471
        %v558 = vpop.f32.mrb[0].mxu0
        %v559 = vadd.f32 0.0, %v558
        %v560 = vpop.f32.mrb[0].mxu0
        %v561 = vpop.f32.mrb[0].mxu0
        %v562 = vadd.f32 0.0, %v561
        %v563 = vpop.f32.mrb[0].mxu0
        %564 = vmatprep.mubr.bf16.mxu0 0
        %565 = vmatmul.mubr.bf16.gmra.mrb[0].mxu0 %v474
        %v566 = vpop.f32.mrb[0].mxu0
        %v567 = vadd.f32 0.0, %v566
        %v568 = vpop.f32.mrb[0].mxu0
        %v569 = vpop.f32.mrb[0].mxu0
        %v570 = vadd.f32 0.0, %v569
        %v571 = vpop.f32.mrb[0].mxu0
        %572 = vdwg.mxu0
        %v573 = vadd.f32 %v403, %v511
        %v574 = vadd.f32 %v404, %v514
        %v575 = vadd.f32 %v405, %v519
        %v576 = vadd.f32 %v406, %v522
        %v577 = vadd.f32 %v407, %v527
        %v578 = vadd.f32 %v408, %v530
        %v579 = vadd.f32 %v409, %v535
        %v580 = vadd.f32 %v410, %v538
        %v581 = vadd.f32 %v411, %v543
        %v582 = vadd.f32 %v412, %v546
        %v583 = vadd.f32 %v413, %v551
        %v584 = vadd.f32 %v414, %v554
        %v585 = vadd.f32 %v415, %v559
        %v586 = vadd.f32 %v416, %v562
        %v587 = vadd.f32 %v417, %v567
        %v588 = vadd.f32 %v418, %v570
        %v589 = vld [vmem:[#allocation2 + $0x2] sm:$0xff]
        %v590 = vld [vmem:[#allocation2 + $0x12] sm:$0xff]
        %v591 = vld [vmem:[#allocation2 + $0x22] sm:$0xff]
        %v592 = vld [vmem:[#allocation2 + $0x32] sm:$0xff]
        %v593 = vld [vmem:[#allocation2 + $0x42] sm:$0xff]
        %v594 = vld [vmem:[#allocation2 + $0x52] sm:$0xff]
        %v595 = vld [vmem:[#allocation2 + $0x62] sm:$0xff]
        %v596 = vld [vmem:[#allocation2 + $0x72] sm:$0xff]
        %v597 = vld [vmem:[#allocation2 + $0xa2] sm:$0xff]
        %v598 = vld [vmem:[#allocation2 + $0xb2] sm:$0xff]
        %v599 = vld [vmem:[#allocation2 + $0xc2] sm:$0xff]
        %v600 = vld [vmem:[#allocation2 + $0xd2] sm:$0xff]
        %v601 = vld [vmem:[#allocation2 + $0xe2] sm:$0xff]
        %v602 = vld [vmem:[#allocation2 + $0xf2] sm:$0xff]
        %v603 = vld [vmem:[#allocation2 + $0x102] sm:$0xff]
        %v604 = vld [vmem:[#allocation2 + $0x112] sm:$0xff]
        %v605 = vpack.c.bf16 %v590, %v589
        %v606 = vpack.c.bf16 %v592, %v591
        %v607 = vpack.c.bf16 %v594, %v593
        %v608 = vpack.c.bf16 %v596, %v595
        %v609 = vpack.c.bf16 %v598, %v597
        %v610 = vpack.c.bf16 %v600, %v599
        %v611 = vpack.c.bf16 %v602, %v601
        %v612 = vpack.c.bf16 %v604, %v603
        %s613 = scalar_lea.vmem %s1, 16
        %v614 = vld [vmem:[%s613] sm:$0xf]
        %v615 = vld [vmem:[%s613 + $0x4] sm:$0xf]
        %v618 = vunpack.c.l.b16 %v614
        %v619 = vunpack.c.l.b16 %v615
        %v620 = vpack.c.b16 %v619, %v618
        %v623 = vsel %vm281, %v605, 0
        %v626 = vsel %vm281, %v606, 0
        %v629 = vsel %vm281, %v607, 0
        %v632 = vsel %vm281, %v608, 0
        %v635 = vsel %vm281, %v609, 0
        %v638 = vsel %vm281, %v610, 0
        %v641 = vsel %vm281, %v611, 0
        %v644 = vsel %vm281, %v612, 0
        %646 = vmatprep.subr.bf16.mxu0 0
        %647 = vmatpush1.bf16.msra.mxu0 %v620
        %648 = vmatprep.subr.bf16.mxu0 0
        %649 = vmatpush1.bf16.msra.mxu0 0
        %650 = vmatprep.subr.bf16.mxu0 0
        %651 = vmatpush1.bf16.msra.mxu0 0
        %652 = vmatprep.subr.bf16.mxu0 0
        %653 = vmatpush1.bf16.msra.mxu0 0
        %654 = vmatprep.subr.bf16.mxu0 0
        %655 = vmatpush1.bf16.msra.mxu0 0
        %656 = vmatprep.subr.bf16.mxu0 0
        %657 = vmatpush1.bf16.msra.mxu0 0
        %658 = vmatprep.subr.bf16.mxu0 0
        %659 = vmatpush1.bf16.msra.mxu0 0
        %660 = vmatprep.subr.bf16.mxu0 0
        %661 = vmatpush1.bf16.msra.mxu0 0
        %662 = vmatprep.subr.bf16.mxu0 0
        %663 = vmatpush1.bf16.msra.mxu0 0
        %664 = vmatprep.subr.bf16.mxu0 0
        %665 = vmatpush1.bf16.msra.mxu0 0
        %666 = vmatprep.subr.bf16.mxu0 0
        %667 = vmatpush1.bf16.msra.mxu0 0
        %668 = vmatprep.subr.bf16.mxu0 0
        %669 = vmatpush1.bf16.msra.mxu0 0
        %670 = vmatprep.subr.bf16.mxu0 0
        %671 = vmatpush1.bf16.msra.mxu0 0
        %672 = vmatprep.subr.bf16.mxu0 0
        %673 = vmatpush1.bf16.msra.mxu0 0
        %674 = vmatprep.subr.bf16.mxu0 0
        %675 = vmatpush1.bf16.msra.mxu0 0
        %676 = vmatprep.subr.bf16.mxu0 0
        %677 = vmatpush1.bf16.msra.mxu0 0
        %678 = vmatprep.mubr.bf16.mxu0 0
        %679 = vmatmul.mubr.bf16.gmra.mrb[0].mxu0 %v623
        %v680 = vpop.f32.mrb[0].mxu0
        %v681 = vadd.f32 0.0, %v680
        %v682 = vpop.f32.mrb[0].mxu0
        %v683 = vpop.f32.mrb[0].mxu0
        %v684 = vadd.f32 0.0, %v683
        %v685 = vpop.f32.mrb[0].mxu0
        %686 = vmatprep.mubr.bf16.mxu0 0
        %687 = vmatmul.mubr.bf16.gmra.mrb[0].mxu0 %v626
        %v688 = vpop.f32.mrb[0].mxu0
        %v689 = vadd.f32 0.0, %v688
        %v690 = vpop.f32.mrb[0].mxu0
        %v691 = vpop.f32.mrb[0].mxu0
        %v692 = vadd.f32 0.0, %v691
        %v693 = vpop.f32.mrb[0].mxu0
        %694 = vmatprep.mubr.bf16.mxu0 0
        %695 = vmatmul.mubr.bf16.gmra.mrb[0].mxu0 %v629
        %v696 = vpop.f32.mrb[0].mxu0
        %v697 = vadd.f32 0.0, %v696
        %v698 = vpop.f32.mrb[0].mxu0
        %v699 = vpop.f32.mrb[0].mxu0
        %v700 = vadd.f32 0.0, %v699
        %v701 = vpop.f32.mrb[0].mxu0
        %702 = vmatprep.mubr.bf16.mxu0 0
        %703 = vmatmul.mubr.bf16.gmra.mrb[0].mxu0 %v632
        %v704 = vpop.f32.mrb[0].mxu0
        %v705 = vadd.f32 0.0, %v704
        %v706 = vpop.f32.mrb[0].mxu0
        %v707 = vpop.f32.mrb[0].mxu0
        %v708 = vadd.f32 0.0, %v707
        %v709 = vpop.f32.mrb[0].mxu0
        %710 = vmatprep.mubr.bf16.mxu0 0
        %711 = vmatmul.mubr.bf16.gmra.mrb[0].mxu0 %v635
        %v712 = vpop.f32.mrb[0].mxu0
        %v713 = vadd.f32 0.0, %v712
        %v714 = vpop.f32.mrb[0].mxu0
        %v715 = vpop.f32.mrb[0].mxu0
        %v716 = vadd.f32 0.0, %v715
        %v717 = vpop.f32.mrb[0].mxu0
        %718 = vmatprep.mubr.bf16.mxu0 0
        %719 = vmatmul.mubr.bf16.gmra.mrb[0].mxu0 %v638
        %v720 = vpop.f32.mrb[0].mxu0
        %v721 = vadd.f32 0.0, %v720
        %v722 = vpop.f32.mrb[0].mxu0
        %v723 = vpop.f32.mrb[0].mxu0
        %v724 = vadd.f32 0.0, %v723
        %v725 = vpop.f32.mrb[0].mxu0
        %726 = vmatprep.mubr.bf16.mxu0 0
        %727 = vmatmul.mubr.bf16.gmra.mrb[0].mxu0 %v641
        %v728 = vpop.f32.mrb[0].mxu0
        %v729 = vadd.f32 0.0, %v728
        %v730 = vpop.f32.mrb[0].mxu0
        %v731 = vpop.f32.mrb[0].mxu0
        %v732 = vadd.f32 0.0, %v731
        %v733 = vpop.f32.mrb[0].mxu0
        %734 = vmatprep.mubr.bf16.mxu0 0
        %735 = vmatmul.mubr.bf16.gmra.mrb[0].mxu0 %v644
        %v736 = vpop.f32.mrb[0].mxu0
        %v737 = vadd.f32 0.0, %v736
        %v738 = vpop.f32.mrb[0].mxu0
        %v739 = vpop.f32.mrb[0].mxu0
        %v740 = vadd.f32 0.0, %v739
        %v741 = vpop.f32.mrb[0].mxu0
        %742 = vdwg.mxu0
        %v743 = vadd.f32 %v573, %v681
        %v744 = vadd.f32 %v574, %v684
        %v745 = vadd.f32 %v575, %v689
        %v746 = vadd.f32 %v576, %v692
        %v747 = vadd.f32 %v577, %v697
        %v748 = vadd.f32 %v578, %v700
        %v749 = vadd.f32 %v579, %v705
        %v750 = vadd.f32 %v580, %v708
        %v751 = vadd.f32 %v581, %v713
        %v752 = vadd.f32 %v582, %v716
        %v753 = vadd.f32 %v583, %v721
        %v754 = vadd.f32 %v584, %v724
        %v755 = vadd.f32 %v585, %v729
        %v756 = vadd.f32 %v586, %v732
        %v757 = vadd.f32 %v587, %v737
        %v758 = vadd.f32 %v588, %v740
        %s759 = scalar_lea.vmem [#allocation2], 16
        %v760 = vld [vmem:[%s759] sm:$0xff]
        %v761 = vld [vmem:[%s759 + $0x10] sm:$0xff]
        %v762 = vld [vmem:[%s759 + $0x20] sm:$0xff]
        %v763 = vld [vmem:[%s759 + $0x30] sm:$0xff]
        %v764 = vld [vmem:[%s759 + $0x40] sm:$0xff]
        %v765 = vld [vmem:[%s759 + $0x50] sm:$0xff]
        %v766 = vld [vmem:[%s759 + $0x60] sm:$0xff]
        %v767 = vld [vmem:[%s759 + $0x70] sm:$0xff]
        %v768 = vld [vmem:[%s759 + $0xa0] sm:$0xff]
        %v769 = vld [vmem:[%s759 + $0xb0] sm:$0xff]
        %v770 = vld [vmem:[%s759 + $0xc0] sm:$0xff]
        %v771 = vld [vmem:[%s759 + $0xd0] sm:$0xff]
        %v772 = vld [vmem:[%s759 + $0xe0] sm:$0xff]
        %v773 = vld [vmem:[%s759 + $0xf0] sm:$0xff]
        %v774 = vld [vmem:[%s759 + $0x100] sm:$0xff]
        %v775 = vld [vmem:[%s759 + $0x110] sm:$0xff]
        %v776 = vpack.c.bf16 %v761, %v760
        %v777 = vpack.c.bf16 %v763, %v762
        %v778 = vpack.c.bf16 %v765, %v764
        %v779 = vpack.c.bf16 %v767, %v766
        %v780 = vpack.c.bf16 %v769, %v768
        %v781 = vpack.c.bf16 %v771, %v770
        %v782 = vpack.c.bf16 %v773, %v772
        %v783 = vpack.c.bf16 %v775, %v774
        %s784 = scalar_lea.vmem %s1, 24
        %v785 = vld [vmem:[%s784] sm:$0xf]
        %v786 = vld [vmem:[%s784 + $0x4] sm:$0xf]
        %v789 = vunpack.c.l.b16 %v785
        %v790 = vunpack.c.l.b16 %v786
        %v791 = vpack.c.b16 %v790, %v789
        %v794 = vsel %vm281, %v776, 0
        %v797 = vsel %vm281, %v777, 0
        %v800 = vsel %vm281, %v778, 0
        %v803 = vsel %vm281, %v779, 0
        %v806 = vsel %vm281, %v780, 0
        %v809 = vsel %vm281, %v781, 0
        %v812 = vsel %vm281, %v782, 0
        %v815 = vsel %vm281, %v783, 0
        %817 = vmatprep.subr.bf16.mxu0 0
        %818 = vmatpush1.bf16.msra.mxu0 %v791
        %819 = vmatprep.subr.bf16.mxu0 0
        %820 = vmatpush1.bf16.msra.mxu0 0
        %821 = vmatprep.subr.bf16.mxu0 0
        %822 = vmatpush1.bf16.msra.mxu0 0
        %823 = vmatprep.subr.bf16.mxu0 0
        %824 = vmatpush1.bf16.msra.mxu0 0
        %825 = vmatprep.subr.bf16.mxu0 0
        %826 = vmatpush1.bf16.msra.mxu0 0
        %827 = vmatprep.subr.bf16.mxu0 0
        %828 = vmatpush1.bf16.msra.mxu0 0
        %829 = vmatprep.subr.bf16.mxu0 0
        %830 = vmatpush1.bf16.msra.mxu0 0
        %831 = vmatprep.subr.bf16.mxu0 0
        %832 = vmatpush1.bf16.msra.mxu0 0
        %833 = vmatprep.subr.bf16.mxu0 0
        %834 = vmatpush1.bf16.msra.mxu0 0
        %835 = vmatprep.subr.bf16.mxu0 0
        %836 = vmatpush1.bf16.msra.mxu0 0
        %837 = vmatprep.subr.bf16.mxu0 0
        %838 = vmatpush1.bf16.msra.mxu0 0
        %839 = vmatprep.subr.bf16.mxu0 0
        %840 = vmatpush1.bf16.msra.mxu0 0
        %841 = vmatprep.subr.bf16.mxu0 0
        %842 = vmatpush1.bf16.msra.mxu0 0
        %843 = vmatprep.subr.bf16.mxu0 0
        %844 = vmatpush1.bf16.msra.mxu0 0
        %845 = vmatprep.subr.bf16.mxu0 0
        %846 = vmatpush1.bf16.msra.mxu0 0
        %847 = vmatprep.subr.bf16.mxu0 0
        %848 = vmatpush1.bf16.msra.mxu0 0
        %849 = vmatprep.mubr.bf16.mxu0 0
        %850 = vmatmul.mubr.bf16.gmra.mrb[0].mxu0 %v794
        %v851 = vpop.f32.mrb[0].mxu0
        %v852 = vadd.f32 0.0, %v851
        %v853 = vpop.f32.mrb[0].mxu0
        %v854 = vpop.f32.mrb[0].mxu0
        %v855 = vadd.f32 0.0, %v854
        %v856 = vpop.f32.mrb[0].mxu0
        %857 = vmatprep.mubr.bf16.mxu0 0
        %858 = vmatmul.mubr.bf16.gmra.mrb[0].mxu0 %v797
        %v859 = vpop.f32.mrb[0].mxu0
        %v860 = vadd.f32 0.0, %v859
        %v861 = vpop.f32.mrb[0].mxu0
        %v862 = vpop.f32.mrb[0].mxu0
        %v863 = vadd.f32 0.0, %v862
        %v864 = vpop.f32.mrb[0].mxu0
        %865 = vmatprep.mubr.bf16.mxu0 0
        %866 = vmatmul.mubr.bf16.gmra.mrb[0].mxu0 %v800
        %v867 = vpop.f32.mrb[0].mxu0
        %v868 = vadd.f32 0.0, %v867
        %v869 = vpop.f32.mrb[0].mxu0
        %v870 = vpop.f32.mrb[0].mxu0
        %v871 = vadd.f32 0.0, %v870
        %v872 = vpop.f32.mrb[0].mxu0
        %873 = vmatprep.mubr.bf16.mxu0 0
        %874 = vmatmul.mubr.bf16.gmra.mrb[0].mxu0 %v803
        %v875 = vpop.f32.mrb[0].mxu0
        %v876 = vadd.f32 0.0, %v875
        %v877 = vpop.f32.mrb[0].mxu0
        %v878 = vpop.f32.mrb[0].mxu0
        %v879 = vadd.f32 0.0, %v878
        %v880 = vpop.f32.mrb[0].mxu0
        %881 = vmatprep.mubr.bf16.mxu0 0
        %882 = vmatmul.mubr.bf16.gmra.mrb[0].mxu0 %v806
        %v883 = vpop.f32.mrb[0].mxu0
        %v884 = vadd.f32 0.0, %v883
        %v885 = vpop.f32.mrb[0].mxu0
        %v886 = vpop.f32.mrb[0].mxu0
        %v887 = vadd.f32 0.0, %v886
        %v888 = vpop.f32.mrb[0].mxu0
        %889 = vmatprep.mubr.bf16.mxu0 0
        %890 = vmatmul.mubr.bf16.gmra.mrb[0].mxu0 %v809
        %v891 = vpop.f32.mrb[0].mxu0
        %v892 = vadd.f32 0.0, %v891
        %v893 = vpop.f32.mrb[0].mxu0
        %v894 = vpop.f32.mrb[0].mxu0
        %v895 = vadd.f32 0.0, %v894
        %v896 = vpop.f32.mrb[0].mxu0
        %897 = vmatprep.mubr.bf16.mxu0 0
        %898 = vmatmul.mubr.bf16.gmra.mrb[0].mxu0 %v812
        %v899 = vpop.f32.mrb[0].mxu0
        %v900 = vadd.f32 0.0, %v899
        %v901 = vpop.f32.mrb[0].mxu0
        %v902 = vpop.f32.mrb[0].mxu0
        %v903 = vadd.f32 0.0, %v902
        %v904 = vpop.f32.mrb[0].mxu0
        %905 = vmatprep.mubr.bf16.mxu0 0
        %906 = vmatmul.mubr.bf16.gmra.mrb[0].mxu0 %v815
        %v907 = vpop.f32.mrb[0].mxu0
        %v908 = vadd.f32 0.0, %v907
        %v909 = vpop.f32.mrb[0].mxu0
        %v910 = vpop.f32.mrb[0].mxu0
        %v911 = vadd.f32 0.0, %v910
        %v912 = vpop.f32.mrb[0].mxu0
        %913 = vdwg.mxu0
        %v914 = vadd.f32 %v743, %v852
        %v915 = vadd.f32 %v744, %v855
        %v916 = vadd.f32 %v745, %v860
        %v917 = vadd.f32 %v746, %v863
        %v918 = vadd.f32 %v747, %v868
        %v919 = vadd.f32 %v748, %v871
        %v920 = vadd.f32 %v749, %v876
        %v921 = vadd.f32 %v750, %v879
        %v922 = vadd.f32 %v751, %v884
        %v923 = vadd.f32 %v752, %v887
        %v924 = vadd.f32 %v753, %v892
        %v925 = vadd.f32 %v754, %v895
        %v926 = vadd.f32 %v755, %v900
        %v927 = vadd.f32 %v756, %v903
        %v928 = vadd.f32 %v757, %v908
        %v929 = vadd.f32 %v758, %v911
        %v930 = vld [vmem:[%s759 + $0x1] sm:$0xff]
        %v931 = vld [vmem:[%s759 + $0x11] sm:$0xff]
        %v932 = vld [vmem:[%s759 + $0x21] sm:$0xff]
        %v933 = vld [vmem:[%s759 + $0x31] sm:$0xff]
        %v934 = vld [vmem:[%s759 + $0x41] sm:$0xff]
        %v935 = vld [vmem:[%s759 + $0x51] sm:$0xff]
        %v936 = vld [vmem:[%s759 + $0x61] sm:$0xff]
        %v937 = vld [vmem:[%s759 + $0x71] sm:$0xff]
        %v938 = vld [vmem:[%s759 + $0xa1] sm:$0xff]
        %v939 = vld [vmem:[%s759 + $0xb1] sm:$0xff]
        %v940 = vld [vmem:[%s759 + $0xc1] sm:$0xff]
        %v941 = vld [vmem:[%s759 + $0xd1] sm:$0xff]
        %v942 = vld [vmem:[%s759 + $0xe1] sm:$0xff]
        %v943 = vld [vmem:[%s759 + $0xf1] sm:$0xff]
        %v944 = vld [vmem:[%s759 + $0x101] sm:$0xff]
        %v945 = vld [vmem:[%s759 + $0x111] sm:$0xff]
        %v946 = vpack.c.bf16 %v931, %v930
        %v947 = vpack.c.bf16 %v933, %v932
        %v948 = vpack.c.bf16 %v935, %v934
        %v949 = vpack.c.bf16 %v937, %v936
        %v950 = vpack.c.bf16 %v939, %v938
        %v951 = vpack.c.bf16 %v941, %v940
        %v952 = vpack.c.bf16 %v943, %v942
        %v953 = vpack.c.bf16 %v945, %v944
        %s954 = scalar_lea.vmem %s1, 32
        %v955 = vld [vmem:[%s954] sm:$0xf]
        %v956 = vld [vmem:[%s954 + $0x4] sm:$0xf]
        %v959 = vunpack.c.l.b16 %v955
        %v960 = vunpack.c.l.b16 %v956
        %v961 = vpack.c.b16 %v960, %v959
        %v964 = vsel %vm281, %v946, 0
        %v967 = vsel %vm281, %v947, 0
        %v970 = vsel %vm281, %v948, 0
        %v973 = vsel %vm281, %v949, 0
        %v976 = vsel %vm281, %v950, 0
        %v979 = vsel %vm281, %v951, 0
        %v982 = vsel %vm281, %v952, 0
        %v985 = vsel %vm281, %v953, 0
        %987 = vmatprep.subr.bf16.mxu0 0
        %988 = vmatpush1.bf16.msra.mxu0 %v961
        %989 = vmatprep.subr.bf16.mxu0 0
        %990 = vmatpush1.bf16.msra.mxu0 0
        %991 = vmatprep.subr.bf16.mxu0 0
        %992 = vmatpush1.bf16.msra.mxu0 0
        %993 = vmatprep.subr.bf16.mxu0 0
        %994 = vmatpush1.bf16.msra.mxu0 0
        %995 = vmatprep.subr.bf16.mxu0 0
        %996 = vmatpush1.bf16.msra.mxu0 0
        %997 = vmatprep.subr.bf16.mxu0 0
        %998 = vmatpush1.bf16.msra.mxu0 0
        %999 = vmatprep.subr.bf16.mxu0 0
        %1000 = vmatpush1.bf16.msra.mxu0 0
        %1001 = vmatprep.subr.bf16.mxu0 0
        %1002 = vmatpush1.bf16.msra.mxu0 0
        %1003 = vmatprep.subr.bf16.mxu0 0
        %1004 = vmatpush1.bf16.msra.mxu0 0
        %1005 = vmatprep.subr.bf16.mxu0 0
        %1006 = vmatpush1.bf16.msra.mxu0 0
        %1007 = vmatprep.subr.bf16.mxu0 0
        %1008 = vmatpush1.bf16.msra.mxu0 0
        %1009 = vmatprep.subr.bf16.mxu0 0
        %1010 = vmatpush1.bf16.msra.mxu0 0
        %1011 = vmatprep.subr.bf16.mxu0 0
        %1012 = vmatpush1.bf16.msra.mxu0 0
        %1013 = vmatprep.subr.bf16.mxu0 0
        %1014 = vmatpush1.bf16.msra.mxu0 0
        %1015 = vmatprep.subr.bf16.mxu0 0
        %1016 = vmatpush1.bf16.msra.mxu0 0
        %1017 = vmatprep.subr.bf16.mxu0 0
        %1018 = vmatpush1.bf16.msra.mxu0 0
        %1019 = vmatprep.mubr.bf16.mxu0 0
        %1020 = vmatmul.mubr.bf16.gmra.mrb[0].mxu0 %v964
        %v1021 = vpop.f32.mrb[0].mxu0
        %v1022 = vadd.f32 0.0, %v1021
        %v1023 = vpop.f32.mrb[0].mxu0
        %v1024 = vpop.f32.mrb[0].mxu0
        %v1025 = vadd.f32 0.0, %v1024
        %v1026 = vpop.f32.mrb[0].mxu0
        %1027 = vmatprep.mubr.bf16.mxu0 0
        %1028 = vmatmul.mubr.bf16.gmra.mrb[0].mxu0 %v967
        %v1029 = vpop.f32.mrb[0].mxu0
        %v1030 = vadd.f32 0.0, %v1029
        %v1031 = vpop.f32.mrb[0].mxu0
        %v1032 = vpop.f32.mrb[0].mxu0
        %v1033 = vadd.f32 0.0, %v1032
        %v1034 = vpop.f32.mrb[0].mxu0
        %1035 = vmatprep.mubr.bf16.mxu0 0
        %1036 = vmatmul.mubr.bf16.gmra.mrb[0].mxu0 %v970
        %v1037 = vpop.f32.mrb[0].mxu0
        %v1038 = vadd.f32 0.0, %v1037
        %v1039 = vpop.f32.mrb[0].mxu0
        %v1040 = vpop.f32.mrb[0].mxu0
        %v1041 = vadd.f32 0.0, %v1040
        %v1042 = vpop.f32.mrb[0].mxu0
        %1043 = vmatprep.mubr.bf16.mxu0 0
        %1044 = vmatmul.mubr.bf16.gmra.mrb[0].mxu0 %v973
        %v1045 = vpop.f32.mrb[0].mxu0
        %v1046 = vadd.f32 0.0, %v1045
        %v1047 = vpop.f32.mrb[0].mxu0
        %v1048 = vpop.f32.mrb[0].mxu0
        %v1049 = vadd.f32 0.0, %v1048
        %v1050 = vpop.f32.mrb[0].mxu0
        %1051 = vmatprep.mubr.bf16.mxu0 0
        %1052 = vmatmul.mubr.bf16.gmra.mrb[0].mxu0 %v976
        %v1053 = vpop.f32.mrb[0].mxu0
        %v1054 = vadd.f32 0.0, %v1053
        %v1055 = vpop.f32.mrb[0].mxu0
        %v1056 = vpop.f32.mrb[0].mxu0
        %v1057 = vadd.f32 0.0, %v1056
        %v1058 = vpop.f32.mrb[0].mxu0
        %1059 = vmatprep.mubr.bf16.mxu0 0
        %1060 = vmatmul.mubr.bf16.gmra.mrb[0].mxu0 %v979
        %v1061 = vpop.f32.mrb[0].mxu0
        %v1062 = vadd.f32 0.0, %v1061
        %v1063 = vpop.f32.mrb[0].mxu0
        %v1064 = vpop.f32.mrb[0].mxu0
        %v1065 = vadd.f32 0.0, %v1064
        %v1066 = vpop.f32.mrb[0].mxu0
        %1067 = vmatprep.mubr.bf16.mxu0 0
        %1068 = vmatmul.mubr.bf16.gmra.mrb[0].mxu0 %v982
        %v1069 = vpop.f32.mrb[0].mxu0
        %v1070 = vadd.f32 0.0, %v1069
        %v1071 = vpop.f32.mrb[0].mxu0
        %v1072 = vpop.f32.mrb[0].mxu0
        %v1073 = vadd.f32 0.0, %v1072
        %v1074 = vpop.f32.mrb[0].mxu0
        %1075 = vmatprep.mubr.bf16.mxu0 0
        %1076 = vmatmul.mubr.bf16.gmra.mrb[0].mxu0 %v985
        %v1077 = vpop.f32.mrb[0].mxu0
        %v1078 = vadd.f32 0.0, %v1077
        %v1079 = vpop.f32.mrb[0].mxu0
        %v1080 = vpop.f32.mrb[0].mxu0
        %v1081 = vadd.f32 0.0, %v1080
        %v1082 = vpop.f32.mrb[0].mxu0
        %1083 = vdwg.mxu0
        %v1084 = vadd.f32 %v914, %v1022
        %v1085 = vadd.f32 %v915, %v1025
        %v1086 = vadd.f32 %v916, %v1030
        %v1087 = vadd.f32 %v917, %v1033
        %v1088 = vadd.f32 %v918, %v1038
        %v1089 = vadd.f32 %v919, %v1041
        %v1090 = vadd.f32 %v920, %v1046
        %v1091 = vadd.f32 %v921, %v1049
        %v1092 = vadd.f32 %v922, %v1054
        %v1093 = vadd.f32 %v923, %v1057
        %v1094 = vadd.f32 %v924, %v1062
        %v1095 = vadd.f32 %v925, %v1065
        %v1096 = vadd.f32 %v926, %v1070
        %v1097 = vadd.f32 %v927, %v1073
        %v1098 = vadd.f32 %v928, %v1078
        %v1099 = vadd.f32 %v929, %v1081
        %v1100 = vld [vmem:[%s759 + $0x2] sm:$0xff]
        %v1101 = vld [vmem:[%s759 + $0x12] sm:$0xff]
        %v1102 = vld [vmem:[%s759 + $0x22] sm:$0xff]
        %v1103 = vld [vmem:[%s759 + $0x32] sm:$0xff]
        %v1104 = vld [vmem:[%s759 + $0x42] sm:$0xff]
        %v1105 = vld [vmem:[%s759 + $0x52] sm:$0xff]
        %v1106 = vld [vmem:[%s759 + $0x62] sm:$0xff]
        %v1107 = vld [vmem:[%s759 + $0x72] sm:$0xff]
        %v1108 = vld [vmem:[%s759 + $0xa2] sm:$0xff]
        %v1109 = vld [vmem:[%s759 + $0xb2] sm:$0xff]
        %v1110 = vld [vmem:[%s759 + $0xc2] sm:$0xff]
        %v1111 = vld [vmem:[%s759 + $0xd2] sm:$0xff]
        %v1112 = vld [vmem:[%s759 + $0xe2] sm:$0xff]
        %v1113 = vld [vmem:[%s759 + $0xf2] sm:$0xff]
        %v1114 = vld [vmem:[%s759 + $0x102] sm:$0xff]
        %v1115 = vld [vmem:[%s759 + $0x112] sm:$0xff]
        %v1116 = vpack.c.bf16 %v1101, %v1100
        %v1117 = vpack.c.bf16 %v1103, %v1102
        %v1118 = vpack.c.bf16 %v1105, %v1104
        %v1119 = vpack.c.bf16 %v1107, %v1106
        %v1120 = vpack.c.bf16 %v1109, %v1108
        %v1121 = vpack.c.bf16 %v1111, %v1110
        %v1122 = vpack.c.bf16 %v1113, %v1112
        %v1123 = vpack.c.bf16 %v1115, %v1114
        %s1124 = scalar_lea.vmem %s1, 40
        %v1125 = vld [vmem:[%s1124] sm:$0xf]
        %v1126 = vld [vmem:[%s1124 + $0x4] sm:$0xf]
        %v1129 = vunpack.c.l.b16 %v1125
        %v1130 = vunpack.c.l.b16 %v1126
        %v1131 = vpack.c.b16 %v1130, %v1129
        %v1134 = vsel %vm281, %v1116, 0
        %v1137 = vsel %vm281, %v1117, 0
        %v1140 = vsel %vm281, %v1118, 0
        %v1143 = vsel %vm281, %v1119, 0
        %v1146 = vsel %vm281, %v1120, 0
        %v1149 = vsel %vm281, %v1121, 0
        %v1152 = vsel %vm281, %v1122, 0
        %v1155 = vsel %vm281, %v1123, 0
        %1157 = vmatprep.subr.bf16.mxu0 0
        %1158 = vmatpush1.bf16.msra.mxu0 %v1131
        %1159 = vmatprep.subr.bf16.mxu0 0
        %1160 = vmatpush1.bf16.msra.mxu0 0
        %1161 = vmatprep.subr.bf16.mxu0 0
        %1162 = vmatpush1.bf16.msra.mxu0 0
        %1163 = vmatprep.subr.bf16.mxu0 0
        %1164 = vmatpush1.bf16.msra.mxu0 0
        %1165 = vmatprep.subr.bf16.mxu0 0
        %1166 = vmatpush1.bf16.msra.mxu0 0
        %1167 = vmatprep.subr.bf16.mxu0 0
        %1168 = vmatpush1.bf16.msra.mxu0 0
        %1169 = vmatprep.subr.bf16.mxu0 0
        %1170 = vmatpush1.bf16.msra.mxu0 0
        %1171 = vmatprep.subr.bf16.mxu0 0
        %1172 = vmatpush1.bf16.msra.mxu0 0
        %1173 = vmatprep.subr.bf16.mxu0 0
        %1174 = vmatpush1.bf16.msra.mxu0 0
        %1175 = vmatprep.subr.bf16.mxu0 0
        %1176 = vmatpush1.bf16.msra.mxu0 0
        %1177 = vmatprep.subr.bf16.mxu0 0
        %1178 = vmatpush1.bf16.msra.mxu0 0
        %1179 = vmatprep.subr.bf16.mxu0 0
        %1180 = vmatpush1.bf16.msra.mxu0 0
        %1181 = vmatprep.subr.bf16.mxu0 0
        %1182 = vmatpush1.bf16.msra.mxu0 0
        %1183 = vmatprep.subr.bf16.mxu0 0
        %1184 = vmatpush1.bf16.msra.mxu0 0
        %1185 = vmatprep.subr.bf16.mxu0 0
        %1186 = vmatpush1.bf16.msra.mxu0 0
        %1187 = vmatprep.subr.bf16.mxu0 0
        %1188 = vmatpush1.bf16.msra.mxu0 0
        %1189 = vmatprep.mubr.bf16.mxu0 0
        %1190 = vmatmul.mubr.bf16.gmra.mrb[0].mxu0 %v1134
        %v1191 = vpop.f32.mrb[0].mxu0
        %v1192 = vadd.f32 0.0, %v1191
        %v1193 = vpop.f32.mrb[0].mxu0
        %v1194 = vpop.f32.mrb[0].mxu0
        %v1195 = vadd.f32 0.0, %v1194
        %v1196 = vpop.f32.mrb[0].mxu0
        %1197 = vmatprep.mubr.bf16.mxu0 0
        %1198 = vmatmul.mubr.bf16.gmra.mrb[0].mxu0 %v1137
        %v1199 = vpop.f32.mrb[0].mxu0
        %v1200 = vadd.f32 0.0, %v1199
        %v1201 = vpop.f32.mrb[0].mxu0
        %v1202 = vpop.f32.mrb[0].mxu0
        %v1203 = vadd.f32 0.0, %v1202
        %v1204 = vpop.f32.mrb[0].mxu0
        %1205 = vmatprep.mubr.bf16.mxu0 0
        %1206 = vmatmul.mubr.bf16.gmra.mrb[0].mxu0 %v1140
        %v1207 = vpop.f32.mrb[0].mxu0
        %v1208 = vadd.f32 0.0, %v1207
        %v1209 = vpop.f32.mrb[0].mxu0
        %v1210 = vpop.f32.mrb[0].mxu0
        %v1211 = vadd.f32 0.0, %v1210
        %v1212 = vpop.f32.mrb[0].mxu0
        %1213 = vmatprep.mubr.bf16.mxu0 0
        %1214 = vmatmul.mubr.bf16.gmra.mrb[0].mxu0 %v1143
        %v1215 = vpop.f32.mrb[0].mxu0
        %v1216 = vadd.f32 0.0, %v1215
        %v1217 = vpop.f32.mrb[0].mxu0
        %v1218 = vpop.f32.mrb[0].mxu0
        %v1219 = vadd.f32 0.0, %v1218
        %v1220 = vpop.f32.mrb[0].mxu0
        %1221 = vmatprep.mubr.bf16.mxu0 0
        %1222 = vmatmul.mubr.bf16.gmra.mrb[0].mxu0 %v1146
        %v1223 = vpop.f32.mrb[0].mxu0
        %v1224 = vadd.f32 0.0, %v1223
        %v1225 = vpop.f32.mrb[0].mxu0
        %v1226 = vpop.f32.mrb[0].mxu0
        %v1227 = vadd.f32 0.0, %v1226
        %v1228 = vpop.f32.mrb[0].mxu0
        %1229 = vmatprep.mubr.bf16.mxu0 0
        %1230 = vmatmul.mubr.bf16.gmra.mrb[0].mxu0 %v1149
        %v1231 = vpop.f32.mrb[0].mxu0
        %v1232 = vadd.f32 0.0, %v1231
        %v1233 = vpop.f32.mrb[0].mxu0
        %v1234 = vpop.f32.mrb[0].mxu0
        %v1235 = vadd.f32 0.0, %v1234
        %v1236 = vpop.f32.mrb[0].mxu0
        %1237 = vmatprep.mubr.bf16.mxu0 0
        %1238 = vmatmul.mubr.bf16.gmra.mrb[0].mxu0 %v1152
        %v1239 = vpop.f32.mrb[0].mxu0
        %v1240 = vadd.f32 0.0, %v1239
        %v1241 = vpop.f32.mrb[0].mxu0
        %v1242 = vpop.f32.mrb[0].mxu0
        %v1243 = vadd.f32 0.0, %v1242
        %v1244 = vpop.f32.mrb[0].mxu0
        %1245 = vmatprep.mubr.bf16.mxu0 0
        %1246 = vmatmul.mubr.bf16.gmra.mrb[0].mxu0 %v1155
        %v1247 = vpop.f32.mrb[0].mxu0
        %v1248 = vadd.f32 0.0, %v1247
        %v1249 = vpop.f32.mrb[0].mxu0
        %v1250 = vpop.f32.mrb[0].mxu0
        %v1251 = vadd.f32 0.0, %v1250
        %v1252 = vpop.f32.mrb[0].mxu0
        %1253 = vdwg.mxu0
        %v1254 = vadd.f32 %v1084, %v1192
        %v1255 = vadd.f32 %v1085, %v1195
        %v1256 = vadd.f32 %v1086, %v1200
        %v1257 = vadd.f32 %v1087, %v1203
        %v1258 = vadd.f32 %v1088, %v1208
        %v1259 = vadd.f32 %v1089, %v1211
        %v1260 = vadd.f32 %v1090, %v1216
        %v1261 = vadd.f32 %v1091, %v1219
        %v1262 = vadd.f32 %v1092, %v1224
        %v1263 = vadd.f32 %v1093, %v1227
        %v1264 = vadd.f32 %v1094, %v1232
        %v1265 = vadd.f32 %v1095, %v1235
        %v1266 = vadd.f32 %v1096, %v1240
        %v1267 = vadd.f32 %v1097, %v1243
        %v1268 = vadd.f32 %v1098, %v1248
        %v1269 = vadd.f32 %v1099, %v1251
        %s1270 = scalar_lea.vmem [#allocation2], 32
        %v1271 = vld [vmem:[%s1270] sm:$0xff]
        %v1272 = vld [vmem:[%s1270 + $0x10] sm:$0xff]
        %v1273 = vld [vmem:[%s1270 + $0x20] sm:$0xff]
        %v1274 = vld [vmem:[%s1270 + $0x30] sm:$0xff]
        %v1275 = vld [vmem:[%s1270 + $0x40] sm:$0xff]
        %v1276 = vld [vmem:[%s1270 + $0x50] sm:$0xff]
        %v1277 = vld [vmem:[%s1270 + $0x60] sm:$0xff]
        %v1278 = vld [vmem:[%s1270 + $0x70] sm:$0xff]
        %v1279 = vld [vmem:[%s1270 + $0xa0] sm:$0xff]
        %v1280 = vld [vmem:[%s1270 + $0xb0] sm:$0xff]
        %v1281 = vld [vmem:[%s1270 + $0xc0] sm:$0xff]
        %v1282 = vld [vmem:[%s1270 + $0xd0] sm:$0xff]
        %v1283 = vld [vmem:[%s1270 + $0xe0] sm:$0xff]
        %v1284 = vld [vmem:[%s1270 + $0xf0] sm:$0xff]
        %v1285 = vld [vmem:[%s1270 + $0x100] sm:$0xff]
        %v1286 = vld [vmem:[%s1270 + $0x110] sm:$0xff]
        %v1287 = vpack.c.bf16 %v1272, %v1271
        %v1288 = vpack.c.bf16 %v1274, %v1273
        %v1289 = vpack.c.bf16 %v1276, %v1275
        %v1290 = vpack.c.bf16 %v1278, %v1277
        %v1291 = vpack.c.bf16 %v1280, %v1279
        %v1292 = vpack.c.bf16 %v1282, %v1281
        %v1293 = vpack.c.bf16 %v1284, %v1283
        %v1294 = vpack.c.bf16 %v1286, %v1285
        %s1295 = scalar_lea.vmem %s1, 48
        %v1296 = vld [vmem:[%s1295] sm:$0xf]
        %v1297 = vld [vmem:[%s1295 + $0x4] sm:$0xf]
        %v1300 = vunpack.c.l.b16 %v1296
        %v1301 = vunpack.c.l.b16 %v1297
        %v1302 = vpack.c.b16 %v1301, %v1300
        %v1305 = vsel %vm281, %v1287, 0
        %v1308 = vsel %vm281, %v1288, 0
        %v1311 = vsel %vm281, %v1289, 0
        %v1314 = vsel %vm281, %v1290, 0
        %v1317 = vsel %vm281, %v1291, 0
        %v1320 = vsel %vm281, %v1292, 0
        %v1323 = vsel %vm281, %v1293, 0
        %v1326 = vsel %vm281, %v1294, 0
        %1328 = vmatprep.subr.bf16.mxu0 0
        %1329 = vmatpush1.bf16.msra.mxu0 %v1302
        %1330 = vmatprep.subr.bf16.mxu0 0
        %1331 = vmatpush1.bf16.msra.mxu0 0
        %1332 = vmatprep.subr.bf16.mxu0 0
        %1333 = vmatpush1.bf16.msra.mxu0 0
        %1334 = vmatprep.subr.bf16.mxu0 0
        %1335 = vmatpush1.bf16.msra.mxu0 0
        %1336 = vmatprep.subr.bf16.mxu0 0
        %1337 = vmatpush1.bf16.msra.mxu0 0
        %1338 = vmatprep.subr.bf16.mxu0 0
        %1339 = vmatpush1.bf16.msra.mxu0 0
        %1340 = vmatprep.subr.bf16.mxu0 0
        %1341 = vmatpush1.bf16.msra.mxu0 0
        %1342 = vmatprep.subr.bf16.mxu0 0
        %1343 = vmatpush1.bf16.msra.mxu0 0
        %1344 = vmatprep.subr.bf16.mxu0 0
        %1345 = vmatpush1.bf16.msra.mxu0 0
        %1346 = vmatprep.subr.bf16.mxu0 0
        %1347 = vmatpush1.bf16.msra.mxu0 0
        %1348 = vmatprep.subr.bf16.mxu0 0
        %1349 = vmatpush1.bf16.msra.mxu0 0
        %1350 = vmatprep.subr.bf16.mxu0 0
        %1351 = vmatpush1.bf16.msra.mxu0 0
        %1352 = vmatprep.subr.bf16.mxu0 0
        %1353 = vmatpush1.bf16.msra.mxu0 0
        %1354 = vmatprep.subr.bf16.mxu0 0
        %1355 = vmatpush1.bf16.msra.mxu0 0
        %1356 = vmatprep.subr.bf16.mxu0 0
        %1357 = vmatpush1.bf16.msra.mxu0 0
        %1358 = vmatprep.subr.bf16.mxu0 0
        %1359 = vmatpush1.bf16.msra.mxu0 0
        %1360 = vmatprep.mubr.bf16.mxu0 0
        %1361 = vmatmul.mubr.bf16.gmra.mrb[0].mxu0 %v1305
        %v1362 = vpop.f32.mrb[0].mxu0
        %v1363 = vadd.f32 0.0, %v1362
        %v1364 = vpop.f32.mrb[0].mxu0
        %v1365 = vpop.f32.mrb[0].mxu0
        %v1366 = vadd.f32 0.0, %v1365
        %v1367 = vpop.f32.mrb[0].mxu0
        %1368 = vmatprep.mubr.bf16.mxu0 0
        %1369 = vmatmul.mubr.bf16.gmra.mrb[0].mxu0 %v1308
        %v1370 = vpop.f32.mrb[0].mxu0
        %v1371 = vadd.f32 0.0, %v1370
        %v1372 = vpop.f32.mrb[0].mxu0
        %v1373 = vpop.f32.mrb[0].mxu0
        %v1374 = vadd.f32 0.0, %v1373
        %v1375 = vpop.f32.mrb[0].mxu0
        %1376 = vmatprep.mubr.bf16.mxu0 0
        %1377 = vmatmul.mubr.bf16.gmra.mrb[0].mxu0 %v1311
        %v1378 = vpop.f32.mrb[0].mxu0
        %v1379 = vadd.f32 0.0, %v1378
        %v1380 = vpop.f32.mrb[0].mxu0
        %v1381 = vpop.f32.mrb[0].mxu0
        %v1382 = vadd.f32 0.0, %v1381
        %v1383 = vpop.f32.mrb[0].mxu0
        %1384 = vmatprep.mubr.bf16.mxu0 0
        %1385 = vmatmul.mubr.bf16.gmra.mrb[0].mxu0 %v1314
        %v1386 = vpop.f32.mrb[0].mxu0
        %v1387 = vadd.f32 0.0, %v1386
        %v1388 = vpop.f32.mrb[0].mxu0
        %v1389 = vpop.f32.mrb[0].mxu0
        %v1390 = vadd.f32 0.0, %v1389
        %v1391 = vpop.f32.mrb[0].mxu0
        %1392 = vmatprep.mubr.bf16.mxu0 0
        %1393 = vmatmul.mubr.bf16.gmra.mrb[0].mxu0 %v1317
        %v1394 = vpop.f32.mrb[0].mxu0
        %v1395 = vadd.f32 0.0, %v1394
        %v1396 = vpop.f32.mrb[0].mxu0
        %v1397 = vpop.f32.mrb[0].mxu0
        %v1398 = vadd.f32 0.0, %v1397
        %v1399 = vpop.f32.mrb[0].mxu0
        %1400 = vmatprep.mubr.bf16.mxu0 0
        %1401 = vmatmul.mubr.bf16.gmra.mrb[0].mxu0 %v1320
        %v1402 = vpop.f32.mrb[0].mxu0
        %v1403 = vadd.f32 0.0, %v1402
        %v1404 = vpop.f32.mrb[0].mxu0
        %v1405 = vpop.f32.mrb[0].mxu0
        %v1406 = vadd.f32 0.0, %v1405
        %v1407 = vpop.f32.mrb[0].mxu0
        %1408 = vmatprep.mubr.bf16.mxu0 0
        %1409 = vmatmul.mubr.bf16.gmra.mrb[0].mxu0 %v1323
        %v1410 = vpop.f32.mrb[0].mxu0
        %v1411 = vadd.f32 0.0, %v1410
        %v1412 = vpop.f32.mrb[0].mxu0
        %v1413 = vpop.f32.mrb[0].mxu0
        %v1414 = vadd.f32 0.0, %v1413
        %v1415 = vpop.f32.mrb[0].mxu0
        %1416 = vmatprep.mubr.bf16.mxu0 0
        %1417 = vmatmul.mubr.bf16.gmra.mrb[0].mxu0 %v1326
        %v1418 = vpop.f32.mrb[0].mxu0
        %v1419 = vadd.f32 0.0, %v1418
        %v1420 = vpop.f32.mrb[0].mxu0
        %v1421 = vpop.f32.mrb[0].mxu0
        %v1422 = vadd.f32 0.0, %v1421
        %v1423 = vpop.f32.mrb[0].mxu0
        %1424 = vdwg.mxu0
        %v1425 = vadd.f32 %v1254, %v1363
        %v1426 = vadd.f32 %v1255, %v1366
        %v1427 = vadd.f32 %v1256, %v1371
        %v1428 = vadd.f32 %v1257, %v1374
        %v1429 = vadd.f32 %v1258, %v1379
        %v1430 = vadd.f32 %v1259, %v1382
        %v1431 = vadd.f32 %v1260, %v1387
        %v1432 = vadd.f32 %v1261, %v1390
        %v1433 = vadd.f32 %v1262, %v1395
        %v1434 = vadd.f32 %v1263, %v1398
        %v1435 = vadd.f32 %v1264, %v1403
        %v1436 = vadd.f32 %v1265, %v1406
        %v1437 = vadd.f32 %v1266, %v1411
        %v1438 = vadd.f32 %v1267, %v1414
        %v1439 = vadd.f32 %v1268, %v1419
        %v1440 = vadd.f32 %v1269, %v1422
        %v1441 = vld [vmem:[%s1270 + $0x1] sm:$0xff]
        %v1442 = vld [vmem:[%s1270 + $0x11] sm:$0xff]
        %v1443 = vld [vmem:[%s1270 + $0x21] sm:$0xff]
        %v1444 = vld [vmem:[%s1270 + $0x31] sm:$0xff]
        %v1445 = vld [vmem:[%s1270 + $0x41] sm:$0xff]
        %v1446 = vld [vmem:[%s1270 + $0x51] sm:$0xff]
        %v1447 = vld [vmem:[%s1270 + $0x61] sm:$0xff]
        %v1448 = vld [vmem:[%s1270 + $0x71] sm:$0xff]
        %v1449 = vld [vmem:[%s1270 + $0xa1] sm:$0xff]
        %v1450 = vld [vmem:[%s1270 + $0xb1] sm:$0xff]
        %v1451 = vld [vmem:[%s1270 + $0xc1] sm:$0xff]
        %v1452 = vld [vmem:[%s1270 + $0xd1] sm:$0xff]
        %v1453 = vld [vmem:[%s1270 + $0xe1] sm:$0xff]
        %v1454 = vld [vmem:[%s1270 + $0xf1] sm:$0xff]
        %v1455 = vld [vmem:[%s1270 + $0x101] sm:$0xff]
        %v1456 = vld [vmem:[%s1270 + $0x111] sm:$0xff]
        %v1457 = vpack.c.bf16 %v1442, %v1441
        %v1458 = vpack.c.bf16 %v1444, %v1443
        %v1459 = vpack.c.bf16 %v1446, %v1445
        %v1460 = vpack.c.bf16 %v1448, %v1447
        %v1461 = vpack.c.bf16 %v1450, %v1449
        %v1462 = vpack.c.bf16 %v1452, %v1451
        %v1463 = vpack.c.bf16 %v1454, %v1453
        %v1464 = vpack.c.bf16 %v1456, %v1455
        %s1465 = scalar_lea.vmem %s1, 56
        %v1466 = vld [vmem:[%s1465] sm:$0xf]
        %v1467 = vld [vmem:[%s1465 + $0x4] sm:$0xf]
        %v1470 = vunpack.c.l.b16 %v1466
        %v1471 = vunpack.c.l.b16 %v1467
        %v1472 = vpack.c.b16 %v1471, %v1470
        %v1475 = vsel %vm281, %v1457, 0
        %v1478 = vsel %vm281, %v1458, 0
        %v1481 = vsel %vm281, %v1459, 0
        %v1484 = vsel %vm281, %v1460, 0
        %v1487 = vsel %vm281, %v1461, 0
        %v1490 = vsel %vm281, %v1462, 0
        %v1493 = vsel %vm281, %v1463, 0
        %v1496 = vsel %vm281, %v1464, 0
        %1498 = vmatprep.subr.bf16.mxu0 0
        %1499 = vmatpush1.bf16.msra.mxu0 %v1472
        %1500 = vmatprep.subr.bf16.mxu0 0
        %1501 = vmatpush1.bf16.msra.mxu0 0
        %1502 = vmatprep.subr.bf16.mxu0 0
        %1503 = vmatpush1.bf16.msra.mxu0 0
        %1504 = vmatprep.subr.bf16.mxu0 0
        %1505 = vmatpush1.bf16.msra.mxu0 0
        %1506 = vmatprep.subr.bf16.mxu0 0
        %1507 = vmatpush1.bf16.msra.mxu0 0
        %1508 = vmatprep.subr.bf16.mxu0 0
        %1509 = vmatpush1.bf16.msra.mxu0 0
        %1510 = vmatprep.subr.bf16.mxu0 0
        %1511 = vmatpush1.bf16.msra.mxu0 0
        %1512 = vmatprep.subr.bf16.mxu0 0
        %1513 = vmatpush1.bf16.msra.mxu0 0
        %1514 = vmatprep.subr.bf16.mxu0 0
        %1515 = vmatpush1.bf16.msra.mxu0 0
        %1516 = vmatprep.subr.bf16.mxu0 0
        %1517 = vmatpush1.bf16.msra.mxu0 0
        %1518 = vmatprep.subr.bf16.mxu0 0
        %1519 = vmatpush1.bf16.msra.mxu0 0
        %1520 = vmatprep.subr.bf16.mxu0 0
        %1521 = vmatpush1.bf16.msra.mxu0 0
        %1522 = vmatprep.subr.bf16.mxu0 0
        %1523 = vmatpush1.bf16.msra.mxu0 0
        %1524 = vmatprep.subr.bf16.mxu0 0
        %1525 = vmatpush1.bf16.msra.mxu0 0
        %1526 = vmatprep.subr.bf16.mxu0 0
        %1527 = vmatpush1.bf16.msra.mxu0 0
        %1528 = vmatprep.subr.bf16.mxu0 0
        %1529 = vmatpush1.bf16.msra.mxu0 0
        %1530 = vmatprep.mubr.bf16.mxu0 0
        %1531 = vmatmul.mubr.bf16.gmra.mrb[0].mxu0 %v1475
        %v1532 = vpop.f32.mrb[0].mxu0
        %v1533 = vadd.f32 0.0, %v1532
        %v1534 = vpop.f32.mrb[0].mxu0
        %v1535 = vpop.f32.mrb[0].mxu0
        %v1536 = vadd.f32 0.0, %v1535
        %v1537 = vpop.f32.mrb[0].mxu0
        %1538 = vmatprep.mubr.bf16.mxu0 0
        %1539 = vmatmul.mubr.bf16.gmra.mrb[0].mxu0 %v1478
        %v1540 = vpop.f32.mrb[0].mxu0
        %v1541 = vadd.f32 0.0, %v1540
        %v1542 = vpop.f32.mrb[0].mxu0
        %v1543 = vpop.f32.mrb[0].mxu0
        %v1544 = vadd.f32 0.0, %v1543
        %v1545 = vpop.f32.mrb[0].mxu0
        %1546 = vmatprep.mubr.bf16.mxu0 0
        %1547 = vmatmul.mubr.bf16.gmra.mrb[0].mxu0 %v1481
        %v1548 = vpop.f32.mrb[0].mxu0
        %v1549 = vadd.f32 0.0, %v1548
        %v1550 = vpop.f32.mrb[0].mxu0
        %v1551 = vpop.f32.mrb[0].mxu0
        %v1552 = vadd.f32 0.0, %v1551
        %v1553 = vpop.f32.mrb[0].mxu0
        %1554 = vmatprep.mubr.bf16.mxu0 0
        %1555 = vmatmul.mubr.bf16.gmra.mrb[0].mxu0 %v1484
        %v1556 = vpop.f32.mrb[0].mxu0
        %v1557 = vadd.f32 0.0, %v1556
        %v1558 = vpop.f32.mrb[0].mxu0
        %v1559 = vpop.f32.mrb[0].mxu0
        %v1560 = vadd.f32 0.0, %v1559
        %v1561 = vpop.f32.mrb[0].mxu0
        %1562 = vmatprep.mubr.bf16.mxu0 0
        %1563 = vmatmul.mubr.bf16.gmra.mrb[0].mxu0 %v1487
        %v1564 = vpop.f32.mrb[0].mxu0
        %v1565 = vadd.f32 0.0, %v1564
        %v1566 = vpop.f32.mrb[0].mxu0
        %v1567 = vpop.f32.mrb[0].mxu0
        %v1568 = vadd.f32 0.0, %v1567
        %v1569 = vpop.f32.mrb[0].mxu0
        %1570 = vmatprep.mubr.bf16.mxu0 0
        %1571 = vmatmul.mubr.bf16.gmra.mrb[0].mxu0 %v1490
        %v1572 = vpop.f32.mrb[0].mxu0
        %v1573 = vadd.f32 0.0, %v1572
        %v1574 = vpop.f32.mrb[0].mxu0
        %v1575 = vpop.f32.mrb[0].mxu0
        %v1576 = vadd.f32 0.0, %v1575
        %v1577 = vpop.f32.mrb[0].mxu0
        %1578 = vmatprep.mubr.bf16.mxu0 0
        %1579 = vmatmul.mubr.bf16.gmra.mrb[0].mxu0 %v1493
        %v1580 = vpop.f32.mrb[0].mxu0
        %v1581 = vadd.f32 0.0, %v1580
        %v1582 = vpop.f32.mrb[0].mxu0
        %v1583 = vpop.f32.mrb[0].mxu0
        %v1584 = vadd.f32 0.0, %v1583
        %v1585 = vpop.f32.mrb[0].mxu0
        %1586 = vmatprep.mubr.bf16.mxu0 0
        %1587 = vmatmul.mubr.bf16.gmra.mrb[0].mxu0 %v1496
        %v1588 = vpop.f32.mrb[0].mxu0
        %v1589 = vadd.f32 0.0, %v1588
        %v1590 = vpop.f32.mrb[0].mxu0
        %v1591 = vpop.f32.mrb[0].mxu0
        %v1592 = vadd.f32 0.0, %v1591
        %v1593 = vpop.f32.mrb[0].mxu0
        %1594 = vdwg.mxu0
        %v1595 = vadd.f32 %v1425, %v1533
        %v1596 = vadd.f32 %v1426, %v1536
        %v1597 = vadd.f32 %v1427, %v1541
        %v1598 = vadd.f32 %v1428, %v1544
        %v1599 = vadd.f32 %v1429, %v1549
        %v1600 = vadd.f32 %v1430, %v1552
        %v1601 = vadd.f32 %v1431, %v1557
        %v1602 = vadd.f32 %v1432, %v1560
        %v1603 = vadd.f32 %v1433, %v1565
        %v1604 = vadd.f32 %v1434, %v1568
        %v1605 = vadd.f32 %v1435, %v1573
        %v1606 = vadd.f32 %v1436, %v1576
        %v1607 = vadd.f32 %v1437, %v1581
        %v1608 = vadd.f32 %v1438, %v1584
        %v1609 = vadd.f32 %v1439, %v1589
        %v1610 = vadd.f32 %v1440, %v1592
        %v1611 = vld [vmem:[%s1270 + $0x2] sm:$0xff]
        %v1612 = vld [vmem:[%s1270 + $0x12] sm:$0xff]
        %v1613 = vld [vmem:[%s1270 + $0x22] sm:$0xff]
        %v1614 = vld [vmem:[%s1270 + $0x32] sm:$0xff]
        %v1615 = vld [vmem:[%s1270 + $0x42] sm:$0xff]
        %v1616 = vld [vmem:[%s1270 + $0x52] sm:$0xff]
        %v1617 = vld [vmem:[%s1270 + $0x62] sm:$0xff]
        %v1618 = vld [vmem:[%s1270 + $0x72] sm:$0xff]
        %v1619 = vld [vmem:[%s1270 + $0xa2] sm:$0xff]
        %v1620 = vld [vmem:[%s1270 + $0xb2] sm:$0xff]
        %v1621 = vld [vmem:[%s1270 + $0xc2] sm:$0xff]
        %v1622 = vld [vmem:[%s1270 + $0xd2] sm:$0xff]
        %v1623 = vld [vmem:[%s1270 + $0xe2] sm:$0xff]
        %v1624 = vld [vmem:[%s1270 + $0xf2] sm:$0xff]
        %v1625 = vld [vmem:[%s1270 + $0x102] sm:$0xff]
        %v1626 = vld [vmem:[%s1270 + $0x112] sm:$0xff]
        %v1627 = vpack.c.bf16 %v1612, %v1611
        %v1628 = vpack.c.bf16 %v1614, %v1613
        %v1629 = vpack.c.bf16 %v1616, %v1615
        %v1630 = vpack.c.bf16 %v1618, %v1617
        %v1631 = vpack.c.bf16 %v1620, %v1619
        %v1632 = vpack.c.bf16 %v1622, %v1621
        %v1633 = vpack.c.bf16 %v1624, %v1623
        %v1634 = vpack.c.bf16 %v1626, %v1625
        %s1635 = scalar_lea.vmem %s1, 64
        %v1636 = vld [vmem:[%s1635] sm:$0xf]
        %v1637 = vld [vmem:[%s1635 + $0x4] sm:$0xf]
        %v1640 = vunpack.c.l.b16 %v1636
        %v1641 = vunpack.c.l.b16 %v1637
        %v1642 = vpack.c.b16 %v1641, %v1640
        %v1645 = vsel %vm281, %v1627, 0
        %v1648 = vsel %vm281, %v1628, 0
        %v1651 = vsel %vm281, %v1629, 0
        %v1654 = vsel %vm281, %v1630, 0
        %v1657 = vsel %vm281, %v1631, 0
        %v1660 = vsel %vm281, %v1632, 0
        %v1663 = vsel %vm281, %v1633, 0
        %v1666 = vsel %vm281, %v1634, 0
        %1668 = vmatprep.subr.bf16.mxu0 0
        %1669 = vmatpush1.bf16.msra.mxu0 %v1642
        %1670 = vmatprep.subr.bf16.mxu0 0
        %1671 = vmatpush1.bf16.msra.mxu0 0
        %1672 = vmatprep.subr.bf16.mxu0 0
        %1673 = vmatpush1.bf16.msra.mxu0 0
        %1674 = vmatprep.subr.bf16.mxu0 0
        %1675 = vmatpush1.bf16.msra.mxu0 0
        %1676 = vmatprep.subr.bf16.mxu0 0
        %1677 = vmatpush1.bf16.msra.mxu0 0
        %1678 = vmatprep.subr.bf16.mxu0 0
        %1679 = vmatpush1.bf16.msra.mxu0 0
        %1680 = vmatprep.subr.bf16.mxu0 0
        %1681 = vmatpush1.bf16.msra.mxu0 0
        %1682 = vmatprep.subr.bf16.mxu0 0
        %1683 = vmatpush1.bf16.msra.mxu0 0
        %1684 = vmatprep.subr.bf16.mxu0 0
        %1685 = vmatpush1.bf16.msra.mxu0 0
        %1686 = vmatprep.subr.bf16.mxu0 0
        %1687 = vmatpush1.bf16.msra.mxu0 0
        %1688 = vmatprep.subr.bf16.mxu0 0
        %1689 = vmatpush1.bf16.msra.mxu0 0
        %1690 = vmatprep.subr.bf16.mxu0 0
        %1691 = vmatpush1.bf16.msra.mxu0 0
        %1692 = vmatprep.subr.bf16.mxu0 0
        %1693 = vmatpush1.bf16.msra.mxu0 0
        %1694 = vmatprep.subr.bf16.mxu0 0
        %1695 = vmatpush1.bf16.msra.mxu0 0
        %1696 = vmatprep.subr.bf16.mxu0 0
        %1697 = vmatpush1.bf16.msra.mxu0 0
        %1698 = vmatprep.subr.bf16.mxu0 0
        %1699 = vmatpush1.bf16.msra.mxu0 0
        %1700 = vmatprep.mubr.bf16.mxu0 0
        %1701 = vmatmul.mubr.bf16.gmra.mrb[0].mxu0 %v1645
        %v1702 = vpop.f32.mrb[0].mxu0
        %v1703 = vadd.f32 0.0, %v1702
        %v1704 = vpop.f32.mrb[0].mxu0
        %v1705 = vpop.f32.mrb[0].mxu0
        %v1706 = vadd.f32 0.0, %v1705
        %v1707 = vpop.f32.mrb[0].mxu0
        %1708 = vmatprep.mubr.bf16.mxu0 0
        %1709 = vmatmul.mubr.bf16.gmra.mrb[0].mxu0 %v1648
        %v1710 = vpop.f32.mrb[0].mxu0
        %v1711 = vadd.f32 0.0, %v1710
        %v1712 = vpop.f32.mrb[0].mxu0
        %v1713 = vpop.f32.mrb[0].mxu0
        %v1714 = vadd.f32 0.0, %v1713
        %v1715 = vpop.f32.mrb[0].mxu0
        %1716 = vmatprep.mubr.bf16.mxu0 0
        %1717 = vmatmul.mubr.bf16.gmra.mrb[0].mxu0 %v1651
        %v1718 = vpop.f32.mrb[0].mxu0
        %v1719 = vadd.f32 0.0, %v1718
        %v1720 = vpop.f32.mrb[0].mxu0
        %v1721 = vpop.f32.mrb[0].mxu0
        %v1722 = vadd.f32 0.0, %v1721
        %v1723 = vpop.f32.mrb[0].mxu0
        %1724 = vmatprep.mubr.bf16.mxu0 0
        %1725 = vmatmul.mubr.bf16.gmra.mrb[0].mxu0 %v1654
        %v1726 = vpop.f32.mrb[0].mxu0
        %v1727 = vadd.f32 0.0, %v1726
        %v1728 = vpop.f32.mrb[0].mxu0
        %v1729 = vpop.f32.mrb[0].mxu0
        %v1730 = vadd.f32 0.0, %v1729
        %v1731 = vpop.f32.mrb[0].mxu0
        %1732 = vmatprep.mubr.bf16.mxu0 0
        %1733 = vmatmul.mubr.bf16.gmra.mrb[0].mxu0 %v1657
        %v1734 = vpop.f32.mrb[0].mxu0
        %v1735 = vadd.f32 0.0, %v1734
        %v1736 = vpop.f32.mrb[0].mxu0
        %v1737 = vpop.f32.mrb[0].mxu0
        %v1738 = vadd.f32 0.0, %v1737
        %v1739 = vpop.f32.mrb[0].mxu0
        %1740 = vmatprep.mubr.bf16.mxu0 0
        %1741 = vmatmul.mubr.bf16.gmra.mrb[0].mxu0 %v1660
        %v1742 = vpop.f32.mrb[0].mxu0
        %v1743 = vadd.f32 0.0, %v1742
        %v1744 = vpop.f32.mrb[0].mxu0
        %v1745 = vpop.f32.mrb[0].mxu0
        %v1746 = vadd.f32 0.0, %v1745
        %v1747 = vpop.f32.mrb[0].mxu0
        %1748 = vmatprep.mubr.bf16.mxu0 0
        %1749 = vmatmul.mubr.bf16.gmra.mrb[0].mxu0 %v1663
        %v1750 = vpop.f32.mrb[0].mxu0
        %v1751 = vadd.f32 0.0, %v1750
        %v1752 = vpop.f32.mrb[0].mxu0
        %v1753 = vpop.f32.mrb[0].mxu0
        %v1754 = vadd.f32 0.0, %v1753
        %v1755 = vpop.f32.mrb[0].mxu0
        %1756 = vmatprep.mubr.bf16.mxu0 0
        %1757 = vmatmul.mubr.bf16.gmra.mrb[0].mxu0 %v1666
        %v1758 = vpop.f32.mrb[0].mxu0
        %v1759 = vadd.f32 0.0, %v1758
        %v1760 = vpop.f32.mrb[0].mxu0
        %v1761 = vpop.f32.mrb[0].mxu0
        %v1762 = vadd.f32 0.0, %v1761
        %v1763 = vpop.f32.mrb[0].mxu0
        %1764 = vdwg.mxu0
        %v1765 = vadd.f32 %v1595, %v1703
        %v1766 = vadd.f32 %v1596, %v1706
        %v1767 = vadd.f32 %v1597, %v1711
        %v1768 = vadd.f32 %v1598, %v1714
        %v1769 = vadd.f32 %v1599, %v1719
        %v1770 = vadd.f32 %v1600, %v1722
        %v1771 = vadd.f32 %v1601, %v1727
        %v1772 = vadd.f32 %v1602, %v1730
        %v1773 = vadd.f32 %v1603, %v1735
        %v1774 = vadd.f32 %v1604, %v1738
        %v1775 = vadd.f32 %v1605, %v1743
        %v1776 = vadd.f32 %v1606, %v1746
        %v1777 = vadd.f32 %v1607, %v1751
        %v1778 = vadd.f32 %v1608, %v1754
        %v1779 = vadd.f32 %v1609, %v1759
        %v1780 = vadd.f32 %v1610, %v1762
        %v1781 = vxor.u32 %v1765, 2147483648
        %v1782 = vxor.u32 %v1766, 2147483648
        %v1783 = vxor.u32 %v1767, 2147483648
        %v1784 = vxor.u32 %v1768, 2147483648
        %v1785 = vxor.u32 %v1769, 2147483648
        %v1786 = vxor.u32 %v1770, 2147483648
        %v1787 = vxor.u32 %v1771, 2147483648
        %v1788 = vxor.u32 %v1772, 2147483648
        %v1789 = vxor.u32 %v1773, 2147483648
        %v1790 = vxor.u32 %v1774, 2147483648
        %v1791 = vxor.u32 %v1775, 2147483648
        %v1792 = vxor.u32 %v1776, 2147483648
        %v1793 = vxor.u32 %v1777, 2147483648
        %v1794 = vxor.u32 %v1778, 2147483648
        %v1795 = vxor.u32 %v1779, 2147483648
        %v1796 = vxor.u32 %v1780, 2147483648
        %v1797 = vmul.f32 %v1781, 1.442695
        %v1798 = vpow.pop %v1797
        %v1799 = vmul.f32 %v1782, 1.442695
        %v1800 = vpow.pop %v1799
        %v1801 = vmul.f32 %v1783, 1.442695
        %v1802 = vpow.pop %v1801
        %v1803 = vmul.f32 %v1784, 1.442695
        %v1804 = vpow.pop %v1803
        %v1805 = vmul.f32 %v1785, 1.442695
        %v1806 = vpow.pop %v1805
        %v1807 = vmul.f32 %v1786, 1.442695
        %v1808 = vpow.pop %v1807
        %v1809 = vmul.f32 %v1787, 1.442695
        %v1810 = vpow.pop %v1809
        %v1811 = vmul.f32 %v1788, 1.442695
        %v1812 = vpow.pop %v1811
        %v1813 = vmul.f32 %v1789, 1.442695
        %v1814 = vpow.pop %v1813
        %v1815 = vmul.f32 %v1790, 1.442695
        %v1816 = vpow.pop %v1815
        %v1817 = vmul.f32 %v1791, 1.442695
        %v1818 = vpow.pop %v1817
        %v1819 = vmul.f32 %v1792, 1.442695
        %v1820 = vpow.pop %v1819
        %v1821 = vmul.f32 %v1793, 1.442695
        %v1822 = vpow.pop %v1821
        %v1823 = vmul.f32 %v1794, 1.442695
        %v1824 = vpow.pop %v1823
        %v1825 = vmul.f32 %v1795, 1.442695
        %v1826 = vpow.pop %v1825
        %v1827 = vmul.f32 %v1796, 1.442695
        %v1828 = vpow.pop %v1827
        %v1829 = vadd.f32 %v1798, 1.0
        %v1830 = vadd.f32 %v1800, 1.0
        %v1831 = vadd.f32 %v1802, 1.0
        %v1832 = vadd.f32 %v1804, 1.0
        %v1833 = vadd.f32 %v1806, 1.0
        %v1834 = vadd.f32 %v1808, 1.0
        %v1835 = vadd.f32 %v1810, 1.0
        %v1836 = vadd.f32 %v1812, 1.0
        %v1837 = vadd.f32 %v1814, 1.0
        %v1838 = vadd.f32 %v1816, 1.0
        %v1839 = vadd.f32 %v1818, 1.0
        %v1840 = vadd.f32 %v1820, 1.0
        %v1841 = vadd.f32 %v1822, 1.0
        %v1842 = vadd.f32 %v1824, 1.0
        %v1843 = vadd.f32 %v1826, 1.0
        %v1844 = vadd.f32 %v1828, 1.0
        %v1845 = vrcp.pop %v1829
        %v1846 = vmul.f32 1.0, %v1845
        %v1847 = vrcp.pop %v1830
        %v1848 = vmul.f32 1.0, %v1847
        %v1849 = vrcp.pop %v1831
        %v1850 = vmul.f32 1.0, %v1849
        %v1851 = vrcp.pop %v1832
        %v1852 = vmul.f32 1.0, %v1851
        %v1853 = vrcp.pop %v1833
        %v1854 = vmul.f32 1.0, %v1853
        %v1855 = vrcp.pop %v1834
        %v1856 = vmul.f32 1.0, %v1855
        %v1857 = vrcp.pop %v1835
        %v1858 = vmul.f32 1.0, %v1857
        %v1859 = vrcp.pop %v1836
        %v1860 = vmul.f32 1.0, %v1859
        %v1861 = vrcp.pop %v1837
        %v1862 = vmul.f32 1.0, %v1861
        %v1863 = vrcp.pop %v1838
        %v1864 = vmul.f32 1.0, %v1863
        %v1865 = vrcp.pop %v1839
        %v1866 = vmul.f32 1.0, %v1865
        %v1867 = vrcp.pop %v1840
        %v1868 = vmul.f32 1.0, %v1867
        %v1869 = vrcp.pop %v1841
        %v1870 = vmul.f32 1.0, %v1869
        %v1871 = vrcp.pop %v1842
        %v1872 = vmul.f32 1.0, %v1871
        %v1873 = vrcp.pop %v1843
        %v1874 = vmul.f32 1.0, %v1873
        %v1875 = vrcp.pop %v1844
        %v1876 = vmul.f32 1.0, %v1875
        %v1877 = vtanh.pop %v1765
        %v1878 = vtanh.pop %v1766
        %v1879 = vtanh.pop %v1767
        %v1880 = vtanh.pop %v1768
        %v1881 = vtanh.pop %v1769
        %v1882 = vtanh.pop %v1770
        %v1883 = vtanh.pop %v1771
        %v1884 = vtanh.pop %v1772
        %v1885 = vtanh.pop %v1773
        %v1886 = vtanh.pop %v1774
        %v1887 = vtanh.pop %v1775
        %v1888 = vtanh.pop %v1776
        %v1889 = vtanh.pop %v1777
        %v1890 = vtanh.pop %v1778
        %v1891 = vtanh.pop %v1779
        %v1892 = vtanh.pop %v1780
        %v1893 = vld [vmem:[#allocation3] sm:$0xff]
        %v1894 = vld [vmem:[#allocation3 + $0x8] sm:$0xff]
        %v1895 = vld [vmem:[#allocation3 + $0x10] sm:$0xff]
        %v1896 = vld [vmem:[#allocation3 + $0x18] sm:$0xff]
        %v1897 = vld [vmem:[#allocation3 + $0x20] sm:$0xff]
        %v1898 = vld [vmem:[#allocation3 + $0x28] sm:$0xff]
        %v1899 = vld [vmem:[#allocation3 + $0x30] sm:$0xff]
        %v1900 = vld [vmem:[#allocation3 + $0x38] sm:$0xff]
        %v1901 = vld [vmem:[#allocation3 + $0x40] sm:$0xff]
        %v1902 = vld [vmem:[#allocation3 + $0x48] sm:$0xff]
        %v1903 = vld [vmem:[#allocation3 + $0x50] sm:$0xff]
        %v1904 = vld [vmem:[#allocation3 + $0x58] sm:$0xff]
        %v1905 = vld [vmem:[#allocation3 + $0x60] sm:$0xff]
        %v1906 = vld [vmem:[#allocation3 + $0x68] sm:$0xff]
        %v1907 = vld [vmem:[#allocation3 + $0x70] sm:$0xff]
        %v1908 = vld [vmem:[#allocation3 + $0x78] sm:$0xff]
        %1925 = vrot.lane.b32.xlu0 %v1893, 16
        %v1926 = vpop.permute.xlu0 %1925
        %1927 = vrot.lane.b32.xlu0 %v1894, 16
        %v1928 = vpop.permute.xlu0 %1927
        %1929 = vrot.lane.b32.xlu0 %v1895, 16
        %v1930 = vpop.permute.xlu0 %1929
        %1931 = vrot.lane.b32.xlu0 %v1896, 16
        %v1932 = vpop.permute.xlu0 %1931
        %1933 = vrot.lane.b32.xlu0 %v1897, 16
        %v1934 = vpop.permute.xlu0 %1933
        %1935 = vrot.lane.b32.xlu0 %v1898, 16
        %v1936 = vpop.permute.xlu0 %1935
        %1937 = vrot.lane.b32.xlu0 %v1899, 16
        %v1938 = vpop.permute.xlu0 %1937
        %1939 = vrot.lane.b32.xlu0 %v1900, 16
        %v1940 = vpop.permute.xlu0 %1939
        %1941 = vrot.lane.b32.xlu0 %v1901, 16
        %v1942 = vpop.permute.xlu0 %1941
        %1943 = vrot.lane.b32.xlu0 %v1902, 16
        %v1944 = vpop.permute.xlu0 %1943
        %1945 = vrot.lane.b32.xlu0 %v1903, 16
        %v1946 = vpop.permute.xlu0 %1945
        %1947 = vrot.lane.b32.xlu0 %v1904, 16
        %v1948 = vpop.permute.xlu0 %1947
        %1949 = vrot.lane.b32.xlu0 %v1905, 16
        %v1950 = vpop.permute.xlu0 %1949
        %1951 = vrot.lane.b32.xlu0 %v1906, 16
        %v1952 = vpop.permute.xlu0 %1951
        %1953 = vrot.lane.b32.xlu0 %v1907, 16
        %v1954 = vpop.permute.xlu0 %1953
        %1955 = vrot.lane.b32.xlu0 %v1908, 16
        %v1956 = vpop.permute.xlu0 %1955
        %v1973 = vmul.f32 %v1846, %v1926
        %v1974 = vmul.f32 %v1848, %v1928
        %v1975 = vmul.f32 %v1850, %v1930
        %v1976 = vmul.f32 %v1852, %v1932
        %v1977 = vmul.f32 %v1854, %v1934
        %v1978 = vmul.f32 %v1856, %v1936
        %v1979 = vmul.f32 %v1858, %v1938
        %v1980 = vmul.f32 %v1860, %v1940
        %v1981 = vmul.f32 %v1862, %v1942
        %v1982 = vmul.f32 %v1864, %v1944
        %v1983 = vmul.f32 %v1866, %v1946
        %v1984 = vmul.f32 %v1868, %v1948
        %v1985 = vmul.f32 %v1870, %v1950
        %v1986 = vmul.f32 %v1872, %v1952
        %v1987 = vmul.f32 %v1874, %v1954
        %v1988 = vmul.f32 %v1876, %v1956
        %2005 = vrot.lane.b32.xlu0 %v1877, 96
        %v2006 = vpop.permute.xlu0 %2005
        %2007 = vrot.lane.b32.xlu0 %v1878, 96
        %v2008 = vpop.permute.xlu0 %2007
        %2009 = vrot.lane.b32.xlu0 %v1879, 96
        %v2010 = vpop.permute.xlu0 %2009
        %2011 = vrot.lane.b32.xlu0 %v1880, 96
        %v2012 = vpop.permute.xlu0 %2011
        %2013 = vrot.lane.b32.xlu0 %v1881, 96
        %v2014 = vpop.permute.xlu0 %2013
        %2015 = vrot.lane.b32.xlu0 %v1882, 96
        %v2016 = vpop.permute.xlu0 %2015
        %2017 = vrot.lane.b32.xlu0 %v1883, 96
        %v2018 = vpop.permute.xlu0 %2017
        %2019 = vrot.lane.b32.xlu0 %v1884, 96
        %v2020 = vpop.permute.xlu0 %2019
        %2021 = vrot.lane.b32.xlu0 %v1885, 96
        %v2022 = vpop.permute.xlu0 %2021
        %2023 = vrot.lane.b32.xlu0 %v1886, 96
        %v2024 = vpop.permute.xlu0 %2023
        %2025 = vrot.lane.b32.xlu0 %v1887, 96
        %v2026 = vpop.permute.xlu0 %2025
        %2027 = vrot.lane.b32.xlu0 %v1888, 96
        %v2028 = vpop.permute.xlu0 %2027
        %2029 = vrot.lane.b32.xlu0 %v1889, 96
        %v2030 = vpop.permute.xlu0 %2029
        %2031 = vrot.lane.b32.xlu0 %v1890, 96
        %v2032 = vpop.permute.xlu0 %2031
        %2033 = vrot.lane.b32.xlu0 %v1891, 96
        %v2034 = vpop.permute.xlu0 %2033
        %2035 = vrot.lane.b32.xlu0 %v1892, 96
        %v2036 = vpop.permute.xlu0 %2035
        %v2053 = vmul.f32 %v1846, %v2006
        %v2054 = vmul.f32 %v1848, %v2008
        %v2055 = vmul.f32 %v1850, %v2010
        %v2056 = vmul.f32 %v1852, %v2012
        %v2057 = vmul.f32 %v1854, %v2014
        %v2058 = vmul.f32 %v1856, %v2016
        %v2059 = vmul.f32 %v1858, %v2018
        %v2060 = vmul.f32 %v1860, %v2020
        %v2061 = vmul.f32 %v1862, %v2022
        %v2062 = vmul.f32 %v1864, %v2024
        %v2063 = vmul.f32 %v1866, %v2026
        %v2064 = vmul.f32 %v1868, %v2028
        %v2065 = vmul.f32 %v1870, %v2030
        %v2066 = vmul.f32 %v1872, %v2032
        %v2067 = vmul.f32 %v1874, %v2034
        %v2068 = vmul.f32 %v1876, %v2036
        %2085 = vrot.lane.b32.xlu0 %v2053, 16
        %v2086 = vpop.permute.xlu0 %2085
        %2087 = vrot.lane.b32.xlu0 %v2054, 16
        %v2088 = vpop.permute.xlu0 %2087
        %2089 = vrot.lane.b32.xlu0 %v2055, 16
        %v2090 = vpop.permute.xlu0 %2089
        %2091 = vrot.lane.b32.xlu0 %v2056, 16
        %v2092 = vpop.permute.xlu0 %2091
        %2093 = vrot.lane.b32.xlu0 %v2057, 16
        %v2094 = vpop.permute.xlu0 %2093
        %2095 = vrot.lane.b32.xlu0 %v2058, 16
        %v2096 = vpop.permute.xlu0 %2095
        %2097 = vrot.lane.b32.xlu0 %v2059, 16
        %v2098 = vpop.permute.xlu0 %2097
        %2099 = vrot.lane.b32.xlu0 %v2060, 16
        %v2100 = vpop.permute.xlu0 %2099
        %2101 = vrot.lane.b32.xlu0 %v2061, 16
        %v2102 = vpop.permute.xlu0 %2101
        %2103 = vrot.lane.b32.xlu0 %v2062, 16
        %v2104 = vpop.permute.xlu0 %2103
        %2105 = vrot.lane.b32.xlu0 %v2063, 16
        %v2106 = vpop.permute.xlu0 %2105
        %2107 = vrot.lane.b32.xlu0 %v2064, 16
        %v2108 = vpop.permute.xlu0 %2107
        %2109 = vrot.lane.b32.xlu0 %v2065, 16
        %v2110 = vpop.permute.xlu0 %2109
        %2111 = vrot.lane.b32.xlu0 %v2066, 16
        %v2112 = vpop.permute.xlu0 %2111
        %2113 = vrot.lane.b32.xlu0 %v2067, 16
        %v2114 = vpop.permute.xlu0 %2113
        %2115 = vrot.lane.b32.xlu0 %v2068, 16
        %v2116 = vpop.permute.xlu0 %2115
        %v2133 = vadd.f32 %v1973, %v2086
        %v2134 = vadd.f32 %v1974, %v2088
        %v2135 = vadd.f32 %v1975, %v2090
        %v2136 = vadd.f32 %v1976, %v2092
        %v2137 = vadd.f32 %v1977, %v2094
        %v2138 = vadd.f32 %v1978, %v2096
        %v2139 = vadd.f32 %v1979, %v2098
        %v2140 = vadd.f32 %v1980, %v2100
        %v2141 = vadd.f32 %v1981, %v2102
        %v2142 = vadd.f32 %v1982, %v2104
        %v2143 = vadd.f32 %v1983, %v2106
        %v2144 = vadd.f32 %v1984, %v2108
        %v2145 = vadd.f32 %v1985, %v2110
        %v2146 = vadd.f32 %v1986, %v2112
        %v2147 = vadd.f32 %v1987, %v2114
        %v2148 = vadd.f32 %v1988, %v2116
        %v2149 = vtanh.pop %v2133
        %v2150 = vtanh.pop %v2134
        %v2151 = vtanh.pop %v2135
        %v2152 = vtanh.pop %v2136
        %v2153 = vtanh.pop %v2137
        %v2154 = vtanh.pop %v2138
        %v2155 = vtanh.pop %v2139
        %v2156 = vtanh.pop %v2140
        %v2157 = vtanh.pop %v2141
        %v2158 = vtanh.pop %v2142
        %v2159 = vtanh.pop %v2143
        %v2160 = vtanh.pop %v2144
        %v2161 = vtanh.pop %v2145
        %v2162 = vtanh.pop %v2146
        %v2163 = vtanh.pop %v2147
        %v2164 = vtanh.pop %v2148
        %2181 = vrot.lane.b32.xlu0 %v2149, 32
        %v2182 = vpop.permute.xlu0 %2181
        %2183 = vrot.lane.b32.xlu0 %v2150, 32
        %v2184 = vpop.permute.xlu0 %2183
        %2185 = vrot.lane.b32.xlu0 %v2151, 32
        %v2186 = vpop.permute.xlu0 %2185
        %2187 = vrot.lane.b32.xlu0 %v2152, 32
        %v2188 = vpop.permute.xlu0 %2187
        %2189 = vrot.lane.b32.xlu0 %v2153, 32
        %v2190 = vpop.permute.xlu0 %2189
        %2191 = vrot.lane.b32.xlu0 %v2154, 32
        %v2192 = vpop.permute.xlu0 %2191
        %2193 = vrot.lane.b32.xlu0 %v2155, 32
        %v2194 = vpop.permute.xlu0 %2193
        %2195 = vrot.lane.b32.xlu0 %v2156, 32
        %v2196 = vpop.permute.xlu0 %2195
        %2197 = vrot.lane.b32.xlu0 %v2157, 32
        %v2198 = vpop.permute.xlu0 %2197
        %2199 = vrot.lane.b32.xlu0 %v2158, 32
        %v2200 = vpop.permute.xlu0 %2199
        %2201 = vrot.lane.b32.xlu0 %v2159, 32
        %v2202 = vpop.permute.xlu0 %2201
        %2203 = vrot.lane.b32.xlu0 %v2160, 32
        %v2204 = vpop.permute.xlu0 %2203
        %2205 = vrot.lane.b32.xlu0 %v2161, 32
        %v2206 = vpop.permute.xlu0 %2205
        %2207 = vrot.lane.b32.xlu0 %v2162, 32
        %v2208 = vpop.permute.xlu0 %2207
        %2209 = vrot.lane.b32.xlu0 %v2163, 32
        %v2210 = vpop.permute.xlu0 %2209
        %2211 = vrot.lane.b32.xlu0 %v2164, 32
        %v2212 = vpop.permute.xlu0 %2211
        %v2229 = vmul.f32 %v1846, %v2182
        %v2230 = vmul.f32 %v1848, %v2184
        %v2231 = vmul.f32 %v1850, %v2186
        %v2232 = vmul.f32 %v1852, %v2188
        %v2233 = vmul.f32 %v1854, %v2190
        %v2234 = vmul.f32 %v1856, %v2192
        %v2235 = vmul.f32 %v1858, %v2194
        %v2236 = vmul.f32 %v1860, %v2196
        %v2237 = vmul.f32 %v1862, %v2198
        %v2238 = vmul.f32 %v1864, %v2200
        %v2239 = vmul.f32 %v1866, %v2202
        %v2240 = vmul.f32 %v1868, %v2204
        %v2241 = vmul.f32 %v1870, %v2206
        %v2242 = vmul.f32 %v1872, %v2208
        %v2243 = vmul.f32 %v1874, %v2210
        %v2244 = vmul.f32 %v1876, %v2212
        %2261 = vrot.lane.b32.xlu0 %v2133, 112
        %v2262 = vpop.permute.xlu0 %2261
        %2263 = vrot.lane.b32.xlu0 %v2134, 112
        %v2264 = vpop.permute.xlu0 %2263
        %2265 = vrot.lane.b32.xlu0 %v2135, 112
        %v2266 = vpop.permute.xlu0 %2265
        %2267 = vrot.lane.b32.xlu0 %v2136, 112
        %v2268 = vpop.permute.xlu0 %2267
        %2269 = vrot.lane.b32.xlu0 %v2137, 112
        %v2270 = vpop.permute.xlu0 %2269
        %2271 = vrot.lane.b32.xlu0 %v2138, 112
        %v2272 = vpop.permute.xlu0 %2271
        %2273 = vrot.lane.b32.xlu0 %v2139, 112
        %v2274 = vpop.permute.xlu0 %2273
        %2275 = vrot.lane.b32.xlu0 %v2140, 112
        %v2276 = vpop.permute.xlu0 %2275
        %2277 = vrot.lane.b32.xlu0 %v2141, 112
        %v2278 = vpop.permute.xlu0 %2277
        %2279 = vrot.lane.b32.xlu0 %v2142, 112
        %v2280 = vpop.permute.xlu0 %2279
        %2281 = vrot.lane.b32.xlu0 %v2143, 112
        %v2282 = vpop.permute.xlu0 %2281
        %2283 = vrot.lane.b32.xlu0 %v2144, 112
        %v2284 = vpop.permute.xlu0 %2283
        %2285 = vrot.lane.b32.xlu0 %v2145, 112
        %v2286 = vpop.permute.xlu0 %2285
        %2287 = vrot.lane.b32.xlu0 %v2146, 112
        %v2288 = vpop.permute.xlu0 %2287
        %2289 = vrot.lane.b32.xlu0 %v2147, 112
        %v2290 = vpop.permute.xlu0 %2289
        %2291 = vrot.lane.b32.xlu0 %v2148, 112
        %v2292 = vpop.permute.xlu0 %2291
        %2309 = vst.msk [vmem:[#allocation3] sm:$0xff] %vm281, %v2262
        %2310 = vst.msk [vmem:[#allocation3 + $0x8] sm:$0xff] %vm281, %v2264
        %2311 = vst.msk [vmem:[#allocation3 + $0x10] sm:$0xff] %vm281, %v2266
        %2312 = vst.msk [vmem:[#allocation3 + $0x18] sm:$0xff] %vm281, %v2268
        %2313 = vst.msk [vmem:[#allocation3 + $0x20] sm:$0xff] %vm281, %v2270
        %2314 = vst.msk [vmem:[#allocation3 + $0x28] sm:$0xff] %vm281, %v2272
        %2315 = vst.msk [vmem:[#allocation3 + $0x30] sm:$0xff] %vm281, %v2274
        %2316 = vst.msk [vmem:[#allocation3 + $0x38] sm:$0xff] %vm281, %v2276
        %2317 = vst.msk [vmem:[#allocation3 + $0x40] sm:$0xff] %vm281, %v2278
        %2318 = vst.msk [vmem:[#allocation3 + $0x48] sm:$0xff] %vm281, %v2280
        %2319 = vst.msk [vmem:[#allocation3 + $0x50] sm:$0xff] %vm281, %v2282
        %2320 = vst.msk [vmem:[#allocation3 + $0x58] sm:$0xff] %vm281, %v2284
        %2321 = vst.msk [vmem:[#allocation3 + $0x60] sm:$0xff] %vm281, %v2286
        %2322 = vst.msk [vmem:[#allocation3 + $0x68] sm:$0xff] %vm281, %v2288
        %2323 = vst.msk [vmem:[#allocation3 + $0x70] sm:$0xff] %vm281, %v2290
        %2324 = vst.msk [vmem:[#allocation3 + $0x78] sm:$0xff] %vm281, %v2292
        %2341 = vrot.lane.b32.xlu0 %v2229, 80
        %v2342 = vpop.permute.xlu0 %2341
        %2343 = vrot.lane.b32.xlu0 %v2230, 80
        %v2344 = vpop.permute.xlu0 %2343
        %2345 = vrot.lane.b32.xlu0 %v2231, 80
        %v2346 = vpop.permute.xlu0 %2345
        %2347 = vrot.lane.b32.xlu0 %v2232, 80
        %v2348 = vpop.permute.xlu0 %2347
        %2349 = vrot.lane.b32.xlu0 %v2233, 80
        %v2350 = vpop.permute.xlu0 %2349
        %2351 = vrot.lane.b32.xlu0 %v2234, 80
        %v2352 = vpop.permute.xlu0 %2351
        %2353 = vrot.lane.b32.xlu0 %v2235, 80
        %v2354 = vpop.permute.xlu0 %2353
        %2355 = vrot.lane.b32.xlu0 %v2236, 80
        %v2356 = vpop.permute.xlu0 %2355
        %2357 = vrot.lane.b32.xlu0 %v2237, 80
        %v2358 = vpop.permute.xlu0 %2357
        %2359 = vrot.lane.b32.xlu0 %v2238, 80
        %v2360 = vpop.permute.xlu0 %2359
        %2361 = vrot.lane.b32.xlu0 %v2239, 80
        %v2362 = vpop.permute.xlu0 %2361
        %2363 = vrot.lane.b32.xlu0 %v2240, 80
        %v2364 = vpop.permute.xlu0 %2363
        %2365 = vrot.lane.b32.xlu0 %v2241, 80
        %v2366 = vpop.permute.xlu0 %2365
        %2367 = vrot.lane.b32.xlu0 %v2242, 80
        %v2368 = vpop.permute.xlu0 %2367
        %2369 = vrot.lane.b32.xlu0 %v2243, 80
        %v2370 = vpop.permute.xlu0 %2369
        %2371 = vrot.lane.b32.xlu0 %v2244, 80
        %v2372 = vpop.permute.xlu0 %2371
        %2389 = vst.msk [vmem:[%s169] sm:$0xff] %vm281, %v2342
        %2390 = vst.msk [vmem:[%s169 + $0x8] sm:$0xff] %vm281, %v2344
        %2391 = vst.msk [vmem:[%s169 + $0x10] sm:$0xff] %vm281, %v2346
        %2392 = vst.msk [vmem:[%s169 + $0x18] sm:$0xff] %vm281, %v2348
        %2393 = vst.msk [vmem:[%s169 + $0x20] sm:$0xff] %vm281, %v2350
        %2394 = vst.msk [vmem:[%s169 + $0x28] sm:$0xff] %vm281, %v2352
        %2395 = vst.msk [vmem:[%s169 + $0x30] sm:$0xff] %vm281, %v2354
        %2396 = vst.msk [vmem:[%s169 + $0x38] sm:$0xff] %vm281, %v2356
        %2397 = vst.msk [vmem:[%s169 + $0x40] sm:$0xff] %vm281, %v2358
        %2398 = vst.msk [vmem:[%s169 + $0x48] sm:$0xff] %vm281, %v2360
        %2399 = vst.msk [vmem:[%s169 + $0x50] sm:$0xff] %vm281, %v2362
        %2400 = vst.msk [vmem:[%s169 + $0x58] sm:$0xff] %vm281, %v2364
        %2401 = vst.msk [vmem:[%s169 + $0x60] sm:$0xff] %vm281, %v2366
        %2402 = vst.msk [vmem:[%s169 + $0x68] sm:$0xff] %vm281, %v2368
        %2403 = vst.msk [vmem:[%s169 + $0x70] sm:$0xff] %vm281, %v2370
        %2404 = vst.msk [vmem:[%s169 + $0x78] sm:$0xff] %vm281, %v2372
        %2405 = vst.msk [vmem:[%s759 + $0x1] sm:$0xff] %vm281, %v2342
        %2406 = vst.msk [vmem:[%s759 + $0x11] sm:$0xff] %vm281, %v2344
        %2407 = vst.msk [vmem:[%s759 + $0x21] sm:$0xff] %vm281, %v2346
        %2408 = vst.msk [vmem:[%s759 + $0x31] sm:$0xff] %vm281, %v2348
        %2409 = vst.msk [vmem:[%s759 + $0x41] sm:$0xff] %vm281, %v2350
        %2410 = vst.msk [vmem:[%s759 + $0x51] sm:$0xff] %vm281, %v2352
        %2411 = vst.msk [vmem:[%s759 + $0x61] sm:$0xff] %vm281, %v2354
        %2412 = vst.msk [vmem:[%s759 + $0x71] sm:$0xff] %vm281, %v2356
        %2413 = vst.msk [vmem:[%s759 + $0xa1] sm:$0xff] %vm281, %v2358
        %2414 = vst.msk [vmem:[%s759 + $0xb1] sm:$0xff] %vm281, %v2360
        %2415 = vst.msk [vmem:[%s759 + $0xc1] sm:$0xff] %vm281, %v2362
        %2416 = vst.msk [vmem:[%s759 + $0xd1] sm:$0xff] %vm281, %v2364
        %2417 = vst.msk [vmem:[%s759 + $0xe1] sm:$0xff] %vm281, %v2366
        %2418 = vst.msk [vmem:[%s759 + $0xf1] sm:$0xff] %vm281, %v2368
        %2419 = vst.msk [vmem:[%s759 + $0x101] sm:$0xff] %vm281, %v2370
        %2420 = vst.msk [vmem:[%s759 + $0x111] sm:$0xff] %vm281, %v2372
        %p2421 = scmp.lt.s32.totalorder %s16, 3
        %s2422 = scalar_select %p2421, %s16, 3
        %s2423 = smul.addr %s2422, 16
        %s2424 = smul.addr %s2423, 8
        %s2425 = scalar_lea.vmem %s2, %s2424
        // Predicated region
        $region33: #{encoder_forward.8} parent=27 // pred_check
          %p2426 = pneg %p81
        $region34: #{encoder_forward.8} parent=27 // pred_check_branch
          %2428 = sbr.rel (%p2426) target = $region36
        $region35: #{encoder_forward.8} parent=27 // pred_region
          _
        $region36: #{encoder_forward.8} parent=27 // pred_fallthru
          _
        // Predicated region
        $region37: #{encoder_forward.8} parent=27 // pred_check
          %p2429 = pneg %p102
        $region38: #{encoder_forward.8} parent=27 // pred_check_branch
          %2431 = sbr.rel (%p2429) target = $region40
        $region39: #{encoder_forward.8} parent=27 // pred_region
          %s2433 = ssub.s32 2048, 2048
          %2434 = vsyncadd [#allocation4], %s2433
          %s2435 = sshll.u32 [#allocation3], 4
          %s2436 = int_to_ptr.vmem [resolvable:$true] %s2435
          %2441 = dma.vmem_to_hbm [thread:$0]  %s2436, 2048, %s3, [#allocation4], 128, 128, 8
        $region40: #{encoder_forward.8} parent=27 // pred_fallthru
          _
        // Predicated region
        $region41: #{encoder_forward.8} parent=27 // pred_check
          %p2442 = pneg %p102
        $region42: #{encoder_forward.8} parent=27 // pred_check_branch
          %2444 = sbr.rel (%p2442) target = $region44
        $region43: #{encoder_forward.8} parent=27 // pred_region
          %2445 = dma.done [#allocation4], 2048
        $region44: #{encoder_forward.8} parent=27 // pred_fallthru
          _
      $region28: #{encoder_forward.8} parent=5 // pred_fallthru
        _
      %p2446 = scmp.le.s32.totalorder 2, %s11
      // Predicated region
      $region45: #{encoder_forward.8} parent=5 // pred_check
        %p2447 = pneg %p2446
      $region46: #{encoder_forward.8} parent=5 // pred_check_branch
        %2449 = sbr.rel (%p2447) target = $region48
      $region47: #{encoder_forward.8} parent=5 // pred_region
        %s2450 = ssub.s32 %s11, 2
        // Predicated region
        $region49: #{encoder_forward.8} parent=47 // pred_check
          %p2451 = pneg %p87
        $region50: #{encoder_forward.8} parent=47 // pred_check_branch
          %2453 = sbr.rel (%p2451) target = $region52
        $region51: #{encoder_forward.8} parent=47 // pred_region
          %p2454 = scmp.lt.s32.totalorder %s17, 3
          %s2455 = scalar_select %p2454, %s17, 3
          %s2456 = smul.addr %s2455, 16
          %s2457 = smul.addr %s2456, 8
          %s2458 = scalar_lea.vmem %s2, %s2457
        $region52: #{encoder_forward.8} parent=47 // pred_fallthru
          _
      $region48: #{encoder_forward.8} parent=5 // pred_fallthru
        _
    $region6: #{encoder_forward.8} parent=1 // loop_footer
      %s15 = sadd.s32 1, %s11
    $region7: #{encoder_forward.8} parent=1 // loop_footer_branch
      %10 = sbr.rel target = $region3
    $region8: #{encoder_forward.8} parent=1 // loop_exit
      _
    %2459 = vsyncpa [#allocation4], 1
    %s2460 = scalar_lea.sflag [#allocation4], 1
    %2461 = vsyncpa %s2460, 1

// kernel: encoder_forward.9
$region0: #{encoder_forward.9}
  #allocation0 [shape = 'u32[]', space=smem, size = 0x4, offset = 0x4, fixed_abs, tag = 'smem constant byte address 0x4 - core index']
  #allocation1 [shape = 'u32[144,128]{1,0:T(1,128)}', space=vmem, size = 0x12000, scoped, tag = 'internal scratch']
  %s0 = inlined_call_operand.vmem [shape: bf16[128,144], index: 0, kind: input, shape index: {}]
  %s1 = inlined_call_operand.vmem [shape: bf16[144,32], index: 1, kind: input, shape index: {}]
  %s2 = inlined_call_operand.vmem [shape: f32[1,32], index: 2, kind: input, shape index: {}]
  %s3 = inlined_call_operand.vmem [shape: f32[128,32], index: 3, kind: output, shape index: {}]
  %s4 = sld [smem:[#allocation0]]
  $region22: #{encoder_forward.9} parent=0
    _
  %s6 = ssub.s32 1, %s4
  %s7 = scalar_select 0, %s6, %s4
  // Predicated region
  $region2: #{encoder_forward.9} parent=0 // pred_check
    _
  $region3: #{encoder_forward.9} parent=0 // pred_check_branch
    %9 = sbr.rel (0) target = $region5
  $region4: #{encoder_forward.9} parent=0 // pred_region
    _
  $region5: #{encoder_forward.9} parent=0 // pred_fallthru
    _
  // Predicated region
  $region6: #{encoder_forward.9} parent=0 // pred_check
    _
  $region7: #{encoder_forward.9} parent=0 // pred_check_branch
    %11 = sbr.rel (0) target = $region9
  $region8: #{encoder_forward.9} parent=0 // pred_region
    _
  $region9: #{encoder_forward.9} parent=0 // pred_fallthru
    _
  // Predicated region
  $region10: #{encoder_forward.9} parent=0 // pred_check
    _
  $region11: #{encoder_forward.9} parent=0 // pred_check_branch
    %13 = sbr.rel (0) target = $region13
  $region12: #{encoder_forward.9} parent=0 // pred_region
    _
  $region13: #{encoder_forward.9} parent=0 // pred_fallthru
    _
  %v15 = vld [vmem:[%s0] sm:$0xff]
  %v16 = vld [vmem:[%s0 + $0x8] sm:$0xff]
  %v17 = vld [vmem:[%s0 + $0x10] sm:$0xff]
  %v18 = vld [vmem:[%s0 + $0x18] sm:$0xff]
  %v19 = vld [vmem:[%s0 + $0x20] sm:$0xff]
  %v20 = vld [vmem:[%s0 + $0x28] sm:$0xff]
  %v21 = vld [vmem:[%s0 + $0x30] sm:$0xff]
  %v22 = vld [vmem:[%s0 + $0x38] sm:$0xff]
  %v23 = vld [vmem:[%s0 + $0x40] sm:$0xff]
  %v24 = vld [vmem:[%s0 + $0x48] sm:$0xff]
  %v25 = vld [vmem:[%s0 + $0x50] sm:$0xff]
  %v26 = vld [vmem:[%s0 + $0x58] sm:$0xff]
  %v27 = vld [vmem:[%s0 + $0x60] sm:$0xff]
  %v28 = vld [vmem:[%s0 + $0x68] sm:$0xff]
  %v29 = vld [vmem:[%s0 + $0x70] sm:$0xff]
  %v30 = vld [vmem:[%s0 + $0x78] sm:$0xff]
  %v31 = vld [vmem:[%s1] sm:$0xf]
  %v32 = vld [vmem:[%s1 + $0x4] sm:$0xf]
  %v33 = vld [vmem:[%s1 + $0x8] sm:$0xf]
  %v34 = vld [vmem:[%s1 + $0xc] sm:$0xf]
  %v35 = vld [vmem:[%s1 + $0x10] sm:$0xf]
  %v36 = vld [vmem:[%s1 + $0x14] sm:$0xf]
  %v37 = vld [vmem:[%s1 + $0x18] sm:$0xf]
  %v38 = vld [vmem:[%s1 + $0x1c] sm:$0xf]
  %v39 = vld [vmem:[%s1 + $0x20] sm:$0xf]
  %v40 = vld [vmem:[%s1 + $0x24] sm:$0xf]
  %v41 = vld [vmem:[%s1 + $0x28] sm:$0xf]
  %v42 = vld [vmem:[%s1 + $0x2c] sm:$0xf]
  %v43 = vld [vmem:[%s1 + $0x30] sm:$0xf]
  %v44 = vld [vmem:[%s1 + $0x34] sm:$0xf]
  %v45 = vld [vmem:[%s1 + $0x38] sm:$0xf]
  %v46 = vld [vmem:[%s1 + $0x3c] sm:$0xf]
  %v47 = vld [vmem:[%s1 + $0x40] sm:$0xf]
  %v48 = vld [vmem:[%s1 + $0x44] sm:$0xf]
  %v49 = vld [vmem:[%s2] sm:$0x1]
  %v51 = vlaneseq
  %v52 = vshrl.u32 %v51, 7
  %v53 = vsub.s32 0, %v52
  %v54 = vrot.slane %v49, %v53
  %v72 = vunpack.c.l.b16 %v15
  %v73 = vunpack.c.h.b16 %v15
  %v74 = vunpack.c.l.b16 %v16
  %v75 = vunpack.c.h.b16 %v16
  %v76 = vunpack.c.l.b16 %v17
  %v77 = vunpack.c.h.b16 %v17
  %v78 = vunpack.c.l.b16 %v18
  %v79 = vunpack.c.h.b16 %v18
  %v80 = vunpack.c.l.b16 %v19
  %v81 = vunpack.c.h.b16 %v19
  %v82 = vunpack.c.l.b16 %v20
  %v83 = vunpack.c.h.b16 %v20
  %v84 = vunpack.c.l.b16 %v21
  %v85 = vunpack.c.h.b16 %v21
  %v86 = vunpack.c.l.b16 %v22
  %v87 = vunpack.c.h.b16 %v22
  %v88 = vunpack.c.l.b16 %v23
  %v89 = vunpack.c.h.b16 %v23
  %v90 = vunpack.c.l.b16 %v24
  %v91 = vunpack.c.h.b16 %v24
  %v92 = vunpack.c.l.b16 %v25
  %v93 = vunpack.c.h.b16 %v25
  %v94 = vunpack.c.l.b16 %v26
  %v95 = vunpack.c.h.b16 %v26
  %v96 = vunpack.c.l.b16 %v27
  %v97 = vunpack.c.h.b16 %v27
  %v98 = vunpack.c.l.b16 %v28
  %v99 = vunpack.c.h.b16 %v28
  %v100 = vunpack.c.l.b16 %v29
  %v101 = vunpack.c.h.b16 %v29
  %v102 = vunpack.c.l.b16 %v30
  %v103 = vunpack.c.h.b16 %v30
  %v104 = vpack.c.b16 %v74, %v72
  %v105 = vpack.c.b16 %v75, %v73
  %v106 = vpack.c.b16 %v78, %v76
  %v107 = vpack.c.b16 %v79, %v77
  %v108 = vpack.c.b16 %v82, %v80
  %v109 = vpack.c.b16 %v83, %v81
  %v110 = vpack.c.b16 %v86, %v84
  %v111 = vpack.c.b16 %v87, %v85
  %v112 = vpack.c.b16 %v90, %v88
  %v113 = vpack.c.b16 %v91, %v89
  %v114 = vpack.c.b16 %v94, %v92
  %v115 = vpack.c.b16 %v95, %v93
  %v116 = vpack.c.b16 %v98, %v96
  %v117 = vpack.c.b16 %v99, %v97
  %v118 = vpack.c.b16 %v102, %v100
  %v119 = vpack.c.b16 %v103, %v101
  %v146 = vunpack.c.l.b16 %v31
  %v147 = vunpack.c.l.b16 %v32
  %v148 = vunpack.c.l.b16 %v33
  %v149 = vunpack.c.l.b16 %v34
  %v150 = vunpack.c.l.b16 %v35
  %v151 = vunpack.c.l.b16 %v36
  %v152 = vunpack.c.l.b16 %v37
  %v153 = vunpack.c.l.b16 %v38
  %v154 = vunpack.c.l.b16 %v39
  %v155 = vunpack.c.l.b16 %v40
  %v156 = vunpack.c.l.b16 %v41
  %v157 = vunpack.c.l.b16 %v42
  %v158 = vunpack.c.l.b16 %v43
  %v159 = vunpack.c.l.b16 %v44
  %v160 = vunpack.c.l.b16 %v45
  %v161 = vunpack.c.l.b16 %v46
  %v162 = vunpack.c.l.b16 %v47
  %v163 = vunpack.c.l.b16 %v48
  %v164 = vpack.c.b16 %v147, %v146
  %v165 = vpack.c.b16 %v149, %v148
  %v166 = vpack.c.b16 %v151, %v150
  %v167 = vpack.c.b16 %v153, %v152
  %v168 = vpack.c.b16 %v155, %v154
  %v169 = vpack.c.b16 %v157, %v156
  %v170 = vpack.c.b16 %v159, %v158
  %v171 = vpack.c.b16 %v161, %v160
  %v172 = vpack.c.b16 %v163, %v162
  %vm182 = vcmask 130048
  %v184 = vsel %vm182, %v105, 0
  %v187 = vsel %vm182, %v107, 0
  %v190 = vsel %vm182, %v109, 0
  %v193 = vsel %vm182, %v111, 0
  %v196 = vsel %vm182, %v113, 0
  %v199 = vsel %vm182, %v115, 0
  %v202 = vsel %vm182, %v117, 0
  %v205 = vsel %vm182, %v119, 0
  %207 = vmatprep.subr.bf16.mxu0 0
  %208 = vmatpush1.bf16.msra.mxu0 %v164
  %209 = vmatprep.subr.bf16.mxu0 0
  %210 = vmatpush1.bf16.msra.mxu0 %v165
  %211 = vmatprep.subr.bf16.mxu0 0
  %212 = vmatpush1.bf16.msra.mxu0 %v166
  %213 = vmatprep.subr.bf16.mxu0 0
  %214 = vmatpush1.bf16.msra.mxu0 %v167
  %215 = vmatprep.subr.bf16.mxu0 0
  %216 = vmatpush1.bf16.msra.mxu0 %v168
  %217 = vmatprep.subr.bf16.mxu0 0
  %218 = vmatpush1.bf16.msra.mxu0 %v169
  %219 = vmatprep.subr.bf16.mxu0 0
  %220 = vmatpush1.bf16.msra.mxu0 %v170
  %221 = vmatprep.subr.bf16.mxu0 0
  %222 = vmatpush1.bf16.msra.mxu0 %v171
  %223 = vmatprep.subr.bf16.mxu0 0
  %224 = vmatpush1.bf16.msra.mxu0 %v172
  %225 = vmatprep.subr.bf16.mxu0 0
  %226 = vmatpush1.bf16.msra.mxu0 0
  %227 = vmatprep.subr.bf16.mxu0 0
  %228 = vmatpush1.bf16.msra.mxu0 0
  %229 = vmatprep.subr.bf16.mxu0 0
  %230 = vmatpush1.bf16.msra.mxu0 0
  %231 = vmatprep.subr.bf16.mxu0 0
  %232 = vmatpush1.bf16.msra.mxu0 0
  %233 = vmatprep.subr.bf16.mxu0 0
  %234 = vmatpush1.bf16.msra.mxu0 0
  %235 = vmatprep.subr.bf16.mxu0 0
  %236 = vmatpush1.bf16.msra.mxu0 0
  %237 = vmatprep.subr.bf16.mxu0 0
  %238 = vmatpush1.bf16.msra.mxu0 0
  %239 = vmatprep.mubr.bf16.mxu0 %v184
  %240 = vmatmul.mubr.bf16.gmra.mrb[0].mxu0 %v104
  %v241 = vpop.f32.mrb[0].mxu0
  %v242 = vadd.f32 %v54, %v241
  %v243 = vpop.f32.mrb[0].mxu0
  %v244 = vpop.f32.mrb[0].mxu0
  %v245 = vadd.f32 %v54, %v244
  %v246 = vpop.f32.mrb[0].mxu0
  %247 = vmatprep.mubr.bf16.mxu0 %v187
  %248 = vmatmul.mubr.bf16.gmra.mrb[0].mxu0 %v106
  %v249 = vpop.f32.mrb[0].mxu0
  %v250 = vadd.f32 %v54, %v249
  %v251 = vpop.f32.mrb[0].mxu0
  %v252 = vpop.f32.mrb[0].mxu0
  %v253 = vadd.f32 %v54, %v252
  %v254 = vpop.f32.mrb[0].mxu0
  %255 = vmatprep.mubr.bf16.mxu0 %v190
  %256 = vmatmul.mubr.bf16.gmra.mrb[0].mxu0 %v108
  %v257 = vpop.f32.mrb[0].mxu0
  %v258 = vadd.f32 %v54, %v257
  %v259 = vpop.f32.mrb[0].mxu0
  %v260 = vpop.f32.mrb[0].mxu0
  %v261 = vadd.f32 %v54, %v260
  %v262 = vpop.f32.mrb[0].mxu0
  %263 = vmatprep.mubr.bf16.mxu0 %v193
  %264 = vmatmul.mubr.bf16.gmra.mrb[0].mxu0 %v110
  %v265 = vpop.f32.mrb[0].mxu0
  %v266 = vadd.f32 %v54, %v265
  %v267 = vpop.f32.mrb[0].mxu0
  %v268 = vpop.f32.mrb[0].mxu0
  %v269 = vadd.f32 %v54, %v268
  %v270 = vpop.f32.mrb[0].mxu0
  %271 = vmatprep.mubr.bf16.mxu0 %v196
  %272 = vmatmul.mubr.bf16.gmra.mrb[0].mxu0 %v112
  %v273 = vpop.f32.mrb[0].mxu0
  %v274 = vadd.f32 %v54, %v273
  %v275 = vpop.f32.mrb[0].mxu0
  %v276 = vpop.f32.mrb[0].mxu0
  %v277 = vadd.f32 %v54, %v276
  %v278 = vpop.f32.mrb[0].mxu0
  %279 = vmatprep.mubr.bf16.mxu0 %v199
  %280 = vmatmul.mubr.bf16.gmra.mrb[0].mxu0 %v114
  %v281 = vpop.f32.mrb[0].mxu0
  %v282 = vadd.f32 %v54, %v281
  %v283 = vpop.f32.mrb[0].mxu0
  %v284 = vpop.f32.mrb[0].mxu0
  %v285 = vadd.f32 %v54, %v284
  %v286 = vpop.f32.mrb[0].mxu0
  %287 = vmatprep.mubr.bf16.mxu0 %v202
  %288 = vmatmul.mubr.bf16.gmra.mrb[0].mxu0 %v116
  %v289 = vpop.f32.mrb[0].mxu0
  %v290 = vadd.f32 %v54, %v289
  %v291 = vpop.f32.mrb[0].mxu0
  %v292 = vpop.f32.mrb[0].mxu0
  %v293 = vadd.f32 %v54, %v292
  %v294 = vpop.f32.mrb[0].mxu0
  %295 = vmatprep.mubr.bf16.mxu0 %v205
  %296 = vmatmul.mubr.bf16.gmra.mrb[0].mxu0 %v118
  %v297 = vpop.f32.mrb[0].mxu0
  %v298 = vadd.f32 %v54, %v297
  %v299 = vpop.f32.mrb[0].mxu0
  %v300 = vpop.f32.mrb[0].mxu0
  %v301 = vadd.f32 %v54, %v300
  %v302 = vpop.f32.mrb[0].mxu0
  %303 = vdwg.mxu0
  %vm304 = vcmp.ge.f32.partialorder %v242, 0.0
  %vm305 = vcmp.ge.f32.partialorder %v245, 0.0
  %vm306 = vcmp.ge.f32.partialorder %v250, 0.0
  %vm307 = vcmp.ge.f32.partialorder %v253, 0.0
  %vm308 = vcmp.ge.f32.partialorder %v258, 0.0
  %vm309 = vcmp.ge.f32.partialorder %v261, 0.0
  %vm310 = vcmp.ge.f32.partialorder %v266, 0.0
  %vm311 = vcmp.ge.f32.partialorder %v269, 0.0
  %vm312 = vcmp.ge.f32.partialorder %v274, 0.0
  %vm313 = vcmp.ge.f32.partialorder %v277, 0.0
  %vm314 = vcmp.ge.f32.partialorder %v282, 0.0
  %vm315 = vcmp.ge.f32.partialorder %v285, 0.0
  %vm316 = vcmp.ge.f32.partialorder %v290, 0.0
  %vm317 = vcmp.ge.f32.partialorder %v293, 0.0
  %vm318 = vcmp.ge.f32.partialorder %v298, 0.0
  %vm319 = vcmp.ge.f32.partialorder %v301, 0.0
  %v320 = vmul.f32 %v242, 0.2
  %v321 = vmul.f32 %v245, 0.2
  %v322 = vmul.f32 %v250, 0.2
  %v323 = vmul.f32 %v253, 0.2
  %v324 = vmul.f32 %v258, 0.2
  %v325 = vmul.f32 %v261, 0.2
  %v326 = vmul.f32 %v266, 0.2
  %v327 = vmul.f32 %v269, 0.2
  %v328 = vmul.f32 %v274, 0.2
  %v329 = vmul.f32 %v277, 0.2
  %v330 = vmul.f32 %v282, 0.2
  %v331 = vmul.f32 %v285, 0.2
  %v332 = vmul.f32 %v290, 0.2
  %v333 = vmul.f32 %v293, 0.2
  %v334 = vmul.f32 %v298, 0.2
  %v335 = vmul.f32 %v301, 0.2
  %v336 = vsel %vm304, %v242, %v320
  %v337 = vsel %vm305, %v245, %v321
  %v338 = vsel %vm306, %v250, %v322
  %v339 = vsel %vm307, %v253, %v323
  %v340 = vsel %vm308, %v258, %v324
  %v341 = vsel %vm309, %v261, %v325
  %v342 = vsel %vm310, %v266, %v326
  %v343 = vsel %vm311, %v269, %v327
  %v344 = vsel %vm312, %v274, %v328
  %v345 = vsel %vm313, %v277, %v329
  %v346 = vsel %vm314, %v282, %v330
  %v347 = vsel %vm315, %v285, %v331
  %v348 = vsel %vm316, %v290, %v332
  %v349 = vsel %vm317, %v293, %v333
  %v350 = vsel %vm318, %v298, %v334
  %v351 = vsel %vm319, %v301, %v335
  %vm352 = vcmask 261120
  %353 = vst.msk [vmem:[%s3] sm:$0xff] %vm352, %v336
  %354 = vst.msk [vmem:[%s3 + $0x8] sm:$0xff] %vm352, %v337
  %355 = vst.msk [vmem:[%s3 + $0x10] sm:$0xff] %vm352, %v338
  %356 = vst.msk [vmem:[%s3 + $0x18] sm:$0xff] %vm352, %v339
  %357 = vst.msk [vmem:[%s3 + $0x20] sm:$0xff] %vm352, %v340
  %358 = vst.msk [vmem:[%s3 + $0x28] sm:$0xff] %vm352, %v341
  %359 = vst.msk [vmem:[%s3 + $0x30] sm:$0xff] %vm352, %v342
  %360 = vst.msk [vmem:[%s3 + $0x38] sm:$0xff] %vm352, %v343
  %361 = vst.msk [vmem:[%s3 + $0x40] sm:$0xff] %vm352, %v344
  %362 = vst.msk [vmem:[%s3 + $0x48] sm:$0xff] %vm352, %v345
  %363 = vst.msk [vmem:[%s3 + $0x50] sm:$0xff] %vm352, %v346
  %364 = vst.msk [vmem:[%s3 + $0x58] sm:$0xff] %vm352, %v347
  %365 = vst.msk [vmem:[%s3 + $0x60] sm:$0xff] %vm352, %v348
  %366 = vst.msk [vmem:[%s3 + $0x68] sm:$0xff] %vm352, %v349
  %367 = vst.msk [vmem:[%s3 + $0x70] sm:$0xff] %vm352, %v350
  %368 = vst.msk [vmem:[%s3 + $0x78] sm:$0xff] %vm352, %v351
  // Predicated region
  $region14: #{encoder_forward.9} parent=0 // pred_check
    _
  $region15: #{encoder_forward.9} parent=0 // pred_check_branch
    %370 = sbr.rel (0) target = $region17
  $region16: #{encoder_forward.9} parent=0 // pred_region
    _
  $region17: #{encoder_forward.9} parent=0 // pred_fallthru
    _
  // Predicated region
  $region18: #{encoder_forward.9} parent=0 // pred_check
    _
  $region19: #{encoder_forward.9} parent=0 // pred_check_branch
    %372 = sbr.rel (0) target = $region21
  $region20: #{encoder_forward.9} parent=0 // pred_region
    _
  $region21: #{encoder_forward.9} parent=0 // pred_fallthru
    _

// kernel: encoder_forward.10
$region0: #{encoder_forward.10}
  #allocation0 [shape = 'u32[]', space=smem, size = 0x4, offset = 0x4, fixed_abs, tag = 'smem constant byte address 0x4 - core index']
  #allocation1 [shape = 'u32[144,128]{1,0:T(1,128)}', space=vmem, size = 0x12000, scoped, tag = 'internal scratch']
  %s0 = inlined_call_operand.vmem [shape: bf16[128,288], index: 0, kind: input, shape index: {}]
  %s1 = inlined_call_operand.vmem [shape: bf16[288,128], index: 1, kind: input, shape index: {}]
  %s2 = inlined_call_operand.vmem [shape: f32[1,128], index: 2, kind: input, shape index: {}]
  %s3 = inlined_call_operand.vmem [shape: f32[128,128], index: 3, kind: output, shape index: {}]
  %s4 = sld [smem:[#allocation0]]
  $region22: #{encoder_forward.10} parent=0
    _
  %s6 = ssub.s32 1, %s4
  %s7 = scalar_select 0, %s6, %s4
  // Predicated region
  $region2: #{encoder_forward.10} parent=0 // pred_check
    _
  $region3: #{encoder_forward.10} parent=0 // pred_check_branch
    %9 = sbr.rel (0) target = $region5
  $region4: #{encoder_forward.10} parent=0 // pred_region
    _
  $region5: #{encoder_forward.10} parent=0 // pred_fallthru
    _
  // Predicated region
  $region6: #{encoder_forward.10} parent=0 // pred_check
    _
  $region7: #{encoder_forward.10} parent=0 // pred_check_branch
    %11 = sbr.rel (0) target = $region9
  $region8: #{encoder_forward.10} parent=0 // pred_region
    _
  $region9: #{encoder_forward.10} parent=0 // pred_fallthru
    _
  // Predicated region
  $region10: #{encoder_forward.10} parent=0 // pred_check
    _
  $region11: #{encoder_forward.10} parent=0 // pred_check_branch
    %13 = sbr.rel (0) target = $region13
  $region12: #{encoder_forward.10} parent=0 // pred_region
    _
  $region13: #{encoder_forward.10} parent=0 // pred_fallthru
    _
  %v15 = vld [vmem:[%s0] sm:$0xff]
  %v16 = vld [vmem:[%s0 + $0x8] sm:$0xf]
  %v17 = vld [vmem:[%s0 + $0xc] sm:$0xff]
  %v18 = vld [vmem:[%s0 + $0x14] sm:$0xf]
  %v19 = vld [vmem:[%s0 + $0x18] sm:$0xff]
  %v20 = vld [vmem:[%s0 + $0x20] sm:$0xf]
  %v21 = vld [vmem:[%s0 + $0x24] sm:$0xff]
  %v22 = vld [vmem:[%s0 + $0x2c] sm:$0xf]
  %v23 = vld [vmem:[%s0 + $0x30] sm:$0xff]
  %v24 = vld [vmem:[%s0 + $0x38] sm:$0xf]
  %v25 = vld [vmem:[%s0 + $0x3c] sm:$0xff]
  %v26 = vld [vmem:[%s0 + $0x44] sm:$0xf]
  %v27 = vld [vmem:[%s0 + $0x48] sm:$0xff]
  %v28 = vld [vmem:[%s0 + $0x50] sm:$0xf]
  %v29 = vld [vmem:[%s0 + $0x54] sm:$0xff]
  %v30 = vld [vmem:[%s0 + $0x5c] sm:$0xf]
  %v31 = vld [vmem:[%s0 + $0x60] sm:$0xff]
  %v32 = vld [vmem:[%s0 + $0x68] sm:$0xf]
  %v33 = vld [vmem:[%s0 + $0x6c] sm:$0xff]
  %v34 = vld [vmem:[%s0 + $0x74] sm:$0xf]
  %v35 = vld [vmem:[%s0 + $0x78] sm:$0xff]
  %v36 = vld [vmem:[%s0 + $0x80] sm:$0xf]
  %v37 = vld [vmem:[%s0 + $0x84] sm:$0xff]
  %v38 = vld [vmem:[%s0 + $0x8c] sm:$0xf]
  %v39 = vld [vmem:[%s0 + $0x90] sm:$0xff]
  %v40 = vld [vmem:[%s0 + $0x98] sm:$0xf]
  %v41 = vld [vmem:[%s0 + $0x9c] sm:$0xff]
  %v42 = vld [vmem:[%s0 + $0xa4] sm:$0xf]
  %v43 = vld [vmem:[%s0 + $0xa8] sm:$0xff]
  %v44 = vld [vmem:[%s0 + $0xb0] sm:$0xf]
  %v45 = vld [vmem:[%s0 + $0xb4] sm:$0xff]
  %v46 = vld [vmem:[%s0 + $0xbc] sm:$0xf]
  %v47 = vld [vmem:[%s1] sm:$0xf]
  %v48 = vld [vmem:[%s1 + $0x4] sm:$0xf]
  %v49 = vld [vmem:[%s1 + $0x8] sm:$0xf]
  %v50 = vld [vmem:[%s1 + $0xc] sm:$0xf]
  %v51 = vld [vmem:[%s1 + $0x10] sm:$0xf]
  %v52 = vld [vmem:[%s1 + $0x14] sm:$0xf]
  %v53 = vld [vmem:[%s1 + $0x18] sm:$0xf]
  %v54 = vld [vmem:[%s1 + $0x1c] sm:$0xf]
  %v55 = vld [vmem:[%s1 + $0x20] sm:$0xf]
  %v56 = vld [vmem:[%s1 + $0x24] sm:$0xf]
  %v57 = vld [vmem:[%s1 + $0x28] sm:$0xf]
  %v58 = vld [vmem:[%s1 + $0x2c] sm:$0xf]
  %v59 = vld [vmem:[%s1 + $0x30] sm:$0xf]
  %v60 = vld [vmem:[%s1 + $0x34] sm:$0xf]
  %v61 = vld [vmem:[%s1 + $0x38] sm:$0xf]
  %v62 = vld [vmem:[%s1 + $0x3c] sm:$0xf]
  %v63 = vld [vmem:[%s1 + $0x40] sm:$0xf]
  %v64 = vld [vmem:[%s1 + $0x44] sm:$0xf]
  %v65 = vld [vmem:[%s1 + $0x48] sm:$0xf]
  %v66 = vld [vmem:[%s1 + $0x4c] sm:$0xf]
  %v67 = vld [vmem:[%s1 + $0x50] sm:$0xf]
  %v68 = vld [vmem:[%s1 + $0x54] sm:$0xf]
  %v69 = vld [vmem:[%s1 + $0x58] sm:$0xf]
  %v70 = vld [vmem:[%s1 + $0x5c] sm:$0xf]
  %v71 = vld [vmem:[%s1 + $0x60] sm:$0xf]
  %v72 = vld [vmem:[%s1 + $0x64] sm:$0xf]
  %v73 = vld [vmem:[%s1 + $0x68] sm:$0xf]
  %v74 = vld [vmem:[%s1 + $0x6c] sm:$0xf]
  %v75 = vld [vmem:[%s1 + $0x70] sm:$0xf]
  %v76 = vld [vmem:[%s1 + $0x74] sm:$0xf]
  %v77 = vld [vmem:[%s1 + $0x78] sm:$0xf]
  %v78 = vld [vmem:[%s1 + $0x7c] sm:$0xf]
  %v79 = vld [vmem:[%s1 + $0x80] sm:$0xf]
  %v80 = vld [vmem:[%s1 + $0x84] sm:$0xf]
  %v81 = vld [vmem:[%s1 + $0x88] sm:$0xf]
  %v82 = vld [vmem:[%s1 + $0x8c] sm:$0xf]
  %v83 = vld [vmem:[%s2] sm:$0x1]
  %v85 = vlaneseq
  %v86 = vshrl.u32 %v85, 7
  %v87 = vsub.s32 0, %v86
  %v88 = vrot.slane %v83, %v87
  %v122 = vunpack.c.l.b16 %v15
  %v123 = vunpack.c.h.b16 %v15
  %v124 = vunpack.c.l.b16 %v16
  %v125 = vunpack.c.l.b16 %v17
  %v126 = vunpack.c.h.b16 %v17
  %v127 = vunpack.c.l.b16 %v18
  %v128 = vunpack.c.l.b16 %v19
  %v129 = vunpack.c.h.b16 %v19
  %v130 = vunpack.c.l.b16 %v20
  %v131 = vunpack.c.l.b16 %v21
  %v132 = vunpack.c.h.b16 %v21
  %v133 = vunpack.c.l.b16 %v22
  %v134 = vunpack.c.l.b16 %v23
  %v135 = vunpack.c.h.b16 %v23
  %v136 = vunpack.c.l.b16 %v24
  %v137 = vunpack.c.l.b16 %v25
  %v138 = vunpack.c.h.b16 %v25
  %v139 = vunpack.c.l.b16 %v26
  %v140 = vunpack.c.l.b16 %v27
  %v141 = vunpack.c.h.b16 %v27
  %v142 = vunpack.c.l.b16 %v28
  %v143 = vunpack.c.l.b16 %v29
  %v144 = vunpack.c.h.b16 %v29
  %v145 = vunpack.c.l.b16 %v30
  %v146 = vunpack.c.l.b16 %v31
  %v147 = vunpack.c.h.b16 %v31
  %v148 = vunpack.c.l.b16 %v32
  %v149 = vunpack.c.l.b16 %v33
  %v150 = vunpack.c.h.b16 %v33
  %v151 = vunpack.c.l.b16 %v34
  %v152 = vunpack.c.l.b16 %v35
  %v153 = vunpack.c.h.b16 %v35
  %v154 = vunpack.c.l.b16 %v36
  %v155 = vunpack.c.l.b16 %v37
  %v156 = vunpack.c.h.b16 %v37
  %v157 = vunpack.c.l.b16 %v38
  %v158 = vunpack.c.l.b16 %v39
  %v159 = vunpack.c.h.b16 %v39
  %v160 = vunpack.c.l.b16 %v40
  %v161 = vunpack.c.l.b16 %v41
  %v162 = vunpack.c.h.b16 %v41
  %v163 = vunpack.c.l.b16 %v42
  %v164 = vunpack.c.l.b16 %v43
  %v165 = vunpack.c.h.b16 %v43
  %v166 = vunpack.c.l.b16 %v44
  %v167 = vunpack.c.l.b16 %v45
  %v168 = vunpack.c.h.b16 %v45
  %v169 = vunpack.c.l.b16 %v46
  %v170 = vpack.c.b16 %v125, %v122
  %v171 = vpack.c.b16 %v126, %v123
  %v172 = vpack.c.b16 %v127, %v124
  %v173 = vpack.c.b16 %v131, %v128
  %v174 = vpack.c.b16 %v132, %v129
  %v175 = vpack.c.b16 %v133, %v130
  %v176 = vpack.c.b16 %v137, %v134
  %v177 = vpack.c.b16 %v138, %v135
  %v178 = vpack.c.b16 %v139, %v136
  %v179 = vpack.c.b16 %v143, %v140
  %v180 = vpack.c.b16 %v144, %v141
  %v181 = vpack.c.b16 %v145, %v142
  %v182 = vpack.c.b16 %v149, %v146
  %v183 = vpack.c.b16 %v150, %v147
  %v184 = vpack.c.b16 %v151, %v148
  %v185 = vpack.c.b16 %v155, %v152
  %v186 = vpack.c.b16 %v156, %v153
  %v187 = vpack.c.b16 %v157, %v154
  %v188 = vpack.c.b16 %v161, %v158
  %v189 = vpack.c.b16 %v162, %v159
  %v190 = vpack.c.b16 %v163, %v160
  %v191 = vpack.c.b16 %v167, %v164
  %v192 = vpack.c.b16 %v168, %v165
  %v193 = vpack.c.b16 %v169, %v166
  %v246 = vunpack.c.l.b16 %v47
  %v247 = vunpack.c.l.b16 %v48
  %v248 = vunpack.c.l.b16 %v49
  %v249 = vunpack.c.l.b16 %v50
  %v250 = vunpack.c.l.b16 %v51
  %v251 = vunpack.c.l.b16 %v52
  %v252 = vunpack.c.l.b16 %v53
  %v253 = vunpack.c.l.b16 %v54
  %v254 = vunpack.c.l.b16 %v55
  %v255 = vunpack.c.l.b16 %v56
  %v256 = vunpack.c.l.b16 %v57
  %v257 = vunpack.c.l.b16 %v58
  %v258 = vunpack.c.l.b16 %v59
  %v259 = vunpack.c.l.b16 %v60
  %v260 = vunpack.c.l.b16 %v61
  %v261 = vunpack.c.l.b16 %v62
  %v262 = vunpack.c.l.b16 %v63
  %v263 = vunpack.c.l.b16 %v64
  %v264 = vunpack.c.l.b16 %v65
  %v265 = vunpack.c.l.b16 %v66
  %v266 = vunpack.c.l.b16 %v67
  %v267 = vunpack.c.l.b16 %v68
  %v268 = vunpack.c.l.b16 %v69
  %v269 = vunpack.c.l.b16 %v70
  %v270 = vunpack.c.l.b16 %v71
  %v271 = vunpack.c.l.b16 %v72
  %v272 = vunpack.c.l.b16 %v73
  %v273 = vunpack.c.l.b16 %v74
  %v274 = vunpack.c.l.b16 %v75
  %v275 = vunpack.c.l.b16 %v76
  %v276 = vunpack.c.l.b16 %v77
  %v277 = vunpack.c.l.b16 %v78
  %v278 = vunpack.c.l.b16 %v79
  %v279 = vunpack.c.l.b16 %v80
  %v280 = vunpack.c.l.b16 %v81
  %v281 = vunpack.c.l.b16 %v82
  %v282 = vpack.c.b16 %v247, %v246
  %v283 = vpack.c.b16 %v249, %v248
  %v284 = vpack.c.b16 %v251, %v250
  %v285 = vpack.c.b16 %v253, %v252
  %v286 = vpack.c.b16 %v255, %v254
  %v287 = vpack.c.b16 %v257, %v256
  %v288 = vpack.c.b16 %v259, %v258
  %v289 = vpack.c.b16 %v261, %v260
  %v290 = vpack.c.b16 %v263, %v262
  %v291 = vpack.c.b16 %v265, %v264
  %v292 = vpack.c.b16 %v267, %v266
  %v293 = vpack.c.b16 %v269, %v268
  %v294 = vpack.c.b16 %v271, %v270
  %v295 = vpack.c.b16 %v273, %v272
  %v296 = vpack.c.b16 %v275, %v274
  %v297 = vpack.c.b16 %v277, %v276
  %v298 = vpack.c.b16 %v279, %v278
  %v299 = vpack.c.b16 %v281, %v280
  %vm318 = vcmask 261120
  %v320 = vsel %vm318, %v172, 0
  %v323 = vsel %vm318, %v175, 0
  %v326 = vsel %vm318, %v178, 0
  %v329 = vsel %vm318, %v181, 0
  %v332 = vsel %vm318, %v184, 0
  %v335 = vsel %vm318, %v187, 0
  %v338 = vsel %vm318, %v190, 0
  %v341 = vsel %vm318, %v193, 0
  %343 = vmatprep.subr.bf16.mxu0 0
  %344 = vmatpush1.bf16.msra.mxu0 %v282
  %345 = vmatprep.subr.bf16.mxu0 0
  %346 = vmatpush1.bf16.msra.mxu0 %v283
  %347 = vmatprep.subr.bf16.mxu0 0
  %348 = vmatpush1.bf16.msra.mxu0 %v284
  %349 = vmatprep.subr.bf16.mxu0 0
  %350 = vmatpush1.bf16.msra.mxu0 %v285
  %351 = vmatprep.subr.bf16.mxu0 0
  %352 = vmatpush1.bf16.msra.mxu0 %v286
  %353 = vmatprep.subr.bf16.mxu0 0
  %354 = vmatpush1.bf16.msra.mxu0 %v287
  %355 = vmatprep.subr.bf16.mxu0 0
  %356 = vmatpush1.bf16.msra.mxu0 %v288
  %357 = vmatprep.subr.bf16.mxu0 0
  %358 = vmatpush1.bf16.msra.mxu0 %v289
  %359 = vmatprep.subr.bf16.mxu0 0
  %360 = vmatpush1.bf16.msra.mxu0 %v290
  %361 = vmatprep.subr.bf16.mxu0 0
  %362 = vmatpush1.bf16.msra.mxu0 %v291
  %363 = vmatprep.subr.bf16.mxu0 0
  %364 = vmatpush1.bf16.msra.mxu0 %v292
  %365 = vmatprep.subr.bf16.mxu0 0
  %366 = vmatpush1.bf16.msra.mxu0 %v293
  %367 = vmatprep.subr.bf16.mxu0 0
  %368 = vmatpush1.bf16.msra.mxu0 %v294
  %369 = vmatprep.subr.bf16.mxu0 0
  %370 = vmatpush1.bf16.msra.mxu0 %v295
  %371 = vmatprep.subr.bf16.mxu0 0
  %372 = vmatpush1.bf16.msra.mxu0 %v296
  %373 = vmatprep.subr.bf16.mxu0 0
  %374 = vmatpush1.bf16.msra.mxu0 %v297
  %375 = vmatprep.mubr.bf16.mxu0 %v171
  %376 = vmatmul.mubr.bf16.gmra.mrb[0].mxu0 %v170
  %v377 = vpop.f32.mrb[0].mxu0
  %v378 = vadd.f32 %v88, %v377
  %v379 = vpop.f32.mrb[0].mxu0
  %v380 = vpop.f32.mrb[0].mxu0
  %v381 = vadd.f32 %v88, %v380
  %v382 = vpop.f32.mrb[0].mxu0
  %383 = vmatprep.mubr.bf16.mxu0 %v174
  %384 = vmatmul.mubr.bf16.gmra.mrb[0].mxu0 %v173
  %v385 = vpop.f32.mrb[0].mxu0
  %v386 = vadd.f32 %v88, %v385
  %v387 = vpop.f32.mrb[0].mxu0
  %v388 = vpop.f32.mrb[0].mxu0
  %v389 = vadd.f32 %v88, %v388
  %v390 = vpop.f32.mrb[0].mxu0
  %391 = vmatprep.mubr.bf16.mxu0 %v177
  %392 = vmatmul.mubr.bf16.gmra.mrb[0].mxu0 %v176
  %v393 = vpop.f32.mrb[0].mxu0
  %v394 = vadd.f32 %v88, %v393
  %v395 = vpop.f32.mrb[0].mxu0
  %v396 = vpop.f32.mrb[0].mxu0
  %v397 = vadd.f32 %v88, %v396
  %v398 = vpop.f32.mrb[0].mxu0
  %399 = vmatprep.mubr.bf16.mxu0 %v180
  %400 = vmatmul.mubr.bf16.gmra.mrb[0].mxu0 %v179
  %v401 = vpop.f32.mrb[0].mxu0
  %v402 = vadd.f32 %v88, %v401
  %v403 = vpop.f32.mrb[0].mxu0
  %v404 = vpop.f32.mrb[0].mxu0
  %v405 = vadd.f32 %v88, %v404
  %v406 = vpop.f32.mrb[0].mxu0
  %407 = vmatprep.mubr.bf16.mxu0 %v183
  %408 = vmatmul.mubr.bf16.gmra.mrb[0].mxu0 %v182
  %v409 = vpop.f32.mrb[0].mxu0
  %v410 = vadd.f32 %v88, %v409
  %v411 = vpop.f32.mrb[0].mxu0
  %v412 = vpop.f32.mrb[0].mxu0
  %v413 = vadd.f32 %v88, %v412
  %v414 = vpop.f32.mrb[0].mxu0
  %415 = vmatprep.mubr.bf16.mxu0 %v186
  %416 = vmatmul.mubr.bf16.gmra.mrb[0].mxu0 %v185
  %v417 = vpop.f32.mrb[0].mxu0
  %v418 = vadd.f32 %v88, %v417
  %v419 = vpop.f32.mrb[0].mxu0
  %v420 = vpop.f32.mrb[0].mxu0
  %v421 = vadd.f32 %v88, %v420
  %v422 = vpop.f32.mrb[0].mxu0
  %423 = vmatprep.mubr.bf16.mxu0 %v189
  %424 = vmatmul.mubr.bf16.gmra.mrb[0].mxu0 %v188
  %v425 = vpop.f32.mrb[0].mxu0
  %v426 = vadd.f32 %v88, %v425
  %v427 = vpop.f32.mrb[0].mxu0
  %v428 = vpop.f32.mrb[0].mxu0
  %v429 = vadd.f32 %v88, %v428
  %v430 = vpop.f32.mrb[0].mxu0
  %431 = vmatprep.mubr.bf16.mxu0 %v192
  %432 = vmatmul.mubr.bf16.gmra.mrb[0].mxu0 %v191
  %v433 = vpop.f32.mrb[0].mxu0
  %v434 = vadd.f32 %v88, %v433
  %v435 = vpop.f32.mrb[0].mxu0
  %v436 = vpop.f32.mrb[0].mxu0
  %v437 = vadd.f32 %v88, %v436
  %v438 = vpop.f32.mrb[0].mxu0
  %439 = vdwg.mxu0
  %440 = vmatprep.subr.bf16.mxu0 0
  %441 = vmatpush1.bf16.msra.mxu0 %v298
  %442 = vmatprep.subr.bf16.mxu0 0
  %443 = vmatpush1.bf16.msra.mxu0 %v299
  %444 = vmatprep.subr.bf16.mxu0 0
  %445 = vmatpush1.bf16.msra.mxu0 0
  %446 = vmatprep.subr.bf16.mxu0 0
  %447 = vmatpush1.bf16.msra.mxu0 0
  %448 = vmatprep.subr.bf16.mxu0 0
  %449 = vmatpush1.bf16.msra.mxu0 0
  %450 = vmatprep.subr.bf16.mxu0 0
  %451 = vmatpush1.bf16.msra.mxu0 0
  %452 = vmatprep.subr.bf16.mxu0 0
  %453 = vmatpush1.bf16.msra.mxu0 0
  %454 = vmatprep.subr.bf16.mxu0 0
  %455 = vmatpush1.bf16.msra.mxu0 0
  %456 = vmatprep.subr.bf16.mxu0 0
  %457 = vmatpush1.bf16.msra.mxu0 0
  %458 = vmatprep.subr.bf16.mxu0 0
  %459 = vmatpush1.bf16.msra.mxu0 0
  %460 = vmatprep.subr.bf16.mxu0 0
  %461 = vmatpush1.bf16.msra.mxu0 0
  %462 = vmatprep.subr.bf16.mxu0 0
  %463 = vmatpush1.bf16.msra.mxu0 0
  %464 = vmatprep.subr.bf16.mxu0 0
  %465 = vmatpush1.bf16.msra.mxu0 0
  %466 = vmatprep.subr.bf16.mxu0 0
  %467 = vmatpush1.bf16.msra.mxu0 0
  %468 = vmatprep.subr.bf16.mxu0 0
  %469 = vmatpush1.bf16.msra.mxu0 0
  %470 = vmatprep.subr.bf16.mxu0 0
  %471 = vmatpush1.bf16.msra.mxu0 0
  %472 = vmatprep.mubr.bf16.mxu0 0
  %473 = vmatmul.mubr.bf16.gmra.mrb[0].mxu0 %v320
  %v474 = vpop.f32.mrb[0].mxu0
  %v475 = vadd.f32 %v378, %v474
  %v476 = vpop.f32.mrb[0].mxu0
  %v477 = vpop.f32.mrb[0].mxu0
  %v478 = vadd.f32 %v381, %v477
  %v479 = vpop.f32.mrb[0].mxu0
  %480 = vmatprep.mubr.bf16.mxu0 0
  %481 = vmatmul.mubr.bf16.gmra.mrb[0].mxu0 %v323
  %v482 = vpop.f32.mrb[0].mxu0
  %v483 = vadd.f32 %v386, %v482
  %v484 = vpop.f32.mrb[0].mxu0
  %v485 = vpop.f32.mrb[0].mxu0
  %v486 = vadd.f32 %v389, %v485
  %v487 = vpop.f32.mrb[0].mxu0
  %488 = vmatprep.mubr.bf16.mxu0 0
  %489 = vmatmul.mubr.bf16.gmra.mrb[0].mxu0 %v326
  %v490 = vpop.f32.mrb[0].mxu0
  %v491 = vadd.f32 %v394, %v490
  %v492 = vpop.f32.mrb[0].mxu0
  %v493 = vpop.f32.mrb[0].mxu0
  %v494 = vadd.f32 %v397, %v493
  %v495 = vpop.f32.mrb[0].mxu0
  %496 = vmatprep.mubr.bf16.mxu0 0
  %497 = vmatmul.mubr.bf16.gmra.mrb[0].mxu0 %v329
  %v498 = vpop.f32.mrb[0].mxu0
  %v499 = vadd.f32 %v402, %v498
  %v500 = vpop.f32.mrb[0].mxu0
  %v501 = vpop.f32.mrb[0].mxu0
  %v502 = vadd.f32 %v405, %v501
  %v503 = vpop.f32.mrb[0].mxu0
  %504 = vmatprep.mubr.bf16.mxu0 0
  %505 = vmatmul.mubr.bf16.gmra.mrb[0].mxu0 %v332
  %v506 = vpop.f32.mrb[0].mxu0
  %v507 = vadd.f32 %v410, %v506
  %v508 = vpop.f32.mrb[0].mxu0
  %v509 = vpop.f32.mrb[0].mxu0
  %v510 = vadd.f32 %v413, %v509
  %v511 = vpop.f32.mrb[0].mxu0
  %512 = vmatprep.mubr.bf16.mxu0 0
  %513 = vmatmul.mubr.bf16.gmra.mrb[0].mxu0 %v335
  %v514 = vpop.f32.mrb[0].mxu0
  %v515 = vadd.f32 %v418, %v514
  %v516 = vpop.f32.mrb[0].mxu0
  %v517 = vpop.f32.mrb[0].mxu0
  %v518 = vadd.f32 %v421, %v517
  %v519 = vpop.f32.mrb[0].mxu0
  %520 = vmatprep.mubr.bf16.mxu0 0
  %521 = vmatmul.mubr.bf16.gmra.mrb[0].mxu0 %v338
  %v522 = vpop.f32.mrb[0].mxu0
  %v523 = vadd.f32 %v426, %v522
  %v524 = vpop.f32.mrb[0].mxu0
  %v525 = vpop.f32.mrb[0].mxu0
  %v526 = vadd.f32 %v429, %v525
  %v527 = vpop.f32.mrb[0].mxu0
  %528 = vmatprep.mubr.bf16.mxu0 0
  %529 = vmatmul.mubr.bf16.gmra.mrb[0].mxu0 %v341
  %v530 = vpop.f32.mrb[0].mxu0
  %v531 = vadd.f32 %v434, %v530
  %v532 = vpop.f32.mrb[0].mxu0
  %v533 = vpop.f32.mrb[0].mxu0
  %v534 = vadd.f32 %v437, %v533
  %v535 = vpop.f32.mrb[0].mxu0
  %536 = vdwg.mxu0
  %537 = vst [vmem:[%s3] sm:$0xff] %v475
  %538 = vst [vmem:[%s3 + $0x8] sm:$0xff] %v478
  %539 = vst [vmem:[%s3 + $0x10] sm:$0xff] %v483
  %540 = vst [vmem:[%s3 + $0x18] sm:$0xff] %v486
  %541 = vst [vmem:[%s3 + $0x20] sm:$0xff] %v491
  %542 = vst [vmem:[%s3 + $0x28] sm:$0xff] %v494
  %543 = vst [vmem:[%s3 + $0x30] sm:$0xff] %v499
  %544 = vst [vmem:[%s3 + $0x38] sm:$0xff] %v502
  %545 = vst [vmem:[%s3 + $0x40] sm:$0xff] %v507
  %546 = vst [vmem:[%s3 + $0x48] sm:$0xff] %v510
  %547 = vst [vmem:[%s3 + $0x50] sm:$0xff] %v515
  %548 = vst [vmem:[%s3 + $0x58] sm:$0xff] %v518
  %549 = vst [vmem:[%s3 + $0x60] sm:$0xff] %v523
  %550 = vst [vmem:[%s3 + $0x68] sm:$0xff] %v526
  %551 = vst [vmem:[%s3 + $0x70] sm:$0xff] %v531
  %552 = vst [vmem:[%s3 + $0x78] sm:$0xff] %v534
  // Predicated region
  $region14: #{encoder_forward.10} parent=0 // pred_check
    _
  $region15: #{encoder_forward.10} parent=0 // pred_check_branch
    %554 = sbr.rel (0) target = $region17
  $region16: #{encoder_forward.10} parent=0 // pred_region
    _
  $region17: #{encoder_forward.10} parent=0 // pred_fallthru
    _
  // Predicated region
  $region18: #{encoder_forward.10} parent=0 // pred_check
    _
  $region19: #{encoder_forward.10} parent=0 // pred_check_branch
    %556 = sbr.rel (0) target = $region21
  $region20: #{encoder_forward.10} parent=0 // pred_region
    _
  $region21: #{encoder_forward.10} parent=0 // pred_fallthru
    _

// kernel: encoder_forward.11
$region0: #{encoder_forward.11}
  #allocation0 [shape = 'u32[]', space=smem, size = 0x4, offset = 0x4, fixed_abs, tag = 'smem constant byte address 0x4 - core index']
  #allocation1 [shape = 'u32[144,128]{1,0:T(1,128)}', space=vmem, size = 0x12000, scoped, tag = 'internal scratch']
  #allocation2 [shape = 'f32[2,6,10,32]{3,2,1,0:T(8,128)}', space=vmem, size = 0x18000, scoped, tag = 'scratch operand']
  %s0 = inlined_call_operand.vmem [shape: f32[4,64,128], index: 0, kind: input, shape index: {}]
  %s1 = inlined_call_operand.vmem [shape: bf16[9,32,128], index: 1, kind: input, shape index: {}]
  %s2 = inlined_call_operand.vmem [shape: f32[4,64,32], index: 2, kind: output, shape index: {0}]
  %s3 = inlined_call_operand.vmem [shape: f32[64,32], index: 3, kind: output, shape index: {1}]
  %4 = xla_tuple %s2, %s3
  %s5 = sld [smem:[#allocation0]]
  $region53: #{encoder_forward.11} parent=0
    _
  %s7 = ssub.s32 1, %s5
  %s8 = scalar_select 0, %s7, %s5
  loop: start=0, step=1, limit=6
  $region2: #{encoder_forward.11} parent=0 // loop_pre_header
    _
  $region3: #{encoder_forward.11} parent=0 // loop_header
    %s10 = sphi 0, %s14
    %p11 = scmp.ge.s32.totalorder %s10, 6
    %s20 = sphi 0, %s22
    %s23 = sphi 0, %s20
    %s24 = sphi 0, %s23
    %s40 = sphi 0, %s24
    %s44 = sphi 0, %s44
    %s46 = sphi 0, %s44
    %s47 = sphi 0, %s46
    %s61 = sphi 0, %s47
    %s67 = sphi 0, %s69
    %s70 = sphi 0, %s67
    %s71 = sphi 0, %s70
    %s87 = sphi 0, %s71
    %s91 = sphi 0, %s91
    %s93 = sphi 0, %s91
    %s94 = sphi 0, %s93
    %s108 = sphi 0, %s94
  $region4: #{encoder_forward.11} parent=0 // loop_header_branch
    %13 = sbr.rel (%p11) target = $region8
  $region5: #{encoder_forward.11} parent=0 // loop_body
    %s15 = ssub.s32 %s10, 1
    %s16 = ssub.s32 %s10, 2
    %s17 = sadd.s32 %s10, 1
    %s18 = ssub.s32 %s10, %s17
    %p19 = scmp.eq.s32.totalorder %s18, 0
    %s21 = sadd.s32 %s20, 1
    %s22 = scalar_select %p19, %s20, %s21
    %p25 = pneg %p19
    %p26 = scmp.eq.s32.totalorder %s10, 3
    %p27 = por %p25, %p26
    %p28 = scmp.ne.s32.totalorder %s20, %s23
    %p29 = scmp.eq.s32.totalorder %s10, 0
    %p30 = por %p28, %p29
    %p31 = scmp.ne.s32.totalorder %s20, %s23
    %p32 = scmp.eq.s32.totalorder %s15, 3
    %p33 = por %p31, %p32
    %p34 = scmp.ne.s32.totalorder %s23, %s24
    %p35 = scmp.eq.s32.totalorder %s15, 0
    %p36 = por %p34, %p35
    %p37 = scmp.ne.s32.totalorder %s23, %s24
    %p38 = scmp.eq.s32.totalorder %s16, 3
    %p39 = por %p37, %p38
    %p41 = scmp.ne.s32.totalorder %s24, %s40
    %p42 = scmp.eq.s32.totalorder %s16, 0
    %p43 = por %p41, %p42
    %s45 = sadd.s32 %s44, 1
    %p48 = scmp.eq.s32.totalorder %s10, 3
    %p49 = scmp.ne.s32.totalorder %s44, %s46
    %p50 = scmp.eq.s32.totalorder %s10, 0
    %p51 = por %p49, %p50
    %p52 = scmp.ne.s32.totalorder %s44, %s46
    %p53 = scmp.eq.s32.totalorder %s15, 3
    %p54 = por %p52, %p53
    %p55 = scmp.ne.s32.totalorder %s46, %s47
    %p56 = scmp.eq.s32.totalorder %s15, 0
    %p57 = por %p55, %p56
    %p58 = scmp.ne.s32.totalorder %s46, %s47
    %p59 = scmp.eq.s32.totalorder %s16, 3
    %p60 = por %p58, %p59
    %p62 = scmp.ne.s32.totalorder %s47, %s61
    %p63 = scmp.eq.s32.totalorder %s16, 0
    %p64 = por %p62, %p63
    %s65 = ssub.s32 %s10, %s17
    %p66 = scmp.eq.s32.totalorder %s65, 0
    %s68 = sadd.s32 %s67, 1
    %s69 = scalar_select %p66, %s67, %s68
    %p72 = pneg %p66
    %p73 = scmp.eq.s32.totalorder %s10, 3
    %p74 = por %p72, %p73
    %p75 = scmp.ne.s32.totalorder %s67, %s70
    %p76 = scmp.eq.s32.totalorder %s10, 0
    %p77 = por %p75, %p76
    %p78 = scmp.ne.s32.totalorder %s67, %s70
    %p79 = scmp.eq.s32.totalorder %s15, 3
    %p80 = por %p78, %p79
    %p81 = scmp.ne.s32.totalorder %s70, %s71
    %p82 = scmp.eq.s32.totalorder %s15, 0
    %p83 = por %p81, %p82
    %p84 = scmp.ne.s32.totalorder %s70, %s71
    %p85 = scmp.eq.s32.totalorder %s16, 3
    %p86 = por %p84, %p85
    %p88 = scmp.ne.s32.totalorder %s71, %s87
    %p89 = scmp.eq.s32.totalorder %s16, 0
    %p90 = por %p88, %p89
    %s92 = sadd.s32 %s91, 1
    %p95 = scmp.eq.s32.totalorder %s10, 3
    %p96 = scmp.ne.s32.totalorder %s91, %s93
    %p97 = scmp.eq.s32.totalorder %s10, 0
    %p98 = por %p96, %p97
    %p99 = scmp.ne.s32.totalorder %s91, %s93
    %p100 = scmp.eq.s32.totalorder %s15, 3
    %p101 = por %p99, %p100
    %p102 = scmp.ne.s32.totalorder %s93, %s94
    %p103 = scmp.eq.s32.totalorder %s15, 0
    %p104 = por %p102, %p103
    %p105 = scmp.ne.s32.totalorder %s93, %s94
    %p106 = scmp.eq.s32.totalorder %s16, 3
    %p107 = por %p105, %p106
    %p109 = scmp.ne.s32.totalorder %s94, %s108
    %p110 = scmp.eq.s32.totalorder %s16, 0
    %p111 = por %p109, %p110
    %p112 = scmp.le.s32.totalorder 1, %s10
    %p113 = scmp.lt.s32.totalorder %s10, 5
    %p114 = pnand %p112, %p113
    %p115 = pneg %p114
    // Predicated region
    $region9: #{encoder_forward.11} parent=5 // pred_check
      _
    $region10: #{encoder_forward.11} parent=5 // pred_check_branch
      %117 = sbr.rel (%p114) target = $region12
    $region11: #{encoder_forward.11} parent=5 // pred_region
      %s118 = ssub.s32 %s10, 1
      // Predicated region
      $region13: #{encoder_forward.11} parent=11 // pred_check
        %p119 = pneg %p57
      $region14: #{encoder_forward.11} parent=11 // pred_check_branch
        %121 = sbr.rel (%p119) target = $region16
      $region15: #{encoder_forward.11} parent=11 // pred_region
        _
      $region16: #{encoder_forward.11} parent=11 // pred_fallthru
        _
    $region12: #{encoder_forward.11} parent=5 // pred_fallthru
      _
    %p122 = scmp.lt.s32.totalorder %s10, 4
    // Predicated region
    $region17: #{encoder_forward.11} parent=5 // pred_check
      %p123 = pneg %p122
    $region18: #{encoder_forward.11} parent=5 // pred_check_branch
      %125 = sbr.rel (%p123) target = $region20
    $region19: #{encoder_forward.11} parent=5 // pred_region
      // Predicated region
      $region21: #{encoder_forward.11} parent=19 // pred_check
        %p126 = pneg %p30
      $region22: #{encoder_forward.11} parent=19 // pred_check_branch
        %128 = sbr.rel (%p126) target = $region24
      $region23: #{encoder_forward.11} parent=19 // pred_region
        %p129 = scmp.lt.s32.totalorder %s10, 3
        %s130 = scalar_select %p129, %s10, 3
        %s131 = smul.addr %s130, 8
        %s132 = smul.addr %s131, 8
        %s133 = scalar_lea.vmem %s0, %s132
      $region24: #{encoder_forward.11} parent=19 // pred_fallthru
        _
    $region20: #{encoder_forward.11} parent=5 // pred_fallthru
      _
    %p134 = scmp.le.s32.totalorder 1, %s10
    %p135 = scmp.lt.s32.totalorder %s10, 5
    %p136 = pnand %p134, %p135
    %p137 = pneg %p136
    // Predicated region
    $region25: #{encoder_forward.11} parent=5 // pred_check
      _
    $region26: #{encoder_forward.11} parent=5 // pred_check_branch
      %139 = sbr.rel (%p136) target = $region28
    $region27: #{encoder_forward.11} parent=5 // pred_region
      %s140 = ssub.s32 %s10, 1
      %p141 = scmp.lt.s32.totalorder %s15, 3
      %s142 = scalar_select %p141, %s15, 3
      %s143 = smul.addr %s142, 8
      %s144 = smul.addr %s143, 8
      %s145 = scalar_lea.vmem %s0, %s144
      %p146 = pneg %p36
      %p147 = pneg %p33
      %p148 = pneg %p57
      %p149 = pneg %p54
      %p150 = pneg %p83
      %p151 = pneg %p80
      %p152 = scmp.lt.s32.totalorder %s15, 3
      %s153 = scalar_select %p152, %s15, 3
      %s154 = smul.addr %s153, 8
      %s155 = smul.addr %s154, 8
      %s156 = scalar_lea.vmem %s2, %s155
      %p157 = pneg %p104
      %p158 = pneg %p101
      %p159 = scmp.lt.s32.totalorder %s15, 3
      %s160 = scalar_select %p159, %s15, 3
      %s161 = smul.addr %s160, 8
      %s162 = smul.addr %s161, 8
      %s163 = scalar_lea.vmem %s0, %s162
      %p164 = scmp.lt.s32.totalorder %s15, 3
      %s165 = scalar_select %p164, %s15, 3
      %s166 = smul.addr %s165, 8
      %s167 = smul.addr %s166, 8
      %s168 = scalar_lea.vmem %s2, %s167
      %p170 = scmp.eq.s32.totalorder %s15, 0
      // Predicated region
      $region29: #{encoder_forward.11} parent=27 // pred_check
        %p171 = pneg %p170
      $region30: #{encoder_forward.11} parent=27 // pred_check_branch
        %173 = sbr.rel (%p171) target = $region32
      $region31: #{encoder_forward.11} parent=27 // pred_region
        %vm174 = vcmask 261120
        %175 = vst.msk [vmem:[#allocation2] sm:$0xff] %vm174, 0.0
        %vm176 = vcmask 254976
        %177 = vst.msk [vmem:[#allocation2 + $0x8] sm:$0x3] %vm176, 0.0
        %178 = vst.msk [vmem:[#allocation2 + $0x10] sm:$0xff] %vm174, 0.0
        %179 = vst.msk [vmem:[#allocation2 + $0x18] sm:$0x3] %vm176, 0.0
        %180 = vst.msk [vmem:[#allocation2 + $0x20] sm:$0xff] %vm174, 0.0
        %181 = vst.msk [vmem:[#allocation2 + $0x28] sm:$0x3] %vm176, 0.0
        %182 = vst.msk [vmem:[#allocation2 + $0x30] sm:$0xff] %vm174, 0.0
        %183 = vst.msk [vmem:[#allocation2 + $0x38] sm:$0x3] %vm176, 0.0
        %184 = vst.msk [vmem:[#allocation2 + $0x40] sm:$0xff] %vm174, 0.0
        %185 = vst.msk [vmem:[#allocation2 + $0x48] sm:$0x3] %vm176, 0.0
        %186 = vst.msk [vmem:[#allocation2 + $0x50] sm:$0xff] %vm174, 0.0
        %187 = vst.msk [vmem:[#allocation2 + $0x58] sm:$0x3] %vm176, 0.0
        %188 = vst.msk [vmem:[#allocation2 + $0x60] sm:$0xff] %vm174, 0.0
        %189 = vst.msk [vmem:[#allocation2 + $0x68] sm:$0x3] %vm176, 0.0
        %190 = vst.msk [vmem:[#allocation2 + $0x70] sm:$0xff] %vm174, 0.0
        %191 = vst.msk [vmem:[#allocation2 + $0x78] sm:$0x3] %vm176, 0.0
        %192 = vst.msk [vmem:[#allocation2 + $0x80] sm:$0xff] %vm174, 0.0
        %193 = vst.msk [vmem:[#allocation2 + $0x88] sm:$0x3] %vm176, 0.0
        %194 = vst.msk [vmem:[#allocation2 + $0x90] sm:$0xff] %vm174, 0.0
        %195 = vst.msk [vmem:[#allocation2 + $0x98] sm:$0x3] %vm176, 0.0
        %196 = vst.msk [vmem:[#allocation2 + $0xa0] sm:$0xff] %vm174, 0.0
        %197 = vst.msk [vmem:[#allocation2 + $0xa8] sm:$0x3] %vm176, 0.0
        %198 = vst.msk [vmem:[#allocation2 + $0xb0] sm:$0xff] %vm174, 0.0
        %199 = vst.msk [vmem:[#allocation2 + $0xb8] sm:$0x3] %vm176, 0.0
        %200 = vst.msk [vmem:[%s3] sm:$0xff] %vm174, 0.0
        %201 = vst.msk [vmem:[%s3 + $0x8] sm:$0xff] %vm174, 0.0
        %202 = vst.msk [vmem:[%s3 + $0x10] sm:$0xff] %vm174, 0.0
        %203 = vst.msk [vmem:[%s3 + $0x18] sm:$0xff] %vm174, 0.0
        %204 = vst.msk [vmem:[%s3 + $0x20] sm:$0xff] %vm174, 0.0
        %205 = vst.msk [vmem:[%s3 + $0x28] sm:$0xff] %vm174, 0.0
        %206 = vst.msk [vmem:[%s3 + $0x30] sm:$0xff] %vm174, 0.0
        %207 = vst.msk [vmem:[%s3 + $0x38] sm:$0xff] %vm174, 0.0
      $region32: #{encoder_forward.11} parent=27 // pred_fallthru
        _
      %v208 = vld [vmem:[%s163] sm:$0xff]
      %v209 = vld [vmem:[%s163 + $0x8] sm:$0xff]
      %v210 = vld [vmem:[%s163 + $0x10] sm:$0xff]
      %v211 = vld [vmem:[%s163 + $0x18] sm:$0xff]
      %v212 = vld [vmem:[%s163 + $0x20] sm:$0xff]
      %v213 = vld [vmem:[%s163 + $0x28] sm:$0xff]
      %v214 = vld [vmem:[%s163 + $0x30] sm:$0xff]
      %v215 = vld [vmem:[%s163 + $0x38] sm:$0xff]
      %v216 = vld [vmem:[#allocation2] sm:$0xff]
      %v217 = vld [vmem:[#allocation2 + $0x10] sm:$0xff]
      %v218 = vld [vmem:[#allocation2 + $0x20] sm:$0xff]
      %v219 = vld [vmem:[#allocation2 + $0x30] sm:$0xff]
      %v220 = vld [vmem:[#allocation2 + $0x60] sm:$0xff]
      %v221 = vld [vmem:[#allocation2 + $0x70] sm:$0xff]
      %v222 = vld [vmem:[#allocation2 + $0x80] sm:$0xff]
      %v223 = vld [vmem:[#allocation2 + $0x90] sm:$0xff]
      %v224 = vpack.c.bf16 %v217, %v216
      %v225 = vpack.c.bf16 %v219, %v218
      %v226 = vpack.c.bf16 %v221, %v220
      %v227 = vpack.c.bf16 %v223, %v222
      %v228 = vld [vmem:[%s1] sm:$0xf]
      %v229 = vld [vmem:[%s1 + $0x4] sm:$0xf]
      %v230 = vld [vmem:[%s1 + $0x8] sm:$0xf]
      %v231 = vld [vmem:[%s1 + $0xc] sm:$0xf]
      %v236 = vunpack.c.l.b16 %v228
      %v237 = vunpack.c.l.b16 %v229
      %v238 = vunpack.c.l.b16 %v230
      %v239 = vunpack.c.l.b16 %v231
      %v240 = vpack.c.b16 %v237, %v236
      %v241 = vpack.c.b16 %v239, %v238
      %vm244 = vcmask 261120
      %v246 = vsel %vm244, %v224, 0
      %v249 = vsel %vm244, %v225, 0
      %v252 = vsel %vm244, %v226, 0
      %v255 = vsel %vm244, %v227, 0
      %257 = vmatprep.subr.bf16.mxu0 0
      %258 = vmatpush1.bf16.msra.mxu0 %v240
      %259 = vmatprep.subr.bf16.mxu0 0
      %260 = vmatpush1.bf16.msra.mxu0 %v241
      %261 = vmatprep.subr.bf16.mxu0 0
      %262 = vmatpush1.bf16.msra.mxu0 0
      %263 = vmatprep.subr.bf16.mxu0 0
      %264 = vmatpush1.bf16.msra.mxu0 0
      %265 = vmatprep.subr.bf16.mxu0 0
      %266 = vmatpush1.bf16.msra.mxu0 0
      %267 = vmatprep.subr.bf16.mxu0 0
      %268 = vmatpush1.bf16.msra.mxu0 0
      %269 = vmatprep.subr.bf16.mxu0 0
      %270 = vmatpush1.bf16.msra.mxu0 0
      %271 = vmatprep.subr.bf16.mxu0 0
      %272 = vmatpush1.bf16.msra.mxu0 0
      %273 = vmatprep.subr.bf16.mxu0 0
      %274 = vmatpush1.bf16.msra.mxu0 0
      %275 = vmatprep.subr.bf16.mxu0 0
      %276 = vmatpush1.bf16.msra.mxu0 0
      %277 = vmatprep.subr.bf16.mxu0 0
      %278 = vmatpush1.bf16.msra.mxu0 0
      %279 = vmatprep.subr.bf16.mxu0 0
      %280 = vmatpush1.bf16.msra.mxu0 0
      %281 = vmatprep.subr.bf16.mxu0 0
      %282 = vmatpush1.bf16.msra.mxu0 0
      %283 = vmatprep.subr.bf16.mxu0 0
      %284 = vmatpush1.bf16.msra.mxu0 0
      %285 = vmatprep.subr.bf16.mxu0 0
      %286 = vmatpush1.bf16.msra.mxu0 0
      %287 = vmatprep.subr.bf16.mxu0 0
      %288 = vmatpush1.bf16.msra.mxu0 0
      %289 = vmatprep.mubr.bf16.mxu0 0
      %290 = vmatmul.mubr.bf16.gmra.mrb[0].mxu0 %v246
      %v291 = vpop.f32.mrb[0].mxu0
      %v292 = vadd.f32 0.0, %v291
      %v293 = vpop.f32.mrb[0].mxu0
      %v294 = vpop.f32.mrb[0].mxu0
      %v295 = vadd.f32 0.0, %v294
      %v296 = vpop.f32.mrb[0].mxu0
      %297 = vmatprep.mubr.bf16.mxu0 0
      %298 = vmatmul.mubr.bf16.gmra.mrb[0].mxu0 %v249
      %v299 = vpop.f32.mrb[0].mxu0
      %v300 = vadd.f32 0.0, %v299
      %v301 = vpop.f32.mrb[0].mxu0
      %v302 = vpop.f32.mrb[0].mxu0
      %v303 = vadd.f32 0.0, %v302
      %v304 = vpop.f32.mrb[0].mxu0
      %305 = vmatprep.mubr.bf16.mxu0 0
      %306 = vmatmul.mubr.bf16.gmra.mrb[0].mxu0 %v252
      %v307 = vpop.f32.mrb[0].mxu0
      %v308 = vadd.f32 0.0, %v307
      %v309 = vpop.f32.mrb[0].mxu0
      %v310 = vpop.f32.mrb[0].mxu0
      %v311 = vadd.f32 0.0, %v310
      %v312 = vpop.f32.mrb[0].mxu0
      %313 = vmatprep.mubr.bf16.mxu0 0
      %314 = vmatmul.mubr.bf16.gmra.mrb[0].mxu0 %v255
      %v315 = vpop.f32.mrb[0].mxu0
      %v316 = vadd.f32 0.0, %v315
      %v317 = vpop.f32.mrb[0].mxu0
      %v318 = vpop.f32.mrb[0].mxu0
      %v319 = vadd.f32 0.0, %v318
      %v320 = vpop.f32.mrb[0].mxu0
      %321 = vdwg.mxu0
      %v322 = vadd.f32 %v208, %v292
      %v323 = vadd.f32 %v209, %v295
      %v324 = vadd.f32 %v210, %v300
      %v325 = vadd.f32 %v211, %v303
      %v326 = vadd.f32 %v212, %v308
      %v327 = vadd.f32 %v213, %v311
      %v328 = vadd.f32 %v214, %v316
      %v329 = vadd.f32 %v215, %v319
      %v330 = vld [vmem:[#allocation2 + $0x1] sm:$0xff]
      %v331 = vld [vmem:[#allocation2 + $0x11] sm:$0xff]
      %v332 = vld [vmem:[#allocation2 + $0x21] sm:$0xff]
      %v333 = vld [vmem:[#allocation2 + $0x31] sm:$0xff]
      %v334 = vld [vmem:[#allocation2 + $0x61] sm:$0xff]
      %v335 = vld [vmem:[#allocation2 + $0x71] sm:$0xff]
      %v336 = vld [vmem:[#allocation2 + $0x81] sm:$0xff]
      %v337 = vld [vmem:[#allocation2 + $0x91] sm:$0xff]
      %v338 = vpack.c.bf16 %v331, %v330
      %v339 = vpack.c.bf16 %v333, %v332
      %v340 = vpack.c.bf16 %v335, %v334
      %v341 = vpack.c.bf16 %v337, %v336
      %s342 = scalar_lea.vmem %s1, 16
      %v343 = vld [vmem:[%s342] sm:$0xf]
      %v344 = vld [vmem:[%s342 + $0x4] sm:$0xf]
      %v345 = vld [vmem:[%s342 + $0x8] sm:$0xf]
      %v346 = vld [vmem:[%s342 + $0xc] sm:$0xf]
      %v351 = vunpack.c.l.b16 %v343
      %v352 = vunpack.c.l.b16 %v344
      %v353 = vunpack.c.l.b16 %v345
      %v354 = vunpack.c.l.b16 %v346
      %v355 = vpack.c.b16 %v352, %v351
      %v356 = vpack.c.b16 %v354, %v353
      %v360 = vsel %vm244, %v338, 0
      %v363 = vsel %vm244, %v339, 0
      %v366 = vsel %vm244, %v340, 0
      %v369 = vsel %vm244, %v341, 0
      %371 = vmatprep.subr.bf16.mxu0 0
      %372 = vmatpush1.bf16.msra.mxu0 %v355
      %373 = vmatprep.subr.bf16.mxu0 0
      %374 = vmatpush1.bf16.msra.mxu0 %v356
      %375 = vmatprep.subr.bf16.mxu0 0
      %376 = vmatpush1.bf16.msra.mxu0 0
      %377 = vmatprep.subr.bf16.mxu0 0
      %378 = vmatpush1.bf16.msra.mxu0 0
      %379 = vmatprep.subr.bf16.mxu0 0
      %380 = vmatpush1.bf16.msra.mxu0 0
      %381 = vmatprep.subr.bf16.mxu0 0
      %382 = vmatpush1.bf16.msra.mxu0 0
      %383 = vmatprep.subr.bf16.mxu0 0
      %384 = vmatpush1.bf16.msra.mxu0 0
      %385 = vmatprep.subr.bf16.mxu0 0
      %386 = vmatpush1.bf16.msra.mxu0 0
      %387 = vmatprep.subr.bf16.mxu0 0
      %388 = vmatpush1.bf16.msra.mxu0 0
      %389 = vmatprep.subr.bf16.mxu0 0
      %390 = vmatpush1.bf16.msra.mxu0 0
      %391 = vmatprep.subr.bf16.mxu0 0
      %392 = vmatpush1.bf16.msra.mxu0 0
      %393 = vmatprep.subr.bf16.mxu0 0
      %394 = vmatpush1.bf16.msra.mxu0 0
      %395 = vmatprep.subr.bf16.mxu0 0
      %396 = vmatpush1.bf16.msra.mxu0 0
      %397 = vmatprep.subr.bf16.mxu0 0
      %398 = vmatpush1.bf16.msra.mxu0 0
      %399 = vmatprep.subr.bf16.mxu0 0
      %400 = vmatpush1.bf16.msra.mxu0 0
      %401 = vmatprep.subr.bf16.mxu0 0
      %402 = vmatpush1.bf16.msra.mxu0 0
      %403 = vmatprep.mubr.bf16.mxu0 0
      %404 = vmatmul.mubr.bf16.gmra.mrb[0].mxu0 %v360
      %v405 = vpop.f32.mrb[0].mxu0
      %v406 = vadd.f32 0.0, %v405
      %v407 = vpop.f32.mrb[0].mxu0
      %v408 = vpop.f32.mrb[0].mxu0
      %v409 = vadd.f32 0.0, %v408
      %v410 = vpop.f32.mrb[0].mxu0
      %411 = vmatprep.mubr.bf16.mxu0 0
      %412 = vmatmul.mubr.bf16.gmra.mrb[0].mxu0 %v363
      %v413 = vpop.f32.mrb[0].mxu0
      %v414 = vadd.f32 0.0, %v413
      %v415 = vpop.f32.mrb[0].mxu0
      %v416 = vpop.f32.mrb[0].mxu0
      %v417 = vadd.f32 0.0, %v416
      %v418 = vpop.f32.mrb[0].mxu0
      %419 = vmatprep.mubr.bf16.mxu0 0
      %420 = vmatmul.mubr.bf16.gmra.mrb[0].mxu0 %v366
      %v421 = vpop.f32.mrb[0].mxu0
      %v422 = vadd.f32 0.0, %v421
      %v423 = vpop.f32.mrb[0].mxu0
      %v424 = vpop.f32.mrb[0].mxu0
      %v425 = vadd.f32 0.0, %v424
      %v426 = vpop.f32.mrb[0].mxu0
      %427 = vmatprep.mubr.bf16.mxu0 0
      %428 = vmatmul.mubr.bf16.gmra.mrb[0].mxu0 %v369
      %v429 = vpop.f32.mrb[0].mxu0
      %v430 = vadd.f32 0.0, %v429
      %v431 = vpop.f32.mrb[0].mxu0
      %v432 = vpop.f32.mrb[0].mxu0
      %v433 = vadd.f32 0.0, %v432
      %v434 = vpop.f32.mrb[0].mxu0
      %435 = vdwg.mxu0
      %v436 = vadd.f32 %v322, %v406
      %v437 = vadd.f32 %v323, %v409
      %v438 = vadd.f32 %v324, %v414
      %v439 = vadd.f32 %v325, %v417
      %v440 = vadd.f32 %v326, %v422
      %v441 = vadd.f32 %v327, %v425
      %v442 = vadd.f32 %v328, %v430
      %v443 = vadd.f32 %v329, %v433
      %v444 = vld [vmem:[#allocation2 + $0x2] sm:$0xff]
      %v445 = vld [vmem:[#allocation2 + $0x12] sm:$0xff]
      %v446 = vld [vmem:[#allocation2 + $0x22] sm:$0xff]
      %v447 = vld [vmem:[#allocation2 + $0x32] sm:$0xff]
      %v448 = vld [vmem:[#allocation2 + $0x62] sm:$0xff]
      %v449 = vld [vmem:[#allocation2 + $0x72] sm:$0xff]
      %v450 = vld [vmem:[#allocation2 + $0x82] sm:$0xff]
      %v451 = vld [vmem:[#allocation2 + $0x92] sm:$0xff]
      %v452 = vpack.c.bf16 %v445, %v444
      %v453 = vpack.c.bf16 %v447, %v446
      %v454 = vpack.c.bf16 %v449, %v448
      %v455 = vpack.c.bf16 %v451, %v450
      %s456 = scalar_lea.vmem %s1, 32
      %v457 = vld [vmem:[%s456] sm:$0xf]
      %v458 = vld [vmem:[%s456 + $0x4] sm:$0xf]
      %v459 = vld [vmem:[%s456 + $0x8] sm:$0xf]
      %v460 = vld [vmem:[%s456 + $0xc] sm:$0xf]
      %v465 = vunpack.c.l.b16 %v457
      %v466 = vunpack.c.l.b16 %v458
      %v467 = vunpack.c.l.b16 %v459
      %v468 = vunpack.c.l.b16 %v460
      %v469 = vpack.c.b16 %v466, %v465
      %v470 = vpack.c.b16 %v468, %v467
      %v474 = vsel %vm244, %v452, 0
      %v477 = vsel %vm244, %v453, 0
      %v480 = vsel %vm244, %v454, 0
      %v483 = vsel %vm244, %v455, 0
      %485 = vmatprep.subr.bf16.mxu0 0
      %486 = vmatpush1.bf16.msra.mxu0 %v469
      %487 = vmatprep.subr.bf16.mxu0 0
      %488 = vmatpush1.bf16.msra.mxu0 %v470
      %489 = vmatprep.subr.bf16.mxu0 0
      %490 = vmatpush1.bf16.msra.mxu0 0
      %491 = vmatprep.subr.bf16.mxu0 0
      %492 = vmatpush1.bf16.msra.mxu0 0
      %493 = vmatprep.subr.bf16.mxu0 0
      %494 = vmatpush1.bf16.msra.mxu0 0
      %495 = vmatprep.subr.bf16.mxu0 0
      %496 = vmatpush1.bf16.msra.mxu0 0
      %497 = vmatprep.subr.bf16.mxu0 0
      %498 = vmatpush1.bf16.msra.mxu0 0
      %499 = vmatprep.subr.bf16.mxu0 0
      %500 = vmatpush1.bf16.msra.mxu0 0
      %501 = vmatprep.subr.bf16.mxu0 0
      %502 = vmatpush1.bf16.msra.mxu0 0
      %503 = vmatprep.subr.bf16.mxu0 0
      %504 = vmatpush1.bf16.msra.mxu0 0
      %505 = vmatprep.subr.bf16.mxu0 0
      %506 = vmatpush1.bf16.msra.mxu0 0
      %507 = vmatprep.subr.bf16.mxu0 0
      %508 = vmatpush1.bf16.msra.mxu0 0
      %509 = vmatprep.subr.bf16.mxu0 0
      %510 = vmatpush1.bf16.msra.mxu0 0
      %511 = vmatprep.subr.bf16.mxu0 0
      %512 = vmatpush1.bf16.msra.mxu0 0
      %513 = vmatprep.subr.bf16.mxu0 0
      %514 = vmatpush1.bf16.msra.mxu0 0
      %515 = vmatprep.subr.bf16.mxu0 0
      %516 = vmatpush1.bf16.msra.mxu0 0
      %517 = vmatprep.mubr.bf16.mxu0 0
      %518 = vmatmul.mubr.bf16.gmra.mrb[0].mxu0 %v474
      %v519 = vpop.f32.mrb[0].mxu0
      %v520 = vadd.f32 0.0, %v519
      %v521 = vpop.f32.mrb[0].mxu0
      %v522 = vpop.f32.mrb[0].mxu0
      %v523 = vadd.f32 0.0, %v522
      %v524 = vpop.f32.mrb[0].mxu0
      %525 = vmatprep.mubr.bf16.mxu0 0
      %526 = vmatmul.mubr.bf16.gmra.mrb[0].mxu0 %v477
      %v527 = vpop.f32.mrb[0].mxu0
      %v528 = vadd.f32 0.0, %v527
      %v529 = vpop.f32.mrb[0].mxu0
      %v530 = vpop.f32.mrb[0].mxu0
      %v531 = vadd.f32 0.0, %v530
      %v532 = vpop.f32.mrb[0].mxu0
      %533 = vmatprep.mubr.bf16.mxu0 0
      %534 = vmatmul.mubr.bf16.gmra.mrb[0].mxu0 %v480
      %v535 = vpop.f32.mrb[0].mxu0
      %v536 = vadd.f32 0.0, %v535
      %v537 = vpop.f32.mrb[0].mxu0
      %v538 = vpop.f32.mrb[0].mxu0
      %v539 = vadd.f32 0.0, %v538
      %v540 = vpop.f32.mrb[0].mxu0
      %541 = vmatprep.mubr.bf16.mxu0 0
      %542 = vmatmul.mubr.bf16.gmra.mrb[0].mxu0 %v483
      %v543 = vpop.f32.mrb[0].mxu0
      %v544 = vadd.f32 0.0, %v543
      %v545 = vpop.f32.mrb[0].mxu0
      %v546 = vpop.f32.mrb[0].mxu0
      %v547 = vadd.f32 0.0, %v546
      %v548 = vpop.f32.mrb[0].mxu0
      %549 = vdwg.mxu0
      %v550 = vadd.f32 %v436, %v520
      %v551 = vadd.f32 %v437, %v523
      %v552 = vadd.f32 %v438, %v528
      %v553 = vadd.f32 %v439, %v531
      %v554 = vadd.f32 %v440, %v536
      %v555 = vadd.f32 %v441, %v539
      %v556 = vadd.f32 %v442, %v544
      %v557 = vadd.f32 %v443, %v547
      %s558 = scalar_lea.vmem [#allocation2], 16
      %v559 = vld [vmem:[%s558] sm:$0xff]
      %v560 = vld [vmem:[%s558 + $0x10] sm:$0xff]
      %v561 = vld [vmem:[%s558 + $0x20] sm:$0xff]
      %v562 = vld [vmem:[%s558 + $0x30] sm:$0xff]
      %v563 = vld [vmem:[%s558 + $0x60] sm:$0xff]
      %v564 = vld [vmem:[%s558 + $0x70] sm:$0xff]
      %v565 = vld [vmem:[%s558 + $0x80] sm:$0xff]
      %v566 = vld [vmem:[%s558 + $0x90] sm:$0xff]
      %v567 = vpack.c.bf16 %v560, %v559
      %v568 = vpack.c.bf16 %v562, %v561
      %v569 = vpack.c.bf16 %v564, %v563
      %v570 = vpack.c.bf16 %v566, %v565
      %s571 = scalar_lea.vmem %s1, 48
      %v572 = vld [vmem:[%s571] sm:$0xf]
      %v573 = vld [vmem:[%s571 + $0x4] sm:$0xf]
      %v574 = vld [vmem:[%s571 + $0x8] sm:$0xf]
      %v575 = vld [vmem:[%s571 + $0xc] sm:$0xf]
      %v580 = vunpack.c.l.b16 %v572
      %v581 = vunpack.c.l.b16 %v573
      %v582 = vunpack.c.l.b16 %v574
      %v583 = vunpack.c.l.b16 %v575
      %v584 = vpack.c.b16 %v581, %v580
      %v585 = vpack.c.b16 %v583, %v582
      %v589 = vsel %vm244, %v567, 0
      %v592 = vsel %vm244, %v568, 0
      %v595 = vsel %vm244, %v569, 0
      %v598 = vsel %vm244, %v570, 0
      %600 = vmatprep.subr.bf16.mxu0 0
      %601 = vmatpush1.bf16.msra.mxu0 %v584
      %602 = vmatprep.subr.bf16.mxu0 0
      %603 = vmatpush1.bf16.msra.mxu0 %v585
      %604 = vmatprep.subr.bf16.mxu0 0
      %605 = vmatpush1.bf16.msra.mxu0 0
      %606 = vmatprep.subr.bf16.mxu0 0
      %607 = vmatpush1.bf16.msra.mxu0 0
      %608 = vmatprep.subr.bf16.mxu0 0
      %609 = vmatpush1.bf16.msra.mxu0 0
      %610 = vmatprep.subr.bf16.mxu0 0
      %611 = vmatpush1.bf16.msra.mxu0 0
      %612 = vmatprep.subr.bf16.mxu0 0
      %613 = vmatpush1.bf16.msra.mxu0 0
      %614 = vmatprep.subr.bf16.mxu0 0
      %615 = vmatpush1.bf16.msra.mxu0 0
      %616 = vmatprep.subr.bf16.mxu0 0
      %617 = vmatpush1.bf16.msra.mxu0 0
      %618 = vmatprep.subr.bf16.mxu0 0
      %619 = vmatpush1.bf16.msra.mxu0 0
      %620 = vmatprep.subr.bf16.mxu0 0
      %621 = vmatpush1.bf16.msra.mxu0 0
      %622 = vmatprep.subr.bf16.mxu0 0
      %623 = vmatpush1.bf16.msra.mxu0 0
      %624 = vmatprep.subr.bf16.mxu0 0
      %625 = vmatpush1.bf16.msra.mxu0 0
      %626 = vmatprep.subr.bf16.mxu0 0
      %627 = vmatpush1.bf16.msra.mxu0 0
      %628 = vmatprep.subr.bf16.mxu0 0
      %629 = vmatpush1.bf16.msra.mxu0 0
      %630 = vmatprep.subr.bf16.mxu0 0
      %631 = vmatpush1.bf16.msra.mxu0 0
      %632 = vmatprep.mubr.bf16.mxu0 0
      %633 = vmatmul.mubr.bf16.gmra.mrb[0].mxu0 %v589
      %v634 = vpop.f32.mrb[0].mxu0
      %v635 = vadd.f32 0.0, %v634
      %v636 = vpop.f32.mrb[0].mxu0
      %v637 = vpop.f32.mrb[0].mxu0
      %v638 = vadd.f32 0.0, %v637
      %v639 = vpop.f32.mrb[0].mxu0
      %640 = vmatprep.mubr.bf16.mxu0 0
      %641 = vmatmul.mubr.bf16.gmra.mrb[0].mxu0 %v592
      %v642 = vpop.f32.mrb[0].mxu0
      %v643 = vadd.f32 0.0, %v642
      %v644 = vpop.f32.mrb[0].mxu0
      %v645 = vpop.f32.mrb[0].mxu0
      %v646 = vadd.f32 0.0, %v645
      %v647 = vpop.f32.mrb[0].mxu0
      %648 = vmatprep.mubr.bf16.mxu0 0
      %649 = vmatmul.mubr.bf16.gmra.mrb[0].mxu0 %v595
      %v650 = vpop.f32.mrb[0].mxu0
      %v651 = vadd.f32 0.0, %v650
      %v652 = vpop.f32.mrb[0].mxu0
      %v653 = vpop.f32.mrb[0].mxu0
      %v654 = vadd.f32 0.0, %v653
      %v655 = vpop.f32.mrb[0].mxu0
      %656 = vmatprep.mubr.bf16.mxu0 0
      %657 = vmatmul.mubr.bf16.gmra.mrb[0].mxu0 %v598
      %v658 = vpop.f32.mrb[0].mxu0
      %v659 = vadd.f32 0.0, %v658
      %v660 = vpop.f32.mrb[0].mxu0
      %v661 = vpop.f32.mrb[0].mxu0
      %v662 = vadd.f32 0.0, %v661
      %v663 = vpop.f32.mrb[0].mxu0
      %664 = vdwg.mxu0
      %v665 = vadd.f32 %v550, %v635
      %v666 = vadd.f32 %v551, %v638
      %v667 = vadd.f32 %v552, %v643
      %v668 = vadd.f32 %v553, %v646
      %v669 = vadd.f32 %v554, %v651
      %v670 = vadd.f32 %v555, %v654
      %v671 = vadd.f32 %v556, %v659
      %v672 = vadd.f32 %v557, %v662
      %v673 = vld [vmem:[%s558 + $0x1] sm:$0xff]
      %v674 = vld [vmem:[%s558 + $0x11] sm:$0xff]
      %v675 = vld [vmem:[%s558 + $0x21] sm:$0xff]
      %v676 = vld [vmem:[%s558 + $0x31] sm:$0xff]
      %v677 = vld [vmem:[%s558 + $0x61] sm:$0xff]
      %v678 = vld [vmem:[%s558 + $0x71] sm:$0xff]
      %v679 = vld [vmem:[%s558 + $0x81] sm:$0xff]
      %v680 = vld [vmem:[%s558 + $0x91] sm:$0xff]
      %v681 = vpack.c.bf16 %v674, %v673
      %v682 = vpack.c.bf16 %v676, %v675
      %v683 = vpack.c.bf16 %v678, %v677
      %v684 = vpack.c.bf16 %v680, %v679
      %s685 = scalar_lea.vmem %s1, 64
      %v686 = vld [vmem:[%s685] sm:$0xf]
      %v687 = vld [vmem:[%s685 + $0x4] sm:$0xf]
      %v688 = vld [vmem:[%s685 + $0x8] sm:$0xf]
      %v689 = vld [vmem:[%s685 + $0xc] sm:$0xf]
      %v694 = vunpack.c.l.b16 %v686
      %v695 = vunpack.c.l.b16 %v687
      %v696 = vunpack.c.l.b16 %v688
      %v697 = vunpack.c.l.b16 %v689
      %v698 = vpack.c.b16 %v695, %v694
      %v699 = vpack.c.b16 %v697, %v696
      %v703 = vsel %vm244, %v681, 0
      %v706 = vsel %vm244, %v682, 0
      %v709 = vsel %vm244, %v683, 0
      %v712 = vsel %vm244, %v684, 0
      %714 = vmatprep.subr.bf16.mxu0 0
      %715 = vmatpush1.bf16.msra.mxu0 %v698
      %716 = vmatprep.subr.bf16.mxu0 0
      %717 = vmatpush1.bf16.msra.mxu0 %v699
      %718 = vmatprep.subr.bf16.mxu0 0
      %719 = vmatpush1.bf16.msra.mxu0 0
      %720 = vmatprep.subr.bf16.mxu0 0
      %721 = vmatpush1.bf16.msra.mxu0 0
      %722 = vmatprep.subr.bf16.mxu0 0
      %723 = vmatpush1.bf16.msra.mxu0 0
      %724 = vmatprep.subr.bf16.mxu0 0
      %725 = vmatpush1.bf16.msra.mxu0 0
      %726 = vmatprep.subr.bf16.mxu0 0
      %727 = vmatpush1.bf16.msra.mxu0 0
      %728 = vmatprep.subr.bf16.mxu0 0
      %729 = vmatpush1.bf16.msra.mxu0 0
      %730 = vmatprep.subr.bf16.mxu0 0
      %731 = vmatpush1.bf16.msra.mxu0 0
      %732 = vmatprep.subr.bf16.mxu0 0
      %733 = vmatpush1.bf16.msra.mxu0 0
      %734 = vmatprep.subr.bf16.mxu0 0
      %735 = vmatpush1.bf16.msra.mxu0 0
      %736 = vmatprep.subr.bf16.mxu0 0
      %737 = vmatpush1.bf16.msra.mxu0 0
      %738 = vmatprep.subr.bf16.mxu0 0
      %739 = vmatpush1.bf16.msra.mxu0 0
      %740 = vmatprep.subr.bf16.mxu0 0
      %741 = vmatpush1.bf16.msra.mxu0 0
      %742 = vmatprep.subr.bf16.mxu0 0
      %743 = vmatpush1.bf16.msra.mxu0 0
      %744 = vmatprep.subr.bf16.mxu0 0
      %745 = vmatpush1.bf16.msra.mxu0 0
      %746 = vmatprep.mubr.bf16.mxu0 0
      %747 = vmatmul.mubr.bf16.gmra.mrb[0].mxu0 %v703
      %v748 = vpop.f32.mrb[0].mxu0
      %v749 = vadd.f32 0.0, %v748
      %v750 = vpop.f32.mrb[0].mxu0
      %v751 = vpop.f32.mrb[0].mxu0
      %v752 = vadd.f32 0.0, %v751
      %v753 = vpop.f32.mrb[0].mxu0
      %754 = vmatprep.mubr.bf16.mxu0 0
      %755 = vmatmul.mubr.bf16.gmra.mrb[0].mxu0 %v706
      %v756 = vpop.f32.mrb[0].mxu0
      %v757 = vadd.f32 0.0, %v756
      %v758 = vpop.f32.mrb[0].mxu0
      %v759 = vpop.f32.mrb[0].mxu0
      %v760 = vadd.f32 0.0, %v759
      %v761 = vpop.f32.mrb[0].mxu0
      %762 = vmatprep.mubr.bf16.mxu0 0
      %763 = vmatmul.mubr.bf16.gmra.mrb[0].mxu0 %v709
      %v764 = vpop.f32.mrb[0].mxu0
      %v765 = vadd.f32 0.0, %v764
      %v766 = vpop.f32.mrb[0].mxu0
      %v767 = vpop.f32.mrb[0].mxu0
      %v768 = vadd.f32 0.0, %v767
      %v769 = vpop.f32.mrb[0].mxu0
      %770 = vmatprep.mubr.bf16.mxu0 0
      %771 = vmatmul.mubr.bf16.gmra.mrb[0].mxu0 %v712
      %v772 = vpop.f32.mrb[0].mxu0
      %v773 = vadd.f32 0.0, %v772
      %v774 = vpop.f32.mrb[0].mxu0
      %v775 = vpop.f32.mrb[0].mxu0
      %v776 = vadd.f32 0.0, %v775
      %v777 = vpop.f32.mrb[0].mxu0
      %778 = vdwg.mxu0
      %v779 = vadd.f32 %v665, %v749
      %v780 = vadd.f32 %v666, %v752
      %v781 = vadd.f32 %v667, %v757
      %v782 = vadd.f32 %v668, %v760
      %v783 = vadd.f32 %v669, %v765
      %v784 = vadd.f32 %v670, %v768
      %v785 = vadd.f32 %v671, %v773
      %v786 = vadd.f32 %v672, %v776
      %v787 = vld [vmem:[%s558 + $0x2] sm:$0xff]
      %v788 = vld [vmem:[%s558 + $0x12] sm:$0xff]
      %v789 = vld [vmem:[%s558 + $0x22] sm:$0xff]
      %v790 = vld [vmem:[%s558 + $0x32] sm:$0xff]
      %v791 = vld [vmem:[%s558 + $0x62] sm:$0xff]
      %v792 = vld [vmem:[%s558 + $0x72] sm:$0xff]
      %v793 = vld [vmem:[%s558 + $0x82] sm:$0xff]
      %v794 = vld [vmem:[%s558 + $0x92] sm:$0xff]
      %v795 = vpack.c.bf16 %v788, %v787
      %v796 = vpack.c.bf16 %v790, %v789
      %v797 = vpack.c.bf16 %v792, %v791
      %v798 = vpack.c.bf16 %v794, %v793
      %s799 = scalar_lea.vmem %s1, 80
      %v800 = vld [vmem:[%s799] sm:$0xf]
      %v801 = vld [vmem:[%s799 + $0x4] sm:$0xf]
      %v802 = vld [vmem:[%s799 + $0x8] sm:$0xf]
      %v803 = vld [vmem:[%s799 + $0xc] sm:$0xf]
      %v808 = vunpack.c.l.b16 %v800
      %v809 = vunpack.c.l.b16 %v801
      %v810 = vunpack.c.l.b16 %v802
      %v811 = vunpack.c.l.b16 %v803
      %v812 = vpack.c.b16 %v809, %v808
      %v813 = vpack.c.b16 %v811, %v810
      %v817 = vsel %vm244, %v795, 0
      %v820 = vsel %vm244, %v796, 0
      %v823 = vsel %vm244, %v797, 0
      %v826 = vsel %vm244, %v798, 0
      %828 = vmatprep.subr.bf16.mxu0 0
      %829 = vmatpush1.bf16.msra.mxu0 %v812
      %830 = vmatprep.subr.bf16.mxu0 0
      %831 = vmatpush1.bf16.msra.mxu0 %v813
      %832 = vmatprep.subr.bf16.mxu0 0
      %833 = vmatpush1.bf16.msra.mxu0 0
      %834 = vmatprep.subr.bf16.mxu0 0
      %835 = vmatpush1.bf16.msra.mxu0 0
      %836 = vmatprep.subr.bf16.mxu0 0
      %837 = vmatpush1.bf16.msra.mxu0 0
      %838 = vmatprep.subr.bf16.mxu0 0
      %839 = vmatpush1.bf16.msra.mxu0 0
      %840 = vmatprep.subr.bf16.mxu0 0
      %841 = vmatpush1.bf16.msra.mxu0 0
      %842 = vmatprep.subr.bf16.mxu0 0
      %843 = vmatpush1.bf16.msra.mxu0 0
      %844 = vmatprep.subr.bf16.mxu0 0
      %845 = vmatpush1.bf16.msra.mxu0 0
      %846 = vmatprep.subr.bf16.mxu0 0
      %847 = vmatpush1.bf16.msra.mxu0 0
      %848 = vmatprep.subr.bf16.mxu0 0
      %849 = vmatpush1.bf16.msra.mxu0 0
      %850 = vmatprep.subr.bf16.mxu0 0
      %851 = vmatpush1.bf16.msra.mxu0 0
      %852 = vmatprep.subr.bf16.mxu0 0
      %853 = vmatpush1.bf16.msra.mxu0 0
      %854 = vmatprep.subr.bf16.mxu0 0
      %855 = vmatpush1.bf16.msra.mxu0 0
      %856 = vmatprep.subr.bf16.mxu0 0
      %857 = vmatpush1.bf16.msra.mxu0 0
      %858 = vmatprep.subr.bf16.mxu0 0
      %859 = vmatpush1.bf16.msra.mxu0 0
      %860 = vmatprep.mubr.bf16.mxu0 0
      %861 = vmatmul.mubr.bf16.gmra.mrb[0].mxu0 %v817
      %v862 = vpop.f32.mrb[0].mxu0
      %v863 = vadd.f32 0.0, %v862
      %v864 = vpop.f32.mrb[0].mxu0
      %v865 = vpop.f32.mrb[0].mxu0
      %v866 = vadd.f32 0.0, %v865
      %v867 = vpop.f32.mrb[0].mxu0
      %868 = vmatprep.mubr.bf16.mxu0 0
      %869 = vmatmul.mubr.bf16.gmra.mrb[0].mxu0 %v820
      %v870 = vpop.f32.mrb[0].mxu0
      %v871 = vadd.f32 0.0, %v870
      %v872 = vpop.f32.mrb[0].mxu0
      %v873 = vpop.f32.mrb[0].mxu0
      %v874 = vadd.f32 0.0, %v873
      %v875 = vpop.f32.mrb[0].mxu0
      %876 = vmatprep.mubr.bf16.mxu0 0
      %877 = vmatmul.mubr.bf16.gmra.mrb[0].mxu0 %v823
      %v878 = vpop.f32.mrb[0].mxu0
      %v879 = vadd.f32 0.0, %v878
      %v880 = vpop.f32.mrb[0].mxu0
      %v881 = vpop.f32.mrb[0].mxu0
      %v882 = vadd.f32 0.0, %v881
      %v883 = vpop.f32.mrb[0].mxu0
      %884 = vmatprep.mubr.bf16.mxu0 0
      %885 = vmatmul.mubr.bf16.gmra.mrb[0].mxu0 %v826
      %v886 = vpop.f32.mrb[0].mxu0
      %v887 = vadd.f32 0.0, %v886
      %v888 = vpop.f32.mrb[0].mxu0
      %v889 = vpop.f32.mrb[0].mxu0
      %v890 = vadd.f32 0.0, %v889
      %v891 = vpop.f32.mrb[0].mxu0
      %892 = vdwg.mxu0
      %v893 = vadd.f32 %v779, %v863
      %v894 = vadd.f32 %v780, %v866
      %v895 = vadd.f32 %v781, %v871
      %v896 = vadd.f32 %v782, %v874
      %v897 = vadd.f32 %v783, %v879
      %v898 = vadd.f32 %v784, %v882
      %v899 = vadd.f32 %v785, %v887
      %v900 = vadd.f32 %v786, %v890
      %s901 = scalar_lea.vmem [#allocation2], 32
      %v902 = vld [vmem:[%s901] sm:$0xff]
      %v903 = vld [vmem:[%s901 + $0x10] sm:$0xff]
      %v904 = vld [vmem:[%s901 + $0x20] sm:$0xff]
      %v905 = vld [vmem:[%s901 + $0x30] sm:$0xff]
      %v906 = vld [vmem:[%s901 + $0x60] sm:$0xff]
      %v907 = vld [vmem:[%s901 + $0x70] sm:$0xff]
      %v908 = vld [vmem:[%s901 + $0x80] sm:$0xff]
      %v909 = vld [vmem:[%s901 + $0x90] sm:$0xff]
      %v910 = vpack.c.bf16 %v903, %v902
      %v911 = vpack.c.bf16 %v905, %v904
      %v912 = vpack.c.bf16 %v907, %v906
      %v913 = vpack.c.bf16 %v909, %v908
      %s914 = scalar_lea.vmem %s1, 96
      %v915 = vld [vmem:[%s914] sm:$0xf]
      %v916 = vld [vmem:[%s914 + $0x4] sm:$0xf]
      %v917 = vld [vmem:[%s914 + $0x8] sm:$0xf]
      %v918 = vld [vmem:[%s914 + $0xc] sm:$0xf]
      %v923 = vunpack.c.l.b16 %v915
      %v924 = vunpack.c.l.b16 %v916
      %v925 = vunpack.c.l.b16 %v917
      %v926 = vunpack.c.l.b16 %v918
      %v927 = vpack.c.b16 %v924, %v923
      %v928 = vpack.c.b16 %v926, %v925
      %v932 = vsel %vm244, %v910, 0
      %v935 = vsel %vm244, %v911, 0
      %v938 = vsel %vm244, %v912, 0
      %v941 = vsel %vm244, %v913, 0
      %943 = vmatprep.subr.bf16.mxu0 0
      %944 = vmatpush1.bf16.msra.mxu0 %v927
      %945 = vmatprep.subr.bf16.mxu0 0
      %946 = vmatpush1.bf16.msra.mxu0 %v928
      %947 = vmatprep.subr.bf16.mxu0 0
      %948 = vmatpush1.bf16.msra.mxu0 0
      %949 = vmatprep.subr.bf16.mxu0 0
      %950 = vmatpush1.bf16.msra.mxu0 0
      %951 = vmatprep.subr.bf16.mxu0 0
      %952 = vmatpush1.bf16.msra.mxu0 0
      %953 = vmatprep.subr.bf16.mxu0 0
      %954 = vmatpush1.bf16.msra.mxu0 0
      %955 = vmatprep.subr.bf16.mxu0 0
      %956 = vmatpush1.bf16.msra.mxu0 0
      %957 = vmatprep.subr.bf16.mxu0 0
      %958 = vmatpush1.bf16.msra.mxu0 0
      %959 = vmatprep.subr.bf16.mxu0 0
      %960 = vmatpush1.bf16.msra.mxu0 0
      %961 = vmatprep.subr.bf16.mxu0 0
      %962 = vmatpush1.bf16.msra.mxu0 0
      %963 = vmatprep.subr.bf16.mxu0 0
      %964 = vmatpush1.bf16.msra.mxu0 0
      %965 = vmatprep.subr.bf16.mxu0 0
      %966 = vmatpush1.bf16.msra.mxu0 0
      %967 = vmatprep.subr.bf16.mxu0 0
      %968 = vmatpush1.bf16.msra.mxu0 0
      %969 = vmatprep.subr.bf16.mxu0 0
      %970 = vmatpush1.bf16.msra.mxu0 0
      %971 = vmatprep.subr.bf16.mxu0 0
      %972 = vmatpush1.bf16.msra.mxu0 0
      %973 = vmatprep.subr.bf16.mxu0 0
      %974 = vmatpush1.bf16.msra.mxu0 0
      %975 = vmatprep.mubr.bf16.mxu0 0
      %976 = vmatmul.mubr.bf16.gmra.mrb[0].mxu0 %v932
      %v977 = vpop.f32.mrb[0].mxu0
      %v978 = vadd.f32 0.0, %v977
      %v979 = vpop.f32.mrb[0].mxu0
      %v980 = vpop.f32.mrb[0].mxu0
      %v981 = vadd.f32 0.0, %v980
      %v982 = vpop.f32.mrb[0].mxu0
      %983 = vmatprep.mubr.bf16.mxu0 0
      %984 = vmatmul.mubr.bf16.gmra.mrb[0].mxu0 %v935
      %v985 = vpop.f32.mrb[0].mxu0
      %v986 = vadd.f32 0.0, %v985
      %v987 = vpop.f32.mrb[0].mxu0
      %v988 = vpop.f32.mrb[0].mxu0
      %v989 = vadd.f32 0.0, %v988
      %v990 = vpop.f32.mrb[0].mxu0
      %991 = vmatprep.mubr.bf16.mxu0 0
      %992 = vmatmul.mubr.bf16.gmra.mrb[0].mxu0 %v938
      %v993 = vpop.f32.mrb[0].mxu0
      %v994 = vadd.f32 0.0, %v993
      %v995 = vpop.f32.mrb[0].mxu0
      %v996 = vpop.f32.mrb[0].mxu0
      %v997 = vadd.f32 0.0, %v996
      %v998 = vpop.f32.mrb[0].mxu0
      %999 = vmatprep.mubr.bf16.mxu0 0
      %1000 = vmatmul.mubr.bf16.gmra.mrb[0].mxu0 %v941
      %v1001 = vpop.f32.mrb[0].mxu0
      %v1002 = vadd.f32 0.0, %v1001
      %v1003 = vpop.f32.mrb[0].mxu0
      %v1004 = vpop.f32.mrb[0].mxu0
      %v1005 = vadd.f32 0.0, %v1004
      %v1006 = vpop.f32.mrb[0].mxu0
      %1007 = vdwg.mxu0
      %v1008 = vadd.f32 %v893, %v978
      %v1009 = vadd.f32 %v894, %v981
      %v1010 = vadd.f32 %v895, %v986
      %v1011 = vadd.f32 %v896, %v989
      %v1012 = vadd.f32 %v897, %v994
      %v1013 = vadd.f32 %v898, %v997
      %v1014 = vadd.f32 %v899, %v1002
      %v1015 = vadd.f32 %v900, %v1005
      %v1016 = vld [vmem:[%s901 + $0x1] sm:$0xff]
      %v1017 = vld [vmem:[%s901 + $0x11] sm:$0xff]
      %v1018 = vld [vmem:[%s901 + $0x21] sm:$0xff]
      %v1019 = vld [vmem:[%s901 + $0x31] sm:$0xff]
      %v1020 = vld [vmem:[%s901 + $0x61] sm:$0xff]
      %v1021 = vld [vmem:[%s901 + $0x71] sm:$0xff]
      %v1022 = vld [vmem:[%s901 + $0x81] sm:$0xff]
      %v1023 = vld [vmem:[%s901 + $0x91] sm:$0xff]
      %v1024 = vpack.c.bf16 %v1017, %v1016
      %v1025 = vpack.c.bf16 %v1019, %v1018
      %v1026 = vpack.c.bf16 %v1021, %v1020
      %v1027 = vpack.c.bf16 %v1023, %v1022
      %s1028 = scalar_lea.vmem %s1, 112
      %v1029 = vld [vmem:[%s1028] sm:$0xf]
      %v1030 = vld [vmem:[%s1028 + $0x4] sm:$0xf]
      %v1031 = vld [vmem:[%s1028 + $0x8] sm:$0xf]
      %v1032 = vld [vmem:[%s1028 + $0xc] sm:$0xf]
      %v1037 = vunpack.c.l.b16 %v1029
      %v1038 = vunpack.c.l.b16 %v1030
      %v1039 = vunpack.c.l.b16 %v1031
      %v1040 = vunpack.c.l.b16 %v1032
      %v1041 = vpack.c.b16 %v1038, %v1037
      %v1042 = vpack.c.b16 %v1040, %v1039
      %v1046 = vsel %vm244, %v1024, 0
      %v1049 = vsel %vm244, %v1025, 0
      %v1052 = vsel %vm244, %v1026, 0
      %v1055 = vsel %vm244, %v1027, 0
      %1057 = vmatprep.subr.bf16.mxu0 0
      %1058 = vmatpush1.bf16.msra.mxu0 %v1041
      %1059 = vmatprep.subr.bf16.mxu0 0
      %1060 = vmatpush1.bf16.msra.mxu0 %v1042
      %1061 = vmatprep.subr.bf16.mxu0 0
      %1062 = vmatpush1.bf16.msra.mxu0 0
      %1063 = vmatprep.subr.bf16.mxu0 0
      %1064 = vmatpush1.bf16.msra.mxu0 0
      %1065 = vmatprep.subr.bf16.mxu0 0
      %1066 = vmatpush1.bf16.msra.mxu0 0
      %1067 = vmatprep.subr.bf16.mxu0 0
      %1068 = vmatpush1.bf16.msra.mxu0 0
      %1069 = vmatprep.subr.bf16.mxu0 0
      %1070 = vmatpush1.bf16.msra.mxu0 0
      %1071 = vmatprep.subr.bf16.mxu0 0
      %1072 = vmatpush1.bf16.msra.mxu0 0
      %1073 = vmatprep.subr.bf16.mxu0 0
      %1074 = vmatpush1.bf16.msra.mxu0 0
      %1075 = vmatprep.subr.bf16.mxu0 0
      %1076 = vmatpush1.bf16.msra.mxu0 0
      %1077 = vmatprep.subr.bf16.mxu0 0
      %1078 = vmatpush1.bf16.msra.mxu0 0
      %1079 = vmatprep.subr.bf16.mxu0 0
      %1080 = vmatpush1.bf16.msra.mxu0 0
      %1081 = vmatprep.subr.bf16.mxu0 0
      %1082 = vmatpush1.bf16.msra.mxu0 0
      %1083 = vmatprep.subr.bf16.mxu0 0
      %1084 = vmatpush1.bf16.msra.mxu0 0
      %1085 = vmatprep.subr.bf16.mxu0 0
      %1086 = vmatpush1.bf16.msra.mxu0 0
      %1087 = vmatprep.subr.bf16.mxu0 0
      %1088 = vmatpush1.bf16.msra.mxu0 0
      %1089 = vmatprep.mubr.bf16.mxu0 0
      %1090 = vmatmul.mubr.bf16.gmra.mrb[0].mxu0 %v1046
      %v1091 = vpop.f32.mrb[0].mxu0
      %v1092 = vadd.f32 0.0, %v1091
      %v1093 = vpop.f32.mrb[0].mxu0
      %v1094 = vpop.f32.mrb[0].mxu0
      %v1095 = vadd.f32 0.0, %v1094
      %v1096 = vpop.f32.mrb[0].mxu0
      %1097 = vmatprep.mubr.bf16.mxu0 0
      %1098 = vmatmul.mubr.bf16.gmra.mrb[0].mxu0 %v1049
      %v1099 = vpop.f32.mrb[0].mxu0
      %v1100 = vadd.f32 0.0, %v1099
      %v1101 = vpop.f32.mrb[0].mxu0
      %v1102 = vpop.f32.mrb[0].mxu0
      %v1103 = vadd.f32 0.0, %v1102
      %v1104 = vpop.f32.mrb[0].mxu0
      %1105 = vmatprep.mubr.bf16.mxu0 0
      %1106 = vmatmul.mubr.bf16.gmra.mrb[0].mxu0 %v1052
      %v1107 = vpop.f32.mrb[0].mxu0
      %v1108 = vadd.f32 0.0, %v1107
      %v1109 = vpop.f32.mrb[0].mxu0
      %v1110 = vpop.f32.mrb[0].mxu0
      %v1111 = vadd.f32 0.0, %v1110
      %v1112 = vpop.f32.mrb[0].mxu0
      %1113 = vmatprep.mubr.bf16.mxu0 0
      %1114 = vmatmul.mubr.bf16.gmra.mrb[0].mxu0 %v1055
      %v1115 = vpop.f32.mrb[0].mxu0
      %v1116 = vadd.f32 0.0, %v1115
      %v1117 = vpop.f32.mrb[0].mxu0
      %v1118 = vpop.f32.mrb[0].mxu0
      %v1119 = vadd.f32 0.0, %v1118
      %v1120 = vpop.f32.mrb[0].mxu0
      %1121 = vdwg.mxu0
      %v1122 = vadd.f32 %v1008, %v1092
      %v1123 = vadd.f32 %v1009, %v1095
      %v1124 = vadd.f32 %v1010, %v1100
      %v1125 = vadd.f32 %v1011, %v1103
      %v1126 = vadd.f32 %v1012, %v1108
      %v1127 = vadd.f32 %v1013, %v1111
      %v1128 = vadd.f32 %v1014, %v1116
      %v1129 = vadd.f32 %v1015, %v1119
      %v1130 = vld [vmem:[%s901 + $0x2] sm:$0xff]
      %v1131 = vld [vmem:[%s901 + $0x12] sm:$0xff]
      %v1132 = vld [vmem:[%s901 + $0x22] sm:$0xff]
      %v1133 = vld [vmem:[%s901 + $0x32] sm:$0xff]
      %v1134 = vld [vmem:[%s901 + $0x62] sm:$0xff]
      %v1135 = vld [vmem:[%s901 + $0x72] sm:$0xff]
      %v1136 = vld [vmem:[%s901 + $0x82] sm:$0xff]
      %v1137 = vld [vmem:[%s901 + $0x92] sm:$0xff]
      %v1138 = vpack.c.bf16 %v1131, %v1130
      %v1139 = vpack.c.bf16 %v1133, %v1132
      %v1140 = vpack.c.bf16 %v1135, %v1134
      %v1141 = vpack.c.bf16 %v1137, %v1136
      %s1142 = scalar_lea.vmem %s1, 128
      %v1143 = vld [vmem:[%s1142] sm:$0xf]
      %v1144 = vld [vmem:[%s1142 + $0x4] sm:$0xf]
      %v1145 = vld [vmem:[%s1142 + $0x8] sm:$0xf]
      %v1146 = vld [vmem:[%s1142 + $0xc] sm:$0xf]
      %v1151 = vunpack.c.l.b16 %v1143
      %v1152 = vunpack.c.l.b16 %v1144
      %v1153 = vunpack.c.l.b16 %v1145
      %v1154 = vunpack.c.l.b16 %v1146
      %v1155 = vpack.c.b16 %v1152, %v1151
      %v1156 = vpack.c.b16 %v1154, %v1153
      %v1160 = vsel %vm244, %v1138, 0
      %v1163 = vsel %vm244, %v1139, 0
      %v1166 = vsel %vm244, %v1140, 0
      %v1169 = vsel %vm244, %v1141, 0
      %1171 = vmatprep.subr.bf16.mxu0 0
      %1172 = vmatpush1.bf16.msra.mxu0 %v1155
      %1173 = vmatprep.subr.bf16.mxu0 0
      %1174 = vmatpush1.bf16.msra.mxu0 %v1156
      %1175 = vmatprep.subr.bf16.mxu0 0
      %1176 = vmatpush1.bf16.msra.mxu0 0
      %1177 = vmatprep.subr.bf16.mxu0 0
      %1178 = vmatpush1.bf16.msra.mxu0 0
      %1179 = vmatprep.subr.bf16.mxu0 0
      %1180 = vmatpush1.bf16.msra.mxu0 0
      %1181 = vmatprep.subr.bf16.mxu0 0
      %1182 = vmatpush1.bf16.msra.mxu0 0
      %1183 = vmatprep.subr.bf16.mxu0 0
      %1184 = vmatpush1.bf16.msra.mxu0 0
      %1185 = vmatprep.subr.bf16.mxu0 0
      %1186 = vmatpush1.bf16.msra.mxu0 0
      %1187 = vmatprep.subr.bf16.mxu0 0
      %1188 = vmatpush1.bf16.msra.mxu0 0
      %1189 = vmatprep.subr.bf16.mxu0 0
      %1190 = vmatpush1.bf16.msra.mxu0 0
      %1191 = vmatprep.subr.bf16.mxu0 0
      %1192 = vmatpush1.bf16.msra.mxu0 0
      %1193 = vmatprep.subr.bf16.mxu0 0
      %1194 = vmatpush1.bf16.msra.mxu0 0
      %1195 = vmatprep.subr.bf16.mxu0 0
      %1196 = vmatpush1.bf16.msra.mxu0 0
      %1197 = vmatprep.subr.bf16.mxu0 0
      %1198 = vmatpush1.bf16.msra.mxu0 0
      %1199 = vmatprep.subr.bf16.mxu0 0
      %1200 = vmatpush1.bf16.msra.mxu0 0
      %1201 = vmatprep.subr.bf16.mxu0 0
      %1202 = vmatpush1.bf16.msra.mxu0 0
      %1203 = vmatprep.mubr.bf16.mxu0 0
      %1204 = vmatmul.mubr.bf16.gmra.mrb[0].mxu0 %v1160
      %v1205 = vpop.f32.mrb[0].mxu0
      %v1206 = vadd.f32 0.0, %v1205
      %v1207 = vpop.f32.mrb[0].mxu0
      %v1208 = vpop.f32.mrb[0].mxu0
      %v1209 = vadd.f32 0.0, %v1208
      %v1210 = vpop.f32.mrb[0].mxu0
      %1211 = vmatprep.mubr.bf16.mxu0 0
      %1212 = vmatmul.mubr.bf16.gmra.mrb[0].mxu0 %v1163
      %v1213 = vpop.f32.mrb[0].mxu0
      %v1214 = vadd.f32 0.0, %v1213
      %v1215 = vpop.f32.mrb[0].mxu0
      %v1216 = vpop.f32.mrb[0].mxu0
      %v1217 = vadd.f32 0.0, %v1216
      %v1218 = vpop.f32.mrb[0].mxu0
      %1219 = vmatprep.mubr.bf16.mxu0 0
      %1220 = vmatmul.mubr.bf16.gmra.mrb[0].mxu0 %v1166
      %v1221 = vpop.f32.mrb[0].mxu0
      %v1222 = vadd.f32 0.0, %v1221
      %v1223 = vpop.f32.mrb[0].mxu0
      %v1224 = vpop.f32.mrb[0].mxu0
      %v1225 = vadd.f32 0.0, %v1224
      %v1226 = vpop.f32.mrb[0].mxu0
      %1227 = vmatprep.mubr.bf16.mxu0 0
      %1228 = vmatmul.mubr.bf16.gmra.mrb[0].mxu0 %v1169
      %v1229 = vpop.f32.mrb[0].mxu0
      %v1230 = vadd.f32 0.0, %v1229
      %v1231 = vpop.f32.mrb[0].mxu0
      %v1232 = vpop.f32.mrb[0].mxu0
      %v1233 = vadd.f32 0.0, %v1232
      %v1234 = vpop.f32.mrb[0].mxu0
      %1235 = vdwg.mxu0
      %v1236 = vadd.f32 %v1122, %v1206
      %v1237 = vadd.f32 %v1123, %v1209
      %v1238 = vadd.f32 %v1124, %v1214
      %v1239 = vadd.f32 %v1125, %v1217
      %v1240 = vadd.f32 %v1126, %v1222
      %v1241 = vadd.f32 %v1127, %v1225
      %v1242 = vadd.f32 %v1128, %v1230
      %v1243 = vadd.f32 %v1129, %v1233
      %v1244 = vxor.u32 %v1236, 2147483648
      %v1245 = vxor.u32 %v1237, 2147483648
      %v1246 = vxor.u32 %v1238, 2147483648
      %v1247 = vxor.u32 %v1239, 2147483648
      %v1248 = vxor.u32 %v1240, 2147483648
      %v1249 = vxor.u32 %v1241, 2147483648
      %v1250 = vxor.u32 %v1242, 2147483648
      %v1251 = vxor.u32 %v1243, 2147483648
      %v1252 = vmul.f32 %v1244, 1.442695
      %v1253 = vpow.pop %v1252
      %v1254 = vmul.f32 %v1245, 1.442695
      %v1255 = vpow.pop %v1254
      %v1256 = vmul.f32 %v1246, 1.442695
      %v1257 = vpow.pop %v1256
      %v1258 = vmul.f32 %v1247, 1.442695
      %v1259 = vpow.pop %v1258
      %v1260 = vmul.f32 %v1248, 1.442695
      %v1261 = vpow.pop %v1260
      %v1262 = vmul.f32 %v1249, 1.442695
      %v1263 = vpow.pop %v1262
      %v1264 = vmul.f32 %v1250, 1.442695
      %v1265 = vpow.pop %v1264
      %v1266 = vmul.f32 %v1251, 1.442695
      %v1267 = vpow.pop %v1266
      %v1268 = vadd.f32 %v1253, 1.0
      %v1269 = vadd.f32 %v1255, 1.0
      %v1270 = vadd.f32 %v1257, 1.0
      %v1271 = vadd.f32 %v1259, 1.0
      %v1272 = vadd.f32 %v1261, 1.0
      %v1273 = vadd.f32 %v1263, 1.0
      %v1274 = vadd.f32 %v1265, 1.0
      %v1275 = vadd.f32 %v1267, 1.0
      %v1276 = vrcp.pop %v1268
      %v1277 = vmul.f32 1.0, %v1276
      %v1278 = vrcp.pop %v1269
      %v1279 = vmul.f32 1.0, %v1278
      %v1280 = vrcp.pop %v1270
      %v1281 = vmul.f32 1.0, %v1280
      %v1282 = vrcp.pop %v1271
      %v1283 = vmul.f32 1.0, %v1282
      %v1284 = vrcp.pop %v1272
      %v1285 = vmul.f32 1.0, %v1284
      %v1286 = vrcp.pop %v1273
      %v1287 = vmul.f32 1.0, %v1286
      %v1288 = vrcp.pop %v1274
      %v1289 = vmul.f32 1.0, %v1288
      %v1290 = vrcp.pop %v1275
      %v1291 = vmul.f32 1.0, %v1290
      %v1292 = vtanh.pop %v1236
      %v1293 = vtanh.pop %v1237
      %v1294 = vtanh.pop %v1238
      %v1295 = vtanh.pop %v1239
      %v1296 = vtanh.pop %v1240
      %v1297 = vtanh.pop %v1241
      %v1298 = vtanh.pop %v1242
      %v1299 = vtanh.pop %v1243
      %v1300 = vld [vmem:[%s3] sm:$0xff]
      %v1301 = vld [vmem:[%s3 + $0x8] sm:$0xff]
      %v1302 = vld [vmem:[%s3 + $0x10] sm:$0xff]
      %v1303 = vld [vmem:[%s3 + $0x18] sm:$0xff]
      %v1304 = vld [vmem:[%s3 + $0x20] sm:$0xff]
      %v1305 = vld [vmem:[%s3 + $0x28] sm:$0xff]
      %v1306 = vld [vmem:[%s3 + $0x30] sm:$0xff]
      %v1307 = vld [vmem:[%s3 + $0x38] sm:$0xff]
      %1316 = vrot.lane.b32.xlu0 %v1300, 32
      %v1317 = vpop.permute.xlu0 %1316
      %1318 = vrot.lane.b32.xlu0 %v1301, 32
      %v1319 = vpop.permute.xlu0 %1318
      %1320 = vrot.lane.b32.xlu0 %v1302, 32
      %v1321 = vpop.permute.xlu0 %1320
      %1322 = vrot.lane.b32.xlu0 %v1303, 32
      %v1323 = vpop.permute.xlu0 %1322
      %1324 = vrot.lane.b32.xlu0 %v1304, 32
      %v1325 = vpop.permute.xlu0 %1324
      %1326 = vrot.lane.b32.xlu0 %v1305, 32
      %v1327 = vpop.permute.xlu0 %1326
      %1328 = vrot.lane.b32.xlu0 %v1306, 32
      %v1329 = vpop.permute.xlu0 %1328
      %1330 = vrot.lane.b32.xlu0 %v1307, 32
      %v1331 = vpop.permute.xlu0 %1330
      %v1340 = vmul.f32 %v1277, %v1317
      %v1341 = vmul.f32 %v1279, %v1319
      %v1342 = vmul.f32 %v1281, %v1321
      %v1343 = vmul.f32 %v1283, %v1323
      %v1344 = vmul.f32 %v1285, %v1325
      %v1345 = vmul.f32 %v1287, %v1327
      %v1346 = vmul.f32 %v1289, %v1329
      %v1347 = vmul.f32 %v1291, %v1331
      %1356 = vrot.lane.b32.xlu0 %v1292, 64
      %v1357 = vpop.permute.xlu0 %1356
      %1358 = vrot.lane.b32.xlu0 %v1293, 64
      %v1359 = vpop.permute.xlu0 %1358
      %1360 = vrot.lane.b32.xlu0 %v1294, 64
      %v1361 = vpop.permute.xlu0 %1360
      %1362 = vrot.lane.b32.xlu0 %v1295, 64
      %v1363 = vpop.permute.xlu0 %1362
      %1364 = vrot.lane.b32.xlu0 %v1296, 64
      %v1365 = vpop.permute.xlu0 %1364
      %1366 = vrot.lane.b32.xlu0 %v1297, 64
      %v1367 = vpop.permute.xlu0 %1366
      %1368 = vrot.lane.b32.xlu0 %v1298, 64
      %v1369 = vpop.permute.xlu0 %1368
      %1370 = vrot.lane.b32.xlu0 %v1299, 64
      %v1371 = vpop.permute.xlu0 %1370
      %v1380 = vmul.f32 %v1277, %v1357
      %v1381 = vmul.f32 %v1279, %v1359
      %v1382 = vmul.f32 %v1281, %v1361
      %v1383 = vmul.f32 %v1283, %v1363
      %v1384 = vmul.f32 %v1285, %v1365
      %v1385 = vmul.f32 %v1287, %v1367
      %v1386 = vmul.f32 %v1289, %v1369
      %v1387 = vmul.f32 %v1291, %v1371
      %1396 = vrot.lane.b32.xlu0 %v1380, 32
      %v1397 = vpop.permute.xlu0 %1396
      %1398 = vrot.lane.b32.xlu0 %v1381, 32
      %v1399 = vpop.permute.xlu0 %1398
      %1400 = vrot.lane.b32.xlu0 %v1382, 32
      %v1401 = vpop.permute.xlu0 %1400
      %1402 = vrot.lane.b32.xlu0 %v1383, 32
      %v1403 = vpop.permute.xlu0 %1402
      %1404 = vrot.lane.b32.xlu0 %v1384, 32
      %v1405 = vpop.permute.xlu0 %1404
      %1406 = vrot.lane.b32.xlu0 %v1385, 32
      %v1407 = vpop.permute.xlu0 %1406
      %1408 = vrot.lane.b32.xlu0 %v1386, 32
      %v1409 = vpop.permute.xlu0 %1408
      %1410 = vrot.lane.b32.xlu0 %v1387, 32
      %v1411 = vpop.permute.xlu0 %1410
      %v1420 = vadd.f32 %v1340, %v1397
      %v1421 = vadd.f32 %v1341, %v1399
      %v1422 = vadd.f32 %v1342, %v1401
      %v1423 = vadd.f32 %v1343, %v1403
      %v1424 = vadd.f32 %v1344, %v1405
      %v1425 = vadd.f32 %v1345, %v1407
      %v1426 = vadd.f32 %v1346, %v1409
      %v1427 = vadd.f32 %v1347, %v1411
      %v1428 = vtanh.pop %v1420
      %v1429 = vtanh.pop %v1421
      %v1430 = vtanh.pop %v1422
      %v1431 = vtanh.pop %v1423
      %v1432 = vtanh.pop %v1424
      %v1433 = vtanh.pop %v1425
      %v1434 = vtanh.pop %v1426
      %v1435 = vtanh.pop %v1427
      %1444 = vrot.lane.b32.xlu0 %v1428, 64
      %v1445 = vpop.permute.xlu0 %1444
      %1446 = vrot.lane.b32.xlu0 %v1429, 64
      %v1447 = vpop.permute.xlu0 %1446
      %1448 = vrot.lane.b32.xlu0 %v1430, 64
      %v1449 = vpop.permute.xlu0 %1448
      %1450 = vrot.lane.b32.xlu0 %v1431, 64
      %v1451 = vpop.permute.xlu0 %1450
      %1452 = vrot.lane.b32.xlu0 %v1432, 64
      %v1453 = vpop.permute.xlu0 %1452
      %1454 = vrot.lane.b32.xlu0 %v1433, 64
      %v1455 = vpop.permute.xlu0 %1454
      %1456 = vrot.lane.b32.xlu0 %v1434, 64
      %v1457 = vpop.permute.xlu0 %1456
      %1458 = vrot.lane.b32.xlu0 %v1435, 64
      %v1459 = vpop.permute.xlu0 %1458
      %v1468 = vmul.f32 %v1277, %v1445
      %v1469 = vmul.f32 %v1279, %v1447
      %v1470 = vmul.f32 %v1281, %v1449
      %v1471 = vmul.f32 %v1283, %v1451
      %v1472 = vmul.f32 %v1285, %v1453
      %v1473 = vmul.f32 %v1287, %v1455
      %v1474 = vmul.f32 %v1289, %v1457
      %v1475 = vmul.f32 %v1291, %v1459
      %1484 = vrot.lane.b32.xlu0 %v1420, 96
      %v1485 = vpop.permute.xlu0 %1484
      %1486 = vrot.lane.b32.xlu0 %v1421, 96
      %v1487 = vpop.permute.xlu0 %1486
      %1488 = vrot.lane.b32.xlu0 %v1422, 96
      %v1489 = vpop.permute.xlu0 %1488
      %1490 = vrot.lane.b32.xlu0 %v1423, 96
      %v1491 = vpop.permute.xlu0 %1490
      %1492 = vrot.lane.b32.xlu0 %v1424, 96
      %v1493 = vpop.permute.xlu0 %1492
      %1494 = vrot.lane.b32.xlu0 %v1425, 96
      %v1495 = vpop.permute.xlu0 %1494
      %1496 = vrot.lane.b32.xlu0 %v1426, 96
      %v1497 = vpop.permute.xlu0 %1496
      %1498 = vrot.lane.b32.xlu0 %v1427, 96
      %v1499 = vpop.permute.xlu0 %1498
      %1508 = vst.msk [vmem:[%s3] sm:$0xff] %vm244, %v1485
      %1509 = vst.msk [vmem:[%s3 + $0x8] sm:$0xff] %vm244, %v1487
      %1510 = vst.msk [vmem:[%s3 + $0x10] sm:$0xff] %vm244, %v1489
      %1511 = vst.msk [vmem:[%s3 + $0x18] sm:$0xff] %vm244, %v1491
      %1512 = vst.msk [vmem:[%s3 + $0x20] sm:$0xff] %vm244, %v1493
      %1513 = vst.msk [vmem:[%s3 + $0x28] sm:$0xff] %vm244, %v1495
      %1514 = vst.msk [vmem:[%s3 + $0x30] sm:$0xff] %vm244, %v1497
      %1515 = vst.msk [vmem:[%s3 + $0x38] sm:$0xff] %vm244, %v1499
      %1524 = vrot.lane.b32.xlu0 %v1468, 32
      %v1525 = vpop.permute.xlu0 %1524
      %1526 = vrot.lane.b32.xlu0 %v1469, 32
      %v1527 = vpop.permute.xlu0 %1526
      %1528 = vrot.lane.b32.xlu0 %v1470, 32
      %v1529 = vpop.permute.xlu0 %1528
      %1530 = vrot.lane.b32.xlu0 %v1471, 32
      %v1531 = vpop.permute.xlu0 %1530
      %1532 = vrot.lane.b32.xlu0 %v1472, 32
      %v1533 = vpop.permute.xlu0 %1532
      %1534 = vrot.lane.b32.xlu0 %v1473, 32
      %v1535 = vpop.permute.xlu0 %1534
      %1536 = vrot.lane.b32.xlu0 %v1474, 32
      %v1537 = vpop.permute.xlu0 %1536
      %1538 = vrot.lane.b32.xlu0 %v1475, 32
      %v1539 = vpop.permute.xlu0 %1538
      %1548 = vst.msk [vmem:[%s168] sm:$0xff] %vm244, %v1525
      %1549 = vst.msk [vmem:[%s168 + $0x8] sm:$0xff] %vm244, %v1527
      %1550 = vst.msk [vmem:[%s168 + $0x10] sm:$0xff] %vm244, %v1529
      %1551 = vst.msk [vmem:[%s168 + $0x18] sm:$0xff] %vm244, %v1531
      %1552 = vst.msk [vmem:[%s168 + $0x20] sm:$0xff] %vm244, %v1533
      %1553 = vst.msk [vmem:[%s168 + $0x28] sm:$0xff] %vm244, %v1535
      %1554 = vst.msk [vmem:[%s168 + $0x30] sm:$0xff] %vm244, %v1537
      %1555 = vst.msk [vmem:[%s168 + $0x38] sm:$0xff] %vm244, %v1539
      %vm1556 = vcmask 257024
      %1557 = vst.msk [vmem:[%s558 + $0x1] sm:$0xf] %vm1556, %v1525
      %1558 = vst.msk [vmem:[%s558 + $0x11] sm:$0xf] %vm1556, %v1527
      %1559 = vst.msk [vmem:[%s558 + $0x21] sm:$0xf] %vm1556, %v1529
      %1560 = vst.msk [vmem:[%s558 + $0x31] sm:$0xf] %vm1556, %v1531
      %1561 = vst.msk [vmem:[%s558 + $0x61] sm:$0xf] %vm1556, %v1533
      %1562 = vst.msk [vmem:[%s558 + $0x71] sm:$0xf] %vm1556, %v1535
      %1563 = vst.msk [vmem:[%s558 + $0x81] sm:$0xf] %vm1556, %v1537
      %1564 = vst.msk [vmem:[%s558 + $0x91] sm:$0xf] %vm1556, %v1539
      %p1565 = scmp.lt.s32.totalorder %s15, 3
      %s1566 = scalar_select %p1565, %s15, 3
      %s1567 = smul.addr %s1566, 8
      %s1568 = smul.addr %s1567, 8
      %s1569 = scalar_lea.vmem %s2, %s1568
      // Predicated region
      $region33: #{encoder_forward.11} parent=27 // pred_check
        %p1570 = pneg %p80
      $region34: #{encoder_forward.11} parent=27 // pred_check_branch
        %1572 = sbr.rel (%p1570) target = $region36
      $region35: #{encoder_forward.11} parent=27 // pred_region
        _
      $region36: #{encoder_forward.11} parent=27 // pred_fallthru
        _
      // Predicated region
      $region37: #{encoder_forward.11} parent=27 // pred_check
        %p1573 = pneg %p101
      $region38: #{encoder_forward.11} parent=27 // pred_check_branch
        %1575 = sbr.rel (%p1573) target = $region40
      $region39: #{encoder_forward.11} parent=27 // pred_region
        _
      $region40: #{encoder_forward.11} parent=27 // pred_fallthru
        _
      // Predicated region
      $region41: #{encoder_forward.11} parent=27 // pred_check
        %p1576 = pneg %p101
      $region42: #{encoder_forward.11} parent=27 // pred_check_branch
        %1578 = sbr.rel (%p1576) target = $region44
      $region43: #{encoder_forward.11} parent=27 // pred_region
        _
      $region44: #{encoder_forward.11} parent=27 // pred_fallthru
        _
    $region28: #{encoder_forward.11} parent=5 // pred_fallthru
      _
    %p1579 = scmp.le.s32.totalorder 2, %s10
    // Predicated region
    $region45: #{encoder_forward.11} parent=5 // pred_check
      %p1580 = pneg %p1579
    $region46: #{encoder_forward.11} parent=5 // pred_check_branch
      %1582 = sbr.rel (%p1580) target = $region48
    $region47: #{encoder_forward.11} parent=5 // pred_region
      %s1583 = ssub.s32 %s10, 2
      // Predicated region
      $region49: #{encoder_forward.11} parent=47 // pred_check
        %p1584 = pneg %p86
      $region50: #{encoder_forward.11} parent=47 // pred_check_branch
        %1586 = sbr.rel (%p1584) target = $region52
      $region51: #{encoder_forward.11} parent=47 // pred_region
        %p1587 = scmp.lt.s32.totalorder %s16, 3
        %s1588 = scalar_select %p1587, %s16, 3
        %s1589 = smul.addr %s1588, 8
        %s1590 = smul.addr %s1589, 8
        %s1591 = scalar_lea.vmem %s2, %s1590
      $region52: #{encoder_forward.11} parent=47 // pred_fallthru
        _
    $region48: #{encoder_forward.11} parent=5 // pred_fallthru
      _
  $region6: #{encoder_forward.11} parent=0 // loop_footer
    %s14 = sadd.s32 1, %s10
  $region7: #{encoder_forward.11} parent=0 // loop_footer_branch
    %9 = sbr.rel target = $region3
  $region8: #{encoder_forward.11} parent=0 // loop_exit
    _

</llo_original>
